<compile_context>
chip_gen: v7x
topology: tpu7x:2x2x1
jax: 0.10.0
libtpu: 0.0.40
codegen_flags: <defaults>
</compile_context>

<pallas_src>
import functools
import math

import jax
import jax.numpy as jnp
from jax.experimental import pallas as pl
from jax.experimental.pallas import tpu as pltpu

VMEM_LIMIT_BYTES = 48 * 1024 * 1024


# ------------------------------ helpers -------------------------------------

def _pick_tile(n, candidates):
    for c in candidates:
        if c <= n and n % c == 0:
            return c
    return n


def _apply_act(y, act):
    if act is None:
        return y
    if act == "silu":
        return y * jax.nn.sigmoid(y)
    if act == "gelu_tanh":
        c = math.sqrt(2.0 / math.pi)
        return 0.5 * y * (1.0 + jnp.tanh(c * (y + 0.044715 * y * y * y)))
    raise ValueError(act)


# ----------------------------- Pallas kernels ------------------------------

def _small_linear_kernel(x_ref, w_ref, b_ref, o_ref, *, act, pre_act):
    """Tiny-M linear (timestep MLP, stacked adaLN). y = act((pre_act(x)) @ W + b)."""
    x = x_ref[...].astype(jnp.float32)
    if pre_act == "silu":
        x = x * jax.nn.sigmoid(x)
    y = jnp.dot(x.astype(jnp.bfloat16), w_ref[...],
                preferred_element_type=jnp.float32)
    y = _apply_act(y + b_ref[...].astype(jnp.float32), act)
    o_ref[...] = y.astype(o_ref.dtype)


def linear_small(x, w, b, act=None, pre_act=None):
    """x: (M, K) f32; w: (K, N) bf16 -> (M, N) f32.  N-tiled only (M is tiny)."""
    M, K = x.shape
    N = w.shape[1]
    tn = _pick_tile(N, (2048, 1024, 768, 512, 384, 256, 128))
    return pl.pallas_call(
        functools.partial(_small_linear_kernel, act=act, pre_act=pre_act),
        out_shape=jax.ShapeDtypeStruct((M, N), jnp.float32),
        grid=(N // tn,),
        in_specs=[
            pl.BlockSpec((M, K), lambda n: (0, 0)),
            pl.BlockSpec((K, tn), lambda n: (0, n)),
            pl.BlockSpec((1, tn), lambda n: (0, n)),
        ],
        out_specs=pl.BlockSpec((M, tn), lambda n: (0, n)),
        compiler_params=pltpu.CompilerParams(
            dimension_semantics=("parallel",),
            vmem_limit_bytes=VMEM_LIMIT_BYTES),
    )(x, w, b.reshape(1, N))


def _input_proj_kernel(x_ref, w_ref, b_ref, pos_ref, o_ref):
    """y = x @ W + b + pos_emb (patchified input projection fused with the APE add)."""
    y = jnp.dot(x_ref[...].astype(jnp.bfloat16), w_ref[...],
                preferred_element_type=jnp.float32)
    y = y + b_ref[...].astype(jnp.float32) + pos_ref[...].astype(jnp.float32)
    o_ref[...] = y.astype(o_ref.dtype)


def input_proj_pallas(x, w, b, pos_emb):
    """x: (B, L, K) -> (B, L, C) f32, adds pos_emb (L, C)."""
    B, L, K = x.shape
    C = w.shape[1]
    tl = _pick_tile(L, (512, 256, 128, 64, 32, 16, 8))
    return pl.pallas_call(
        _input_proj_kernel,
        out_shape=jax.ShapeDtypeStruct((B, L, C), jnp.float32),
        grid=(B, L // tl),
        in_specs=[
            pl.BlockSpec((None, tl, K), lambda b_, l: (b_, l, 0)),
            pl.BlockSpec((K, C), lambda b_, l: (0, 0)),
            pl.BlockSpec((1, C), lambda b_, l: (0, 0)),
            pl.BlockSpec((tl, C), lambda b_, l: (l, 0)),
        ],
        out_specs=pl.BlockSpec((None, tl, C), lambda b_, l: (b_, l, 0)),
        compiler_params=pltpu.CompilerParams(
            dimension_semantics=("parallel", "parallel"),
            vmem_limit_bytes=VMEM_LIMIT_BYTES),
    )(x, w, b.reshape(1, C), pos_emb)


def _ln_mod_matmul_kernel(x_ref, s_ref, t_ref, w_ref, b_ref, o_ref, *, eps, act):
    """y = act((LN(x) * scale + shift) @ W + b).  LN over last dim, no affine, f32 math."""
    x = x_ref[...].astype(jnp.float32)                               # (tl, C)
    mu = jnp.mean(x, axis=-1, keepdims=True)
    var = jnp.mean(jnp.square(x - mu), axis=-1, keepdims=True)       # biased, as torch LayerNorm
    xn = (x - mu) * jax.lax.rsqrt(var + eps)
    xn = xn * s_ref[...].astype(jnp.float32) + t_ref[...].astype(jnp.float32)
    y = jnp.dot(xn.astype(jnp.bfloat16), w_ref[...],
                preferred_element_type=jnp.float32)
    y = _apply_act(y + b_ref[...].astype(jnp.float32), act)
    o_ref[...] = y.astype(o_ref.dtype)


def ln_mod_matmul_pallas(x, scale, shift, w, b, *, eps, act=None, out_dtype=None):
    """x: (B, L, C) f32; scale/shift: (B, 1, C) f32; w: (C, N) bf16 -> (B, L, N)."""
    B, L, C = x.shape
    N = w.shape[1]
    tl = _pick_tile(L, (256, 128, 64, 32, 16, 8))
    tn = _pick_tile(N, (512, 384, 256, 128))
    out_dtype = out_dtype or x.dtype
    return pl.pallas_call(
        functools.partial(_ln_mod_matmul_kernel, eps=eps, act=act),
        out_shape=jax.ShapeDtypeStruct((B, L, N), out_dtype),
        grid=(B, N // tn, L // tl),           # L innermost -> weight block re-DMA elided
        in_specs=[
            pl.BlockSpec((None, tl, C), lambda b_, n, l: (b_, l, 0)),
            pl.BlockSpec((None, 1, C), lambda b_, n, l: (b_, 0, 0)),
            pl.BlockSpec((None, 1, C), lambda b_, n, l: (b_, 0, 0)),
            pl.BlockSpec((C, tn), lambda b_, n, l: (0, n)),
            pl.BlockSpec((1, tn), lambda b_, n, l: (0, n)),
        ],
        out_specs=pl.BlockSpec((None, tl, tn), lambda b_, n, l: (b_, l, n)),
        compiler_params=pltpu.CompilerParams(
            dimension_semantics=("parallel", "parallel", "parallel"),
            vmem_limit_bytes=VMEM_LIMIT_BYTES),
    )(x, scale, shift, w, b.reshape(1, N))


def _proj_kernel(x_ref, w_ref, b_ref, *rest, act, has_gate, has_residual):
    """y = [residual +] [gate *] act(x @ W + b)."""
    o_ref = rest[-1]
    idx = 0
    gate_ref = res_ref = None
    if has_gate:
        gate_ref = rest[idx]; idx += 1
    if has_residual:
        res_ref = rest[idx]; idx += 1
    y = jnp.dot(x_ref[...].astype(jnp.bfloat16), w_ref[...],
                preferred_element_type=jnp.float32)
    y = _apply_act(y + b_ref[...].astype(jnp.float32), act)
    if has_gate:
        y = y * gate_ref[...].astype(jnp.float32)
    if has_residual:
        y = y + res_ref[...].astype(jnp.float32)
    o_ref[...] = y.astype(o_ref.dtype)


def proj_pallas(x, w, b, *, gate=None, residual=None, act=None, out_dtype=None):
    """x: (B, L, K); w: (K, N) bf16; gate: (B,1,N)|None; residual: (B,L,N)|None."""
    B, L, K = x.shape
    N = w.shape[1]
    tl = _pick_tile(L, (256, 128, 64, 32, 16, 8))
    tn = _pick_tile(N, (512, 384, 256, 128))
    out_dtype = out_dtype or x.dtype
    in_specs = [
        pl.BlockSpec((None, tl, K), lambda b_, n, l: (b_, l, 0)),
        pl.BlockSpec((K, tn), lambda b_, n, l: (0, n)),
        pl.BlockSpec((1, tn), lambda b_, n, l: (0, n)),
    ]
    args = [x, w, b.reshape(1, N)]
    if gate is not None:
        in_specs.append(pl.BlockSpec((None, 1, tn), lambda b_, n, l: (b_, 0, n)))
        args.append(gate)
    if residual is not None:
        in_specs.append(pl.BlockSpec((None, tl, tn), lambda b_, n, l: (b_, l, n)))
        args.append(residual)
    return pl.pallas_call(
        functools.partial(_proj_kernel, act=act,
                          has_gate=gate is not None, has_residual=residual is not None),
        out_shape=jax.ShapeDtypeStruct((B, L, N), out_dtype),
        grid=(B, N // tn, L // tl),           # L innermost -> weight block re-DMA elided
        in_specs=in_specs,
        out_specs=pl.BlockSpec((None, tl, tn), lambda b_, n, l: (b_, l, n)),
        compiler_params=pltpu.CompilerParams(
            dimension_semantics=("parallel", "parallel", "parallel"),
            vmem_limit_bytes=VMEM_LIMIT_BYTES),
    )(*args)


def _flash_attn_kernel(q_ref, k_ref, v_ref, o_ref, m_sc, l_sc, acc_sc, *, scale):
    kv = pl.program_id(3)

    @pl.when(kv == 0)
    def _():
        m_sc[...] = jnp.full(m_sc.shape, -jnp.inf, m_sc.dtype)
        l_sc[...] = jnp.zeros(l_sc.shape, l_sc.dtype)
        acc_sc[...] = jnp.zeros(acc_sc.shape, acc_sc.dtype)

    q = q_ref[...]                                           # (tq, Dh) bf16
    k = k_ref[...]                                           # (tk, Dh) bf16
    v = v_ref[...]                                           # (tk, Dh) bf16
    s = jax.lax.dot_general(q, k, (((1,), (1,)), ((), ())),
                            preferred_element_type=jnp.float32) * scale    # (tq, tk) f32
    m_prev = m_sc[...]
    m_new = jnp.maximum(m_prev, jnp.max(s, axis=-1, keepdims=True))
    alpha = jnp.exp(m_prev - m_new)
    p = jnp.exp(s - m_new)
    l_sc[...] = alpha * l_sc[...] + jnp.sum(p, axis=-1, keepdims=True)
    acc_sc[...] = alpha * acc_sc[...] + jnp.dot(p.astype(jnp.bfloat16), v,
                                                preferred_element_type=jnp.float32)
    m_sc[...] = m_new

    @pl.when(kv == pl.num_programs(3) - 1)
    def _():
        o_ref[...] = (acc_sc[...] *
                      pl.reciprocal(l_sc[...], approx=True)).astype(o_ref.dtype)


def flash_attention_pallas(q, k, v):
    """q,k,v: (B, H, L, Dh) bf16 -> (B, H, Lq, Dh) bf16; online softmax over KV tiles."""
    B, H, Lq, Dh = q.shape
    Lk = k.shape[2]
    tq = _pick_tile(Lq, (256, 128, 64, 32, 16, 8))
    tk = _pick_tile(Lk, (256, 128, 64, 32, 16, 8))
    return pl.pallas_call(
        functools.partial(_flash_attn_kernel, scale=1.0 / math.sqrt(Dh)),
        out_shape=jax.ShapeDtypeStruct((B, H, Lq, Dh), jnp.bfloat16),
        grid=(B, H, Lq // tq, Lk // tk),
        in_specs=[
            pl.BlockSpec((None, None, tq, Dh), lambda b, h, i, j: (b, h, i, 0)),
            pl.BlockSpec((None, None, tk, Dh), lambda b, h, i, j: (b, h, j, 0)),
            pl.BlockSpec((None, None, tk, Dh), lambda b, h, i, j: (b, h, j, 0)),
        ],
        out_specs=pl.BlockSpec((None, None, tq, Dh), lambda b, h, i, j: (b, h, i, 0)),
        scratch_shapes=[
            pltpu.VMEM((tq, 1), jnp.float32),      # running max
            pltpu.VMEM((tq, 1), jnp.float32),      # running denom
            pltpu.VMEM((tq, Dh), jnp.float32),     # running accumulator
        ],
        compiler_params=pltpu.CompilerParams(
            dimension_semantics=("parallel", "parallel", "parallel", "arbitrary"),
            vmem_limit_bytes=VMEM_LIMIT_BYTES),
    )(q, k, v)


# -------------------------- plain-JAX glue (setup) --------------------------

def _split_heads(x, H, Dh):
    B, L, _ = x.shape
    return jnp.transpose(x.reshape(B, L, H, Dh), (0, 2, 1, 3))         # (B, H, L, Dh)


def _merge_heads(x):
    B, H, L, Dh = x.shape
    return jnp.transpose(x, (0, 2, 1, 3)).reshape(B, L, H * Dh)        # (B, L, C)


def timestep_embedding(t, dim, max_period=10000.0):
    half = dim // 2
    freqs = jnp.exp(-math.log(max_period) * jnp.arange(half, dtype=jnp.float32) / half)
    args = t[:, None].astype(jnp.float32) * freqs[None]
    return jnp.concatenate([jnp.cos(args), jnp.sin(args)], axis=-1)


def make_pos_emb(channels, grid_res):
    # AbsolutePositionEmbedder(channels, 3) over a [grid_res]^3 meshgrid (indexing='ij').
    freq_dim = channels // 3 // 2
    freqs = 1.0 / (10000.0 ** (jnp.arange(freq_dim, dtype=jnp.float32) / freq_dim))
    coords = jnp.stack(
        jnp.meshgrid(jnp.arange(grid_res), jnp.arange(grid_res), jnp.arange(grid_res), indexing="ij"),
        axis=-1,
    ).reshape(-1, 3).astype(jnp.float32)
    n = coords.shape[0]
    out = coords.reshape(-1)[:, None] * freqs[None]
    emb = jnp.concatenate([jnp.sin(out), jnp.cos(out)], axis=-1).reshape(n, -1)
    if emb.shape[1] < channels:
        emb = jnp.concatenate([emb, jnp.zeros((n, channels - emb.shape[1]), jnp.float32)], axis=-1)
    return emb


def init_params(key, cfg):
    C = cfg["model_channels"]
    p = cfg["patch_size"]
    Lg = cfg["resolution"] // p
    mlp_hidden = int(C * cfg["mlp_ratio"])
    nb = cfg["num_blocks"]
    keys = iter(jax.random.split(key, 512))

    def w(shape, std=0.02):
        # matmul weights pre-cast to bf16 once (half the weight DMA, no per-tile cast)
        return (std * jax.random.normal(next(keys), shape, jnp.float32)).astype(jnp.bfloat16)

    def b(shape, std=0.02):
        return std * jax.random.normal(next(keys), shape, jnp.float32)

    n_out = cfg["out_channels"] * p ** 3
    n_out_pad = max(128, ((n_out + 127) // 128) * 128)        # lane-dense final output
    out_w = jnp.zeros((C, n_out_pad), jnp.float32).at[:, :n_out].set(
        0.02 * jax.random.normal(next(keys), (C, n_out), jnp.float32))
    out_b = jnp.zeros((n_out_pad,), jnp.float32).at[:n_out].set(b((n_out,)))

    params = {
        "input_w": w((cfg["in_channels"] * p ** 3, C)), "input_b": b((C,)),
        "t_mlp0_w": w((256, C)), "t_mlp0_b": b((C,)),
        "t_mlp2_w": w((C, C)), "t_mlp2_b": b((C,)),
        "pos_emb": make_pos_emb(C, Lg),
        # adaLN weights of ALL blocks stacked along N -> a single matmul per forward
        "ada_w": w((C, nb * 6 * C)), "ada_b": b((nb * 6 * C,)),
        "out_w": out_w.astype(jnp.bfloat16), "out_b": out_b, "n_out": n_out,
        "blocks": [],
    }
    for _ in range(nb):
        params["blocks"].append(dict(
            norm2_g=jnp.ones((C,), jnp.float32), norm2_b=jnp.zeros((C,), jnp.float32),
            qkv_w=w((C, 3 * C)), qkv_b=b((3 * C,)),
            sa_out_w=w((C, C)), sa_out_b=b((C,)),
            q_w=w((C, C)), q_b=b((C,)),
            kv_w=w((cfg["cond_channels"], 2 * C)), kv_b=b((2 * C,)),
            ca_out_w=w((C, C)), ca_out_b=b((C,)),
            mlp0_w=w((C, mlp_hidden)), mlp0_b=b((mlp_hidden,)),
            mlp2_w=w((mlp_hidden, C)), mlp2_b=b((C,)),
        ))
    return params


# ------------------------------ model forward -------------------------------

def block_forward(blk, h, mod, cond, H, Dh):
    """mod: (B, 6, 1, C) f32 = this block's adaLN chunks (shift/scale/gate msa, mlp)."""
    B, L, C = h.shape
    shift_msa, scale_msa, gate_msa = mod[:, 0], mod[:, 1], mod[:, 2]
    shift_mlp, scale_mlp, gate_mlp = mod[:, 3], mod[:, 4], mod[:, 5]

    # --- self attention: fused LN(no affine,1e-6)+mod+qkv proj -> flash attn -> fused out+gate+res
    qkv = ln_mod_matmul_pallas(h, 1.0 + scale_msa, shift_msa,
                               blk["qkv_w"], blk["qkv_b"], eps=1e-6,
                               out_dtype=jnp.bfloat16)                        # (B, L, 3C) bf16
    qkv = jnp.transpose(qkv.reshape(B, L, 3, H, Dh), (2, 0, 3, 1, 4))         # (3, B, H, L, Dh)
    sa = flash_attention_pallas(qkv[0], qkv[1], qkv[2])                       # (B, H, L, Dh) bf16
    h = proj_pallas(_merge_heads(sa), blk["sa_out_w"], blk["sa_out_b"],
                    gate=gate_msa, residual=h, out_dtype=jnp.float32)

    # --- cross attention: affine LN (1e-6), no modulation / no gate ---
    g = jnp.broadcast_to(blk["norm2_g"][None, None, :], (B, 1, C))
    bb = jnp.broadcast_to(blk["norm2_b"][None, None, :], (B, 1, C))
    qc = ln_mod_matmul_pallas(h, g, bb, blk["q_w"], blk["q_b"], eps=1e-6,
                              out_dtype=jnp.bfloat16)                         # (B, L, C) bf16
    kvc = proj_pallas(cond, blk["kv_w"], blk["kv_b"], out_dtype=jnp.bfloat16)  # (B, Lc, 2C) bf16
    Lc = kvc.shape[1]
    kvc = jnp.transpose(kvc.reshape(B, Lc, 2, H, Dh), (2, 0, 3, 1, 4))        # (2, B, H, Lc, Dh)
    ca = flash_attention_pallas(_split_heads(qc, H, Dh), kvc[0], kvc[1])      # (B, H, L, Dh) bf16
    h = proj_pallas(_merge_heads(ca), blk["ca_out_w"], blk["ca_out_b"],
                    residual=h, out_dtype=jnp.float32)

    # --- FFN: fused LN+mod+mlp0(gelu) -> fused mlp2+gate+res ---
    ff = ln_mod_matmul_pallas(h, 1.0 + scale_mlp, shift_mlp,
                              blk["mlp0_w"], blk["mlp0_b"], eps=1e-6, act="gelu_tanh",
                              out_dtype=jnp.bfloat16)                         # (B, L, 4C) bf16
    h = proj_pallas(ff, blk["mlp2_w"], blk["mlp2_b"],
                    gate=gate_mlp, residual=h, out_dtype=jnp.float32)
    return h


def sparse_structure_flow_forward(params, cfg, x, t, cond):
    B = x.shape[0]
    Cin, R, p = cfg["in_channels"], cfg["resolution"], cfg["patch_size"]
    C, Cout = cfg["model_channels"], cfg["out_channels"]
    H = C // cfg["num_head_channels"]
    Dh = cfg["num_head_channels"]
    Lg = R // p
    Ltok = Lg ** 3
    nb = cfg["num_blocks"]
    assert x.shape == (B, Cin, R, R, R)

    # patchify: (B, Cin, R, R, R) -> (B, L^3, Cin*p^3)   [matches TRELLIS patchify + view/permute]
    h = x.reshape(B, Cin, Lg, p, Lg, p, Lg, p)
    h = h.transpose(0, 1, 3, 5, 7, 2, 4, 6)                    # (B, Cin, p, p, p, L, L, L)
    h = h.reshape(B, Cin * p ** 3, Ltok).transpose(0, 2, 1)    # (B, L^3, Cin*p^3)

    # input layer fused with absolute positional embedding add
    h = input_proj_pallas(h, params["input_w"], params["input_b"], params["pos_emb"])

    # timestep embedder: sinusoid(256) -> Linear -> SiLU -> Linear
    t_freq = timestep_embedding(t, 256)
    t_emb = linear_small(t_freq, params["t_mlp0_w"], params["t_mlp0_b"], act="silu")
    t_emb = linear_small(t_emb, params["t_mlp2_w"], params["t_mlp2_b"])

    # adaLN modulation for ALL blocks in one launch (SiLU fused in), split per block after
    mod_all = linear_small(t_emb, params["ada_w"], params["ada_b"], pre_act="silu")
    mod_all = mod_all.reshape(B, nb, 6, 1, C)

    for bi, blk in enumerate(params["blocks"]):
        h = block_forward(blk, h, mod_all[:, bi], cond, H, Dh)

    # final LayerNorm (no affine, eps=1e-5) fused with the lane-padded out projection
    ones = jnp.ones((B, 1, C), jnp.float32)
    zeros = jnp.zeros((B, 1, C), jnp.float32)
    h = ln_mod_matmul_pallas(h, ones, zeros, params["out_w"], params["out_b"], eps=1e-5,
                             out_dtype=jnp.float32)
    h = h[:, :, :params["n_out"]]

    # unpatchify: (B, L^3, Cout*p^3) -> (B, Cout, R, R, R)
    h = h.reshape(B, Ltok, Cout * p ** 3).transpose(0, 2, 1).reshape(B, Cout * p ** 3, Lg, Lg, Lg)
    h = h.reshape(B, Cout, p, p, p, Lg, Lg, Lg)
    h = h.transpose(0, 1, 5, 2, 6, 3, 7, 4)                    # (B, Cout, L, p, L, p, L, p)
    h = h.reshape(B, Cout, R, R, R)
    return h


# ---------------------------------- main ------------------------------------

if __name__ == "__main__":
    cfg = dict(
        resolution=8,
        in_channels=4,
        model_channels=64,
        cond_channels=48,
        out_channels=4,
        num_blocks=2,
        num_head_channels=16,   # -> num_heads = 4
        mlp_ratio=4,
        patch_size=2,
    )

    root = jax.random.PRNGKey(0)
    kp, kx, kt, kc = jax.random.split(root, 4)
    params = init_params(kp, cfg)

    B = 2
    x = jax.random.normal(kx, (B, cfg["in_channels"]) + (cfg["resolution"],) * 3, jnp.float32)
    t = jax.random.uniform(kt, (B,), jnp.float32) * 1000.0
    cond = jax.random.normal(kc, (B, 8, cfg["cond_channels"]), jnp.float32)

    forward = jax.jit(lambda x_, t_, c_: sparse_structure_flow_forward(params, cfg, x_, t_, c_))
    out = jax.block_until_ready(forward(x, t, cond))

    assert out.shape == (B, cfg["out_channels"], cfg["resolution"], cfg["resolution"], cfg["resolution"]), out.shape
    assert bool(jnp.all(jnp.isfinite(out)))
    print("KERNEL_OK")
</pallas_src>

<mosaic_0001>
module attributes {stable_mosaic.version = 11 : i64} {
  func.func @_input_proj_kernel(%arg0: i32, %arg1: i32, %arg2: memref<1x64x32xf32, #tpu.memory_space<vmem>>, %arg3: memref<32x64xbf16, #tpu.memory_space<vmem>>, %arg4: memref<1x64xf32, #tpu.memory_space<vmem>>, %arg5: memref<64x64xf32, #tpu.memory_space<vmem>>, %arg6: memref<1x64x64xf32, #tpu.memory_space<vmem>>) attributes {dimension_semantics = [#tpu.dimension_semantics<parallel>, #tpu.dimension_semantics<parallel>], iteration_bounds = array<i64: 2, 1>, scalar_prefetch = 0 : i64, scratch_operands = 0 : i64, tpu.core_type = #tpu.core_type<tc>, window_params = [{transform_indices = @transform_0, window_bounds = array<i64: 1, 64, 32>}, {pipeline_mode = #tpu.pipeline_mode<synchronous>, transform_indices = @transform_1, window_bounds = array<i64: 32, 64>}, {pipeline_mode = #tpu.pipeline_mode<synchronous>, transform_indices = @transform_2, window_bounds = array<i64: 1, 64>}, {transform_indices = @transform_3, window_bounds = array<i64: 64, 64>}, {transform_indices = @transform_4, window_bounds = array<i64: 1, 64, 64>}]} {
    %c0 = arith.constant 0 : index
    %c0_0 = arith.constant 0 : index
    %c0_1 = arith.constant 0 : index
    %0 = vector.load %arg2[%c0, %c0_0, %c0_1] : memref<1x64x32xf32, #tpu.memory_space<vmem>>, vector<1x64x32xf32>
    %1 = vector.shape_cast %0 : vector<1x64x32xf32> to vector<64x32xf32>
    %2 = arith.truncf %1 : vector<64x32xf32> to vector<64x32xbf16>
    %c0_2 = arith.constant 0 : index
    %c0_3 = arith.constant 0 : index
    %3 = vector.load %arg3[%c0_2, %c0_3] : memref<32x64xbf16, #tpu.memory_space<vmem>>, vector<32x64xbf16>
    %cst = arith.constant dense<0.000000e+00> : vector<64x64xf32>
    %4 = tpu.matmul %2, %3, %cst {dimension_numbers = #tpu.dot_dimension_numbers<[1], [0], [0], [1], [0, 0, 1, 1], [], []>} : vector<64x32xbf16>, vector<32x64xbf16>, vector<64x64xf32> -> vector<64x64xf32>
    %c0_4 = arith.constant 0 : index
    %c0_5 = arith.constant 0 : index
    %5 = vector.load %arg4[%c0_4, %c0_5] : memref<1x64xf32, #tpu.memory_space<vmem>>, vector<1x64xf32>
    %6 = vector.broadcast %5 : vector<1x64xf32> to vector<64x64xf32>
    %7 = arith.addf %4, %6 : vector<64x64xf32>
    %c0_6 = arith.constant 0 : index
    %c0_7 = arith.constant 0 : index
    %8 = vector.load %arg5[%c0_6, %c0_7] : memref<64x64xf32, #tpu.memory_space<vmem>>, vector<64x64xf32>
    %9 = arith.addf %7, %8 : vector<64x64xf32>
    %c0_8 = arith.constant 0 : index
    %c0_9 = arith.constant 0 : index
    %c0_10 = arith.constant 0 : index
    %10 = vector.load %arg6[%c0_8, %c0_9, %c0_10] : memref<1x64x64xf32, #tpu.memory_space<vmem>>, vector<1x64x64xf32>
    %11 = vector.shape_cast %10 : vector<1x64x64xf32> to vector<64x64xf32>
    %12 = vector.shape_cast %9 : vector<64x64xf32> to vector<1x64x64xf32>
    tpu.vector_store %arg6[%c0_8, %c0_9, %c0_10], %12 {strides = array<i32>} : memref<1x64x64xf32, #tpu.memory_space<vmem>>, vector<1x64x64xf32>,
    return
  }
  func.func @transform_0(%arg0: i32, %arg1: i32) -> (i32, i32, i32) {
    %c0_i32 = arith.constant 0 : i32
    %c0_i32_0 = arith.constant 0 : i32
    return %arg0, %arg1, %c0_i32 : i32, i32, i32
  }
  func.func @transform_1(%arg0: i32, %arg1: i32) -> (i32, i32) {
    %c0_i32 = arith.constant 0 : i32
    %c0_i32_0 = arith.constant 0 : i32
    %c0_i32_1 = arith.constant 0 : i32
    return %c0_i32, %c0_i32_0 : i32, i32
  }
  func.func @transform_2(%arg0: i32, %arg1: i32) -> (i32, i32) {
    %c0_i32 = arith.constant 0 : i32
    %c0_i32_0 = arith.constant 0 : i32
    %c0_i32_1 = arith.constant 0 : i32
    return %c0_i32, %c0_i32_0 : i32, i32
  }
  func.func @transform_3(%arg0: i32, %arg1: i32) -> (i32, i32) {
    %c0_i32 = arith.constant 0 : i32
    %c0_i32_0 = arith.constant 0 : i32
    return %arg1, %c0_i32 : i32, i32
  }
  func.func @transform_4(%arg0: i32, %arg1: i32) -> (i32, i32, i32) {
    %c0_i32 = arith.constant 0 : i32
    %c0_i32_0 = arith.constant 0 : i32
    return %arg0, %arg1, %c0_i32 : i32, i32, i32
  }
}

module attributes {stable_mosaic.version = 11 : i64} {
  func.func @_small_linear_kernel(%arg0: i32, %arg1: memref<2x64xf32, #tpu.memory_space<vmem>>, %arg2: memref<64x64xbf16, #tpu.memory_space<vmem>>, %arg3: memref<1x64xf32, #tpu.memory_space<vmem>>, %arg4: memref<2x64xf32, #tpu.memory_space<vmem>>) attributes {dimension_semantics = [#tpu.dimension_semantics<parallel>], iteration_bounds = array<i64: 1>, scalar_prefetch = 0 : i64, scratch_operands = 0 : i64, tpu.core_type = #tpu.core_type<tc>, window_params = [{pipeline_mode = #tpu.pipeline_mode<synchronous>, transform_indices = @transform_0, window_bounds = array<i64: 2, 64>}, {transform_indices = @transform_1, window_bounds = array<i64: 64, 64>}, {transform_indices = @transform_2, window_bounds = array<i64: 1, 64>}, {transform_indices = @transform_3, window_bounds = array<i64: 2, 64>}]} {
    %c0 = arith.constant 0 : index
    %c0_0 = arith.constant 0 : index
    %0 = vector.load %arg1[%c0, %c0_0] : memref<2x64xf32, #tpu.memory_space<vmem>>, vector<2x64xf32>
    %1 = arith.truncf %0 : vector<2x64xf32> to vector<2x64xbf16>
    %c0_1 = arith.constant 0 : index
    %c0_2 = arith.constant 0 : index
    %2 = vector.load %arg2[%c0_1, %c0_2] : memref<64x64xbf16, #tpu.memory_space<vmem>>, vector<64x64xbf16>
    %cst = arith.constant dense<0.000000e+00> : vector<2x64xf32>
    %3 = tpu.matmul %1, %2, %cst {dimension_numbers = #tpu.dot_dimension_numbers<[1], [0], [0], [1], [0, 0, 1, 1], [], []>} : vector<2x64xbf16>, vector<64x64xbf16>, vector<2x64xf32> -> vector<2x64xf32>
    %c0_3 = arith.constant 0 : index
    %c0_4 = arith.constant 0 : index
    %4 = vector.load %arg3[%c0_3, %c0_4] : memref<1x64xf32, #tpu.memory_space<vmem>>, vector<1x64xf32>
    %5 = vector.broadcast %4 : vector<1x64xf32> to vector<2x64xf32>
    %6 = arith.addf %3, %5 : vector<2x64xf32>
    %c0_5 = arith.constant 0 : index
    %c0_6 = arith.constant 0 : index
    %7 = vector.load %arg4[%c0_5, %c0_6] : memref<2x64xf32, #tpu.memory_space<vmem>>, vector<2x64xf32>
    tpu.vector_store %arg4[%c0_5, %c0_6], %6 {strides = array<i32>} : memref<2x64xf32, #tpu.memory_space<vmem>>, vector<2x64xf32>,
    return
  }
  func.func @transform_0(%arg0: i32) -> (i32, i32) {
    %c0_i32 = arith.constant 0 : i32
    %c0_i32_0 = arith.constant 0 : i32
    %c0_i32_1 = arith.constant 0 : i32
    return %c0_i32, %c0_i32_0 : i32, i32
  }
  func.func @transform_1(%arg0: i32) -> (i32, i32) {
    %c0_i32 = arith.constant 0 : i32
    %c0_i32_0 = arith.constant 0 : i32
    return %c0_i32, %arg0 : i32, i32
  }
  func.func @transform_2(%arg0: i32) -> (i32, i32) {
    %c0_i32 = arith.constant 0 : i32
    %c0_i32_0 = arith.constant 0 : i32
    return %c0_i32, %arg0 : i32, i32
  }
  func.func @transform_3(%arg0: i32) -> (i32, i32) {
    %c0_i32 = arith.constant 0 : i32
    %c0_i32_0 = arith.constant 0 : i32
    return %c0_i32, %arg0 : i32, i32
  }
}

module attributes {stable_mosaic.version = 11 : i64} {
  func.func @_small_linear_kernel(%arg0: i32, %arg1: memref<2x256xf32, #tpu.memory_space<vmem>>, %arg2: memref<256x64xbf16, #tpu.memory_space<vmem>>, %arg3: memref<1x64xf32, #tpu.memory_space<vmem>>, %arg4: memref<2x64xf32, #tpu.memory_space<vmem>>) attributes {dimension_semantics = [#tpu.dimension_semantics<parallel>], iteration_bounds = array<i64: 1>, scalar_prefetch = 0 : i64, scratch_operands = 0 : i64, tpu.core_type = #tpu.core_type<tc>, window_params = [{pipeline_mode = #tpu.pipeline_mode<synchronous>, transform_indices = @transform_0, window_bounds = array<i64: 2, 256>}, {transform_indices = @transform_1, window_bounds = array<i64: 256, 64>}, {transform_indices = @transform_2, window_bounds = array<i64: 1, 64>}, {transform_indices = @transform_3, window_bounds = array<i64: 2, 64>}]} {
    %c0 = arith.constant 0 : index
    %c0_0 = arith.constant 0 : index
    %0 = vector.load %arg1[%c0, %c0_0] : memref<2x256xf32, #tpu.memory_space<vmem>>, vector<2x256xf32>
    %1 = arith.truncf %0 : vector<2x256xf32> to vector<2x256xbf16>
    %c0_1 = arith.constant 0 : index
    %c0_2 = arith.constant 0 : index
    %2 = vector.load %arg2[%c0_1, %c0_2] : memref<256x64xbf16, #tpu.memory_space<vmem>>, vector<256x64xbf16>
    %cst = arith.constant dense<0.000000e+00> : vector<2x64xf32>
    %3 = tpu.matmul %1, %2, %cst {dimension_numbers = #tpu.dot_dimension_numbers<[1], [0], [0], [1], [0, 0, 1, 1], [], []>} : vector<2x256xbf16>, vector<256x64xbf16>, vector<2x64xf32> -> vector<2x64xf32>
    %c0_3 = arith.constant 0 : index
    %c0_4 = arith.constant 0 : index
    %4 = vector.load %arg3[%c0_3, %c0_4] : memref<1x64xf32, #tpu.memory_space<vmem>>, vector<1x64xf32>
    %5 = vector.broadcast %4 : vector<1x64xf32> to vector<2x64xf32>
    %6 = arith.addf %3, %5 : vector<2x64xf32>
    %7 = arith.negf %6 : vector<2x64xf32>
    %8 = math.exp %7 : vector<2x64xf32>
    %cst_5 = arith.constant 1.000000e+00 : f32
    %9 = vector.broadcast %cst_5 : f32 to vector<2x64xf32>
    %10 = arith.addf %9, %8 : vector<2x64xf32>
    %11 = arith.divf %9, %10 : vector<2x64xf32>
    %12 = arith.mulf %6, %11 : vector<2x64xf32>
    %c0_6 = arith.constant 0 : index
    %c0_7 = arith.constant 0 : index
    %13 = vector.load %arg4[%c0_6, %c0_7] : memref<2x64xf32, #tpu.memory_space<vmem>>, vector<2x64xf32>
    tpu.vector_store %arg4[%c0_6, %c0_7], %12 {strides = array<i32>} : memref<2x64xf32, #tpu.memory_space<vmem>>, vector<2x64xf32>,
    return
  }
  func.func @transform_0(%arg0: i32) -> (i32, i32) {
    %c0_i32 = arith.constant 0 : i32
    %c0_i32_0 = arith.constant 0 : i32
    %c0_i32_1 = arith.constant 0 : i32
    return %c0_i32, %c0_i32_0 : i32, i32
  }
  func.func @transform_1(%arg0: i32) -> (i32, i32) {
    %c0_i32 = arith.constant 0 : i32
    %c0_i32_0 = arith.constant 0 : i32
    return %c0_i32, %arg0 : i32, i32
  }
  func.func @transform_2(%arg0: i32) -> (i32, i32) {
    %c0_i32 = arith.constant 0 : i32
    %c0_i32_0 = arith.constant 0 : i32
    return %c0_i32, %arg0 : i32, i32
  }
  func.func @transform_3(%arg0: i32) -> (i32, i32) {
    %c0_i32 = arith.constant 0 : i32
    %c0_i32_0 = arith.constant 0 : i32
    return %c0_i32, %arg0 : i32, i32
  }
}

module attributes {stable_mosaic.version = 11 : i64} {
  func.func @_small_linear_kernel(%arg0: i32, %arg1: memref<2x64xf32, #tpu.memory_space<vmem>>, %arg2: memref<64x768xbf16, #tpu.memory_space<vmem>>, %arg3: memref<1x768xf32, #tpu.memory_space<vmem>>, %arg4: memref<2x768xf32, #tpu.memory_space<vmem>>) attributes {dimension_semantics = [#tpu.dimension_semantics<parallel>], iteration_bounds = array<i64: 1>, scalar_prefetch = 0 : i64, scratch_operands = 0 : i64, tpu.core_type = #tpu.core_type<tc>, window_params = [{pipeline_mode = #tpu.pipeline_mode<synchronous>, transform_indices = @transform_0, window_bounds = array<i64: 2, 64>}, {transform_indices = @transform_1, window_bounds = array<i64: 64, 768>}, {transform_indices = @transform_2, window_bounds = array<i64: 1, 768>}, {transform_indices = @transform_3, window_bounds = array<i64: 2, 768>}]} {
    %c0 = arith.constant 0 : index
    %c0_0 = arith.constant 0 : index
    %0 = vector.load %arg1[%c0, %c0_0] : memref<2x64xf32, #tpu.memory_space<vmem>>, vector<2x64xf32>
    %1 = arith.negf %0 : vector<2x64xf32>
    %2 = math.exp %1 : vector<2x64xf32>
    %cst = arith.constant 1.000000e+00 : f32
    %3 = vector.broadcast %cst : f32 to vector<2x64xf32>
    %4 = arith.addf %3, %2 : vector<2x64xf32>
    %5 = arith.divf %3, %4 : vector<2x64xf32>
    %6 = arith.mulf %0, %5 : vector<2x64xf32>
    %7 = arith.truncf %6 : vector<2x64xf32> to vector<2x64xbf16>
    %c0_1 = arith.constant 0 : index
    %c0_2 = arith.constant 0 : index
    %8 = vector.load %arg2[%c0_1, %c0_2] : memref<64x768xbf16, #tpu.memory_space<vmem>>, vector<64x768xbf16>
    %cst_3 = arith.constant dense<0.000000e+00> : vector<2x768xf32>
    %9 = tpu.matmul %7, %8, %cst_3 {dimension_numbers = #tpu.dot_dimension_numbers<[1], [0], [0], [1], [0, 0, 1, 1], [], []>} : vector<2x64xbf16>, vector<64x768xbf16>, vector<2x768xf32> -> vector<2x768xf32>
    %c0_4 = arith.constant 0 : index
    %c0_5 = arith.constant 0 : index
    %10 = vector.load %arg3[%c0_4, %c0_5] : memref<1x768xf32, #tpu.memory_space<vmem>>, vector<1x768xf32>
    %11 = vector.broadcast %10 : vector<1x768xf32> to vector<2x768xf32>
    %12 = arith.addf %9, %11 : vector<2x768xf32>
    %c0_6 = arith.constant 0 : index
    %c0_7 = arith.constant 0 : index
    %13 = vector.load %arg4[%c0_6, %c0_7] : memref<2x768xf32, #tpu.memory_space<vmem>>, vector<2x768xf32>
    tpu.vector_store %arg4[%c0_6, %c0_7], %12 {strides = array<i32>} : memref<2x768xf32, #tpu.memory_space<vmem>>, vector<2x768xf32>,
    return
  }
  func.func @transform_0(%arg0: i32) -> (i32, i32) {
    %c0_i32 = arith.constant 0 : i32
    %c0_i32_0 = arith.constant 0 : i32
    %c0_i32_1 = arith.constant 0 : i32
    return %c0_i32, %c0_i32_0 : i32, i32
  }
  func.func @transform_1(%arg0: i32) -> (i32, i32) {
    %c0_i32 = arith.constant 0 : i32
    %c0_i32_0 = arith.constant 0 : i32
    return %c0_i32, %arg0 : i32, i32
  }
  func.func @transform_2(%arg0: i32) -> (i32, i32) {
    %c0_i32 = arith.constant 0 : i32
    %c0_i32_0 = arith.constant 0 : i32
    return %c0_i32, %arg0 : i32, i32
  }
  func.func @transform_3(%arg0: i32) -> (i32, i32) {
    %c0_i32 = arith.constant 0 : i32
    %c0_i32_0 = arith.constant 0 : i32
    return %c0_i32, %arg0 : i32, i32
  }
}

module attributes {stable_mosaic.version = 11 : i64} {
  func.func @_ln_mod_matmul_kernel(%arg0: i32, %arg1: i32, %arg2: i32, %arg3: memref<1x64x64xf32, #tpu.memory_space<vmem>>, %arg4: memref<1x1x64xf32, #tpu.memory_space<vmem>>, %arg5: memref<1x1x64xf32, #tpu.memory_space<vmem>>, %arg6: memref<64x192xbf16, #tpu.memory_space<vmem>>, %arg7: memref<1x192xf32, #tpu.memory_space<vmem>>, %arg8: memref<1x64x192xbf16, #tpu.memory_space<vmem>>) attributes {dimension_semantics = [#tpu.dimension_semantics<parallel>, #tpu.dimension_semantics<parallel>, #tpu.dimension_semantics<parallel>], iteration_bounds = array<i64: 2, 1, 1>, scalar_prefetch = 0 : i64, scratch_operands = 0 : i64, tpu.core_type = #tpu.core_type<tc>, window_params = [{transform_indices = @transform_0, window_bounds = array<i64: 1, 64, 64>}, {transform_indices = @transform_1, window_bounds = array<i64: 1, 1, 64>}, {transform_indices = @transform_2, window_bounds = array<i64: 1, 1, 64>}, {transform_indices = @transform_3, window_bounds = array<i64: 64, 192>}, {transform_indices = @transform_4, window_bounds = array<i64: 1, 192>}, {transform_indices = @transform_5, window_bounds = array<i64: 1, 64, 192>}]} {
    %c0 = arith.constant 0 : index
    %c0_0 = arith.constant 0 : index
    %c0_1 = arith.constant 0 : index
    %0 = vector.load %arg3[%c0, %c0_0, %c0_1] : memref<1x64x64xf32, #tpu.memory_space<vmem>>, vector<1x64x64xf32>
    %1 = vector.shape_cast %0 : vector<1x64x64xf32> to vector<64x64xf32>
    %cst = arith.constant dense<0.000000e+00> : vector<64xf32>
    %2 = vector.multi_reduction <add>, %1, %cst [1] : vector<64x64xf32> to vector<64xf32>
    %3 = vector.shape_cast %2 : vector<64xf32> to vector<64x1xf32>
    %cst_2 = arith.constant 6.400000e+01 : f32
    %4 = vector.broadcast %cst_2 : f32 to vector<64x1xf32>
    %5 = arith.divf %3, %4 : vector<64x1xf32>
    %6 = vector.broadcast %5 : vector<64x1xf32> to vector<64x64xf32>
    %7 = arith.subf %1, %6 : vector<64x64xf32>
    %8 = arith.mulf %7, %7 : vector<64x64xf32>
    %cst_3 = arith.constant dense<0.000000e+00> : vector<64xf32>
    %9 = vector.multi_reduction <add>, %8, %cst_3 [1] : vector<64x64xf32> to vector<64xf32>
    %10 = vector.shape_cast %9 : vector<64xf32> to vector<64x1xf32>
    %cst_4 = arith.constant 6.400000e+01 : f32
    %11 = vector.broadcast %cst_4 : f32 to vector<64x1xf32>
    %12 = arith.divf %10, %11 : vector<64x1xf32>
    %13 = vector.broadcast %5 : vector<64x1xf32> to vector<64x64xf32>
    %14 = arith.subf %1, %13 : vector<64x64xf32>
    %cst_5 = arith.constant 9.99999997E-7 : f32
    %15 = vector.broadcast %cst_5 : f32 to vector<64x1xf32>
    %16 = arith.addf %12, %15 : vector<64x1xf32>
    %17 = math.rsqrt %16 : vector<64x1xf32>
    %18 = vector.broadcast %17 : vector<64x1xf32> to vector<64x64xf32>
    %19 = arith.mulf %14, %18 : vector<64x64xf32>
    %c0_6 = arith.constant 0 : index
    %c0_7 = arith.constant 0 : index
    %c0_8 = arith.constant 0 : index
    %20 = vector.load %arg4[%c0_6, %c0_7, %c0_8] : memref<1x1x64xf32, #tpu.memory_space<vmem>>, vector<1x1x64xf32>
    %21 = vector.shape_cast %20 : vector<1x1x64xf32> to vector<1x64xf32>
    %22 = vector.broadcast %21 : vector<1x64xf32> to vector<64x64xf32>
    %23 = arith.mulf %19, %22 : vector<64x64xf32>
    %c0_9 = arith.constant 0 : index
    %c0_10 = arith.constant 0 : index
    %c0_11 = arith.constant 0 : index
    %24 = vector.load %arg5[%c0_9, %c0_10, %c0_11] : memref<1x1x64xf32, #tpu.memory_space<vmem>>, vector<1x1x64xf32>
    %25 = vector.shape_cast %24 : vector<1x1x64xf32> to vector<1x64xf32>
    %26 = vector.broadcast %25 : vector<1x64xf32> to vector<64x64xf32>
    %27 = arith.addf %23, %26 : vector<64x64xf32>
    %28 = arith.truncf %27 : vector<64x64xf32> to vector<64x64xbf16>
    %c0_12 = arith.constant 0 : index
    %c0_13 = arith.constant 0 : index
    %29 = vector.load %arg6[%c0_12, %c0_13] : memref<64x192xbf16, #tpu.memory_space<vmem>>, vector<64x192xbf16>
    %cst_14 = arith.constant dense<0.000000e+00> : vector<64x192xf32>
    %30 = tpu.matmul %28, %29, %cst_14 {dimension_numbers = #tpu.dot_dimension_numbers<[1], [0], [0], [1], [0, 0, 1, 1], [], []>} : vector<64x64xbf16>, vector<64x192xbf16>, vector<64x192xf32> -> vector<64x192xf32>
    %c0_15 = arith.constant 0 : index
    %c0_16 = arith.constant 0 : index
    %31 = vector.load %arg7[%c0_15, %c0_16] : memref<1x192xf32, #tpu.memory_space<vmem>>, vector<1x192xf32>
    %32 = vector.broadcast %31 : vector<1x192xf32> to vector<64x192xf32>
    %33 = arith.addf %30, %32 : vector<64x192xf32>
    %34 = arith.truncf %33 : vector<64x192xf32> to vector<64x192xbf16>
    %c0_17 = arith.constant 0 : index
    %c0_18 = arith.constant 0 : index
    %c0_19 = arith.constant 0 : index
    %35 = vector.load %arg8[%c0_17, %c0_18, %c0_19] : memref<1x64x192xbf16, #tpu.memory_space<vmem>>, vector<1x64x192xbf16>
    %36 = vector.shape_cast %35 : vector<1x64x192xbf16> to vector<64x192xbf16>
    %37 = vector.shape_cast %34 : vector<64x192xbf16> to vector<1x64x192xbf16>
    tpu.vector_store %arg8[%c0_17, %c0_18, %c0_19], %37 {strides = array<i32>} : memref<1x64x192xbf16, #tpu.memory_space<vmem>>, vector<1x64x192xbf16>,
    return
  }
  func.func @transform_0(%arg0: i32, %arg1: i32, %arg2: i32) -> (i32, i32, i32) {
    %c0_i32 = arith.constant 0 : i32
    %c0_i32_0 = arith.constant 0 : i32
    return %arg0, %arg2, %c0_i32 : i32, i32, i32
  }
  func.func @transform_1(%arg0: i32, %arg1: i32, %arg2: i32) -> (i32, i32, i32) {
    %c0_i32 = arith.constant 0 : i32
    %c0_i32_0 = arith.constant 0 : i32
    %c0_i32_1 = arith.constant 0 : i32
    return %arg0, %c0_i32, %c0_i32_0 : i32, i32, i32
  }
  func.func @transform_2(%arg0: i32, %arg1: i32, %arg2: i32) -> (i32, i32, i32) {
    %c0_i32 = arith.constant 0 : i32
    %c0_i32_0 = arith.constant 0 : i32
    %c0_i32_1 = arith.constant 0 : i32
    return %arg0, %c0_i32, %c0_i32_0 : i32, i32, i32
  }
  func.func @transform_3(%arg0: i32, %arg1: i32, %arg2: i32) -> (i32, i32) {
    %c0_i32 = arith.constant 0 : i32
    %c0_i32_0 = arith.constant 0 : i32
    return %c0_i32, %arg1 : i32, i32
  }
  func.func @transform_4(%arg0: i32, %arg1: i32, %arg2: i32) -> (i32, i32) {
    %c0_i32 = arith.constant 0 : i32
    %c0_i32_0 = arith.constant 0 : i32
    return %c0_i32, %arg1 : i32, i32
  }
  func.func @transform_5(%arg0: i32, %arg1: i32, %arg2: i32) -> (i32, i32, i32) {
    %c0_i32 = arith.constant 0 : i32
    return %arg0, %arg2, %arg1 : i32, i32, i32
  }
}

module attributes {stable_mosaic.version = 11 : i64} {
  func.func @_flash_attn_kernel(%arg0: i32, %arg1: i32, %arg2: i32, %arg3: i32, %arg4: memref<1x1x64x16xbf16, #tpu.memory_space<vmem>>, %arg5: memref<1x1x64x16xbf16, #tpu.memory_space<vmem>>, %arg6: memref<1x1x64x16xbf16, #tpu.memory_space<vmem>>, %arg7: memref<1x1x64x16xbf16, #tpu.memory_space<vmem>>, %arg8: memref<64x1xf32, #tpu.memory_space<vmem>>, %arg9: memref<64x1xf32, #tpu.memory_space<vmem>>, %arg10: memref<64x16xf32, #tpu.memory_space<vmem>>) attributes {dimension_semantics = [#tpu.dimension_semantics<parallel>, #tpu.dimension_semantics<parallel>, #tpu.dimension_semantics<parallel>, #tpu.dimension_semantics<arbitrary>], iteration_bounds = array<i64: 2, 4, 1, 1>, scalar_prefetch = 0 : i64, scratch_operands = 3 : i64, tpu.core_type = #tpu.core_type<tc>, window_params = [{transform_indices = @transform_0, window_bounds = array<i64: 1, 1, 64, 16>}, {transform_indices = @transform_1, window_bounds = array<i64: 1, 1, 64, 16>}, {transform_indices = @transform_2, window_bounds = array<i64: 1, 1, 64, 16>}, {transform_indices = @transform_3, window_bounds = array<i64: 1, 1, 64, 16>}]} {
    %c0_i32 = arith.constant 0 : i32
    %0 = arith.cmpi eq, %arg3, %c0_i32 : i32
    %1 = arith.extui %0 : i1 to i32
    %c0_i32_0 = arith.constant 0 : i32
    %2 = arith.cmpi ne, %1, %c0_i32_0 : i32
    scf.if %2 {
      %cst_30 = arith.constant 0xFF800000 : f32
      %38 = vector.broadcast %cst_30 : f32 to vector<64x1xf32>
      %c0_31 = arith.constant 0 : index
      %c0_32 = arith.constant 0 : index
      %39 = vector.load %arg8[%c0_31, %c0_32] : memref<64x1xf32, #tpu.memory_space<vmem>>, vector<64x1xf32>
      tpu.vector_store %arg8[%c0_31, %c0_32], %38 {strides = array<i32>} : memref<64x1xf32, #tpu.memory_space<vmem>>, vector<64x1xf32>,
      %cst_33 = arith.constant 0.000000e+00 : f32
      %40 = vector.broadcast %cst_33 : f32 to vector<64x1xf32>
      %c0_34 = arith.constant 0 : index
      %c0_35 = arith.constant 0 : index
      %41 = vector.load %arg9[%c0_34, %c0_35] : memref<64x1xf32, #tpu.memory_space<vmem>>, vector<64x1xf32>
      tpu.vector_store %arg9[%c0_34, %c0_35], %40 {strides = array<i32>} : memref<64x1xf32, #tpu.memory_space<vmem>>, vector<64x1xf32>,
      %cst_36 = arith.constant 0.000000e+00 : f32
      %42 = vector.broadcast %cst_36 : f32 to vector<64x16xf32>
      %c0_37 = arith.constant 0 : index
      %c0_38 = arith.constant 0 : index
      %43 = vector.load %arg10[%c0_37, %c0_38] : memref<64x16xf32, #tpu.memory_space<vmem>>, vector<64x16xf32>
      tpu.vector_store %arg10[%c0_37, %c0_38], %42 {strides = array<i32>} : memref<64x16xf32, #tpu.memory_space<vmem>>, vector<64x16xf32>,
    } else {
    }
    %c0 = arith.constant 0 : index
    %c0_1 = arith.constant 0 : index
    %c0_2 = arith.constant 0 : index
    %c0_3 = arith.constant 0 : index
    %3 = vector.load %arg4[%c0, %c0_1, %c0_2, %c0_3] : memref<1x1x64x16xbf16, #tpu.memory_space<vmem>>, vector<1x1x64x16xbf16>
    %4 = vector.shape_cast %3 : vector<1x1x64x16xbf16> to vector<64x16xbf16>
    %c0_4 = arith.constant 0 : index
    %c0_5 = arith.constant 0 : index
    %c0_6 = arith.constant 0 : index
    %c0_7 = arith.constant 0 : index
    %5 = vector.load %arg5[%c0_4, %c0_5, %c0_6, %c0_7] : memref<1x1x64x16xbf16, #tpu.memory_space<vmem>>, vector<1x1x64x16xbf16>
    %6 = vector.shape_cast %5 : vector<1x1x64x16xbf16> to vector<64x16xbf16>
    %c0_8 = arith.constant 0 : index
    %c0_9 = arith.constant 0 : index
    %c0_10 = arith.constant 0 : index
    %c0_11 = arith.constant 0 : index
    %7 = vector.load %arg6[%c0_8, %c0_9, %c0_10, %c0_11] : memref<1x1x64x16xbf16, #tpu.memory_space<vmem>>, vector<1x1x64x16xbf16>
    %8 = vector.shape_cast %7 : vector<1x1x64x16xbf16> to vector<64x16xbf16>
    %cst = arith.constant dense<0.000000e+00> : vector<64x64xf32>
    %9 = tpu.matmul %4, %6, %cst {dimension_numbers = #tpu.dot_dimension_numbers<[1], [1], [0], [0], [0, 0, 1, 0], [], []>} : vector<64x16xbf16>, vector<64x16xbf16>, vector<64x64xf32> -> vector<64x64xf32>
    %cst_12 = arith.constant 2.500000e-01 : f32
    %10 = vector.broadcast %cst_12 : f32 to vector<64x64xf32>
    %11 = arith.mulf %9, %10 : vector<64x64xf32>
    %c0_13 = arith.constant 0 : index
    %c0_14 = arith.constant 0 : index
    %12 = vector.load %arg8[%c0_13, %c0_14] : memref<64x1xf32, #tpu.memory_space<vmem>>, vector<64x1xf32>
    %cst_15 = arith.constant dense<0xFF800000> : vector<64xf32>
    %13 = vector.multi_reduction <maximumf>, %11, %cst_15 [1] : vector<64x64xf32> to vector<64xf32>
    %14 = vector.shape_cast %13 : vector<64xf32> to vector<64x1xf32>
    %15 = arith.maximumf %12, %14 : vector<64x1xf32>
    %16 = arith.subf %12, %15 : vector<64x1xf32>
    %17 = math.exp %16 : vector<64x1xf32>
    %18 = vector.broadcast %15 : vector<64x1xf32> to vector<64x64xf32>
    %19 = arith.subf %11, %18 : vector<64x64xf32>
    %20 = math.exp %19 : vector<64x64xf32>
    %c0_16 = arith.constant 0 : index
    %c0_17 = arith.constant 0 : index
    %21 = vector.load %arg9[%c0_16, %c0_17] : memref<64x1xf32, #tpu.memory_space<vmem>>, vector<64x1xf32>
    %22 = arith.mulf %17, %21 : vector<64x1xf32>
    %cst_18 = arith.constant dense<0.000000e+00> : vector<64xf32>
    %23 = vector.multi_reduction <add>, %20, %cst_18 [1] : vector<64x64xf32> to vector<64xf32>
    %24 = vector.shape_cast %23 : vector<64xf32> to vector<64x1xf32>
    %25 = arith.addf %22, %24 : vector<64x1xf32>
    %c0_19 = arith.constant 0 : index
    %c0_20 = arith.constant 0 : index
    %26 = vector.load %arg9[%c0_19, %c0_20] : memref<64x1xf32, #tpu.memory_space<vmem>>, vector<64x1xf32>
    tpu.vector_store %arg9[%c0_19, %c0_20], %25 {strides = array<i32>} : memref<64x1xf32, #tpu.memory_space<vmem>>, vector<64x1xf32>,
    %c0_21 = arith.constant 0 : index
    %c0_22 = arith.constant 0 : index
    %27 = vector.load %arg10[%c0_21, %c0_22] : memref<64x16xf32, #tpu.memory_space<vmem>>, vector<64x16xf32>
    %28 = vector.broadcast %17 : vector<64x1xf32> to vector<64x16xf32>
    %29 = arith.mulf %28, %27 : vector<64x16xf32>
    %30 = arith.truncf %20 : vector<64x64xf32> to vector<64x64xbf16>
    %cst_23 = arith.constant dense<0.000000e+00> : vector<64x16xf32>
    %31 = tpu.matmul %30, %8, %cst_23 {dimension_numbers = #tpu.dot_dimension_numbers<[1], [0], [0], [1], [0, 0, 1, 1], [], []>} : vector<64x64xbf16>, vector<64x16xbf16>, vector<64x16xf32> -> vector<64x16xf32>
    %32 = arith.addf %29, %31 : vector<64x16xf32>
    %c0_24 = arith.constant 0 : index
    %c0_25 = arith.constant 0 : index
    %33 = vector.load %arg10[%c0_24, %c0_25] : memref<64x16xf32, #tpu.memory_space<vmem>>, vector<64x16xf32>
    tpu.vector_store %arg10[%c0_24, %c0_25], %32 {strides = array<i32>} : memref<64x16xf32, #tpu.memory_space<vmem>>, vector<64x16xf32>,
    %c0_26 = arith.constant 0 : index
    %c0_27 = arith.constant 0 : index
    %34 = vector.load %arg8[%c0_26, %c0_27] : memref<64x1xf32, #tpu.memory_space<vmem>>, vector<64x1xf32>
    tpu.vector_store %arg8[%c0_26, %c0_27], %15 {strides = array<i32>} : memref<64x1xf32, #tpu.memory_space<vmem>>, vector<64x1xf32>,
    %c0_i32_28 = arith.constant 0 : i32
    %35 = arith.cmpi eq, %arg3, %c0_i32_28 : i32
    %36 = arith.extui %35 : i1 to i32
    %c0_i32_29 = arith.constant 0 : i32
    %37 = arith.cmpi ne, %36, %c0_i32_29 : i32
    scf.if %37 {
      %c0_30 = arith.constant 0 : index
      %c0_31 = arith.constant 0 : index
      %38 = vector.load %arg10[%c0_30, %c0_31] : memref<64x16xf32, #tpu.memory_space<vmem>>, vector<64x16xf32>
      %c0_32 = arith.constant 0 : index
      %c0_33 = arith.constant 0 : index
      %39 = vector.load %arg9[%c0_32, %c0_33] : memref<64x1xf32, #tpu.memory_space<vmem>>, vector<64x1xf32>
      %40 = tpu.reciprocal %39 {approx = true} : vector<64x1xf32> -> vector<64x1xf32>
      %41 = vector.broadcast %40 : vector<64x1xf32> to vector<64x16xf32>
      %42 = arith.mulf %38, %41 : vector<64x16xf32>
      %43 = arith.truncf %42 : vector<64x16xf32> to vector<64x16xbf16>
      %c0_34 = arith.constant 0 : index
      %c0_35 = arith.constant 0 : index
      %c0_36 = arith.constant 0 : index
      %c0_37 = arith.constant 0 : index
      %44 = vector.load %arg7[%c0_34, %c0_35, %c0_36, %c0_37] : memref<1x1x64x16xbf16, #tpu.memory_space<vmem>>, vector<1x1x64x16xbf16>
      %45 = vector.shape_cast %44 : vector<1x1x64x16xbf16> to vector<64x16xbf16>
      %46 = vector.shape_cast %43 : vector<64x16xbf16> to vector<1x1x64x16xbf16>
      tpu.vector_store %arg7[%c0_34, %c0_35, %c0_36, %c0_37], %46 {strides = array<i32>} : memref<1x1x64x16xbf16, #tpu.memory_space<vmem>>, vector<1x1x64x16xbf16>,
    } else {
    }
    return
  }
  func.func @transform_0(%arg0: i32, %arg1: i32, %arg2: i32, %arg3: i32) -> (i32, i32, i32, i32) {
    %c0_i32 = arith.constant 0 : i32
    %c0_i32_0 = arith.constant 0 : i32
    return %arg0, %arg1, %arg2, %c0_i32 : i32, i32, i32, i32
  }
  func.func @transform_1(%arg0: i32, %arg1: i32, %arg2: i32, %arg3: i32) -> (i32, i32, i32, i32) {
    %c0_i32 = arith.constant 0 : i32
    %c0_i32_0 = arith.constant 0 : i32
    return %arg0, %arg1, %arg3, %c0_i32 : i32, i32, i32, i32
  }
  func.func @transform_2(%arg0: i32, %arg1: i32, %arg2: i32, %arg3: i32) -> (i32, i32, i32, i32) {
    %c0_i32 = arith.constant 0 : i32
    %c0_i32_0 = arith.constant 0 : i32
    return %arg0, %arg1, %arg3, %c0_i32 : i32, i32, i32, i32
  }
  func.func @transform_3(%arg0: i32, %arg1: i32, %arg2: i32, %arg3: i32) -> (i32, i32, i32, i32) {
    %c0_i32 = arith.constant 0 : i32
    %c0_i32_0 = arith.constant 0 : i32
    return %arg0, %arg1, %arg2, %c0_i32 : i32, i32, i32, i32
  }
}

module attributes {stable_mosaic.version = 11 : i64} {
  func.func @_ln_mod_matmul_kernel(%arg0: i32, %arg1: i32, %arg2: i32, %arg3: memref<1x64x64xf32, #tpu.memory_space<vmem>>, %arg4: memref<1x1x64xf32, #tpu.memory_space<vmem>>, %arg5: memref<1x1x64xf32, #tpu.memory_space<vmem>>, %arg6: memref<64x64xbf16, #tpu.memory_space<vmem>>, %arg7: memref<1x64xf32, #tpu.memory_space<vmem>>, %arg8: memref<1x64x64xbf16, #tpu.memory_space<vmem>>) attributes {dimension_semantics = [#tpu.dimension_semantics<parallel>, #tpu.dimension_semantics<parallel>, #tpu.dimension_semantics<parallel>], iteration_bounds = array<i64: 2, 1, 1>, scalar_prefetch = 0 : i64, scratch_operands = 0 : i64, tpu.core_type = #tpu.core_type<tc>, window_params = [{transform_indices = @transform_0, window_bounds = array<i64: 1, 64, 64>}, {transform_indices = @transform_1, window_bounds = array<i64: 1, 1, 64>}, {transform_indices = @transform_2, window_bounds = array<i64: 1, 1, 64>}, {transform_indices = @transform_3, window_bounds = array<i64: 64, 64>}, {transform_indices = @transform_4, window_bounds = array<i64: 1, 64>}, {transform_indices = @transform_5, window_bounds = array<i64: 1, 64, 64>}]} {
    %c0 = arith.constant 0 : index
    %c0_0 = arith.constant 0 : index
    %c0_1 = arith.constant 0 : index
    %0 = vector.load %arg3[%c0, %c0_0, %c0_1] : memref<1x64x64xf32, #tpu.memory_space<vmem>>, vector<1x64x64xf32>
    %1 = vector.shape_cast %0 : vector<1x64x64xf32> to vector<64x64xf32>
    %cst = arith.constant dense<0.000000e+00> : vector<64xf32>
    %2 = vector.multi_reduction <add>, %1, %cst [1] : vector<64x64xf32> to vector<64xf32>
    %3 = vector.shape_cast %2 : vector<64xf32> to vector<64x1xf32>
    %cst_2 = arith.constant 6.400000e+01 : f32
    %4 = vector.broadcast %cst_2 : f32 to vector<64x1xf32>
    %5 = arith.divf %3, %4 : vector<64x1xf32>
    %6 = vector.broadcast %5 : vector<64x1xf32> to vector<64x64xf32>
    %7 = arith.subf %1, %6 : vector<64x64xf32>
    %8 = arith.mulf %7, %7 : vector<64x64xf32>
    %cst_3 = arith.constant dense<0.000000e+00> : vector<64xf32>
    %9 = vector.multi_reduction <add>, %8, %cst_3 [1] : vector<64x64xf32> to vector<64xf32>
    %10 = vector.shape_cast %9 : vector<64xf32> to vector<64x1xf32>
    %cst_4 = arith.constant 6.400000e+01 : f32
    %11 = vector.broadcast %cst_4 : f32 to vector<64x1xf32>
    %12 = arith.divf %10, %11 : vector<64x1xf32>
    %13 = vector.broadcast %5 : vector<64x1xf32> to vector<64x64xf32>
    %14 = arith.subf %1, %13 : vector<64x64xf32>
    %cst_5 = arith.constant 9.99999997E-7 : f32
    %15 = vector.broadcast %cst_5 : f32 to vector<64x1xf32>
    %16 = arith.addf %12, %15 : vector<64x1xf32>
    %17 = math.rsqrt %16 : vector<64x1xf32>
    %18 = vector.broadcast %17 : vector<64x1xf32> to vector<64x64xf32>
    %19 = arith.mulf %14, %18 : vector<64x64xf32>
    %c0_6 = arith.constant 0 : index
    %c0_7 = arith.constant 0 : index
    %c0_8 = arith.constant 0 : index
    %20 = vector.load %arg4[%c0_6, %c0_7, %c0_8] : memref<1x1x64xf32, #tpu.memory_space<vmem>>, vector<1x1x64xf32>
    %21 = vector.shape_cast %20 : vector<1x1x64xf32> to vector<1x64xf32>
    %22 = vector.broadcast %21 : vector<1x64xf32> to vector<64x64xf32>
    %23 = arith.mulf %19, %22 : vector<64x64xf32>
    %c0_9 = arith.constant 0 : index
    %c0_10 = arith.constant 0 : index
    %c0_11 = arith.constant 0 : index
    %24 = vector.load %arg5[%c0_9, %c0_10, %c0_11] : memref<1x1x64xf32, #tpu.memory_space<vmem>>, vector<1x1x64xf32>
    %25 = vector.shape_cast %24 : vector<1x1x64xf32> to vector<1x64xf32>
    %26 = vector.broadcast %25 : vector<1x64xf32> to vector<64x64xf32>
    %27 = arith.addf %23, %26 : vector<64x64xf32>
    %28 = arith.truncf %27 : vector<64x64xf32> to vector<64x64xbf16>
    %c0_12 = arith.constant 0 : index
    %c0_13 = arith.constant 0 : index
    %29 = vector.load %arg6[%c0_12, %c0_13] : memref<64x64xbf16, #tpu.memory_space<vmem>>, vector<64x64xbf16>
    %cst_14 = arith.constant dense<0.000000e+00> : vector<64x64xf32>
    %30 = tpu.matmul %28, %29, %cst_14 {dimension_numbers = #tpu.dot_dimension_numbers<[1], [0], [0], [1], [0, 0, 1, 1], [], []>} : vector<64x64xbf16>, vector<64x64xbf16>, vector<64x64xf32> -> vector<64x64xf32>
    %c0_15 = arith.constant 0 : index
    %c0_16 = arith.constant 0 : index
    %31 = vector.load %arg7[%c0_15, %c0_16] : memref<1x64xf32, #tpu.memory_space<vmem>>, vector<1x64xf32>
    %32 = vector.broadcast %31 : vector<1x64xf32> to vector<64x64xf32>
    %33 = arith.addf %30, %32 : vector<64x64xf32>
    %34 = arith.truncf %33 : vector<64x64xf32> to vector<64x64xbf16>
    %c0_17 = arith.constant 0 : index
    %c0_18 = arith.constant 0 : index
    %c0_19 = arith.constant 0 : index
    %35 = vector.load %arg8[%c0_17, %c0_18, %c0_19] : memref<1x64x64xbf16, #tpu.memory_space<vmem>>, vector<1x64x64xbf16>
    %36 = vector.shape_cast %35 : vector<1x64x64xbf16> to vector<64x64xbf16>
    %37 = vector.shape_cast %34 : vector<64x64xbf16> to vector<1x64x64xbf16>
    tpu.vector_store %arg8[%c0_17, %c0_18, %c0_19], %37 {strides = array<i32>} : memref<1x64x64xbf16, #tpu.memory_space<vmem>>, vector<1x64x64xbf16>,
    return
  }
  func.func @transform_0(%arg0: i32, %arg1: i32, %arg2: i32) -> (i32, i32, i32) {
    %c0_i32 = arith.constant 0 : i32
    %c0_i32_0 = arith.constant 0 : i32
    return %arg0, %arg2, %c0_i32 : i32, i32, i32
  }
  func.func @transform_1(%arg0: i32, %arg1: i32, %arg2: i32) -> (i32, i32, i32) {
    %c0_i32 = arith.constant 0 : i32
    %c0_i32_0 = arith.constant 0 : i32
    %c0_i32_1 = arith.constant 0 : i32
    return %arg0, %c0_i32, %c0_i32_0 : i32, i32, i32
  }
  func.func @transform_2(%arg0: i32, %arg1: i32, %arg2: i32) -> (i32, i32, i32) {
    %c0_i32 = arith.constant 0 : i32
    %c0_i32_0 = arith.constant 0 : i32
    %c0_i32_1 = arith.constant 0 : i32
    return %arg0, %c0_i32, %c0_i32_0 : i32, i32, i32
  }
  func.func @transform_3(%arg0: i32, %arg1: i32, %arg2: i32) -> (i32, i32) {
    %c0_i32 = arith.constant 0 : i32
    %c0_i32_0 = arith.constant 0 : i32
    return %c0_i32, %arg1 : i32, i32
  }
  func.func @transform_4(%arg0: i32, %arg1: i32, %arg2: i32) -> (i32, i32) {
    %c0_i32 = arith.constant 0 : i32
    %c0_i32_0 = arith.constant 0 : i32
    return %c0_i32, %arg1 : i32, i32
  }
  func.func @transform_5(%arg0: i32, %arg1: i32, %arg2: i32) -> (i32, i32, i32) {
    %c0_i32 = arith.constant 0 : i32
    return %arg0, %arg2, %arg1 : i32, i32, i32
  }
}

module attributes {stable_mosaic.version = 11 : i64} {
  func.func @_proj_kernel(%arg0: i32, %arg1: i32, %arg2: i32, %arg3: memref<1x64x64xbf16, #tpu.memory_space<vmem>>, %arg4: memref<64x64xbf16, #tpu.memory_space<vmem>>, %arg5: memref<1x64xf32, #tpu.memory_space<vmem>>, %arg6: memref<1x1x64xf32, #tpu.memory_space<vmem>>, %arg7: memref<1x64x64xf32, #tpu.memory_space<vmem>>, %arg8: memref<1x64x64xf32, #tpu.memory_space<vmem>>) attributes {dimension_semantics = [#tpu.dimension_semantics<parallel>, #tpu.dimension_semantics<parallel>, #tpu.dimension_semantics<parallel>], iteration_bounds = array<i64: 2, 1, 1>, scalar_prefetch = 0 : i64, scratch_operands = 0 : i64, tpu.core_type = #tpu.core_type<tc>, window_params = [{transform_indices = @transform_0, window_bounds = array<i64: 1, 64, 64>}, {transform_indices = @transform_1, window_bounds = array<i64: 64, 64>}, {transform_indices = @transform_2, window_bounds = array<i64: 1, 64>}, {transform_indices = @transform_3, window_bounds = array<i64: 1, 1, 64>}, {transform_indices = @transform_4, window_bounds = array<i64: 1, 64, 64>}, {transform_indices = @transform_5, window_bounds = array<i64: 1, 64, 64>}]} {
    %c0 = arith.constant 0 : index
    %c0_0 = arith.constant 0 : index
    %c0_1 = arith.constant 0 : index
    %0 = vector.load %arg3[%c0, %c0_0, %c0_1] : memref<1x64x64xbf16, #tpu.memory_space<vmem>>, vector<1x64x64xbf16>
    %1 = vector.shape_cast %0 : vector<1x64x64xbf16> to vector<64x64xbf16>
    %c0_2 = arith.constant 0 : index
    %c0_3 = arith.constant 0 : index
    %2 = vector.load %arg4[%c0_2, %c0_3] : memref<64x64xbf16, #tpu.memory_space<vmem>>, vector<64x64xbf16>
    %cst = arith.constant dense<0.000000e+00> : vector<64x64xf32>
    %3 = tpu.matmul %1, %2, %cst {dimension_numbers = #tpu.dot_dimension_numbers<[1], [0], [0], [1], [0, 0, 1, 1], [], []>} : vector<64x64xbf16>, vector<64x64xbf16>, vector<64x64xf32> -> vector<64x64xf32>
    %c0_4 = arith.constant 0 : index
    %c0_5 = arith.constant 0 : index
    %4 = vector.load %arg5[%c0_4, %c0_5] : memref<1x64xf32, #tpu.memory_space<vmem>>, vector<1x64xf32>
    %5 = vector.broadcast %4 : vector<1x64xf32> to vector<64x64xf32>
    %6 = arith.addf %3, %5 : vector<64x64xf32>
    %c0_6 = arith.constant 0 : index
    %c0_7 = arith.constant 0 : index
    %c0_8 = arith.constant 0 : index
    %7 = vector.load %arg6[%c0_6, %c0_7, %c0_8] : memref<1x1x64xf32, #tpu.memory_space<vmem>>, vector<1x1x64xf32>
    %8 = vector.shape_cast %7 : vector<1x1x64xf32> to vector<1x64xf32>
    %9 = vector.broadcast %8 : vector<1x64xf32> to vector<64x64xf32>
    %10 = arith.mulf %6, %9 : vector<64x64xf32>
    %c0_9 = arith.constant 0 : index
    %c0_10 = arith.constant 0 : index
    %c0_11 = arith.constant 0 : index
    %11 = vector.load %arg7[%c0_9, %c0_10, %c0_11] : memref<1x64x64xf32, #tpu.memory_space<vmem>>, vector<1x64x64xf32>
    %12 = vector.shape_cast %11 : vector<1x64x64xf32> to vector<64x64xf32>
    %13 = arith.addf %10, %12 : vector<64x64xf32>
    %c0_12 = arith.constant 0 : index
    %c0_13 = arith.constant 0 : index
    %c0_14 = arith.constant 0 : index
    %14 = vector.load %arg8[%c0_12, %c0_13, %c0_14] : memref<1x64x64xf32, #tpu.memory_space<vmem>>, vector<1x64x64xf32>
    %15 = vector.shape_cast %14 : vector<1x64x64xf32> to vector<64x64xf32>
    %16 = vector.shape_cast %13 : vector<64x64xf32> to vector<1x64x64xf32>
    tpu.vector_store %arg8[%c0_12, %c0_13, %c0_14], %16 {strides = array<i32>} : memref<1x64x64xf32, #tpu.memory_space<vmem>>, vector<1x64x64xf32>,
    return
  }
  func.func @transform_0(%arg0: i32, %arg1: i32, %arg2: i32) -> (i32, i32, i32) {
    %c0_i32 = arith.constant 0 : i32
    %c0_i32_0 = arith.constant 0 : i32
    return %arg0, %arg2, %c0_i32 : i32, i32, i32
  }
  func.func @transform_1(%arg0: i32, %arg1: i32, %arg2: i32) -> (i32, i32) {
    %c0_i32 = arith.constant 0 : i32
    %c0_i32_0 = arith.constant 0 : i32
    return %c0_i32, %arg1 : i32, i32
  }
  func.func @transform_2(%arg0: i32, %arg1: i32, %arg2: i32) -> (i32, i32) {
    %c0_i32 = arith.constant 0 : i32
    %c0_i32_0 = arith.constant 0 : i32
    return %c0_i32, %arg1 : i32, i32
  }
  func.func @transform_3(%arg0: i32, %arg1: i32, %arg2: i32) -> (i32, i32, i32) {
    %c0_i32 = arith.constant 0 : i32
    %c0_i32_0 = arith.constant 0 : i32
    return %arg0, %c0_i32, %arg1 : i32, i32, i32
  }
  func.func @transform_4(%arg0: i32, %arg1: i32, %arg2: i32) -> (i32, i32, i32) {
    %c0_i32 = arith.constant 0 : i32
    return %arg0, %arg2, %arg1 : i32, i32, i32
  }
  func.func @transform_5(%arg0: i32, %arg1: i32, %arg2: i32) -> (i32, i32, i32) {
    %c0_i32 = arith.constant 0 : i32
    return %arg0, %arg2, %arg1 : i32, i32, i32
  }
}

module attributes {stable_mosaic.version = 11 : i64} {
  func.func @_proj_kernel(%arg0: i32, %arg1: i32, %arg2: i32, %arg3: memref<1x8x48xf32, #tpu.memory_space<vmem>>, %arg4: memref<48x128xbf16, #tpu.memory_space<vmem>>, %arg5: memref<1x128xf32, #tpu.memory_space<vmem>>, %arg6: memref<1x8x128xbf16, #tpu.memory_space<vmem>>) attributes {dimension_semantics = [#tpu.dimension_semantics<parallel>, #tpu.dimension_semantics<parallel>, #tpu.dimension_semantics<parallel>], iteration_bounds = array<i64: 2, 1, 1>, scalar_prefetch = 0 : i64, scratch_operands = 0 : i64, tpu.core_type = #tpu.core_type<tc>, window_params = [{transform_indices = @transform_0, window_bounds = array<i64: 1, 8, 48>}, {transform_indices = @transform_1, window_bounds = array<i64: 48, 128>}, {transform_indices = @transform_2, window_bounds = array<i64: 1, 128>}, {transform_indices = @transform_3, window_bounds = array<i64: 1, 8, 128>}]} {
    %c0 = arith.constant 0 : index
    %c0_0 = arith.constant 0 : index
    %c0_1 = arith.constant 0 : index
    %0 = vector.load %arg3[%c0, %c0_0, %c0_1] : memref<1x8x48xf32, #tpu.memory_space<vmem>>, vector<1x8x48xf32>
    %1 = vector.shape_cast %0 : vector<1x8x48xf32> to vector<8x48xf32>
    %2 = arith.truncf %1 : vector<8x48xf32> to vector<8x48xbf16>
    %c0_2 = arith.constant 0 : index
    %c0_3 = arith.constant 0 : index
    %3 = vector.load %arg4[%c0_2, %c0_3] : memref<48x128xbf16, #tpu.memory_space<vmem>>, vector<48x128xbf16>
    %cst = arith.constant dense<0.000000e+00> : vector<8x128xf32>
    %4 = tpu.matmul %2, %3, %cst {dimension_numbers = #tpu.dot_dimension_numbers<[1], [0], [0], [1], [0, 0, 1, 1], [], []>} : vector<8x48xbf16>, vector<48x128xbf16>, vector<8x128xf32> -> vector<8x128xf32>
    %c0_4 = arith.constant 0 : index
    %c0_5 = arith.constant 0 : index
    %5 = vector.load %arg5[%c0_4, %c0_5] : memref<1x128xf32, #tpu.memory_space<vmem>>, vector<1x128xf32>
    %6 = vector.broadcast %5 : vector<1x128xf32> to vector<8x128xf32>
    %7 = arith.addf %4, %6 : vector<8x128xf32>
    %8 = arith.truncf %7 : vector<8x128xf32> to vector<8x128xbf16>
    %c0_6 = arith.constant 0 : index
    %c0_7 = arith.constant 0 : index
    %c0_8 = arith.constant 0 : index
    %9 = vector.load %arg6[%c0_6, %c0_7, %c0_8] : memref<1x8x128xbf16, #tpu.memory_space<vmem>>, vector<1x8x128xbf16>
    %10 = vector.shape_cast %9 : vector<1x8x128xbf16> to vector<8x128xbf16>
    %11 = vector.shape_cast %8 : vector<8x128xbf16> to vector<1x8x128xbf16>
    tpu.vector_store %arg6[%c0_6, %c0_7, %c0_8], %11 {strides = array<i32>} : memref<1x8x128xbf16, #tpu.memory_space<vmem>>, vector<1x8x128xbf16>,
    return
  }
  func.func @transform_0(%arg0: i32, %arg1: i32, %arg2: i32) -> (i32, i32, i32) {
    %c0_i32 = arith.constant 0 : i32
    %c0_i32_0 = arith.constant 0 : i32
    return %arg0, %arg2, %c0_i32 : i32, i32, i32
  }
  func.func @transform_1(%arg0: i32, %arg1: i32, %arg2: i32) -> (i32, i32) {
    %c0_i32 = arith.constant 0 : i32
    %c0_i32_0 = arith.constant 0 : i32
    return %c0_i32, %arg1 : i32, i32
  }
  func.func @transform_2(%arg0: i32, %arg1: i32, %arg2: i32) -> (i32, i32) {
    %c0_i32 = arith.constant 0 : i32
    %c0_i32_0 = arith.constant 0 : i32
    return %c0_i32, %arg1 : i32, i32
  }
  func.func @transform_3(%arg0: i32, %arg1: i32, %arg2: i32) -> (i32, i32, i32) {
    %c0_i32 = arith.constant 0 : i32
    return %arg0, %arg2, %arg1 : i32, i32, i32
  }
}

module attributes {stable_mosaic.version = 11 : i64} {
  func.func @_flash_attn_kernel(%arg0: i32, %arg1: i32, %arg2: i32, %arg3: i32, %arg4: memref<1x1x64x16xbf16, #tpu.memory_space<vmem>>, %arg5: memref<1x1x8x16xbf16, #tpu.memory_space<vmem>>, %arg6: memref<1x1x8x16xbf16, #tpu.memory_space<vmem>>, %arg7: memref<1x1x64x16xbf16, #tpu.memory_space<vmem>>, %arg8: memref<64x1xf32, #tpu.memory_space<vmem>>, %arg9: memref<64x1xf32, #tpu.memory_space<vmem>>, %arg10: memref<64x16xf32, #tpu.memory_space<vmem>>) attributes {dimension_semantics = [#tpu.dimension_semantics<parallel>, #tpu.dimension_semantics<parallel>, #tpu.dimension_semantics<parallel>, #tpu.dimension_semantics<arbitrary>], iteration_bounds = array<i64: 2, 4, 1, 1>, scalar_prefetch = 0 : i64, scratch_operands = 3 : i64, tpu.core_type = #tpu.core_type<tc>, window_params = [{transform_indices = @transform_0, window_bounds = array<i64: 1, 1, 64, 16>}, {transform_indices = @transform_1, window_bounds = array<i64: 1, 1, 8, 16>}, {transform_indices = @transform_2, window_bounds = array<i64: 1, 1, 8, 16>}, {transform_indices = @transform_3, window_bounds = array<i64: 1, 1, 64, 16>}]} {
    %c0_i32 = arith.constant 0 : i32
    %0 = arith.cmpi eq, %arg3, %c0_i32 : i32
    %1 = arith.extui %0 : i1 to i32
    %c0_i32_0 = arith.constant 0 : i32
    %2 = arith.cmpi ne, %1, %c0_i32_0 : i32
    scf.if %2 {
      %cst_30 = arith.constant 0xFF800000 : f32
      %38 = vector.broadcast %cst_30 : f32 to vector<64x1xf32>
      %c0_31 = arith.constant 0 : index
      %c0_32 = arith.constant 0 : index
      %39 = vector.load %arg8[%c0_31, %c0_32] : memref<64x1xf32, #tpu.memory_space<vmem>>, vector<64x1xf32>
      tpu.vector_store %arg8[%c0_31, %c0_32], %38 {strides = array<i32>} : memref<64x1xf32, #tpu.memory_space<vmem>>, vector<64x1xf32>,
      %cst_33 = arith.constant 0.000000e+00 : f32
      %40 = vector.broadcast %cst_33 : f32 to vector<64x1xf32>
      %c0_34 = arith.constant 0 : index
      %c0_35 = arith.constant 0 : index
      %41 = vector.load %arg9[%c0_34, %c0_35] : memref<64x1xf32, #tpu.memory_space<vmem>>, vector<64x1xf32>
      tpu.vector_store %arg9[%c0_34, %c0_35], %40 {strides = array<i32>} : memref<64x1xf32, #tpu.memory_space<vmem>>, vector<64x1xf32>,
      %cst_36 = arith.constant 0.000000e+00 : f32
      %42 = vector.broadcast %cst_36 : f32 to vector<64x16xf32>
      %c0_37 = arith.constant 0 : index
      %c0_38 = arith.constant 0 : index
      %43 = vector.load %arg10[%c0_37, %c0_38] : memref<64x16xf32, #tpu.memory_space<vmem>>, vector<64x16xf32>
      tpu.vector_store %arg10[%c0_37, %c0_38], %42 {strides = array<i32>} : memref<64x16xf32, #tpu.memory_space<vmem>>, vector<64x16xf32>,
    } else {
    }
    %c0 = arith.constant 0 : index
    %c0_1 = arith.constant 0 : index
    %c0_2 = arith.constant 0 : index
    %c0_3 = arith.constant 0 : index
    %3 = vector.load %arg4[%c0, %c0_1, %c0_2, %c0_3] : memref<1x1x64x16xbf16, #tpu.memory_space<vmem>>, vector<1x1x64x16xbf16>
    %4 = vector.shape_cast %3 : vector<1x1x64x16xbf16> to vector<64x16xbf16>
    %c0_4 = arith.constant 0 : index
    %c0_5 = arith.constant 0 : index
    %c0_6 = arith.constant 0 : index
    %c0_7 = arith.constant 0 : index
    %5 = vector.load %arg5[%c0_4, %c0_5, %c0_6, %c0_7] : memref<1x1x8x16xbf16, #tpu.memory_space<vmem>>, vector<1x1x8x16xbf16>
    %6 = vector.shape_cast %5 : vector<1x1x8x16xbf16> to vector<8x16xbf16>
    %c0_8 = arith.constant 0 : index
    %c0_9 = arith.constant 0 : index
    %c0_10 = arith.constant 0 : index
    %c0_11 = arith.constant 0 : index
    %7 = vector.load %arg6[%c0_8, %c0_9, %c0_10, %c0_11] : memref<1x1x8x16xbf16, #tpu.memory_space<vmem>>, vector<1x1x8x16xbf16>
    %8 = vector.shape_cast %7 : vector<1x1x8x16xbf16> to vector<8x16xbf16>
    %cst = arith.constant dense<0.000000e+00> : vector<64x8xf32>
    %9 = tpu.matmul %4, %6, %cst {dimension_numbers = #tpu.dot_dimension_numbers<[1], [1], [0], [0], [0, 0, 1, 0], [], []>} : vector<64x16xbf16>, vector<8x16xbf16>, vector<64x8xf32> -> vector<64x8xf32>
    %cst_12 = arith.constant 2.500000e-01 : f32
    %10 = vector.broadcast %cst_12 : f32 to vector<64x8xf32>
    %11 = arith.mulf %9, %10 : vector<64x8xf32>
    %c0_13 = arith.constant 0 : index
    %c0_14 = arith.constant 0 : index
    %12 = vector.load %arg8[%c0_13, %c0_14] : memref<64x1xf32, #tpu.memory_space<vmem>>, vector<64x1xf32>
    %cst_15 = arith.constant dense<0xFF800000> : vector<64xf32>
    %13 = vector.multi_reduction <maximumf>, %11, %cst_15 [1] : vector<64x8xf32> to vector<64xf32>
    %14 = vector.shape_cast %13 : vector<64xf32> to vector<64x1xf32>
    %15 = arith.maximumf %12, %14 : vector<64x1xf32>
    %16 = arith.subf %12, %15 : vector<64x1xf32>
    %17 = math.exp %16 : vector<64x1xf32>
    %18 = vector.broadcast %15 : vector<64x1xf32> to vector<64x8xf32>
    %19 = arith.subf %11, %18 : vector<64x8xf32>
    %20 = math.exp %19 : vector<64x8xf32>
    %c0_16 = arith.constant 0 : index
    %c0_17 = arith.constant 0 : index
    %21 = vector.load %arg9[%c0_16, %c0_17] : memref<64x1xf32, #tpu.memory_space<vmem>>, vector<64x1xf32>
    %22 = arith.mulf %17, %21 : vector<64x1xf32>
    %cst_18 = arith.constant dense<0.000000e+00> : vector<64xf32>
    %23 = vector.multi_reduction <add>, %20, %cst_18 [1] : vector<64x8xf32> to vector<64xf32>
    %24 = vector.shape_cast %23 : vector<64xf32> to vector<64x1xf32>
    %25 = arith.addf %22, %24 : vector<64x1xf32>
    %c0_19 = arith.constant 0 : index
    %c0_20 = arith.constant 0 : index
    %26 = vector.load %arg9[%c0_19, %c0_20] : memref<64x1xf32, #tpu.memory_space<vmem>>, vector<64x1xf32>
    tpu.vector_store %arg9[%c0_19, %c0_20], %25 {strides = array<i32>} : memref<64x1xf32, #tpu.memory_space<vmem>>, vector<64x1xf32>,
    %c0_21 = arith.constant 0 : index
    %c0_22 = arith.constant 0 : index
    %27 = vector.load %arg10[%c0_21, %c0_22] : memref<64x16xf32, #tpu.memory_space<vmem>>, vector<64x16xf32>
    %28 = vector.broadcast %17 : vector<64x1xf32> to vector<64x16xf32>
    %29 = arith.mulf %28, %27 : vector<64x16xf32>
    %30 = arith.truncf %20 : vector<64x8xf32> to vector<64x8xbf16>
    %cst_23 = arith.constant dense<0.000000e+00> : vector<64x16xf32>
    %31 = tpu.matmul %30, %8, %cst_23 {dimension_numbers = #tpu.dot_dimension_numbers<[1], [0], [0], [1], [0, 0, 1, 1], [], []>} : vector<64x8xbf16>, vector<8x16xbf16>, vector<64x16xf32> -> vector<64x16xf32>
    %32 = arith.addf %29, %31 : vector<64x16xf32>
    %c0_24 = arith.constant 0 : index
    %c0_25 = arith.constant 0 : index
    %33 = vector.load %arg10[%c0_24, %c0_25] : memref<64x16xf32, #tpu.memory_space<vmem>>, vector<64x16xf32>
    tpu.vector_store %arg10[%c0_24, %c0_25], %32 {strides = array<i32>} : memref<64x16xf32, #tpu.memory_space<vmem>>, vector<64x16xf32>,
    %c0_26 = arith.constant 0 : index
    %c0_27 = arith.constant 0 : index
    %34 = vector.load %arg8[%c0_26, %c0_27] : memref<64x1xf32, #tpu.memory_space<vmem>>, vector<64x1xf32>
    tpu.vector_store %arg8[%c0_26, %c0_27], %15 {strides = array<i32>} : memref<64x1xf32, #tpu.memory_space<vmem>>, vector<64x1xf32>,
    %c0_i32_28 = arith.constant 0 : i32
    %35 = arith.cmpi eq, %arg3, %c0_i32_28 : i32
    %36 = arith.extui %35 : i1 to i32
    %c0_i32_29 = arith.constant 0 : i32
    %37 = arith.cmpi ne, %36, %c0_i32_29 : i32
    scf.if %37 {
      %c0_30 = arith.constant 0 : index
      %c0_31 = arith.constant 0 : index
      %38 = vector.load %arg10[%c0_30, %c0_31] : memref<64x16xf32, #tpu.memory_space<vmem>>, vector<64x16xf32>
      %c0_32 = arith.constant 0 : index
      %c0_33 = arith.constant 0 : index
      %39 = vector.load %arg9[%c0_32, %c0_33] : memref<64x1xf32, #tpu.memory_space<vmem>>, vector<64x1xf32>
      %40 = tpu.reciprocal %39 {approx = true} : vector<64x1xf32> -> vector<64x1xf32>
      %41 = vector.broadcast %40 : vector<64x1xf32> to vector<64x16xf32>
      %42 = arith.mulf %38, %41 : vector<64x16xf32>
      %43 = arith.truncf %42 : vector<64x16xf32> to vector<64x16xbf16>
      %c0_34 = arith.constant 0 : index
      %c0_35 = arith.constant 0 : index
      %c0_36 = arith.constant 0 : index
      %c0_37 = arith.constant 0 : index
      %44 = vector.load %arg7[%c0_34, %c0_35, %c0_36, %c0_37] : memref<1x1x64x16xbf16, #tpu.memory_space<vmem>>, vector<1x1x64x16xbf16>
      %45 = vector.shape_cast %44 : vector<1x1x64x16xbf16> to vector<64x16xbf16>
      %46 = vector.shape_cast %43 : vector<64x16xbf16> to vector<1x1x64x16xbf16>
      tpu.vector_store %arg7[%c0_34, %c0_35, %c0_36, %c0_37], %46 {strides = array<i32>} : memref<1x1x64x16xbf16, #tpu.memory_space<vmem>>, vector<1x1x64x16xbf16>,
    } else {
    }
    return
  }
  func.func @transform_0(%arg0: i32, %arg1: i32, %arg2: i32, %arg3: i32) -> (i32, i32, i32, i32) {
    %c0_i32 = arith.constant 0 : i32
    %c0_i32_0 = arith.constant 0 : i32
    return %arg0, %arg1, %arg2, %c0_i32 : i32, i32, i32, i32
  }
  func.func @transform_1(%arg0: i32, %arg1: i32, %arg2: i32, %arg3: i32) -> (i32, i32, i32, i32) {
    %c0_i32 = arith.constant 0 : i32
    %c0_i32_0 = arith.constant 0 : i32
    return %arg0, %arg1, %arg3, %c0_i32 : i32, i32, i32, i32
  }
  func.func @transform_2(%arg0: i32, %arg1: i32, %arg2: i32, %arg3: i32) -> (i32, i32, i32, i32) {
    %c0_i32 = arith.constant 0 : i32
    %c0_i32_0 = arith.constant 0 : i32
    return %arg0, %arg1, %arg3, %c0_i32 : i32, i32, i32, i32
  }
  func.func @transform_3(%arg0: i32, %arg1: i32, %arg2: i32, %arg3: i32) -> (i32, i32, i32, i32) {
    %c0_i32 = arith.constant 0 : i32
    %c0_i32_0 = arith.constant 0 : i32
    return %arg0, %arg1, %arg2, %c0_i32 : i32, i32, i32, i32
  }
}

module attributes {stable_mosaic.version = 11 : i64} {
  func.func @_proj_kernel(%arg0: i32, %arg1: i32, %arg2: i32, %arg3: memref<1x64x64xbf16, #tpu.memory_space<vmem>>, %arg4: memref<64x64xbf16, #tpu.memory_space<vmem>>, %arg5: memref<1x64xf32, #tpu.memory_space<vmem>>, %arg6: memref<1x64x64xf32, #tpu.memory_space<vmem>>, %arg7: memref<1x64x64xf32, #tpu.memory_space<vmem>>) attributes {dimension_semantics = [#tpu.dimension_semantics<parallel>, #tpu.dimension_semantics<parallel>, #tpu.dimension_semantics<parallel>], iteration_bounds = array<i64: 2, 1, 1>, scalar_prefetch = 0 : i64, scratch_operands = 0 : i64, tpu.core_type = #tpu.core_type<tc>, window_params = [{transform_indices = @transform_0, window_bounds = array<i64: 1, 64, 64>}, {transform_indices = @transform_1, window_bounds = array<i64: 64, 64>}, {transform_indices = @transform_2, window_bounds = array<i64: 1, 64>}, {transform_indices = @transform_3, window_bounds = array<i64: 1, 64, 64>}, {transform_indices = @transform_4, window_bounds = array<i64: 1, 64, 64>}]} {
    %c0 = arith.constant 0 : index
    %c0_0 = arith.constant 0 : index
    %c0_1 = arith.constant 0 : index
    %0 = vector.load %arg3[%c0, %c0_0, %c0_1] : memref<1x64x64xbf16, #tpu.memory_space<vmem>>, vector<1x64x64xbf16>
    %1 = vector.shape_cast %0 : vector<1x64x64xbf16> to vector<64x64xbf16>
    %c0_2 = arith.constant 0 : index
    %c0_3 = arith.constant 0 : index
    %2 = vector.load %arg4[%c0_2, %c0_3] : memref<64x64xbf16, #tpu.memory_space<vmem>>, vector<64x64xbf16>
    %cst = arith.constant dense<0.000000e+00> : vector<64x64xf32>
    %3 = tpu.matmul %1, %2, %cst {dimension_numbers = #tpu.dot_dimension_numbers<[1], [0], [0], [1], [0, 0, 1, 1], [], []>} : vector<64x64xbf16>, vector<64x64xbf16>, vector<64x64xf32> -> vector<64x64xf32>
    %c0_4 = arith.constant 0 : index
    %c0_5 = arith.constant 0 : index
    %4 = vector.load %arg5[%c0_4, %c0_5] : memref<1x64xf32, #tpu.memory_space<vmem>>, vector<1x64xf32>
    %5 = vector.broadcast %4 : vector<1x64xf32> to vector<64x64xf32>
    %6 = arith.addf %3, %5 : vector<64x64xf32>
    %c0_6 = arith.constant 0 : index
    %c0_7 = arith.constant 0 : index
    %c0_8 = arith.constant 0 : index
    %7 = vector.load %arg6[%c0_6, %c0_7, %c0_8] : memref<1x64x64xf32, #tpu.memory_space<vmem>>, vector<1x64x64xf32>
    %8 = vector.shape_cast %7 : vector<1x64x64xf32> to vector<64x64xf32>
    %9 = arith.addf %6, %8 : vector<64x64xf32>
    %c0_9 = arith.constant 0 : index
    %c0_10 = arith.constant 0 : index
    %c0_11 = arith.constant 0 : index
    %10 = vector.load %arg7[%c0_9, %c0_10, %c0_11] : memref<1x64x64xf32, #tpu.memory_space<vmem>>, vector<1x64x64xf32>
    %11 = vector.shape_cast %10 : vector<1x64x64xf32> to vector<64x64xf32>
    %12 = vector.shape_cast %9 : vector<64x64xf32> to vector<1x64x64xf32>
    tpu.vector_store %arg7[%c0_9, %c0_10, %c0_11], %12 {strides = array<i32>} : memref<1x64x64xf32, #tpu.memory_space<vmem>>, vector<1x64x64xf32>,
    return
  }
  func.func @transform_0(%arg0: i32, %arg1: i32, %arg2: i32) -> (i32, i32, i32) {
    %c0_i32 = arith.constant 0 : i32
    %c0_i32_0 = arith.constant 0 : i32
    return %arg0, %arg2, %c0_i32 : i32, i32, i32
  }
  func.func @transform_1(%arg0: i32, %arg1: i32, %arg2: i32) -> (i32, i32) {
    %c0_i32 = arith.constant 0 : i32
    %c0_i32_0 = arith.constant 0 : i32
    return %c0_i32, %arg1 : i32, i32
  }
  func.func @transform_2(%arg0: i32, %arg1: i32, %arg2: i32) -> (i32, i32) {
    %c0_i32 = arith.constant 0 : i32
    %c0_i32_0 = arith.constant 0 : i32
    return %c0_i32, %arg1 : i32, i32
  }
  func.func @transform_3(%arg0: i32, %arg1: i32, %arg2: i32) -> (i32, i32, i32) {
    %c0_i32 = arith.constant 0 : i32
    return %arg0, %arg2, %arg1 : i32, i32, i32
  }
  func.func @transform_4(%arg0: i32, %arg1: i32, %arg2: i32) -> (i32, i32, i32) {
    %c0_i32 = arith.constant 0 : i32
    return %arg0, %arg2, %arg1 : i32, i32, i32
  }
}

module attributes {stable_mosaic.version = 11 : i64} {
  func.func @_ln_mod_matmul_kernel(%arg0: i32, %arg1: i32, %arg2: i32, %arg3: memref<1x64x64xf32, #tpu.memory_space<vmem>>, %arg4: memref<1x1x64xf32, #tpu.memory_space<vmem>>, %arg5: memref<1x1x64xf32, #tpu.memory_space<vmem>>, %arg6: memref<64x256xbf16, #tpu.memory_space<vmem>>, %arg7: memref<1x256xf32, #tpu.memory_space<vmem>>, %arg8: memref<1x64x256xbf16, #tpu.memory_space<vmem>>) attributes {dimension_semantics = [#tpu.dimension_semantics<parallel>, #tpu.dimension_semantics<parallel>, #tpu.dimension_semantics<parallel>], iteration_bounds = array<i64: 2, 1, 1>, scalar_prefetch = 0 : i64, scratch_operands = 0 : i64, tpu.core_type = #tpu.core_type<tc>, window_params = [{transform_indices = @transform_0, window_bounds = array<i64: 1, 64, 64>}, {transform_indices = @transform_1, window_bounds = array<i64: 1, 1, 64>}, {transform_indices = @transform_2, window_bounds = array<i64: 1, 1, 64>}, {transform_indices = @transform_3, window_bounds = array<i64: 64, 256>}, {transform_indices = @transform_4, window_bounds = array<i64: 1, 256>}, {transform_indices = @transform_5, window_bounds = array<i64: 1, 64, 256>}]} {
    %c0 = arith.constant 0 : index
    %c0_0 = arith.constant 0 : index
    %c0_1 = arith.constant 0 : index
    %0 = vector.load %arg3[%c0, %c0_0, %c0_1] : memref<1x64x64xf32, #tpu.memory_space<vmem>>, vector<1x64x64xf32>
    %1 = vector.shape_cast %0 : vector<1x64x64xf32> to vector<64x64xf32>
    %cst = arith.constant dense<0.000000e+00> : vector<64xf32>
    %2 = vector.multi_reduction <add>, %1, %cst [1] : vector<64x64xf32> to vector<64xf32>
    %3 = vector.shape_cast %2 : vector<64xf32> to vector<64x1xf32>
    %cst_2 = arith.constant 6.400000e+01 : f32
    %4 = vector.broadcast %cst_2 : f32 to vector<64x1xf32>
    %5 = arith.divf %3, %4 : vector<64x1xf32>
    %6 = vector.broadcast %5 : vector<64x1xf32> to vector<64x64xf32>
    %7 = arith.subf %1, %6 : vector<64x64xf32>
    %8 = arith.mulf %7, %7 : vector<64x64xf32>
    %cst_3 = arith.constant dense<0.000000e+00> : vector<64xf32>
    %9 = vector.multi_reduction <add>, %8, %cst_3 [1] : vector<64x64xf32> to vector<64xf32>
    %10 = vector.shape_cast %9 : vector<64xf32> to vector<64x1xf32>
    %cst_4 = arith.constant 6.400000e+01 : f32
    %11 = vector.broadcast %cst_4 : f32 to vector<64x1xf32>
    %12 = arith.divf %10, %11 : vector<64x1xf32>
    %13 = vector.broadcast %5 : vector<64x1xf32> to vector<64x64xf32>
    %14 = arith.subf %1, %13 : vector<64x64xf32>
    %cst_5 = arith.constant 9.99999997E-7 : f32
    %15 = vector.broadcast %cst_5 : f32 to vector<64x1xf32>
    %16 = arith.addf %12, %15 : vector<64x1xf32>
    %17 = math.rsqrt %16 : vector<64x1xf32>
    %18 = vector.broadcast %17 : vector<64x1xf32> to vector<64x64xf32>
    %19 = arith.mulf %14, %18 : vector<64x64xf32>
    %c0_6 = arith.constant 0 : index
    %c0_7 = arith.constant 0 : index
    %c0_8 = arith.constant 0 : index
    %20 = vector.load %arg4[%c0_6, %c0_7, %c0_8] : memref<1x1x64xf32, #tpu.memory_space<vmem>>, vector<1x1x64xf32>
    %21 = vector.shape_cast %20 : vector<1x1x64xf32> to vector<1x64xf32>
    %22 = vector.broadcast %21 : vector<1x64xf32> to vector<64x64xf32>
    %23 = arith.mulf %19, %22 : vector<64x64xf32>
    %c0_9 = arith.constant 0 : index
    %c0_10 = arith.constant 0 : index
    %c0_11 = arith.constant 0 : index
    %24 = vector.load %arg5[%c0_9, %c0_10, %c0_11] : memref<1x1x64xf32, #tpu.memory_space<vmem>>, vector<1x1x64xf32>
    %25 = vector.shape_cast %24 : vector<1x1x64xf32> to vector<1x64xf32>
    %26 = vector.broadcast %25 : vector<1x64xf32> to vector<64x64xf32>
    %27 = arith.addf %23, %26 : vector<64x64xf32>
    %28 = arith.truncf %27 : vector<64x64xf32> to vector<64x64xbf16>
    %c0_12 = arith.constant 0 : index
    %c0_13 = arith.constant 0 : index
    %29 = vector.load %arg6[%c0_12, %c0_13] : memref<64x256xbf16, #tpu.memory_space<vmem>>, vector<64x256xbf16>
    %cst_14 = arith.constant dense<0.000000e+00> : vector<64x256xf32>
    %30 = tpu.matmul %28, %29, %cst_14 {dimension_numbers = #tpu.dot_dimension_numbers<[1], [0], [0], [1], [0, 0, 1, 1], [], []>} : vector<64x64xbf16>, vector<64x256xbf16>, vector<64x256xf32> -> vector<64x256xf32>
    %c0_15 = arith.constant 0 : index
    %c0_16 = arith.constant 0 : index
    %31 = vector.load %arg7[%c0_15, %c0_16] : memref<1x256xf32, #tpu.memory_space<vmem>>, vector<1x256xf32>
    %32 = vector.broadcast %31 : vector<1x256xf32> to vector<64x256xf32>
    %33 = arith.addf %30, %32 : vector<64x256xf32>
    %cst_17 = arith.constant 5.000000e-01 : f32
    %34 = vector.broadcast %cst_17 : f32 to vector<64x256xf32>
    %35 = arith.mulf %34, %33 : vector<64x256xf32>
    %cst_18 = arith.constant 4.471500e-02 : f32
    %36 = vector.broadcast %cst_18 : f32 to vector<64x256xf32>
    %37 = arith.mulf %36, %33 : vector<64x256xf32>
    %38 = arith.mulf %37, %33 : vector<64x256xf32>
    %39 = arith.mulf %38, %33 : vector<64x256xf32>
    %40 = arith.addf %33, %39 : vector<64x256xf32>
    %cst_19 = arith.constant 0.797884583 : f32
    %41 = vector.broadcast %cst_19 : f32 to vector<64x256xf32>
    %42 = arith.mulf %41, %40 : vector<64x256xf32>
    %43 = math.tanh %42 : vector<64x256xf32>
    %cst_20 = arith.constant 1.000000e+00 : f32
    %44 = vector.broadcast %cst_20 : f32 to vector<64x256xf32>
    %45 = arith.addf %44, %43 : vector<64x256xf32>
    %46 = arith.mulf %35, %45 : vector<64x256xf32>
    %47 = arith.truncf %46 : vector<64x256xf32> to vector<64x256xbf16>
    %c0_21 = arith.constant 0 : index
    %c0_22 = arith.constant 0 : index
    %c0_23 = arith.constant 0 : index
    %48 = vector.load %arg8[%c0_21, %c0_22, %c0_23] : memref<1x64x256xbf16, #tpu.memory_space<vmem>>, vector<1x64x256xbf16>
    %49 = vector.shape_cast %48 : vector<1x64x256xbf16> to vector<64x256xbf16>
    %50 = vector.shape_cast %47 : vector<64x256xbf16> to vector<1x64x256xbf16>
    tpu.vector_store %arg8[%c0_21, %c0_22, %c0_23], %50 {strides = array<i32>} : memref<1x64x256xbf16, #tpu.memory_space<vmem>>, vector<1x64x256xbf16>,
    return
  }
  func.func @transform_0(%arg0: i32, %arg1: i32, %arg2: i32) -> (i32, i32, i32) {
    %c0_i32 = arith.constant 0 : i32
    %c0_i32_0 = arith.constant 0 : i32
    return %arg0, %arg2, %c0_i32 : i32, i32, i32
  }
  func.func @transform_1(%arg0: i32, %arg1: i32, %arg2: i32) -> (i32, i32, i32) {
    %c0_i32 = arith.constant 0 : i32
    %c0_i32_0 = arith.constant 0 : i32
    %c0_i32_1 = arith.constant 0 : i32
    return %arg0, %c0_i32, %c0_i32_0 : i32, i32, i32
  }
  func.func @transform_2(%arg0: i32, %arg1: i32, %arg2: i32) -> (i32, i32, i32) {
    %c0_i32 = arith.constant 0 : i32
    %c0_i32_0 = arith.constant 0 : i32
    %c0_i32_1 = arith.constant 0 : i32
    return %arg0, %c0_i32, %c0_i32_0 : i32, i32, i32
  }
  func.func @transform_3(%arg0: i32, %arg1: i32, %arg2: i32) -> (i32, i32) {
    %c0_i32 = arith.constant 0 : i32
    %c0_i32_0 = arith.constant 0 : i32
    return %c0_i32, %arg1 : i32, i32
  }
  func.func @transform_4(%arg0: i32, %arg1: i32, %arg2: i32) -> (i32, i32) {
    %c0_i32 = arith.constant 0 : i32
    %c0_i32_0 = arith.constant 0 : i32
    return %c0_i32, %arg1 : i32, i32
  }
  func.func @transform_5(%arg0: i32, %arg1: i32, %arg2: i32) -> (i32, i32, i32) {
    %c0_i32 = arith.constant 0 : i32
    return %arg0, %arg2, %arg1 : i32, i32, i32
  }
}

module attributes {stable_mosaic.version = 11 : i64} {
  func.func @_proj_kernel(%arg0: i32, %arg1: i32, %arg2: i32, %arg3: memref<1x64x256xbf16, #tpu.memory_space<vmem>>, %arg4: memref<256x64xbf16, #tpu.memory_space<vmem>>, %arg5: memref<1x64xf32, #tpu.memory_space<vmem>>, %arg6: memref<1x1x64xf32, #tpu.memory_space<vmem>>, %arg7: memref<1x64x64xf32, #tpu.memory_space<vmem>>, %arg8: memref<1x64x64xf32, #tpu.memory_space<vmem>>) attributes {dimension_semantics = [#tpu.dimension_semantics<parallel>, #tpu.dimension_semantics<parallel>, #tpu.dimension_semantics<parallel>], iteration_bounds = array<i64: 2, 1, 1>, scalar_prefetch = 0 : i64, scratch_operands = 0 : i64, tpu.core_type = #tpu.core_type<tc>, window_params = [{transform_indices = @transform_0, window_bounds = array<i64: 1, 64, 256>}, {transform_indices = @transform_1, window_bounds = array<i64: 256, 64>}, {transform_indices = @transform_2, window_bounds = array<i64: 1, 64>}, {transform_indices = @transform_3, window_bounds = array<i64: 1, 1, 64>}, {transform_indices = @transform_4, window_bounds = array<i64: 1, 64, 64>}, {transform_indices = @transform_5, window_bounds = array<i64: 1, 64, 64>}]} {
    %c0 = arith.constant 0 : index
    %c0_0 = arith.constant 0 : index
    %c0_1 = arith.constant 0 : index
    %0 = vector.load %arg3[%c0, %c0_0, %c0_1] : memref<1x64x256xbf16, #tpu.memory_space<vmem>>, vector<1x64x256xbf16>
    %1 = vector.shape_cast %0 : vector<1x64x256xbf16> to vector<64x256xbf16>
    %c0_2 = arith.constant 0 : index
    %c0_3 = arith.constant 0 : index
    %2 = vector.load %arg4[%c0_2, %c0_3] : memref<256x64xbf16, #tpu.memory_space<vmem>>, vector<256x64xbf16>
    %cst = arith.constant dense<0.000000e+00> : vector<64x64xf32>
    %3 = tpu.matmul %1, %2, %cst {dimension_numbers = #tpu.dot_dimension_numbers<[1], [0], [0], [1], [0, 0, 1, 1], [], []>} : vector<64x256xbf16>, vector<256x64xbf16>, vector<64x64xf32> -> vector<64x64xf32>
    %c0_4 = arith.constant 0 : index
    %c0_5 = arith.constant 0 : index
    %4 = vector.load %arg5[%c0_4, %c0_5] : memref<1x64xf32, #tpu.memory_space<vmem>>, vector<1x64xf32>
    %5 = vector.broadcast %4 : vector<1x64xf32> to vector<64x64xf32>
    %6 = arith.addf %3, %5 : vector<64x64xf32>
    %c0_6 = arith.constant 0 : index
    %c0_7 = arith.constant 0 : index
    %c0_8 = arith.constant 0 : index
    %7 = vector.load %arg6[%c0_6, %c0_7, %c0_8] : memref<1x1x64xf32, #tpu.memory_space<vmem>>, vector<1x1x64xf32>
    %8 = vector.shape_cast %7 : vector<1x1x64xf32> to vector<1x64xf32>
    %9 = vector.broadcast %8 : vector<1x64xf32> to vector<64x64xf32>
    %10 = arith.mulf %6, %9 : vector<64x64xf32>
    %c0_9 = arith.constant 0 : index
    %c0_10 = arith.constant 0 : index
    %c0_11 = arith.constant 0 : index
    %11 = vector.load %arg7[%c0_9, %c0_10, %c0_11] : memref<1x64x64xf32, #tpu.memory_space<vmem>>, vector<1x64x64xf32>
    %12 = vector.shape_cast %11 : vector<1x64x64xf32> to vector<64x64xf32>
    %13 = arith.addf %10, %12 : vector<64x64xf32>
    %c0_12 = arith.constant 0 : index
    %c0_13 = arith.constant 0 : index
    %c0_14 = arith.constant 0 : index
    %14 = vector.load %arg8[%c0_12, %c0_13, %c0_14] : memref<1x64x64xf32, #tpu.memory_space<vmem>>, vector<1x64x64xf32>
    %15 = vector.shape_cast %14 : vector<1x64x64xf32> to vector<64x64xf32>
    %16 = vector.shape_cast %13 : vector<64x64xf32> to vector<1x64x64xf32>
    tpu.vector_store %arg8[%c0_12, %c0_13, %c0_14], %16 {strides = array<i32>} : memref<1x64x64xf32, #tpu.memory_space<vmem>>, vector<1x64x64xf32>,
    return
  }
  func.func @transform_0(%arg0: i32, %arg1: i32, %arg2: i32) -> (i32, i32, i32) {
    %c0_i32 = arith.constant 0 : i32
    %c0_i32_0 = arith.constant 0 : i32
    return %arg0, %arg2, %c0_i32 : i32, i32, i32
  }
  func.func @transform_1(%arg0: i32, %arg1: i32, %arg2: i32) -> (i32, i32) {
    %c0_i32 = arith.constant 0 : i32
    %c0_i32_0 = arith.constant 0 : i32
    return %c0_i32, %arg1 : i32, i32
  }
  func.func @transform_2(%arg0: i32, %arg1: i32, %arg2: i32) -> (i32, i32) {
    %c0_i32 = arith.constant 0 : i32
    %c0_i32_0 = arith.constant 0 : i32
    return %c0_i32, %arg1 : i32, i32
  }
  func.func @transform_3(%arg0: i32, %arg1: i32, %arg2: i32) -> (i32, i32, i32) {
    %c0_i32 = arith.constant 0 : i32
    %c0_i32_0 = arith.constant 0 : i32
    return %arg0, %c0_i32, %arg1 : i32, i32, i32
  }
  func.func @transform_4(%arg0: i32, %arg1: i32, %arg2: i32) -> (i32, i32, i32) {
    %c0_i32 = arith.constant 0 : i32
    return %arg0, %arg2, %arg1 : i32, i32, i32
  }
  func.func @transform_5(%arg0: i32, %arg1: i32, %arg2: i32) -> (i32, i32, i32) {
    %c0_i32 = arith.constant 0 : i32
    return %arg0, %arg2, %arg1 : i32, i32, i32
  }
}

module attributes {stable_mosaic.version = 11 : i64} {
  func.func @_ln_mod_matmul_kernel(%arg0: i32, %arg1: i32, %arg2: i32, %arg3: memref<1x64x64xf32, #tpu.memory_space<vmem>>, %arg4: memref<1x1x64xf32, #tpu.memory_space<vmem>>, %arg5: memref<1x1x64xf32, #tpu.memory_space<vmem>>, %arg6: memref<64x128xbf16, #tpu.memory_space<vmem>>, %arg7: memref<1x128xf32, #tpu.memory_space<vmem>>, %arg8: memref<1x64x128xf32, #tpu.memory_space<vmem>>) attributes {dimension_semantics = [#tpu.dimension_semantics<parallel>, #tpu.dimension_semantics<parallel>, #tpu.dimension_semantics<parallel>], iteration_bounds = array<i64: 2, 1, 1>, scalar_prefetch = 0 : i64, scratch_operands = 0 : i64, tpu.core_type = #tpu.core_type<tc>, window_params = [{transform_indices = @transform_0, window_bounds = array<i64: 1, 64, 64>}, {transform_indices = @transform_1, window_bounds = array<i64: 1, 1, 64>}, {transform_indices = @transform_2, window_bounds = array<i64: 1, 1, 64>}, {transform_indices = @transform_3, window_bounds = array<i64: 64, 128>}, {transform_indices = @transform_4, window_bounds = array<i64: 1, 128>}, {transform_indices = @transform_5, window_bounds = array<i64: 1, 64, 128>}]} {
    %c0 = arith.constant 0 : index
    %c0_0 = arith.constant 0 : index
    %c0_1 = arith.constant 0 : index
    %0 = vector.load %arg3[%c0, %c0_0, %c0_1] : memref<1x64x64xf32, #tpu.memory_space<vmem>>, vector<1x64x64xf32>
    %1 = vector.shape_cast %0 : vector<1x64x64xf32> to vector<64x64xf32>
    %cst = arith.constant dense<0.000000e+00> : vector<64xf32>
    %2 = vector.multi_reduction <add>, %1, %cst [1] : vector<64x64xf32> to vector<64xf32>
    %3 = vector.shape_cast %2 : vector<64xf32> to vector<64x1xf32>
    %cst_2 = arith.constant 6.400000e+01 : f32
    %4 = vector.broadcast %cst_2 : f32 to vector<64x1xf32>
    %5 = arith.divf %3, %4 : vector<64x1xf32>
    %6 = vector.broadcast %5 : vector<64x1xf32> to vector<64x64xf32>
    %7 = arith.subf %1, %6 : vector<64x64xf32>
    %8 = arith.mulf %7, %7 : vector<64x64xf32>
    %cst_3 = arith.constant dense<0.000000e+00> : vector<64xf32>
    %9 = vector.multi_reduction <add>, %8, %cst_3 [1] : vector<64x64xf32> to vector<64xf32>
    %10 = vector.shape_cast %9 : vector<64xf32> to vector<64x1xf32>
    %cst_4 = arith.constant 6.400000e+01 : f32
    %11 = vector.broadcast %cst_4 : f32 to vector<64x1xf32>
    %12 = arith.divf %10, %11 : vector<64x1xf32>
    %13 = vector.broadcast %5 : vector<64x1xf32> to vector<64x64xf32>
    %14 = arith.subf %1, %13 : vector<64x64xf32>
    %cst_5 = arith.constant 9.99999974E-6 : f32
    %15 = vector.broadcast %cst_5 : f32 to vector<64x1xf32>
    %16 = arith.addf %12, %15 : vector<64x1xf32>
    %17 = math.rsqrt %16 : vector<64x1xf32>
    %18 = vector.broadcast %17 : vector<64x1xf32> to vector<64x64xf32>
    %19 = arith.mulf %14, %18 : vector<64x64xf32>
    %c0_6 = arith.constant 0 : index
    %c0_7 = arith.constant 0 : index
    %c0_8 = arith.constant 0 : index
    %20 = vector.load %arg4[%c0_6, %c0_7, %c0_8] : memref<1x1x64xf32, #tpu.memory_space<vmem>>, vector<1x1x64xf32>
    %21 = vector.shape_cast %20 : vector<1x1x64xf32> to vector<1x64xf32>
    %22 = vector.broadcast %21 : vector<1x64xf32> to vector<64x64xf32>
    %23 = arith.mulf %19, %22 : vector<64x64xf32>
    %c0_9 = arith.constant 0 : index
    %c0_10 = arith.constant 0 : index
    %c0_11 = arith.constant 0 : index
    %24 = vector.load %arg5[%c0_9, %c0_10, %c0_11] : memref<1x1x64xf32, #tpu.memory_space<vmem>>, vector<1x1x64xf32>
    %25 = vector.shape_cast %24 : vector<1x1x64xf32> to vector<1x64xf32>
    %26 = vector.broadcast %25 : vector<1x64xf32> to vector<64x64xf32>
    %27 = arith.addf %23, %26 : vector<64x64xf32>
    %28 = arith.truncf %27 : vector<64x64xf32> to vector<64x64xbf16>
    %c0_12 = arith.constant 0 : index
    %c0_13 = arith.constant 0 : index
    %29 = vector.load %arg6[%c0_12, %c0_13] : memref<64x128xbf16, #tpu.memory_space<vmem>>, vector<64x128xbf16>
    %cst_14 = arith.constant dense<0.000000e+00> : vector<64x128xf32>
    %30 = tpu.matmul %28, %29, %cst_14 {dimension_numbers = #tpu.dot_dimension_numbers<[1], [0], [0], [1], [0, 0, 1, 1], [], []>} : vector<64x64xbf16>, vector<64x128xbf16>, vector<64x128xf32> -> vector<64x128xf32>
    %c0_15 = arith.constant 0 : index
    %c0_16 = arith.constant 0 : index
    %31 = vector.load %arg7[%c0_15, %c0_16] : memref<1x128xf32, #tpu.memory_space<vmem>>, vector<1x128xf32>
    %32 = vector.broadcast %31 : vector<1x128xf32> to vector<64x128xf32>
    %33 = arith.addf %30, %32 : vector<64x128xf32>
    %c0_17 = arith.constant 0 : index
    %c0_18 = arith.constant 0 : index
    %c0_19 = arith.constant 0 : index
    %34 = vector.load %arg8[%c0_17, %c0_18, %c0_19] : memref<1x64x128xf32, #tpu.memory_space<vmem>>, vector<1x64x128xf32>
    %35 = vector.shape_cast %34 : vector<1x64x128xf32> to vector<64x128xf32>
    %36 = vector.shape_cast %33 : vector<64x128xf32> to vector<1x64x128xf32>
    tpu.vector_store %arg8[%c0_17, %c0_18, %c0_19], %36 {strides = array<i32>} : memref<1x64x128xf32, #tpu.memory_space<vmem>>, vector<1x64x128xf32>,
    return
  }
  func.func @transform_0(%arg0: i32, %arg1: i32, %arg2: i32) -> (i32, i32, i32) {
    %c0_i32 = arith.constant 0 : i32
    %c0_i32_0 = arith.constant 0 : i32
    return %arg0, %arg2, %c0_i32 : i32, i32, i32
  }
  func.func @transform_1(%arg0: i32, %arg1: i32, %arg2: i32) -> (i32, i32, i32) {
    %c0_i32 = arith.constant 0 : i32
    %c0_i32_0 = arith.constant 0 : i32
    %c0_i32_1 = arith.constant 0 : i32
    return %arg0, %c0_i32, %c0_i32_0 : i32, i32, i32
  }
  func.func @transform_2(%arg0: i32, %arg1: i32, %arg2: i32) -> (i32, i32, i32) {
    %c0_i32 = arith.constant 0 : i32
    %c0_i32_0 = arith.constant 0 : i32
    %c0_i32_1 = arith.constant 0 : i32
    return %arg0, %c0_i32, %c0_i32_0 : i32, i32, i32
  }
  func.func @transform_3(%arg0: i32, %arg1: i32, %arg2: i32) -> (i32, i32) {
    %c0_i32 = arith.constant 0 : i32
    %c0_i32_0 = arith.constant 0 : i32
    return %c0_i32, %arg1 : i32, i32
  }
  func.func @transform_4(%arg0: i32, %arg1: i32, %arg2: i32) -> (i32, i32) {
    %c0_i32 = arith.constant 0 : i32
    %c0_i32_0 = arith.constant 0 : i32
    return %c0_i32, %arg1 : i32, i32
  }
  func.func @transform_5(%arg0: i32, %arg1: i32, %arg2: i32) -> (i32, i32, i32) {
    %c0_i32 = arith.constant 0 : i32
    return %arg0, %arg2, %arg1 : i32, i32, i32
  }
}

</mosaic_0001>

<llo_original>
// kernel: _lambda_.23
$region0: #{_lambda_.23}
  #allocation0 [shape = 'u32[]', space=smem, size = 0x4, offset = 0x4, fixed_abs, tag = 'smem constant byte address 0x4 - core index']
  #allocation1 [shape = 'u32[144,128]{1,0:T(1,128)}', space=vmem, size = 0x12000, scoped, tag = 'internal scratch']
  %s0 = inlined_call_operand.vmem [shape: f32[2,64,32], index: 0, kind: input, shape index: {}]
  %s1 = inlined_call_operand.vmem [shape: bf16[32,64], index: 1, kind: input, shape index: {}]
  %s2 = inlined_call_operand.vmem [shape: f32[1,64], index: 2, kind: input, shape index: {}]
  %s3 = inlined_call_operand.vmem [shape: f32[64,64], index: 3, kind: input, shape index: {}]
  %s4 = inlined_call_operand.vmem [shape: f32[2,64,64], index: 4, kind: output, shape index: {}]
  %s5 = sld [smem:[#allocation0]]
  $region49: #{_lambda_.23} parent=0
    _
  %s7 = ssub.s32 1, %s5
  %s8 = scalar_select 0, %s7, %s5
  loop: start=0, step=1, limit=4
  $region2: #{_lambda_.23} parent=0 // loop_pre_header
    _
  $region3: #{_lambda_.23} parent=0 // loop_header
    %s10 = sphi 0, %s14
    %p11 = scmp.ge.s32.totalorder %s10, 4
    %s17 = sphi 0, %s29
    %s18 = sphi 0, %s25
    %s19 = sphi 0, %s17
    %s20 = sphi 0, %s18
    %s21 = sphi 0, %s19
    %s22 = sphi 0, %s20
    %s34 = sphi 0, %s36
    %s37 = sphi 0, %s34
    %s38 = sphi 0, %s37
    %s54 = sphi 0, %s38
    %s58 = sphi 0, %s58
    %s60 = sphi 0, %s58
    %s61 = sphi 0, %s60
    %s75 = sphi 0, %s61
    %s79 = sphi 0, %s79
    %s81 = sphi 0, %s79
    %s82 = sphi 0, %s81
    %s96 = sphi 0, %s82
    %s102 = sphi 0, %s104
    %s105 = sphi 0, %s102
    %s106 = sphi 0, %s105
    %s122 = sphi 0, %s106
    %s130 = sphi 0, %s132
    %s133 = sphi 0, %s130
    %s134 = sphi 0, %s133
    %s150 = sphi 0, %s134
  $region4: #{_lambda_.23} parent=0 // loop_header_branch
    %13 = sbr.rel (%p11) target = $region8
  $region5: #{_lambda_.23} parent=0 // loop_body
    %s15 = ssub.s32 %s10, 1
    %s16 = ssub.s32 %s10, 2
    %s23 = sadd.s32 1, %s18
    %p24 = scmp.ge.s32.totalorder %s23, 1
    %s25 = scalar_select %p24, 0, %s23
    %s26 = sadd.s32 1, %s17
    %s27 = scalar_select %p24, %s26, %s17
    %p28 = scmp.ge.s32.totalorder %s27, 2
    %s29 = scalar_select %p28, 0, %s27
    %s30 = ssub.s32 %s17, %s29
    %s31 = ssub.s32 %s18, %s25
    %s32 = sor.u32 %s30, %s31
    %p33 = scmp.eq.s32.totalorder %s32, 0
    %s35 = sadd.s32 %s34, 1
    %s36 = scalar_select %p33, %s34, %s35
    %p39 = pneg %p33
    %p40 = scmp.eq.s32.totalorder %s10, 1
    %p41 = por %p39, %p40
    %p42 = scmp.ne.s32.totalorder %s34, %s37
    %p43 = scmp.eq.s32.totalorder %s10, 0
    %p44 = por %p42, %p43
    %p45 = scmp.ne.s32.totalorder %s34, %s37
    %p46 = scmp.eq.s32.totalorder %s15, 1
    %p47 = por %p45, %p46
    %p48 = scmp.ne.s32.totalorder %s37, %s38
    %p49 = scmp.eq.s32.totalorder %s15, 0
    %p50 = por %p48, %p49
    %p51 = scmp.ne.s32.totalorder %s37, %s38
    %p52 = scmp.eq.s32.totalorder %s16, 1
    %p53 = por %p51, %p52
    %p55 = scmp.ne.s32.totalorder %s38, %s54
    %p56 = scmp.eq.s32.totalorder %s16, 0
    %p57 = por %p55, %p56
    %s59 = sadd.s32 %s58, 1
    %p62 = scmp.eq.s32.totalorder %s10, 1
    %p63 = scmp.ne.s32.totalorder %s58, %s60
    %p64 = scmp.eq.s32.totalorder %s10, 0
    %p65 = por %p63, %p64
    %p66 = scmp.ne.s32.totalorder %s58, %s60
    %p67 = scmp.eq.s32.totalorder %s15, 1
    %p68 = por %p66, %p67
    %p69 = scmp.ne.s32.totalorder %s60, %s61
    %p70 = scmp.eq.s32.totalorder %s15, 0
    %p71 = por %p69, %p70
    %p72 = scmp.ne.s32.totalorder %s60, %s61
    %p73 = scmp.eq.s32.totalorder %s16, 1
    %p74 = por %p72, %p73
    %p76 = scmp.ne.s32.totalorder %s61, %s75
    %p77 = scmp.eq.s32.totalorder %s16, 0
    %p78 = por %p76, %p77
    %s80 = sadd.s32 %s79, 1
    %p83 = scmp.eq.s32.totalorder %s10, 1
    %p84 = scmp.ne.s32.totalorder %s79, %s81
    %p85 = scmp.eq.s32.totalorder %s10, 0
    %p86 = por %p84, %p85
    %p87 = scmp.ne.s32.totalorder %s79, %s81
    %p88 = scmp.eq.s32.totalorder %s15, 1
    %p89 = por %p87, %p88
    %p90 = scmp.ne.s32.totalorder %s81, %s82
    %p91 = scmp.eq.s32.totalorder %s15, 0
    %p92 = por %p90, %p91
    %p93 = scmp.ne.s32.totalorder %s81, %s82
    %p94 = scmp.eq.s32.totalorder %s16, 1
    %p95 = por %p93, %p94
    %p97 = scmp.ne.s32.totalorder %s82, %s96
    %p98 = scmp.eq.s32.totalorder %s16, 0
    %p99 = por %p97, %p98
    %s100 = ssub.s32 %s18, %s25
    %p101 = scmp.eq.s32.totalorder %s100, 0
    %s103 = sadd.s32 %s102, 1
    %s104 = scalar_select %p101, %s102, %s103
    %p107 = pneg %p101
    %p108 = scmp.eq.s32.totalorder %s10, 1
    %p109 = por %p107, %p108
    %p110 = scmp.ne.s32.totalorder %s102, %s105
    %p111 = scmp.eq.s32.totalorder %s10, 0
    %p112 = por %p110, %p111
    %p113 = scmp.ne.s32.totalorder %s102, %s105
    %p114 = scmp.eq.s32.totalorder %s15, 1
    %p115 = por %p113, %p114
    %p116 = scmp.ne.s32.totalorder %s105, %s106
    %p117 = scmp.eq.s32.totalorder %s15, 0
    %p118 = por %p116, %p117
    %p119 = scmp.ne.s32.totalorder %s105, %s106
    %p120 = scmp.eq.s32.totalorder %s16, 1
    %p121 = por %p119, %p120
    %p123 = scmp.ne.s32.totalorder %s106, %s122
    %p124 = scmp.eq.s32.totalorder %s16, 0
    %p125 = por %p123, %p124
    %s126 = ssub.s32 %s17, %s29
    %s127 = ssub.s32 %s18, %s25
    %s128 = sor.u32 %s126, %s127
    %p129 = scmp.eq.s32.totalorder %s128, 0
    %s131 = sadd.s32 %s130, 1
    %s132 = scalar_select %p129, %s130, %s131
    %p135 = pneg %p129
    %p136 = scmp.eq.s32.totalorder %s10, 1
    %p137 = por %p135, %p136
    %p138 = scmp.ne.s32.totalorder %s130, %s133
    %p139 = scmp.eq.s32.totalorder %s10, 0
    %p140 = por %p138, %p139
    %p141 = scmp.ne.s32.totalorder %s130, %s133
    %p142 = scmp.eq.s32.totalorder %s15, 1
    %p143 = por %p141, %p142
    %p144 = scmp.ne.s32.totalorder %s133, %s134
    %p145 = scmp.eq.s32.totalorder %s15, 0
    %p146 = por %p144, %p145
    %p147 = scmp.ne.s32.totalorder %s133, %s134
    %p148 = scmp.eq.s32.totalorder %s16, 1
    %p149 = por %p147, %p148
    %p151 = scmp.ne.s32.totalorder %s134, %s150
    %p152 = scmp.eq.s32.totalorder %s16, 0
    %p153 = por %p151, %p152
    %p154 = scmp.le.s32.totalorder 1, %s10
    %p155 = scmp.lt.s32.totalorder %s10, 3
    %p156 = pnand %p154, %p155
    %p157 = pneg %p156
    // Predicated region
    $region9: #{_lambda_.23} parent=5 // pred_check
      _
    $region10: #{_lambda_.23} parent=5 // pred_check_branch
      %159 = sbr.rel (%p156) target = $region12
    $region11: #{_lambda_.23} parent=5 // pred_region
      %s160 = ssub.s32 %s10, 1
      // Predicated region
      $region13: #{_lambda_.23} parent=11 // pred_check
        %p161 = pneg %p71
      $region14: #{_lambda_.23} parent=11 // pred_check_branch
        %163 = sbr.rel (%p161) target = $region16
      $region15: #{_lambda_.23} parent=11 // pred_region
        _
      $region16: #{_lambda_.23} parent=11 // pred_fallthru
        _
      // Predicated region
      $region17: #{_lambda_.23} parent=11 // pred_check
        %p164 = pneg %p92
      $region18: #{_lambda_.23} parent=11 // pred_check_branch
        %166 = sbr.rel (%p164) target = $region20
      $region19: #{_lambda_.23} parent=11 // pred_region
        _
      $region20: #{_lambda_.23} parent=11 // pred_fallthru
        _
      // Predicated region
      $region21: #{_lambda_.23} parent=11 // pred_check
        %p167 = pneg %p118
      $region22: #{_lambda_.23} parent=11 // pred_check_branch
        %169 = sbr.rel (%p167) target = $region24
      $region23: #{_lambda_.23} parent=11 // pred_region
        %s170 = smul.u32 8, %s20
        %p171 = scmp.lt.s32.totalorder %s170, 7
        %s172 = scalar_select %p171, %s170, 7
        %s173 = smul.addr %s172, 8
        %s174 = scalar_lea.vmem %s3, %s173
        %s175 = smul.u32 8, %s20
      $region24: #{_lambda_.23} parent=11 // pred_fallthru
        _
    $region12: #{_lambda_.23} parent=5 // pred_fallthru
      _
    %p176 = scmp.lt.s32.totalorder %s10, 2
    // Predicated region
    $region25: #{_lambda_.23} parent=5 // pred_check
      %p177 = pneg %p176
    $region26: #{_lambda_.23} parent=5 // pred_check_branch
      %179 = sbr.rel (%p177) target = $region28
    $region27: #{_lambda_.23} parent=5 // pred_region
      // Predicated region
      $region29: #{_lambda_.23} parent=27 // pred_check
        %p180 = pneg %p44
      $region30: #{_lambda_.23} parent=27 // pred_check_branch
        %182 = sbr.rel (%p180) target = $region32
      $region31: #{_lambda_.23} parent=27 // pred_region
        %s183 = smul.u32 8, %s18
        %p184 = scmp.lt.s32.totalorder %s17, 1
        %s185 = scalar_select %p184, %s17, 1
        %p186 = scmp.lt.s32.totalorder %s183, 7
        %s187 = scalar_select %p186, %s183, 7
        %s188 = smul.addr %s185, 8
        %s189 = sadd.s32 %s187, %s188
        %s190 = smul.addr %s189, 8
        %s191 = scalar_lea.vmem %s0, %s190
        %s192 = smul.u32 8, %s18
      $region32: #{_lambda_.23} parent=27 // pred_fallthru
        _
    $region28: #{_lambda_.23} parent=5 // pred_fallthru
      _
    %p193 = scmp.le.s32.totalorder 1, %s10
    %p194 = scmp.lt.s32.totalorder %s10, 3
    %p195 = pnand %p193, %p194
    %p196 = pneg %p195
    // Predicated region
    $region33: #{_lambda_.23} parent=5 // pred_check
      _
    $region34: #{_lambda_.23} parent=5 // pred_check_branch
      %198 = sbr.rel (%p195) target = $region36
    $region35: #{_lambda_.23} parent=5 // pred_region
      %s199 = ssub.s32 %s10, 1
      %s200 = smul.u32 8, %s20
      %p201 = scmp.lt.s32.totalorder %s19, 1
      %s202 = scalar_select %p201, %s19, 1
      %p203 = scmp.lt.s32.totalorder %s200, 7
      %s204 = scalar_select %p203, %s200, 7
      %s205 = smul.addr %s202, 8
      %s206 = sadd.s32 %s204, %s205
      %s207 = smul.addr %s206, 8
      %s208 = scalar_lea.vmem %s0, %s207
      %p209 = pneg %p50
      %p210 = pneg %p47
      %p211 = pneg %p71
      %p212 = pneg %p68
      %p213 = pneg %p92
      %p214 = pneg %p89
      %s215 = smul.u32 8, %s20
      %p216 = scmp.lt.s32.totalorder %s215, 7
      %s217 = scalar_select %p216, %s215, 7
      %s218 = smul.addr %s217, 8
      %s219 = scalar_lea.vmem %s3, %s218
      %p220 = pneg %p118
      %p221 = pneg %p115
      %p222 = pneg %p146
      %p223 = pneg %p143
      %s224 = smul.u32 8, %s20
      %p225 = scmp.lt.s32.totalorder %s19, 1
      %s226 = scalar_select %p225, %s19, 1
      %p227 = scmp.lt.s32.totalorder %s224, 7
      %s228 = scalar_select %p227, %s224, 7
      %s229 = smul.addr %s226, 8
      %s230 = sadd.s32 %s228, %s229
      %s231 = smul.addr %s230, 8
      %s232 = scalar_lea.vmem %s4, %s231
      %s233 = smul.u32 8, %s20
      %p234 = scmp.lt.s32.totalorder %s19, 1
      %s235 = scalar_select %p234, %s19, 1
      %p236 = scmp.lt.s32.totalorder %s233, 7
      %s237 = scalar_select %p236, %s233, 7
      %s238 = smul.addr %s235, 8
      %s239 = sadd.s32 %s237, %s238
      %s240 = smul.addr %s239, 8
      %s241 = scalar_lea.vmem %s0, %s240
      %s242 = smul.u32 8, %s20
      %s243 = smul.u32 8, %s20
      %p244 = scmp.lt.s32.totalorder %s243, 7
      %s245 = scalar_select %p244, %s243, 7
      %s246 = smul.addr %s245, 8
      %s247 = scalar_lea.vmem %s3, %s246
      %s248 = smul.u32 8, %s20
      %s249 = smul.u32 8, %s20
      %p250 = scmp.lt.s32.totalorder %s19, 1
      %s251 = scalar_select %p250, %s19, 1
      %p252 = scmp.lt.s32.totalorder %s249, 7
      %s253 = scalar_select %p252, %s249, 7
      %s254 = smul.addr %s251, 8
      %s255 = sadd.s32 %s253, %s254
      %s256 = smul.addr %s255, 8
      %s257 = scalar_lea.vmem %s4, %s256
      %s258 = smul.u32 8, %s20
      %v260 = vld [vmem:[%s241] sm:$0xff]
      %v261 = vld [vmem:[%s241 + $0x8] sm:$0xff]
      %v262 = vld [vmem:[%s241 + $0x10] sm:$0xff]
      %v263 = vld [vmem:[%s241 + $0x18] sm:$0xff]
      %v264 = vld [vmem:[%s241 + $0x20] sm:$0xff]
      %v265 = vld [vmem:[%s241 + $0x28] sm:$0xff]
      %v266 = vld [vmem:[%s241 + $0x30] sm:$0xff]
      %v267 = vld [vmem:[%s241 + $0x38] sm:$0xff]
      %v268 = vpack.c.bf16 %v261, %v260
      %v269 = vpack.c.bf16 %v263, %v262
      %v270 = vpack.c.bf16 %v265, %v264
      %v271 = vpack.c.bf16 %v267, %v266
      %v272 = vld [vmem:[%s1] sm:$0xf]
      %v273 = vld [vmem:[%s1 + $0x4] sm:$0xf]
      %v274 = vld [vmem:[%s1 + $0x8] sm:$0xf]
      %v275 = vld [vmem:[%s1 + $0xc] sm:$0xf]
      %v276 = vld [vmem:[%s2] sm:$0x1]
      %v278 = vlaneseq
      %v279 = vshrl.u32 %v278, 7
      %v280 = vsub.s32 0, %v279
      %v281 = vrot.slane %v276, %v280
      %v287 = vunpack.c.l.b16 %v272
      %v288 = vunpack.c.l.b16 %v273
      %v289 = vunpack.c.l.b16 %v274
      %v290 = vunpack.c.l.b16 %v275
      %v291 = vpack.c.b16 %v288, %v287
      %v292 = vpack.c.b16 %v290, %v289
      %vm295 = vcmask 261120
      %v297 = vsel %vm295, %v268, 0
      %v300 = vsel %vm295, %v269, 0
      %v303 = vsel %vm295, %v270, 0
      %v306 = vsel %vm295, %v271, 0
      %308 = vmatprep.subr.bf16.mxu0 0
      %309 = vmatpush1.bf16.msra.mxu0 %v291
      %310 = vmatprep.subr.bf16.mxu0 0
      %311 = vmatpush1.bf16.msra.mxu0 %v292
      %312 = vmatprep.subr.bf16.mxu0 0
      %313 = vmatpush1.bf16.msra.mxu0 0
      %314 = vmatprep.subr.bf16.mxu0 0
      %315 = vmatpush1.bf16.msra.mxu0 0
      %316 = vmatprep.subr.bf16.mxu0 0
      %317 = vmatpush1.bf16.msra.mxu0 0
      %318 = vmatprep.subr.bf16.mxu0 0
      %319 = vmatpush1.bf16.msra.mxu0 0
      %320 = vmatprep.subr.bf16.mxu0 0
      %321 = vmatpush1.bf16.msra.mxu0 0
      %322 = vmatprep.subr.bf16.mxu0 0
      %323 = vmatpush1.bf16.msra.mxu0 0
      %324 = vmatprep.subr.bf16.mxu0 0
      %325 = vmatpush1.bf16.msra.mxu0 0
      %326 = vmatprep.subr.bf16.mxu0 0
      %327 = vmatpush1.bf16.msra.mxu0 0
      %328 = vmatprep.subr.bf16.mxu0 0
      %329 = vmatpush1.bf16.msra.mxu0 0
      %330 = vmatprep.subr.bf16.mxu0 0
      %331 = vmatpush1.bf16.msra.mxu0 0
      %332 = vmatprep.subr.bf16.mxu0 0
      %333 = vmatpush1.bf16.msra.mxu0 0
      %334 = vmatprep.subr.bf16.mxu0 0
      %335 = vmatpush1.bf16.msra.mxu0 0
      %336 = vmatprep.subr.bf16.mxu0 0
      %337 = vmatpush1.bf16.msra.mxu0 0
      %338 = vmatprep.subr.bf16.mxu0 0
      %339 = vmatpush1.bf16.msra.mxu0 0
      %340 = vmatprep.mubr.bf16.mxu0 0
      %341 = vmatmul.mubr.bf16.gmra.mrb[0].mxu0 %v297
      %v342 = vpop.f32.mrb[0].mxu0
      %v343 = vadd.f32 %v281, %v342
      %v344 = vpop.f32.mrb[0].mxu0
      %v345 = vpop.f32.mrb[0].mxu0
      %v346 = vadd.f32 %v281, %v345
      %v347 = vpop.f32.mrb[0].mxu0
      %348 = vmatprep.mubr.bf16.mxu0 0
      %349 = vmatmul.mubr.bf16.gmra.mrb[0].mxu0 %v300
      %v350 = vpop.f32.mrb[0].mxu0
      %v351 = vadd.f32 %v281, %v350
      %v352 = vpop.f32.mrb[0].mxu0
      %v353 = vpop.f32.mrb[0].mxu0
      %v354 = vadd.f32 %v281, %v353
      %v355 = vpop.f32.mrb[0].mxu0
      %356 = vmatprep.mubr.bf16.mxu0 0
      %357 = vmatmul.mubr.bf16.gmra.mrb[0].mxu0 %v303
      %v358 = vpop.f32.mrb[0].mxu0
      %v359 = vadd.f32 %v281, %v358
      %v360 = vpop.f32.mrb[0].mxu0
      %v361 = vpop.f32.mrb[0].mxu0
      %v362 = vadd.f32 %v281, %v361
      %v363 = vpop.f32.mrb[0].mxu0
      %364 = vmatprep.mubr.bf16.mxu0 0
      %365 = vmatmul.mubr.bf16.gmra.mrb[0].mxu0 %v306
      %v366 = vpop.f32.mrb[0].mxu0
      %v367 = vadd.f32 %v281, %v366
      %v368 = vpop.f32.mrb[0].mxu0
      %v369 = vpop.f32.mrb[0].mxu0
      %v370 = vadd.f32 %v281, %v369
      %v371 = vpop.f32.mrb[0].mxu0
      %372 = vdwg.mxu0
      %v373 = vld [vmem:[%s247] sm:$0xff]
      %v374 = vld [vmem:[%s247 + $0x8] sm:$0xff]
      %v375 = vld [vmem:[%s247 + $0x10] sm:$0xff]
      %v376 = vld [vmem:[%s247 + $0x18] sm:$0xff]
      %v377 = vld [vmem:[%s247 + $0x20] sm:$0xff]
      %v378 = vld [vmem:[%s247 + $0x28] sm:$0xff]
      %v379 = vld [vmem:[%s247 + $0x30] sm:$0xff]
      %v380 = vld [vmem:[%s247 + $0x38] sm:$0xff]
      %v381 = vadd.f32 %v343, %v373
      %v382 = vadd.f32 %v346, %v374
      %v383 = vadd.f32 %v351, %v375
      %v384 = vadd.f32 %v354, %v376
      %v385 = vadd.f32 %v359, %v377
      %v386 = vadd.f32 %v362, %v378
      %v387 = vadd.f32 %v367, %v379
      %v388 = vadd.f32 %v370, %v380
      %vm389 = vcmask 523264
      %390 = vst.msk [vmem:[%s257] sm:$0xff] %vm389, %v381
      %391 = vst.msk [vmem:[%s257 + $0x8] sm:$0xff] %vm389, %v382
      %392 = vst.msk [vmem:[%s257 + $0x10] sm:$0xff] %vm389, %v383
      %393 = vst.msk [vmem:[%s257 + $0x18] sm:$0xff] %vm389, %v384
      %394 = vst.msk [vmem:[%s257 + $0x20] sm:$0xff] %vm389, %v385
      %395 = vst.msk [vmem:[%s257 + $0x28] sm:$0xff] %vm389, %v386
      %396 = vst.msk [vmem:[%s257 + $0x30] sm:$0xff] %vm389, %v387
      %397 = vst.msk [vmem:[%s257 + $0x38] sm:$0xff] %vm389, %v388
      %s398 = smul.u32 8, %s20
      %p399 = scmp.lt.s32.totalorder %s19, 1
      %s400 = scalar_select %p399, %s19, 1
      %p401 = scmp.lt.s32.totalorder %s398, 7
      %s402 = scalar_select %p401, %s398, 7
      %s403 = smul.addr %s400, 8
      %s404 = sadd.s32 %s402, %s403
      %s405 = smul.addr %s404, 8
      %s406 = scalar_lea.vmem %s4, %s405
      // Predicated region
      $region37: #{_lambda_.23} parent=35 // pred_check
        %p407 = pneg %p143
      $region38: #{_lambda_.23} parent=35 // pred_check_branch
        %409 = sbr.rel (%p407) target = $region40
      $region39: #{_lambda_.23} parent=35 // pred_region
        %s410 = smul.u32 8, %s20
      $region40: #{_lambda_.23} parent=35 // pred_fallthru
        _
    $region36: #{_lambda_.23} parent=5 // pred_fallthru
      _
    %p411 = scmp.le.s32.totalorder 2, %s10
    // Predicated region
    $region41: #{_lambda_.23} parent=5 // pred_check
      %p412 = pneg %p411
    $region42: #{_lambda_.23} parent=5 // pred_check_branch
      %414 = sbr.rel (%p412) target = $region44
    $region43: #{_lambda_.23} parent=5 // pred_region
      %s415 = ssub.s32 %s10, 2
      // Predicated region
      $region45: #{_lambda_.23} parent=43 // pred_check
        %p416 = pneg %p149
      $region46: #{_lambda_.23} parent=43 // pred_check_branch
        %418 = sbr.rel (%p416) target = $region48
      $region47: #{_lambda_.23} parent=43 // pred_region
        %s419 = smul.u32 8, %s22
        %p420 = scmp.lt.s32.totalorder %s21, 1
        %s421 = scalar_select %p420, %s21, 1
        %p422 = scmp.lt.s32.totalorder %s419, 7
        %s423 = scalar_select %p422, %s419, 7
        %s424 = smul.addr %s421, 8
        %s425 = sadd.s32 %s423, %s424
        %s426 = smul.addr %s425, 8
        %s427 = scalar_lea.vmem %s4, %s426
      $region48: #{_lambda_.23} parent=43 // pred_fallthru
        _
    $region44: #{_lambda_.23} parent=5 // pred_fallthru
      _
  $region6: #{_lambda_.23} parent=0 // loop_footer
    %s14 = sadd.s32 1, %s10
  $region7: #{_lambda_.23} parent=0 // loop_footer_branch
    %9 = sbr.rel target = $region3
  $region8: #{_lambda_.23} parent=0 // loop_exit
    _

// kernel: _lambda_.25
$region0: #{_lambda_.25}
  #allocation0 [shape = 'u32[]', space=smem, size = 0x4, offset = 0x4, fixed_abs, tag = 'smem constant byte address 0x4 - core index']
  #allocation1 [shape = 'u32[144,128]{1,0:T(1,128)}', space=vmem, size = 0x12000, scoped, tag = 'internal scratch']
  %s0 = inlined_call_operand.vmem [shape: f32[2,64], index: 0, kind: input, shape index: {}]
  %s1 = inlined_call_operand.vmem [shape: bf16[64,64], index: 1, kind: input, shape index: {}]
  %s2 = inlined_call_operand.vmem [shape: f32[1,64], index: 2, kind: input, shape index: {}]
  %s3 = inlined_call_operand.vmem [shape: f32[2,64], index: 3, kind: output, shape index: {}]
  %s4 = sld [smem:[#allocation0]]
  $region22: #{_lambda_.25} parent=0
    _
  %s6 = ssub.s32 1, %s4
  %s7 = scalar_select 0, %s6, %s4
  // Predicated region
  $region2: #{_lambda_.25} parent=0 // pred_check
    _
  $region3: #{_lambda_.25} parent=0 // pred_check_branch
    %9 = sbr.rel (0) target = $region5
  $region4: #{_lambda_.25} parent=0 // pred_region
    _
  $region5: #{_lambda_.25} parent=0 // pred_fallthru
    _
  // Predicated region
  $region6: #{_lambda_.25} parent=0 // pred_check
    _
  $region7: #{_lambda_.25} parent=0 // pred_check_branch
    %11 = sbr.rel (0) target = $region9
  $region8: #{_lambda_.25} parent=0 // pred_region
    _
  $region9: #{_lambda_.25} parent=0 // pred_fallthru
    _
  // Predicated region
  $region10: #{_lambda_.25} parent=0 // pred_check
    _
  $region11: #{_lambda_.25} parent=0 // pred_check_branch
    %13 = sbr.rel (0) target = $region13
  $region12: #{_lambda_.25} parent=0 // pred_region
    _
  $region13: #{_lambda_.25} parent=0 // pred_fallthru
    _
  %v15 = vld [vmem:[%s0] sm:$0x3]
  %v16 = vpack.c.bf16 %v15, %v15
  %v17 = vld [vmem:[%s1] sm:$0xf]
  %v18 = vld [vmem:[%s1 + $0x4] sm:$0xf]
  %v19 = vld [vmem:[%s1 + $0x8] sm:$0xf]
  %v20 = vld [vmem:[%s1 + $0xc] sm:$0xf]
  %v21 = vld [vmem:[%s1 + $0x10] sm:$0xf]
  %v22 = vld [vmem:[%s1 + $0x14] sm:$0xf]
  %v23 = vld [vmem:[%s1 + $0x18] sm:$0xf]
  %v24 = vld [vmem:[%s1 + $0x1c] sm:$0xf]
  %v25 = vld [vmem:[%s2] sm:$0x1]
  %v27 = vlaneseq
  %v28 = vshrl.u32 %v27, 7
  %v29 = vsub.s32 0, %v28
  %v30 = vrot.slane %v25, %v29
  %v40 = vunpack.c.l.b16 %v17
  %v41 = vunpack.c.l.b16 %v18
  %v42 = vunpack.c.l.b16 %v19
  %v43 = vunpack.c.l.b16 %v20
  %v44 = vunpack.c.l.b16 %v21
  %v45 = vunpack.c.l.b16 %v22
  %v46 = vunpack.c.l.b16 %v23
  %v47 = vunpack.c.l.b16 %v24
  %v48 = vpack.c.b16 %v41, %v40
  %v49 = vpack.c.b16 %v43, %v42
  %v50 = vpack.c.b16 %v45, %v44
  %v51 = vpack.c.b16 %v47, %v46
  %vm56 = vcmask 523264
  %v58 = vsel %vm56, %v16, 0
  %60 = vmatprep.subr.bf16.mxu0 0
  %61 = vmatpush1.bf16.msra.mxu0 %v48
  %62 = vmatprep.subr.bf16.mxu0 0
  %63 = vmatpush1.bf16.msra.mxu0 %v49
  %64 = vmatprep.subr.bf16.mxu0 0
  %65 = vmatpush1.bf16.msra.mxu0 %v50
  %66 = vmatprep.subr.bf16.mxu0 0
  %67 = vmatpush1.bf16.msra.mxu0 %v51
  %68 = vmatprep.subr.bf16.mxu0 0
  %69 = vmatpush1.bf16.msra.mxu0 0
  %70 = vmatprep.subr.bf16.mxu0 0
  %71 = vmatpush1.bf16.msra.mxu0 0
  %72 = vmatprep.subr.bf16.mxu0 0
  %73 = vmatpush1.bf16.msra.mxu0 0
  %74 = vmatprep.subr.bf16.mxu0 0
  %75 = vmatpush1.bf16.msra.mxu0 0
  %76 = vmatprep.subr.bf16.mxu0 0
  %77 = vmatpush1.bf16.msra.mxu0 0
  %78 = vmatprep.subr.bf16.mxu0 0
  %79 = vmatpush1.bf16.msra.mxu0 0
  %80 = vmatprep.subr.bf16.mxu0 0
  %81 = vmatpush1.bf16.msra.mxu0 0
  %82 = vmatprep.subr.bf16.mxu0 0
  %83 = vmatpush1.bf16.msra.mxu0 0
  %84 = vmatprep.subr.bf16.mxu0 0
  %85 = vmatpush1.bf16.msra.mxu0 0
  %86 = vmatprep.subr.bf16.mxu0 0
  %87 = vmatpush1.bf16.msra.mxu0 0
  %88 = vmatprep.subr.bf16.mxu0 0
  %89 = vmatpush1.bf16.msra.mxu0 0
  %90 = vmatprep.subr.bf16.mxu0 0
  %91 = vmatpush1.bf16.msra.mxu0 0
  %92 = vmatprep.mubr.bf16.mxu0 0
  %93 = vmatmul.mubr.bf16.gmra.mrb[0].mxu0 %v58
  %v94 = vpop.f32.mrb[0].mxu0
  %v95 = vadd.f32 %v30, %v94
  %v96 = vpop.f32.mrb[0].mxu0
  %v97 = vpop.f32.mrb[0].mxu0
  %v98 = vpop.f32.mrb[0].mxu0
  %99 = vdwg.mxu0
  %vm100 = vcmask 517120
  %101 = vst.msk [vmem:[%s3] sm:$0x3] %vm100, %v95
  // Predicated region
  $region14: #{_lambda_.25} parent=0 // pred_check
    _
  $region15: #{_lambda_.25} parent=0 // pred_check_branch
    %103 = sbr.rel (0) target = $region17
  $region16: #{_lambda_.25} parent=0 // pred_region
    _
  $region17: #{_lambda_.25} parent=0 // pred_fallthru
    _
  // Predicated region
  $region18: #{_lambda_.25} parent=0 // pred_check
    _
  $region19: #{_lambda_.25} parent=0 // pred_check_branch
    %105 = sbr.rel (0) target = $region21
  $region20: #{_lambda_.25} parent=0 // pred_region
    _
  $region21: #{_lambda_.25} parent=0 // pred_fallthru
    _

// kernel: _lambda_.24
$region0: #{_lambda_.24}
  #allocation0 [shape = 'u32[]', space=smem, size = 0x4, offset = 0x4, fixed_abs, tag = 'smem constant byte address 0x4 - core index']
  #allocation1 [shape = 'u32[144,128]{1,0:T(1,128)}', space=vmem, size = 0x12000, scoped, tag = 'internal scratch']
  %s0 = inlined_call_operand.vmem [shape: f32[2,256], index: 0, kind: input, shape index: {}]
  %s1 = inlined_call_operand.vmem [shape: bf16[256,64], index: 1, kind: input, shape index: {}]
  %s2 = inlined_call_operand.vmem [shape: f32[1,64], index: 2, kind: input, shape index: {}]
  %s3 = inlined_call_operand.vmem [shape: f32[2,64], index: 3, kind: output, shape index: {}]
  %s4 = sld [smem:[#allocation0]]
  $region22: #{_lambda_.24} parent=0
    _
  %s6 = ssub.s32 1, %s4
  %s7 = scalar_select 0, %s6, %s4
  // Predicated region
  $region2: #{_lambda_.24} parent=0 // pred_check
    _
  $region3: #{_lambda_.24} parent=0 // pred_check_branch
    %9 = sbr.rel (0) target = $region5
  $region4: #{_lambda_.24} parent=0 // pred_region
    _
  $region5: #{_lambda_.24} parent=0 // pred_fallthru
    _
  // Predicated region
  $region6: #{_lambda_.24} parent=0 // pred_check
    _
  $region7: #{_lambda_.24} parent=0 // pred_check_branch
    %11 = sbr.rel (0) target = $region9
  $region8: #{_lambda_.24} parent=0 // pred_region
    _
  $region9: #{_lambda_.24} parent=0 // pred_fallthru
    _
  // Predicated region
  $region10: #{_lambda_.24} parent=0 // pred_check
    _
  $region11: #{_lambda_.24} parent=0 // pred_check_branch
    %13 = sbr.rel (0) target = $region13
  $region12: #{_lambda_.24} parent=0 // pred_region
    _
  $region13: #{_lambda_.24} parent=0 // pred_fallthru
    _
  %v15 = vld [vmem:[%s0] sm:$0xf]
  %v18 = vunpack.c.l.s4 1983009808
  %v19 = vunpack.c.0.s8 %v18
  %v20 = vlaneseq
  %v21 = vshrl.u32 %v20, 7
  %v22 = vsub.s32 %v19, %v21
  %v23 = vrot.slane %v15, %v22
  %v24 = vcombine.high %v23, %v23
  %v27 = vpack.c.bf16 %v23, %v23
  %v28 = vpack.c.bf16 %v24, %v24
  %v29 = vld [vmem:[%s1] sm:$0xf]
  %v30 = vld [vmem:[%s1 + $0x4] sm:$0xf]
  %v31 = vld [vmem:[%s1 + $0x8] sm:$0xf]
  %v32 = vld [vmem:[%s1 + $0xc] sm:$0xf]
  %v33 = vld [vmem:[%s1 + $0x10] sm:$0xf]
  %v34 = vld [vmem:[%s1 + $0x14] sm:$0xf]
  %v35 = vld [vmem:[%s1 + $0x18] sm:$0xf]
  %v36 = vld [vmem:[%s1 + $0x1c] sm:$0xf]
  %v37 = vld [vmem:[%s1 + $0x20] sm:$0xf]
  %v38 = vld [vmem:[%s1 + $0x24] sm:$0xf]
  %v39 = vld [vmem:[%s1 + $0x28] sm:$0xf]
  %v40 = vld [vmem:[%s1 + $0x2c] sm:$0xf]
  %v41 = vld [vmem:[%s1 + $0x30] sm:$0xf]
  %v42 = vld [vmem:[%s1 + $0x34] sm:$0xf]
  %v43 = vld [vmem:[%s1 + $0x38] sm:$0xf]
  %v44 = vld [vmem:[%s1 + $0x3c] sm:$0xf]
  %v45 = vld [vmem:[%s1 + $0x40] sm:$0xf]
  %v46 = vld [vmem:[%s1 + $0x44] sm:$0xf]
  %v47 = vld [vmem:[%s1 + $0x48] sm:$0xf]
  %v48 = vld [vmem:[%s1 + $0x4c] sm:$0xf]
  %v49 = vld [vmem:[%s1 + $0x50] sm:$0xf]
  %v50 = vld [vmem:[%s1 + $0x54] sm:$0xf]
  %v51 = vld [vmem:[%s1 + $0x58] sm:$0xf]
  %v52 = vld [vmem:[%s1 + $0x5c] sm:$0xf]
  %v53 = vld [vmem:[%s1 + $0x60] sm:$0xf]
  %v54 = vld [vmem:[%s1 + $0x64] sm:$0xf]
  %v55 = vld [vmem:[%s1 + $0x68] sm:$0xf]
  %v56 = vld [vmem:[%s1 + $0x6c] sm:$0xf]
  %v57 = vld [vmem:[%s1 + $0x70] sm:$0xf]
  %v58 = vld [vmem:[%s1 + $0x74] sm:$0xf]
  %v59 = vld [vmem:[%s1 + $0x78] sm:$0xf]
  %v60 = vld [vmem:[%s1 + $0x7c] sm:$0xf]
  %v61 = vld [vmem:[%s2] sm:$0x1]
  %v63 = vlaneseq
  %v64 = vshrl.u32 %v63, 7
  %v65 = vsub.s32 0, %v64
  %v66 = vrot.slane %v61, %v65
  %v100 = vunpack.c.l.b16 %v29
  %v101 = vunpack.c.l.b16 %v30
  %v102 = vunpack.c.l.b16 %v31
  %v103 = vunpack.c.l.b16 %v32
  %v104 = vunpack.c.l.b16 %v33
  %v105 = vunpack.c.l.b16 %v34
  %v106 = vunpack.c.l.b16 %v35
  %v107 = vunpack.c.l.b16 %v36
  %v108 = vunpack.c.l.b16 %v37
  %v109 = vunpack.c.l.b16 %v38
  %v110 = vunpack.c.l.b16 %v39
  %v111 = vunpack.c.l.b16 %v40
  %v112 = vunpack.c.l.b16 %v41
  %v113 = vunpack.c.l.b16 %v42
  %v114 = vunpack.c.l.b16 %v43
  %v115 = vunpack.c.l.b16 %v44
  %v116 = vunpack.c.l.b16 %v45
  %v117 = vunpack.c.l.b16 %v46
  %v118 = vunpack.c.l.b16 %v47
  %v119 = vunpack.c.l.b16 %v48
  %v120 = vunpack.c.l.b16 %v49
  %v121 = vunpack.c.l.b16 %v50
  %v122 = vunpack.c.l.b16 %v51
  %v123 = vunpack.c.l.b16 %v52
  %v124 = vunpack.c.l.b16 %v53
  %v125 = vunpack.c.l.b16 %v54
  %v126 = vunpack.c.l.b16 %v55
  %v127 = vunpack.c.l.b16 %v56
  %v128 = vunpack.c.l.b16 %v57
  %v129 = vunpack.c.l.b16 %v58
  %v130 = vunpack.c.l.b16 %v59
  %v131 = vunpack.c.l.b16 %v60
  %v132 = vpack.c.b16 %v101, %v100
  %v133 = vpack.c.b16 %v103, %v102
  %v134 = vpack.c.b16 %v105, %v104
  %v135 = vpack.c.b16 %v107, %v106
  %v136 = vpack.c.b16 %v109, %v108
  %v137 = vpack.c.b16 %v111, %v110
  %v138 = vpack.c.b16 %v113, %v112
  %v139 = vpack.c.b16 %v115, %v114
  %v140 = vpack.c.b16 %v117, %v116
  %v141 = vpack.c.b16 %v119, %v118
  %v142 = vpack.c.b16 %v121, %v120
  %v143 = vpack.c.b16 %v123, %v122
  %v144 = vpack.c.b16 %v125, %v124
  %v145 = vpack.c.b16 %v127, %v126
  %v146 = vpack.c.b16 %v129, %v128
  %v147 = vpack.c.b16 %v131, %v130
  %164 = vmatprep.subr.bf16.mxu0 0
  %165 = vmatpush1.bf16.msra.mxu0 %v132
  %166 = vmatprep.subr.bf16.mxu0 0
  %167 = vmatpush1.bf16.msra.mxu0 %v133
  %168 = vmatprep.subr.bf16.mxu0 0
  %169 = vmatpush1.bf16.msra.mxu0 %v134
  %170 = vmatprep.subr.bf16.mxu0 0
  %171 = vmatpush1.bf16.msra.mxu0 %v135
  %172 = vmatprep.subr.bf16.mxu0 0
  %173 = vmatpush1.bf16.msra.mxu0 %v136
  %174 = vmatprep.subr.bf16.mxu0 0
  %175 = vmatpush1.bf16.msra.mxu0 %v137
  %176 = vmatprep.subr.bf16.mxu0 0
  %177 = vmatpush1.bf16.msra.mxu0 %v138
  %178 = vmatprep.subr.bf16.mxu0 0
  %179 = vmatpush1.bf16.msra.mxu0 %v139
  %180 = vmatprep.subr.bf16.mxu0 0
  %181 = vmatpush1.bf16.msra.mxu0 %v140
  %182 = vmatprep.subr.bf16.mxu0 0
  %183 = vmatpush1.bf16.msra.mxu0 %v141
  %184 = vmatprep.subr.bf16.mxu0 0
  %185 = vmatpush1.bf16.msra.mxu0 %v142
  %186 = vmatprep.subr.bf16.mxu0 0
  %187 = vmatpush1.bf16.msra.mxu0 %v143
  %188 = vmatprep.subr.bf16.mxu0 0
  %189 = vmatpush1.bf16.msra.mxu0 %v144
  %190 = vmatprep.subr.bf16.mxu0 0
  %191 = vmatpush1.bf16.msra.mxu0 %v145
  %192 = vmatprep.subr.bf16.mxu0 0
  %193 = vmatpush1.bf16.msra.mxu0 %v146
  %194 = vmatprep.subr.bf16.mxu0 0
  %195 = vmatpush1.bf16.msra.mxu0 %v147
  %196 = vmatprep.mubr.bf16.mxu0 %v28
  %197 = vmatmul.mubr.bf16.gmra.mrb[0].mxu0 %v27
  %v198 = vpop.f32.mrb[0].mxu0
  %v199 = vadd.f32 %v66, %v198
  %v200 = vpop.f32.mrb[0].mxu0
  %v201 = vpop.f32.mrb[0].mxu0
  %v202 = vpop.f32.mrb[0].mxu0
  %203 = vdwg.mxu0
  %v204 = vxor.u32 %v199, 2147483648
  %v205 = vmul.f32 %v204, 1.442695
  %v206 = vpow.pop %v205
  %v207 = vadd.f32 %v206, 1.0
  %v208 = vrcp.pop %v207
  %v209 = vmul.f32 1.0, %v208
  %v210 = vmul.f32 %v199, %v209
  %vm211 = vcmask 517120
  %212 = vst.msk [vmem:[%s3] sm:$0x3] %vm211, %v210
  // Predicated region
  $region14: #{_lambda_.24} parent=0 // pred_check
    _
  $region15: #{_lambda_.24} parent=0 // pred_check_branch
    %214 = sbr.rel (0) target = $region17
  $region16: #{_lambda_.24} parent=0 // pred_region
    _
  $region17: #{_lambda_.24} parent=0 // pred_fallthru
    _
  // Predicated region
  $region18: #{_lambda_.24} parent=0 // pred_check
    _
  $region19: #{_lambda_.24} parent=0 // pred_check_branch
    %216 = sbr.rel (0) target = $region21
  $region20: #{_lambda_.24} parent=0 // pred_region
    _
  $region21: #{_lambda_.24} parent=0 // pred_fallthru
    _

// kernel: _lambda_.26
$region0: #{_lambda_.26}
  #allocation0 [shape = 'u32[]', space=smem, size = 0x4, offset = 0x4, fixed_abs, tag = 'smem constant byte address 0x4 - core index']
  #allocation1 [shape = 'u32[144,128]{1,0:T(1,128)}', space=vmem, size = 0x12000, scoped, tag = 'internal scratch']
  %s0 = inlined_call_operand.vmem [shape: f32[2,64], index: 0, kind: input, shape index: {}]
  %s1 = inlined_call_operand.vmem [shape: bf16[64,768], index: 1, kind: input, shape index: {}]
  %s2 = inlined_call_operand.vmem [shape: f32[1,768], index: 2, kind: input, shape index: {}]
  %s3 = inlined_call_operand.vmem [shape: f32[2,768], index: 3, kind: output, shape index: {}]
  %s4 = sld [smem:[#allocation0]]
  $region22: #{_lambda_.26} parent=0
    _
  %s6 = ssub.s32 1, %s4
  %s7 = scalar_select 0, %s6, %s4
  // Predicated region
  $region2: #{_lambda_.26} parent=0 // pred_check
    _
  $region3: #{_lambda_.26} parent=0 // pred_check_branch
    %9 = sbr.rel (0) target = $region5
  $region4: #{_lambda_.26} parent=0 // pred_region
    _
  $region5: #{_lambda_.26} parent=0 // pred_fallthru
    _
  // Predicated region
  $region6: #{_lambda_.26} parent=0 // pred_check
    _
  $region7: #{_lambda_.26} parent=0 // pred_check_branch
    %11 = sbr.rel (0) target = $region9
  $region8: #{_lambda_.26} parent=0 // pred_region
    _
  $region9: #{_lambda_.26} parent=0 // pred_fallthru
    _
  // Predicated region
  $region10: #{_lambda_.26} parent=0 // pred_check
    _
  $region11: #{_lambda_.26} parent=0 // pred_check_branch
    %13 = sbr.rel (0) target = $region13
  $region12: #{_lambda_.26} parent=0 // pred_region
    _
  $region13: #{_lambda_.26} parent=0 // pred_fallthru
    _
  %v15 = vld [vmem:[%s0] sm:$0x3]
  %v16 = vxor.u32 %v15, 2147483648
  %v17 = vmul.f32 %v16, 1.442695
  %v18 = vpow.pop %v17
  %v19 = vadd.f32 %v18, 1.0
  %v20 = vrcp.pop %v19
  %v21 = vmul.f32 1.0, %v20
  %v22 = vmul.f32 %v15, %v21
  %v23 = vpack.c.bf16 %v22, %v22
  %v24 = vld [vmem:[%s1] sm:$0xff]
  %v25 = vld [vmem:[%s1 + $0x8] sm:$0xff]
  %v26 = vld [vmem:[%s1 + $0x10] sm:$0xff]
  %v27 = vld [vmem:[%s1 + $0x18] sm:$0xff]
  %v28 = vld [vmem:[%s1 + $0x20] sm:$0xff]
  %v29 = vld [vmem:[%s1 + $0x28] sm:$0xff]
  %v30 = vld [vmem:[%s1 + $0x30] sm:$0xff]
  %v31 = vld [vmem:[%s1 + $0x38] sm:$0xff]
  %v32 = vld [vmem:[%s1 + $0x40] sm:$0xff]
  %v33 = vld [vmem:[%s1 + $0x48] sm:$0xff]
  %v34 = vld [vmem:[%s1 + $0x50] sm:$0xff]
  %v35 = vld [vmem:[%s1 + $0x58] sm:$0xff]
  %v36 = vld [vmem:[%s1 + $0x60] sm:$0xff]
  %v37 = vld [vmem:[%s1 + $0x68] sm:$0xff]
  %v38 = vld [vmem:[%s1 + $0x70] sm:$0xff]
  %v39 = vld [vmem:[%s1 + $0x78] sm:$0xff]
  %v40 = vld [vmem:[%s1 + $0x80] sm:$0xff]
  %v41 = vld [vmem:[%s1 + $0x88] sm:$0xff]
  %v42 = vld [vmem:[%s1 + $0x90] sm:$0xff]
  %v43 = vld [vmem:[%s1 + $0x98] sm:$0xff]
  %v44 = vld [vmem:[%s1 + $0xa0] sm:$0xff]
  %v45 = vld [vmem:[%s1 + $0xa8] sm:$0xff]
  %v46 = vld [vmem:[%s1 + $0xb0] sm:$0xff]
  %v47 = vld [vmem:[%s1 + $0xb8] sm:$0xff]
  %v48 = vld [vmem:[%s2] sm:$0x3f]
  %v50 = vlaneseq
  %v51 = vshrl.u32 %v50, 7
  %v52 = vsub.s32 0, %v51
  %v53 = vrot.slane %v48, %v52
  %v54 = vlaneseq
  %v55 = vshrl.u32 %v54, 7
  %v56 = vsub.s32 1, %v55
  %v57 = vrot.slane %v48, %v56
  %v58 = vlaneseq
  %v59 = vshrl.u32 %v58, 7
  %v60 = vsub.s32 2, %v59
  %v61 = vrot.slane %v48, %v60
  %v62 = vlaneseq
  %v63 = vshrl.u32 %v62, 7
  %v64 = vsub.s32 3, %v63
  %v65 = vrot.slane %v48, %v64
  %v66 = vlaneseq
  %v67 = vshrl.u32 %v66, 7
  %v68 = vsub.s32 4, %v67
  %v69 = vrot.slane %v48, %v68
  %v70 = vlaneseq
  %v71 = vshrl.u32 %v70, 7
  %v72 = vsub.s32 5, %v71
  %v73 = vrot.slane %v48, %v72
  %v104 = vunpack.c.l.b16 %v24
  %v105 = vunpack.c.h.b16 %v24
  %v106 = vunpack.c.l.b16 %v25
  %v107 = vunpack.c.h.b16 %v25
  %v108 = vunpack.c.l.b16 %v26
  %v109 = vunpack.c.h.b16 %v26
  %v110 = vunpack.c.l.b16 %v27
  %v111 = vunpack.c.h.b16 %v27
  %v112 = vunpack.c.l.b16 %v28
  %v113 = vunpack.c.h.b16 %v28
  %v114 = vunpack.c.l.b16 %v29
  %v115 = vunpack.c.h.b16 %v29
  %v116 = vunpack.c.l.b16 %v30
  %v117 = vunpack.c.h.b16 %v30
  %v118 = vunpack.c.l.b16 %v31
  %v119 = vunpack.c.h.b16 %v31
  %v120 = vunpack.c.l.b16 %v32
  %v121 = vunpack.c.h.b16 %v32
  %v122 = vunpack.c.l.b16 %v33
  %v123 = vunpack.c.h.b16 %v33
  %v124 = vunpack.c.l.b16 %v34
  %v125 = vunpack.c.h.b16 %v34
  %v126 = vunpack.c.l.b16 %v35
  %v127 = vunpack.c.h.b16 %v35
  %v128 = vunpack.c.l.b16 %v36
  %v129 = vunpack.c.h.b16 %v36
  %v130 = vunpack.c.l.b16 %v37
  %v131 = vunpack.c.h.b16 %v37
  %v132 = vunpack.c.l.b16 %v38
  %v133 = vunpack.c.h.b16 %v38
  %v134 = vunpack.c.l.b16 %v39
  %v135 = vunpack.c.h.b16 %v39
  %v136 = vunpack.c.l.b16 %v40
  %v137 = vunpack.c.h.b16 %v40
  %v138 = vunpack.c.l.b16 %v41
  %v139 = vunpack.c.h.b16 %v41
  %v140 = vunpack.c.l.b16 %v42
  %v141 = vunpack.c.h.b16 %v42
  %v142 = vunpack.c.l.b16 %v43
  %v143 = vunpack.c.h.b16 %v43
  %v144 = vunpack.c.l.b16 %v44
  %v145 = vunpack.c.h.b16 %v44
  %v146 = vunpack.c.l.b16 %v45
  %v147 = vunpack.c.h.b16 %v45
  %v148 = vunpack.c.l.b16 %v46
  %v149 = vunpack.c.h.b16 %v46
  %v150 = vunpack.c.l.b16 %v47
  %v151 = vunpack.c.h.b16 %v47
  %v152 = vpack.c.b16 %v110, %v104
  %v153 = vpack.c.b16 %v111, %v105
  %v154 = vpack.c.b16 %v112, %v106
  %v155 = vpack.c.b16 %v113, %v107
  %v156 = vpack.c.b16 %v114, %v108
  %v157 = vpack.c.b16 %v115, %v109
  %v158 = vpack.c.b16 %v122, %v116
  %v159 = vpack.c.b16 %v123, %v117
  %v160 = vpack.c.b16 %v124, %v118
  %v161 = vpack.c.b16 %v125, %v119
  %v162 = vpack.c.b16 %v126, %v120
  %v163 = vpack.c.b16 %v127, %v121
  %v164 = vpack.c.b16 %v134, %v128
  %v165 = vpack.c.b16 %v135, %v129
  %v166 = vpack.c.b16 %v136, %v130
  %v167 = vpack.c.b16 %v137, %v131
  %v168 = vpack.c.b16 %v138, %v132
  %v169 = vpack.c.b16 %v139, %v133
  %v170 = vpack.c.b16 %v146, %v140
  %v171 = vpack.c.b16 %v147, %v141
  %v172 = vpack.c.b16 %v148, %v142
  %v173 = vpack.c.b16 %v149, %v143
  %v174 = vpack.c.b16 %v150, %v144
  %v175 = vpack.c.b16 %v151, %v145
  %vm200 = vcmask 523264
  %v202 = vsel %vm200, %v23, 0
  %204 = vmatprep.subr.bf16.mxu0 %v153
  %205 = vmatpush1.bf16.msra.mxu0 %v152
  %206 = vmatprep.subr.bf16.mxu0 %v159
  %207 = vmatpush1.bf16.msra.mxu0 %v158
  %208 = vmatprep.subr.bf16.mxu0 %v165
  %209 = vmatpush1.bf16.msra.mxu0 %v164
  %210 = vmatprep.subr.bf16.mxu0 %v171
  %211 = vmatpush1.bf16.msra.mxu0 %v170
  %212 = vmatprep.subr.bf16.mxu0 0
  %213 = vmatpush1.bf16.msra.mxu0 0
  %214 = vmatprep.subr.bf16.mxu0 0
  %215 = vmatpush1.bf16.msra.mxu0 0
  %216 = vmatprep.subr.bf16.mxu0 0
  %217 = vmatpush1.bf16.msra.mxu0 0
  %218 = vmatprep.subr.bf16.mxu0 0
  %219 = vmatpush1.bf16.msra.mxu0 0
  %220 = vmatprep.subr.bf16.mxu0 0
  %221 = vmatpush1.bf16.msra.mxu0 0
  %222 = vmatprep.subr.bf16.mxu0 0
  %223 = vmatpush1.bf16.msra.mxu0 0
  %224 = vmatprep.subr.bf16.mxu0 0
  %225 = vmatpush1.bf16.msra.mxu0 0
  %226 = vmatprep.subr.bf16.mxu0 0
  %227 = vmatpush1.bf16.msra.mxu0 0
  %228 = vmatprep.subr.bf16.mxu0 0
  %229 = vmatpush1.bf16.msra.mxu0 0
  %230 = vmatprep.subr.bf16.mxu0 0
  %231 = vmatpush1.bf16.msra.mxu0 0
  %232 = vmatprep.subr.bf16.mxu0 0
  %233 = vmatpush1.bf16.msra.mxu0 0
  %234 = vmatprep.subr.bf16.mxu0 0
  %235 = vmatpush1.bf16.msra.mxu0 0
  %236 = vmatprep.mubr.bf16.mxu0 0
  %237 = vmatmul.mubr.bf16.gmra.mrb[0].mxu0 %v202
  %v238 = vpop.f32.mrb[0].mxu0
  %v239 = vadd.f32 %v53, %v238
  %v240 = vpop.f32.mrb[0].mxu0
  %v241 = vadd.f32 %v57, %v240
  %v242 = vpop.f32.mrb[0].mxu0
  %v243 = vpop.f32.mrb[0].mxu0
  %244 = vdwg.mxu0
  %245 = vmatprep.subr.bf16.mxu0 %v155
  %246 = vmatpush1.bf16.msra.mxu0 %v154
  %247 = vmatprep.subr.bf16.mxu0 %v161
  %248 = vmatpush1.bf16.msra.mxu0 %v160
  %249 = vmatprep.subr.bf16.mxu0 %v167
  %250 = vmatpush1.bf16.msra.mxu0 %v166
  %251 = vmatprep.subr.bf16.mxu0 %v173
  %252 = vmatpush1.bf16.msra.mxu0 %v172
  %253 = vmatprep.subr.bf16.mxu0 0
  %254 = vmatpush1.bf16.msra.mxu0 0
  %255 = vmatprep.subr.bf16.mxu0 0
  %256 = vmatpush1.bf16.msra.mxu0 0
  %257 = vmatprep.subr.bf16.mxu0 0
  %258 = vmatpush1.bf16.msra.mxu0 0
  %259 = vmatprep.subr.bf16.mxu0 0
  %260 = vmatpush1.bf16.msra.mxu0 0
  %261 = vmatprep.subr.bf16.mxu0 0
  %262 = vmatpush1.bf16.msra.mxu0 0
  %263 = vmatprep.subr.bf16.mxu0 0
  %264 = vmatpush1.bf16.msra.mxu0 0
  %265 = vmatprep.subr.bf16.mxu0 0
  %266 = vmatpush1.bf16.msra.mxu0 0
  %267 = vmatprep.subr.bf16.mxu0 0
  %268 = vmatpush1.bf16.msra.mxu0 0
  %269 = vmatprep.subr.bf16.mxu0 0
  %270 = vmatpush1.bf16.msra.mxu0 0
  %271 = vmatprep.subr.bf16.mxu0 0
  %272 = vmatpush1.bf16.msra.mxu0 0
  %273 = vmatprep.subr.bf16.mxu0 0
  %274 = vmatpush1.bf16.msra.mxu0 0
  %275 = vmatprep.subr.bf16.mxu0 0
  %276 = vmatpush1.bf16.msra.mxu0 0
  %277 = vmatprep.mubr.bf16.mxu0 0
  %278 = vmatmul.mubr.bf16.gmra.mrb[0].mxu0 %v202
  %v279 = vpop.f32.mrb[0].mxu0
  %v280 = vadd.f32 %v61, %v279
  %v281 = vpop.f32.mrb[0].mxu0
  %v282 = vadd.f32 %v65, %v281
  %v283 = vpop.f32.mrb[0].mxu0
  %v284 = vpop.f32.mrb[0].mxu0
  %285 = vdwg.mxu0
  %286 = vmatprep.subr.bf16.mxu0 %v157
  %287 = vmatpush1.bf16.msra.mxu0 %v156
  %288 = vmatprep.subr.bf16.mxu0 %v163
  %289 = vmatpush1.bf16.msra.mxu0 %v162
  %290 = vmatprep.subr.bf16.mxu0 %v169
  %291 = vmatpush1.bf16.msra.mxu0 %v168
  %292 = vmatprep.subr.bf16.mxu0 %v175
  %293 = vmatpush1.bf16.msra.mxu0 %v174
  %294 = vmatprep.subr.bf16.mxu0 0
  %295 = vmatpush1.bf16.msra.mxu0 0
  %296 = vmatprep.subr.bf16.mxu0 0
  %297 = vmatpush1.bf16.msra.mxu0 0
  %298 = vmatprep.subr.bf16.mxu0 0
  %299 = vmatpush1.bf16.msra.mxu0 0
  %300 = vmatprep.subr.bf16.mxu0 0
  %301 = vmatpush1.bf16.msra.mxu0 0
  %302 = vmatprep.subr.bf16.mxu0 0
  %303 = vmatpush1.bf16.msra.mxu0 0
  %304 = vmatprep.subr.bf16.mxu0 0
  %305 = vmatpush1.bf16.msra.mxu0 0
  %306 = vmatprep.subr.bf16.mxu0 0
  %307 = vmatpush1.bf16.msra.mxu0 0
  %308 = vmatprep.subr.bf16.mxu0 0
  %309 = vmatpush1.bf16.msra.mxu0 0
  %310 = vmatprep.subr.bf16.mxu0 0
  %311 = vmatpush1.bf16.msra.mxu0 0
  %312 = vmatprep.subr.bf16.mxu0 0
  %313 = vmatpush1.bf16.msra.mxu0 0
  %314 = vmatprep.subr.bf16.mxu0 0
  %315 = vmatpush1.bf16.msra.mxu0 0
  %316 = vmatprep.subr.bf16.mxu0 0
  %317 = vmatpush1.bf16.msra.mxu0 0
  %318 = vmatprep.mubr.bf16.mxu0 0
  %319 = vmatmul.mubr.bf16.gmra.mrb[0].mxu0 %v202
  %v320 = vpop.f32.mrb[0].mxu0
  %v321 = vadd.f32 %v69, %v320
  %v322 = vpop.f32.mrb[0].mxu0
  %v323 = vadd.f32 %v73, %v322
  %v324 = vpop.f32.mrb[0].mxu0
  %v325 = vpop.f32.mrb[0].mxu0
  %326 = vdwg.mxu0
  %v333 = vcombine.low %v239, %v241
  %v334 = vcombine.low %v280, %v282
  %v336 = vunpack.c.l.s4 1983009808
  %v337 = vunpack.c.0.s8 %v336
  %v338 = vlaneseq
  %v339 = vshrl.u32 %v338, 7
  %v340 = vsub.s32 %v337, %v339
  %v341 = vrot.slane %v333, %v340
  %v343 = vunpack.c.l.s4 1983009808
  %v344 = vunpack.c.0.s8 %v343
  %v345 = vlaneseq
  %v346 = vshrl.u32 %v345, 7
  %v347 = vsub.s32 %v344, %v346
  %v348 = vrot.slane %v334, %v347
  %v349 = vcombine.low %v341, %v348
  %v350 = vcombine.low %v321, %v323
  %v352 = vunpack.c.l.s4 1983009808
  %v353 = vunpack.c.0.s8 %v352
  %v354 = vlaneseq
  %v355 = vshrl.u32 %v354, 7
  %v356 = vsub.s32 %v353, %v355
  %v357 = vrot.slane %v350, %v356
  %360 = vst [vmem:[%s3] sm:$0xff] %v349
  %361 = vst [vmem:[%s3 + $0x8] sm:$0xf] %v357
  // Predicated region
  $region14: #{_lambda_.26} parent=0 // pred_check
    _
  $region15: #{_lambda_.26} parent=0 // pred_check_branch
    %363 = sbr.rel (0) target = $region17
  $region16: #{_lambda_.26} parent=0 // pred_region
    _
  $region17: #{_lambda_.26} parent=0 // pred_fallthru
    _
  // Predicated region
  $region18: #{_lambda_.26} parent=0 // pred_check
    _
  $region19: #{_lambda_.26} parent=0 // pred_check_branch
    %365 = sbr.rel (0) target = $region21
  $region20: #{_lambda_.26} parent=0 // pred_region
    _
  $region21: #{_lambda_.26} parent=0 // pred_fallthru
    _

// kernel: _lambda_.27
$region0: #{_lambda_.27}
  #allocation0 [shape = 'u32[]', space=smem, size = 0x4, offset = 0x4, fixed_abs, tag = 'smem constant byte address 0x4 - core index']
  #allocation1 [shape = 'u32[144,128]{1,0:T(1,128)}', space=vmem, size = 0x12000, scoped, tag = 'internal scratch']
  %s0 = inlined_call_operand.vmem [shape: f32[2,64,64], index: 0, kind: input, shape index: {}]
  %s1 = inlined_call_operand.vmem [shape: f32[2,1,64], index: 1, kind: input, shape index: {}]
  %s2 = inlined_call_operand.vmem [shape: f32[2,1,64], index: 2, kind: input, shape index: {}]
  %s3 = inlined_call_operand.vmem [shape: bf16[64,192], index: 3, kind: input, shape index: {}]
  %s4 = inlined_call_operand.vmem [shape: f32[1,192], index: 4, kind: input, shape index: {}]
  %s5 = inlined_call_operand.vmem [shape: bf16[2,64,192], index: 5, kind: output, shape index: {}]
  %s6 = sld [smem:[#allocation0]]
  $region53: #{_lambda_.27} parent=0
    _
  %s8 = ssub.s32 1, %s6
  %s9 = scalar_select 0, %s8, %s6
  loop: start=0, step=1, limit=4
  $region2: #{_lambda_.27} parent=0 // loop_pre_header
    _
  $region3: #{_lambda_.27} parent=0 // loop_header
    %s11 = sphi 0, %s15
    %p12 = scmp.ge.s32.totalorder %s11, 4
    %s18 = sphi 0, %s37
    %s19 = sphi 0, %s33
    %s20 = sphi 0, %s29
    %s21 = sphi 0, %s18
    %s22 = sphi 0, %s19
    %s23 = sphi 0, %s20
    %s24 = sphi 0, %s21
    %s25 = sphi 0, %s22
    %s26 = sphi 0, %s23
    %s42 = sphi 0, %s44
    %s45 = sphi 0, %s42
    %s46 = sphi 0, %s45
    %s62 = sphi 0, %s46
    %s68 = sphi 0, %s70
    %s71 = sphi 0, %s68
    %s72 = sphi 0, %s71
    %s88 = sphi 0, %s72
    %s94 = sphi 0, %s96
    %s97 = sphi 0, %s94
    %s98 = sphi 0, %s97
    %s114 = sphi 0, %s98
    %s120 = sphi 0, %s122
    %s123 = sphi 0, %s120
    %s124 = sphi 0, %s123
    %s140 = sphi 0, %s124
    %s146 = sphi 0, %s148
    %s149 = sphi 0, %s146
    %s150 = sphi 0, %s149
    %s166 = sphi 0, %s150
    %s176 = sphi 0, %s178
    %s179 = sphi 0, %s176
    %s180 = sphi 0, %s179
    %s196 = sphi 0, %s180
  $region4: #{_lambda_.27} parent=0 // loop_header_branch
    %14 = sbr.rel (%p12) target = $region8
  $region5: #{_lambda_.27} parent=0 // loop_body
    %s16 = ssub.s32 %s11, 1
    %s17 = ssub.s32 %s11, 2
    %s27 = sadd.s32 1, %s20
    %p28 = scmp.ge.s32.totalorder %s27, 1
    %s29 = scalar_select %p28, 0, %s27
    %s30 = sadd.s32 1, %s19
    %s31 = scalar_select %p28, %s30, %s19
    %p32 = scmp.ge.s32.totalorder %s31, 1
    %s33 = scalar_select %p32, 0, %s31
    %s34 = sadd.s32 1, %s18
    %s35 = scalar_select %p32, %s34, %s18
    %p36 = scmp.ge.s32.totalorder %s35, 2
    %s37 = scalar_select %p36, 0, %s35
    %s38 = ssub.s32 %s18, %s37
    %s39 = ssub.s32 %s20, %s29
    %s40 = sor.u32 %s38, %s39
    %p41 = scmp.eq.s32.totalorder %s40, 0
    %s43 = sadd.s32 %s42, 1
    %s44 = scalar_select %p41, %s42, %s43
    %p47 = pneg %p41
    %p48 = scmp.eq.s32.totalorder %s11, 1
    %p49 = por %p47, %p48
    %p50 = scmp.ne.s32.totalorder %s42, %s45
    %p51 = scmp.eq.s32.totalorder %s11, 0
    %p52 = por %p50, %p51
    %p53 = scmp.ne.s32.totalorder %s42, %s45
    %p54 = scmp.eq.s32.totalorder %s16, 1
    %p55 = por %p53, %p54
    %p56 = scmp.ne.s32.totalorder %s45, %s46
    %p57 = scmp.eq.s32.totalorder %s16, 0
    %p58 = por %p56, %p57
    %p59 = scmp.ne.s32.totalorder %s45, %s46
    %p60 = scmp.eq.s32.totalorder %s17, 1
    %p61 = por %p59, %p60
    %p63 = scmp.ne.s32.totalorder %s46, %s62
    %p64 = scmp.eq.s32.totalorder %s17, 0
    %p65 = por %p63, %p64
    %s66 = ssub.s32 %s18, %s37
    %p67 = scmp.eq.s32.totalorder %s66, 0
    %s69 = sadd.s32 %s68, 1
    %s70 = scalar_select %p67, %s68, %s69
    %p73 = pneg %p67
    %p74 = scmp.eq.s32.totalorder %s11, 1
    %p75 = por %p73, %p74
    %p76 = scmp.ne.s32.totalorder %s68, %s71
    %p77 = scmp.eq.s32.totalorder %s11, 0
    %p78 = por %p76, %p77
    %p79 = scmp.ne.s32.totalorder %s68, %s71
    %p80 = scmp.eq.s32.totalorder %s16, 1
    %p81 = por %p79, %p80
    %p82 = scmp.ne.s32.totalorder %s71, %s72
    %p83 = scmp.eq.s32.totalorder %s16, 0
    %p84 = por %p82, %p83
    %p85 = scmp.ne.s32.totalorder %s71, %s72
    %p86 = scmp.eq.s32.totalorder %s17, 1
    %p87 = por %p85, %p86
    %p89 = scmp.ne.s32.totalorder %s72, %s88
    %p90 = scmp.eq.s32.totalorder %s17, 0
    %p91 = por %p89, %p90
    %s92 = ssub.s32 %s18, %s37
    %p93 = scmp.eq.s32.totalorder %s92, 0
    %s95 = sadd.s32 %s94, 1
    %s96 = scalar_select %p93, %s94, %s95
    %p99 = pneg %p93
    %p100 = scmp.eq.s32.totalorder %s11, 1
    %p101 = por %p99, %p100
    %p102 = scmp.ne.s32.totalorder %s94, %s97
    %p103 = scmp.eq.s32.totalorder %s11, 0
    %p104 = por %p102, %p103
    %p105 = scmp.ne.s32.totalorder %s94, %s97
    %p106 = scmp.eq.s32.totalorder %s16, 1
    %p107 = por %p105, %p106
    %p108 = scmp.ne.s32.totalorder %s97, %s98
    %p109 = scmp.eq.s32.totalorder %s16, 0
    %p110 = por %p108, %p109
    %p111 = scmp.ne.s32.totalorder %s97, %s98
    %p112 = scmp.eq.s32.totalorder %s17, 1
    %p113 = por %p111, %p112
    %p115 = scmp.ne.s32.totalorder %s98, %s114
    %p116 = scmp.eq.s32.totalorder %s17, 0
    %p117 = por %p115, %p116
    %s118 = ssub.s32 %s19, %s33
    %p119 = scmp.eq.s32.totalorder %s118, 0
    %s121 = sadd.s32 %s120, 1
    %s122 = scalar_select %p119, %s120, %s121
    %p125 = pneg %p119
    %p126 = scmp.eq.s32.totalorder %s11, 1
    %p127 = por %p125, %p126
    %p128 = scmp.ne.s32.totalorder %s120, %s123
    %p129 = scmp.eq.s32.totalorder %s11, 0
    %p130 = por %p128, %p129
    %p131 = scmp.ne.s32.totalorder %s120, %s123
    %p132 = scmp.eq.s32.totalorder %s16, 1
    %p133 = por %p131, %p132
    %p134 = scmp.ne.s32.totalorder %s123, %s124
    %p135 = scmp.eq.s32.totalorder %s16, 0
    %p136 = por %p134, %p135
    %p137 = scmp.ne.s32.totalorder %s123, %s124
    %p138 = scmp.eq.s32.totalorder %s17, 1
    %p139 = por %p137, %p138
    %p141 = scmp.ne.s32.totalorder %s124, %s140
    %p142 = scmp.eq.s32.totalorder %s17, 0
    %p143 = por %p141, %p142
    %s144 = ssub.s32 %s19, %s33
    %p145 = scmp.eq.s32.totalorder %s144, 0
    %s147 = sadd.s32 %s146, 1
    %s148 = scalar_select %p145, %s146, %s147
    %p151 = pneg %p145
    %p152 = scmp.eq.s32.totalorder %s11, 1
    %p153 = por %p151, %p152
    %p154 = scmp.ne.s32.totalorder %s146, %s149
    %p155 = scmp.eq.s32.totalorder %s11, 0
    %p156 = por %p154, %p155
    %p157 = scmp.ne.s32.totalorder %s146, %s149
    %p158 = scmp.eq.s32.totalorder %s16, 1
    %p159 = por %p157, %p158
    %p160 = scmp.ne.s32.totalorder %s149, %s150
    %p161 = scmp.eq.s32.totalorder %s16, 0
    %p162 = por %p160, %p161
    %p163 = scmp.ne.s32.totalorder %s149, %s150
    %p164 = scmp.eq.s32.totalorder %s17, 1
    %p165 = por %p163, %p164
    %p167 = scmp.ne.s32.totalorder %s150, %s166
    %p168 = scmp.eq.s32.totalorder %s17, 0
    %p169 = por %p167, %p168
    %s170 = ssub.s32 %s18, %s37
    %s171 = ssub.s32 %s20, %s29
    %s172 = sor.u32 %s170, %s171
    %s173 = ssub.s32 %s19, %s33
    %s174 = sor.u32 %s172, %s173
    %p175 = scmp.eq.s32.totalorder %s174, 0
    %s177 = sadd.s32 %s176, 1
    %s178 = scalar_select %p175, %s176, %s177
    %p181 = pneg %p175
    %p182 = scmp.eq.s32.totalorder %s11, 1
    %p183 = por %p181, %p182
    %p184 = scmp.ne.s32.totalorder %s176, %s179
    %p185 = scmp.eq.s32.totalorder %s11, 0
    %p186 = por %p184, %p185
    %p187 = scmp.ne.s32.totalorder %s176, %s179
    %p188 = scmp.eq.s32.totalorder %s16, 1
    %p189 = por %p187, %p188
    %p190 = scmp.ne.s32.totalorder %s179, %s180
    %p191 = scmp.eq.s32.totalorder %s16, 0
    %p192 = por %p190, %p191
    %p193 = scmp.ne.s32.totalorder %s179, %s180
    %p194 = scmp.eq.s32.totalorder %s17, 1
    %p195 = por %p193, %p194
    %p197 = scmp.ne.s32.totalorder %s180, %s196
    %p198 = scmp.eq.s32.totalorder %s17, 0
    %p199 = por %p197, %p198
    %p200 = scmp.le.s32.totalorder 1, %s11
    %p201 = scmp.lt.s32.totalorder %s11, 3
    %p202 = pnand %p200, %p201
    %p203 = pneg %p202
    // Predicated region
    $region9: #{_lambda_.27} parent=5 // pred_check
      _
    $region10: #{_lambda_.27} parent=5 // pred_check_branch
      %205 = sbr.rel (%p202) target = $region12
    $region11: #{_lambda_.27} parent=5 // pred_region
      %s206 = ssub.s32 %s11, 1
      // Predicated region
      $region13: #{_lambda_.27} parent=11 // pred_check
        %p207 = pneg %p136
      $region14: #{_lambda_.27} parent=11 // pred_check_branch
        %209 = sbr.rel (%p207) target = $region16
      $region15: #{_lambda_.27} parent=11 // pred_region
        %s210 = smul.u32 2, %s22
        %p211 = scmp.lt.s32.totalorder %s210, 1
        %s212 = scalar_select %p211, %s210, 1
        %s213 = smul.addr %s212, 4
        %s214 = scalar_lea.vmem %s3, %s213
        %s215 = smul.u32 2, %s22
      $region16: #{_lambda_.27} parent=11 // pred_fallthru
        _
      // Predicated region
      $region17: #{_lambda_.27} parent=11 // pred_check
        %p216 = pneg %p162
      $region18: #{_lambda_.27} parent=11 // pred_check_branch
        %218 = sbr.rel (%p216) target = $region20
      $region19: #{_lambda_.27} parent=11 // pred_region
        %s219 = smul.u32 2, %s22
        %p220 = scmp.lt.s32.totalorder %s219, 1
        %s221 = scalar_select %p220, %s219, 1
        %s222 = scalar_lea.vmem %s4, %s221
        %s223 = smul.u32 2, %s22
      $region20: #{_lambda_.27} parent=11 // pred_fallthru
        _
    $region12: #{_lambda_.27} parent=5 // pred_fallthru
      _
    %p224 = scmp.lt.s32.totalorder %s11, 2
    // Predicated region
    $region21: #{_lambda_.27} parent=5 // pred_check
      %p225 = pneg %p224
    $region22: #{_lambda_.27} parent=5 // pred_check_branch
      %227 = sbr.rel (%p225) target = $region24
    $region23: #{_lambda_.27} parent=5 // pred_region
      // Predicated region
      $region25: #{_lambda_.27} parent=23 // pred_check
        %p228 = pneg %p52
      $region26: #{_lambda_.27} parent=23 // pred_check_branch
        %230 = sbr.rel (%p228) target = $region28
      $region27: #{_lambda_.27} parent=23 // pred_region
        %s231 = smul.u32 8, %s20
        %p232 = scmp.lt.s32.totalorder %s18, 1
        %s233 = scalar_select %p232, %s18, 1
        %p234 = scmp.lt.s32.totalorder %s231, 7
        %s235 = scalar_select %p234, %s231, 7
        %s236 = smul.addr %s233, 8
        %s237 = sadd.s32 %s235, %s236
        %s238 = smul.addr %s237, 8
        %s239 = scalar_lea.vmem %s0, %s238
        %s240 = smul.u32 8, %s20
      $region28: #{_lambda_.27} parent=23 // pred_fallthru
        _
      // Predicated region
      $region29: #{_lambda_.27} parent=23 // pred_check
        %p241 = pneg %p78
      $region30: #{_lambda_.27} parent=23 // pred_check_branch
        %243 = sbr.rel (%p241) target = $region32
      $region31: #{_lambda_.27} parent=23 // pred_region
        %p244 = scmp.lt.s32.totalorder %s18, 1
        %s245 = scalar_select %p244, %s18, 1
        %s246 = scalar_lea.vmem %s1, %s245
      $region32: #{_lambda_.27} parent=23 // pred_fallthru
        _
      // Predicated region
      $region33: #{_lambda_.27} parent=23 // pred_check
        %p247 = pneg %p104
      $region34: #{_lambda_.27} parent=23 // pred_check_branch
        %249 = sbr.rel (%p247) target = $region36
      $region35: #{_lambda_.27} parent=23 // pred_region
        %p250 = scmp.lt.s32.totalorder %s18, 1
        %s251 = scalar_select %p250, %s18, 1
        %s252 = scalar_lea.vmem %s2, %s251
      $region36: #{_lambda_.27} parent=23 // pred_fallthru
        _
    $region24: #{_lambda_.27} parent=5 // pred_fallthru
      _
    %p253 = scmp.le.s32.totalorder 1, %s11
    %p254 = scmp.lt.s32.totalorder %s11, 3
    %p255 = pnand %p253, %p254
    %p256 = pneg %p255
    // Predicated region
    $region37: #{_lambda_.27} parent=5 // pred_check
      _
    $region38: #{_lambda_.27} parent=5 // pred_check_branch
      %258 = sbr.rel (%p255) target = $region40
    $region39: #{_lambda_.27} parent=5 // pred_region
      %s259 = ssub.s32 %s11, 1
      %s260 = smul.u32 8, %s23
      %p261 = scmp.lt.s32.totalorder %s21, 1
      %s262 = scalar_select %p261, %s21, 1
      %p263 = scmp.lt.s32.totalorder %s260, 7
      %s264 = scalar_select %p263, %s260, 7
      %s265 = smul.addr %s262, 8
      %s266 = sadd.s32 %s264, %s265
      %s267 = smul.addr %s266, 8
      %s268 = scalar_lea.vmem %s0, %s267
      %p269 = pneg %p58
      %p270 = pneg %p55
      %p271 = scmp.lt.s32.totalorder %s21, 1
      %s272 = scalar_select %p271, %s21, 1
      %s273 = scalar_lea.vmem %s1, %s272
      %p274 = pneg %p84
      %p275 = pneg %p81
      %p276 = scmp.lt.s32.totalorder %s21, 1
      %s277 = scalar_select %p276, %s21, 1
      %s278 = scalar_lea.vmem %s2, %s277
      %p279 = pneg %p110
      %p280 = pneg %p107
      %s281 = smul.u32 2, %s22
      %p282 = scmp.lt.s32.totalorder %s281, 1
      %s283 = scalar_select %p282, %s281, 1
      %s284 = smul.addr %s283, 4
      %s285 = scalar_lea.vmem %s3, %s284
      %p286 = pneg %p136
      %p287 = pneg %p133
      %s288 = smul.u32 2, %s22
      %p289 = scmp.lt.s32.totalorder %s288, 1
      %s290 = scalar_select %p289, %s288, 1
      %s291 = scalar_lea.vmem %s4, %s290
      %p292 = pneg %p162
      %p293 = pneg %p159
      %p294 = pneg %p192
      %p295 = pneg %p189
      %s296 = smul.u32 8, %s23
      %s297 = smul.u32 2, %s22
      %p298 = scmp.lt.s32.totalorder %s21, 1
      %s299 = scalar_select %p298, %s21, 1
      %p300 = scmp.lt.s32.totalorder %s296, 7
      %s301 = scalar_select %p300, %s296, 7
      %p302 = scmp.lt.s32.totalorder %s297, 1
      %s303 = scalar_select %p302, %s297, 1
      %s304 = smul.addr %s301, 2
      %s305 = sadd.s32 %s303, %s304
      %s306 = smul.addr %s299, 16
      %s307 = sadd.s32 %s305, %s306
      %s308 = smul.addr %s307, 4
      %s309 = scalar_lea.vmem %s5, %s308
      %s310 = smul.u32 8, %s23
      %p311 = scmp.lt.s32.totalorder %s21, 1
      %s312 = scalar_select %p311, %s21, 1
      %p313 = scmp.lt.s32.totalorder %s310, 7
      %s314 = scalar_select %p313, %s310, 7
      %s315 = smul.addr %s312, 8
      %s316 = sadd.s32 %s314, %s315
      %s317 = smul.addr %s316, 8
      %s318 = scalar_lea.vmem %s0, %s317
      %s319 = smul.u32 8, %s23
      %p320 = scmp.lt.s32.totalorder %s21, 1
      %s321 = scalar_select %p320, %s21, 1
      %s322 = scalar_lea.vmem %s1, %s321
      %p323 = scmp.lt.s32.totalorder %s21, 1
      %s324 = scalar_select %p323, %s21, 1
      %s325 = scalar_lea.vmem %s2, %s324
      %s326 = smul.u32 2, %s22
      %p327 = scmp.lt.s32.totalorder %s326, 1
      %s328 = scalar_select %p327, %s326, 1
      %s329 = smul.addr %s328, 4
      %s330 = scalar_lea.vmem %s3, %s329
      %s331 = smul.u32 2, %s22
      %s332 = smul.u32 2, %s22
      %p333 = scmp.lt.s32.totalorder %s332, 1
      %s334 = scalar_select %p333, %s332, 1
      %s335 = scalar_lea.vmem %s4, %s334
      %s336 = smul.u32 2, %s22
      %s337 = smul.u32 8, %s23
      %s338 = smul.u32 2, %s22
      %p339 = scmp.lt.s32.totalorder %s21, 1
      %s340 = scalar_select %p339, %s21, 1
      %p341 = scmp.lt.s32.totalorder %s337, 7
      %s342 = scalar_select %p341, %s337, 7
      %p343 = scmp.lt.s32.totalorder %s338, 1
      %s344 = scalar_select %p343, %s338, 1
      %s345 = smul.addr %s342, 2
      %s346 = sadd.s32 %s344, %s345
      %s347 = smul.addr %s340, 16
      %s348 = sadd.s32 %s346, %s347
      %s349 = smul.addr %s348, 4
      %s350 = scalar_lea.vmem %s5, %s349
      %s351 = smul.u32 8, %s23
      %s352 = smul.u32 2, %s22
      %v354 = vld [vmem:[%s318] sm:$0xff]
      %v355 = vld [vmem:[%s318 + $0x8] sm:$0xff]
      %v356 = vld [vmem:[%s318 + $0x10] sm:$0xff]
      %v357 = vld [vmem:[%s318 + $0x18] sm:$0xff]
      %v358 = vld [vmem:[%s318 + $0x20] sm:$0xff]
      %v359 = vld [vmem:[%s318 + $0x28] sm:$0xff]
      %v360 = vld [vmem:[%s318 + $0x30] sm:$0xff]
      %v361 = vld [vmem:[%s318 + $0x38] sm:$0xff]
      %vm362 = vcmask 523264
      %v363 = vsel %vm362, %v354, 0.0
      %364 = vadd.xlane.f32.xlu0 %v363
      %v365 = vpop.xlane.xlu0 %364
      %v366 = vsel %vm362, %v355, 0.0
      %367 = vadd.xlane.f32.xlu0 %v366
      %v368 = vpop.xlane.xlu0 %367
      %v369 = vsel %vm362, %v356, 0.0
      %370 = vadd.xlane.f32.xlu0 %v369
      %v371 = vpop.xlane.xlu0 %370
      %v372 = vsel %vm362, %v357, 0.0
      %373 = vadd.xlane.f32.xlu0 %v372
      %v374 = vpop.xlane.xlu0 %373
      %v375 = vsel %vm362, %v358, 0.0
      %376 = vadd.xlane.f32.xlu0 %v375
      %v377 = vpop.xlane.xlu0 %376
      %v378 = vsel %vm362, %v359, 0.0
      %379 = vadd.xlane.f32.xlu0 %v378
      %v380 = vpop.xlane.xlu0 %379
      %v381 = vsel %vm362, %v360, 0.0
      %382 = vadd.xlane.f32.xlu0 %v381
      %v383 = vpop.xlane.xlu0 %382
      %v384 = vsel %vm362, %v361, 0.0
      %385 = vadd.xlane.f32.xlu0 %v384
      %v386 = vpop.xlane.xlu0 %385
      %v387 = vrcp.pop 64.0
      %v388 = vmul.f32 %v365, %v387
      %v389 = vmul.f32 %v368, %v387
      %v390 = vmul.f32 %v371, %v387
      %v391 = vmul.f32 %v374, %v387
      %v392 = vmul.f32 %v377, %v387
      %v393 = vmul.f32 %v380, %v387
      %v394 = vmul.f32 %v383, %v387
      %v395 = vmul.f32 %v386, %v387
      %v396 = vsub.f32 %v354, %v388
      %v397 = vsub.f32 %v355, %v389
      %v398 = vsub.f32 %v356, %v390
      %v399 = vsub.f32 %v357, %v391
      %v400 = vsub.f32 %v358, %v392
      %v401 = vsub.f32 %v359, %v393
      %v402 = vsub.f32 %v360, %v394
      %v403 = vsub.f32 %v361, %v395
      %v404 = vmul.f32 %v396, %v396
      %v405 = vmul.f32 %v397, %v397
      %v406 = vmul.f32 %v398, %v398
      %v407 = vmul.f32 %v399, %v399
      %v408 = vmul.f32 %v400, %v400
      %v409 = vmul.f32 %v401, %v401
      %v410 = vmul.f32 %v402, %v402
      %v411 = vmul.f32 %v403, %v403
      %v412 = vsel %vm362, %v404, 0.0
      %413 = vadd.xlane.f32.xlu0 %v412
      %v414 = vpop.xlane.xlu0 %413
      %v415 = vsel %vm362, %v405, 0.0
      %416 = vadd.xlane.f32.xlu0 %v415
      %v417 = vpop.xlane.xlu0 %416
      %v418 = vsel %vm362, %v406, 0.0
      %419 = vadd.xlane.f32.xlu0 %v418
      %v420 = vpop.xlane.xlu0 %419
      %v421 = vsel %vm362, %v407, 0.0
      %422 = vadd.xlane.f32.xlu0 %v421
      %v423 = vpop.xlane.xlu0 %422
      %v424 = vsel %vm362, %v408, 0.0
      %425 = vadd.xlane.f32.xlu0 %v424
      %v426 = vpop.xlane.xlu0 %425
      %v427 = vsel %vm362, %v409, 0.0
      %428 = vadd.xlane.f32.xlu0 %v427
      %v429 = vpop.xlane.xlu0 %428
      %v430 = vsel %vm362, %v410, 0.0
      %431 = vadd.xlane.f32.xlu0 %v430
      %v432 = vpop.xlane.xlu0 %431
      %v433 = vsel %vm362, %v411, 0.0
      %434 = vadd.xlane.f32.xlu0 %v433
      %v435 = vpop.xlane.xlu0 %434
      %v436 = vmul.f32 %v414, %v387
      %v437 = vmul.f32 %v417, %v387
      %v438 = vmul.f32 %v420, %v387
      %v439 = vmul.f32 %v423, %v387
      %v440 = vmul.f32 %v426, %v387
      %v441 = vmul.f32 %v429, %v387
      %v442 = vmul.f32 %v432, %v387
      %v443 = vmul.f32 %v435, %v387
      %v444 = vadd.f32 %v436, 1e-06
      %v445 = vadd.f32 %v437, 1e-06
      %v446 = vadd.f32 %v438, 1e-06
      %v447 = vadd.f32 %v439, 1e-06
      %v448 = vadd.f32 %v440, 1e-06
      %v449 = vadd.f32 %v441, 1e-06
      %v450 = vadd.f32 %v442, 1e-06
      %v451 = vadd.f32 %v443, 1e-06
      %v452 = vrsqrt.pop %v444
      %v453 = vrsqrt.pop %v445
      %v454 = vrsqrt.pop %v446
      %v455 = vrsqrt.pop %v447
      %v456 = vrsqrt.pop %v448
      %v457 = vrsqrt.pop %v449
      %v458 = vrsqrt.pop %v450
      %v459 = vrsqrt.pop %v451
      %v460 = vmul.f32 %v396, %v452
      %v461 = vmul.f32 %v397, %v453
      %v462 = vmul.f32 %v398, %v454
      %v463 = vmul.f32 %v399, %v455
      %v464 = vmul.f32 %v400, %v456
      %v465 = vmul.f32 %v401, %v457
      %v466 = vmul.f32 %v402, %v458
      %v467 = vmul.f32 %v403, %v459
      %v468 = vld [vmem:[%s322] sm:$0x1]
      %v470 = vlaneseq
      %v471 = vshrl.u32 %v470, 7
      %v472 = vsub.s32 0, %v471
      %v473 = vrot.slane %v468, %v472
      %v475 = vmul.f32 %v460, %v473
      %v476 = vmul.f32 %v461, %v473
      %v477 = vmul.f32 %v462, %v473
      %v478 = vmul.f32 %v463, %v473
      %v479 = vmul.f32 %v464, %v473
      %v480 = vmul.f32 %v465, %v473
      %v481 = vmul.f32 %v466, %v473
      %v482 = vmul.f32 %v467, %v473
      %v483 = vld [vmem:[%s325] sm:$0x1]
      %v485 = vlaneseq
      %v486 = vshrl.u32 %v485, 7
      %v487 = vsub.s32 0, %v486
      %v488 = vrot.slane %v483, %v487
      %v490 = vadd.f32 %v475, %v488
      %v491 = vadd.f32 %v476, %v488
      %v492 = vadd.f32 %v477, %v488
      %v493 = vadd.f32 %v478, %v488
      %v494 = vadd.f32 %v479, %v488
      %v495 = vadd.f32 %v480, %v488
      %v496 = vadd.f32 %v481, %v488
      %v497 = vadd.f32 %v482, %v488
      %v498 = vpack.c.bf16 %v491, %v490
      %v499 = vpack.c.bf16 %v493, %v492
      %v500 = vpack.c.bf16 %v495, %v494
      %v501 = vpack.c.bf16 %v497, %v496
      %v502 = vld [vmem:[%s330] sm:$0xff]
      %v503 = vld [vmem:[%s330 + $0x8] sm:$0xff]
      %v504 = vld [vmem:[%s330 + $0x10] sm:$0xff]
      %v505 = vld [vmem:[%s330 + $0x18] sm:$0xff]
      %v506 = vld [vmem:[%s330 + $0x20] sm:$0xff]
      %v507 = vld [vmem:[%s330 + $0x28] sm:$0xff]
      %v508 = vld [vmem:[%s330 + $0x30] sm:$0xff]
      %v509 = vld [vmem:[%s330 + $0x38] sm:$0xff]
      %v510 = vld [vmem:[%s335] sm:$0x3]
      %v512 = vlaneseq
      %v513 = vshrl.u32 %v512, 7
      %v514 = vsub.s32 0, %v513
      %v515 = vrot.slane %v510, %v514
      %v516 = vlaneseq
      %v517 = vshrl.u32 %v516, 7
      %v518 = vsub.s32 1, %v517
      %v519 = vrot.slane %v510, %v518
      %v530 = vunpack.c.l.b16 %v502
      %v531 = vunpack.c.h.b16 %v502
      %v532 = vunpack.c.l.b16 %v503
      %v533 = vunpack.c.h.b16 %v503
      %v534 = vunpack.c.l.b16 %v504
      %v535 = vunpack.c.h.b16 %v504
      %v536 = vunpack.c.l.b16 %v505
      %v537 = vunpack.c.h.b16 %v505
      %v538 = vunpack.c.l.b16 %v506
      %v539 = vunpack.c.h.b16 %v506
      %v540 = vunpack.c.l.b16 %v507
      %v541 = vunpack.c.h.b16 %v507
      %v542 = vunpack.c.l.b16 %v508
      %v543 = vunpack.c.h.b16 %v508
      %v544 = vunpack.c.l.b16 %v509
      %v545 = vunpack.c.h.b16 %v509
      %v546 = vpack.c.b16 %v532, %v530
      %v547 = vpack.c.b16 %v533, %v531
      %v548 = vpack.c.b16 %v536, %v534
      %v549 = vpack.c.b16 %v537, %v535
      %v550 = vpack.c.b16 %v540, %v538
      %v551 = vpack.c.b16 %v541, %v539
      %v552 = vpack.c.b16 %v544, %v542
      %v553 = vpack.c.b16 %v545, %v543
      %v563 = vsel %vm362, %v498, 0
      %v566 = vsel %vm362, %v499, 0
      %v569 = vsel %vm362, %v500, 0
      %v572 = vsel %vm362, %v501, 0
      %574 = vmatprep.subr.bf16.mxu0 %v547
      %575 = vmatpush1.bf16.msra.mxu0 %v546
      %576 = vmatprep.subr.bf16.mxu0 %v549
      %577 = vmatpush1.bf16.msra.mxu0 %v548
      %578 = vmatprep.subr.bf16.mxu0 %v551
      %579 = vmatpush1.bf16.msra.mxu0 %v550
      %580 = vmatprep.subr.bf16.mxu0 %v553
      %581 = vmatpush1.bf16.msra.mxu0 %v552
      %582 = vmatprep.subr.bf16.mxu0 0
      %583 = vmatpush1.bf16.msra.mxu0 0
      %584 = vmatprep.subr.bf16.mxu0 0
      %585 = vmatpush1.bf16.msra.mxu0 0
      %586 = vmatprep.subr.bf16.mxu0 0
      %587 = vmatpush1.bf16.msra.mxu0 0
      %588 = vmatprep.subr.bf16.mxu0 0
      %589 = vmatpush1.bf16.msra.mxu0 0
      %590 = vmatprep.subr.bf16.mxu0 0
      %591 = vmatpush1.bf16.msra.mxu0 0
      %592 = vmatprep.subr.bf16.mxu0 0
      %593 = vmatpush1.bf16.msra.mxu0 0
      %594 = vmatprep.subr.bf16.mxu0 0
      %595 = vmatpush1.bf16.msra.mxu0 0
      %596 = vmatprep.subr.bf16.mxu0 0
      %597 = vmatpush1.bf16.msra.mxu0 0
      %598 = vmatprep.subr.bf16.mxu0 0
      %599 = vmatpush1.bf16.msra.mxu0 0
      %600 = vmatprep.subr.bf16.mxu0 0
      %601 = vmatpush1.bf16.msra.mxu0 0
      %602 = vmatprep.subr.bf16.mxu0 0
      %603 = vmatpush1.bf16.msra.mxu0 0
      %604 = vmatprep.subr.bf16.mxu0 0
      %605 = vmatpush1.bf16.msra.mxu0 0
      %606 = vmatprep.mubr.bf16.mxu0 0
      %607 = vmatmul.mubr.bf16.gmra.mrb[0].mxu0 %v563
      %v608 = vpop.f32.mrb[0].mxu0
      %v609 = vadd.f32 %v515, %v608
      %v610 = vpop.f32.mrb[0].mxu0
      %v611 = vadd.f32 %v519, %v610
      %v612 = vpop.f32.mrb[0].mxu0
      %v613 = vadd.f32 %v515, %v612
      %v614 = vpop.f32.mrb[0].mxu0
      %v615 = vadd.f32 %v519, %v614
      %616 = vmatprep.mubr.bf16.mxu0 0
      %617 = vmatmul.mubr.bf16.gmra.mrb[0].mxu0 %v566
      %v618 = vpop.f32.mrb[0].mxu0
      %v619 = vadd.f32 %v515, %v618
      %v620 = vpop.f32.mrb[0].mxu0
      %v621 = vadd.f32 %v519, %v620
      %v622 = vpop.f32.mrb[0].mxu0
      %v623 = vadd.f32 %v515, %v622
      %v624 = vpop.f32.mrb[0].mxu0
      %v625 = vadd.f32 %v519, %v624
      %626 = vmatprep.mubr.bf16.mxu0 0
      %627 = vmatmul.mubr.bf16.gmra.mrb[0].mxu0 %v569
      %v628 = vpop.f32.mrb[0].mxu0
      %v629 = vadd.f32 %v515, %v628
      %v630 = vpop.f32.mrb[0].mxu0
      %v631 = vadd.f32 %v519, %v630
      %v632 = vpop.f32.mrb[0].mxu0
      %v633 = vadd.f32 %v515, %v632
      %v634 = vpop.f32.mrb[0].mxu0
      %v635 = vadd.f32 %v519, %v634
      %636 = vmatprep.mubr.bf16.mxu0 0
      %637 = vmatmul.mubr.bf16.gmra.mrb[0].mxu0 %v572
      %v638 = vpop.f32.mrb[0].mxu0
      %v639 = vadd.f32 %v515, %v638
      %v640 = vpop.f32.mrb[0].mxu0
      %v641 = vadd.f32 %v519, %v640
      %v642 = vpop.f32.mrb[0].mxu0
      %v643 = vadd.f32 %v515, %v642
      %v644 = vpop.f32.mrb[0].mxu0
      %v645 = vadd.f32 %v519, %v644
      %646 = vdwg.mxu0
      %v647 = vpack.c.bf16 %v613, %v609
      %v648 = vpack.c.bf16 %v615, %v611
      %v649 = vpack.c.bf16 %v623, %v619
      %v650 = vpack.c.bf16 %v625, %v621
      %v651 = vpack.c.bf16 %v633, %v629
      %v652 = vpack.c.bf16 %v635, %v631
      %v653 = vpack.c.bf16 %v643, %v639
      %v654 = vpack.c.bf16 %v645, %v641
      %v663 = vunpack.c.l.b16 %v647
      %v664 = vunpack.c.l.b16 %v648
      %v665 = vunpack.c.h.b16 %v647
      %v666 = vunpack.c.h.b16 %v648
      %v667 = vunpack.c.l.b16 %v649
      %v668 = vunpack.c.l.b16 %v650
      %v669 = vunpack.c.h.b16 %v649
      %v670 = vunpack.c.h.b16 %v650
      %v671 = vunpack.c.l.b16 %v651
      %v672 = vunpack.c.l.b16 %v652
      %v673 = vunpack.c.h.b16 %v651
      %v674 = vunpack.c.h.b16 %v652
      %v675 = vunpack.c.l.b16 %v653
      %v676 = vunpack.c.l.b16 %v654
      %v677 = vunpack.c.h.b16 %v653
      %v678 = vunpack.c.h.b16 %v654
      %v679 = vpack.c.b16 %v664, %v663
      %v680 = vpack.c.b16 %v666, %v665
      %v681 = vpack.c.b16 %v668, %v667
      %v682 = vpack.c.b16 %v670, %v669
      %v683 = vpack.c.b16 %v672, %v671
      %v684 = vpack.c.b16 %v674, %v673
      %v685 = vpack.c.b16 %v676, %v675
      %v686 = vpack.c.b16 %v678, %v677
      %vm695 = vcmask 1043456
      %vm696 = vcmask 523268
      %vm697 = vmor %vm696, %vm695
      %698 = vst.msk [vmem:[%s350] sm:$0xff] %vm697, %v679
      %699 = vst.msk [vmem:[%s350 + $0x8] sm:$0xff] %vm697, %v680
      %700 = vst.msk [vmem:[%s350 + $0x10] sm:$0xff] %vm697, %v681
      %701 = vst.msk [vmem:[%s350 + $0x18] sm:$0xff] %vm697, %v682
      %702 = vst.msk [vmem:[%s350 + $0x20] sm:$0xff] %vm697, %v683
      %703 = vst.msk [vmem:[%s350 + $0x28] sm:$0xff] %vm697, %v684
      %704 = vst.msk [vmem:[%s350 + $0x30] sm:$0xff] %vm697, %v685
      %705 = vst.msk [vmem:[%s350 + $0x38] sm:$0xff] %vm697, %v686
      %s706 = smul.u32 8, %s23
      %s707 = smul.u32 2, %s22
      %p708 = scmp.lt.s32.totalorder %s21, 1
      %s709 = scalar_select %p708, %s21, 1
      %p710 = scmp.lt.s32.totalorder %s706, 7
      %s711 = scalar_select %p710, %s706, 7
      %p712 = scmp.lt.s32.totalorder %s707, 1
      %s713 = scalar_select %p712, %s707, 1
      %s714 = smul.addr %s711, 2
      %s715 = sadd.s32 %s713, %s714
      %s716 = smul.addr %s709, 16
      %s717 = sadd.s32 %s715, %s716
      %s718 = smul.addr %s717, 4
      %s719 = scalar_lea.vmem %s5, %s718
      // Predicated region
      $region41: #{_lambda_.27} parent=39 // pred_check
        %p720 = pneg %p189
      $region42: #{_lambda_.27} parent=39 // pred_check_branch
        %722 = sbr.rel (%p720) target = $region44
      $region43: #{_lambda_.27} parent=39 // pred_region
        %s723 = smul.u32 8, %s23
        %s724 = smul.u32 2, %s22
      $region44: #{_lambda_.27} parent=39 // pred_fallthru
        _
    $region40: #{_lambda_.27} parent=5 // pred_fallthru
      _
    %p725 = scmp.le.s32.totalorder 2, %s11
    // Predicated region
    $region45: #{_lambda_.27} parent=5 // pred_check
      %p726 = pneg %p725
    $region46: #{_lambda_.27} parent=5 // pred_check_branch
      %728 = sbr.rel (%p726) target = $region48
    $region47: #{_lambda_.27} parent=5 // pred_region
      %s729 = ssub.s32 %s11, 2
      // Predicated region
      $region49: #{_lambda_.27} parent=47 // pred_check
        %p730 = pneg %p195
      $region50: #{_lambda_.27} parent=47 // pred_check_branch
        %732 = sbr.rel (%p730) target = $region52
      $region51: #{_lambda_.27} parent=47 // pred_region
        %s733 = smul.u32 8, %s26
        %s734 = smul.u32 2, %s25
        %p735 = scmp.lt.s32.totalorder %s24, 1
        %s736 = scalar_select %p735, %s24, 1
        %p737 = scmp.lt.s32.totalorder %s733, 7
        %s738 = scalar_select %p737, %s733, 7
        %p739 = scmp.lt.s32.totalorder %s734, 1
        %s740 = scalar_select %p739, %s734, 1
        %s741 = smul.addr %s738, 2
        %s742 = sadd.s32 %s740, %s741
        %s743 = smul.addr %s736, 16
        %s744 = sadd.s32 %s742, %s743
        %s745 = smul.addr %s744, 4
        %s746 = scalar_lea.vmem %s5, %s745
      $region52: #{_lambda_.27} parent=47 // pred_fallthru
        _
    $region48: #{_lambda_.27} parent=5 // pred_fallthru
      _
  $region6: #{_lambda_.27} parent=0 // loop_footer
    %s15 = sadd.s32 1, %s11
  $region7: #{_lambda_.27} parent=0 // loop_footer_branch
    %10 = sbr.rel target = $region3
  $region8: #{_lambda_.27} parent=0 // loop_exit
    _

// kernel: _lambda_.28
$region0: #{_lambda_.28}
  #allocation0 [shape = 'u32[]', space=smem, size = 0x4, offset = 0x4, fixed_abs, tag = 'smem constant byte address 0x4 - core index']
  #allocation1 [shape = 'u32[144,128]{1,0:T(1,128)}', space=vmem, size = 0x12000, scoped, tag = 'internal scratch']
  #allocation2 [shape = 'f32[64,1]{1,0:T(8,128)}', space=vmem, size = 0x8000, scoped, tag = 'scratch operand']
  #allocation3 [shape = 'f32[64,1]{1,0:T(8,128)}', space=vmem, size = 0x8000, scoped, tag = 'scratch operand']
  #allocation4 [shape = 'f32[64,16]{1,0:T(8,128)}', space=vmem, size = 0x8000, scoped, tag = 'scratch operand']
  %s0 = inlined_call_operand.vmem [shape: bf16[2,4,64,16], index: 0, kind: input, shape index: {}]
  %s1 = inlined_call_operand.vmem [shape: bf16[2,4,64,16], index: 1, kind: input, shape index: {}]
  %s2 = inlined_call_operand.vmem [shape: bf16[2,4,64,16], index: 2, kind: input, shape index: {}]
  %s3 = inlined_call_operand.vmem [shape: bf16[2,4,64,16], index: 3, kind: output, shape index: {}]
  %s4 = sld [smem:[#allocation0]]
  $region53: #{_lambda_.28} parent=0
    _
  %s6 = ssub.s32 1, %s4
  %s7 = scalar_select 0, %s6, %s4
  loop: start=0, step=1, limit=10
  $region2: #{_lambda_.28} parent=0 // loop_pre_header
    _
  $region3: #{_lambda_.28} parent=0 // loop_header
    %s9 = sphi 0, %s13
    %p10 = scmp.ge.s32.totalorder %s9, 10
    %s16 = sphi 0, %s42
    %s17 = sphi 0, %s38
    %s18 = sphi 0, %s34
    %s19 = sphi 0, %s30
    %s20 = sphi 0, %s16
    %s21 = sphi 0, %s17
    %s22 = sphi 0, %s18
    %s23 = sphi 0, %s19
    %s24 = sphi 0, %s20
    %s25 = sphi 0, %s21
    %s26 = sphi 0, %s22
    %s27 = sphi 0, %s23
    %s49 = sphi 0, %s51
    %s52 = sphi 0, %s49
    %s53 = sphi 0, %s52
    %s69 = sphi 0, %s53
    %s79 = sphi 0, %s81
    %s82 = sphi 0, %s79
    %s83 = sphi 0, %s82
    %s99 = sphi 0, %s83
    %s109 = sphi 0, %s111
    %s112 = sphi 0, %s109
    %s113 = sphi 0, %s112
    %s129 = sphi 0, %s113
    %s139 = sphi 0, %s141
    %s142 = sphi 0, %s139
    %s143 = sphi 0, %s142
    %s159 = sphi 0, %s143
  $region4: #{_lambda_.28} parent=0 // loop_header_branch
    %12 = sbr.rel (%p10) target = $region8
  $region5: #{_lambda_.28} parent=0 // loop_body
    %s14 = ssub.s32 %s9, 1
    %s15 = ssub.s32 %s9, 2
    %s28 = sadd.s32 1, %s19
    %p29 = scmp.ge.s32.totalorder %s28, 1
    %s30 = scalar_select %p29, 0, %s28
    %s31 = sadd.s32 1, %s18
    %s32 = scalar_select %p29, %s31, %s18
    %p33 = scmp.ge.s32.totalorder %s32, 1
    %s34 = scalar_select %p33, 0, %s32
    %s35 = sadd.s32 1, %s17
    %s36 = scalar_select %p33, %s35, %s17
    %p37 = scmp.ge.s32.totalorder %s36, 4
    %s38 = scalar_select %p37, 0, %s36
    %s39 = sadd.s32 1, %s16
    %s40 = scalar_select %p37, %s39, %s16
    %p41 = scmp.ge.s32.totalorder %s40, 2
    %s42 = scalar_select %p41, 0, %s40
    %s43 = ssub.s32 %s16, %s42
    %s44 = ssub.s32 %s17, %s38
    %s45 = sor.u32 %s43, %s44
    %s46 = ssub.s32 %s18, %s34
    %s47 = sor.u32 %s45, %s46
    %p48 = scmp.eq.s32.totalorder %s47, 0
    %s50 = sadd.s32 %s49, 1
    %s51 = scalar_select %p48, %s49, %s50
    %p54 = pneg %p48
    %p55 = scmp.eq.s32.totalorder %s9, 7
    %p56 = por %p54, %p55
    %p57 = scmp.ne.s32.totalorder %s49, %s52
    %p58 = scmp.eq.s32.totalorder %s9, 0
    %p59 = por %p57, %p58
    %p60 = scmp.ne.s32.totalorder %s49, %s52
    %p61 = scmp.eq.s32.totalorder %s14, 7
    %p62 = por %p60, %p61
    %p63 = scmp.ne.s32.totalorder %s52, %s53
    %p64 = scmp.eq.s32.totalorder %s14, 0
    %p65 = por %p63, %p64
    %p66 = scmp.ne.s32.totalorder %s52, %s53
    %p67 = scmp.eq.s32.totalorder %s15, 7
    %p68 = por %p66, %p67
    %p70 = scmp.ne.s32.totalorder %s53, %s69
    %p71 = scmp.eq.s32.totalorder %s15, 0
    %p72 = por %p70, %p71
    %s73 = ssub.s32 %s16, %s42
    %s74 = ssub.s32 %s17, %s38
    %s75 = sor.u32 %s73, %s74
    %s76 = ssub.s32 %s19, %s30
    %s77 = sor.u32 %s75, %s76
    %p78 = scmp.eq.s32.totalorder %s77, 0
    %s80 = sadd.s32 %s79, 1
    %s81 = scalar_select %p78, %s79, %s80
    %p84 = pneg %p78
    %p85 = scmp.eq.s32.totalorder %s9, 7
    %p86 = por %p84, %p85
    %p87 = scmp.ne.s32.totalorder %s79, %s82
    %p88 = scmp.eq.s32.totalorder %s9, 0
    %p89 = por %p87, %p88
    %p90 = scmp.ne.s32.totalorder %s79, %s82
    %p91 = scmp.eq.s32.totalorder %s14, 7
    %p92 = por %p90, %p91
    %p93 = scmp.ne.s32.totalorder %s82, %s83
    %p94 = scmp.eq.s32.totalorder %s14, 0
    %p95 = por %p93, %p94
    %p96 = scmp.ne.s32.totalorder %s82, %s83
    %p97 = scmp.eq.s32.totalorder %s15, 7
    %p98 = por %p96, %p97
    %p100 = scmp.ne.s32.totalorder %s83, %s99
    %p101 = scmp.eq.s32.totalorder %s15, 0
    %p102 = por %p100, %p101
    %s103 = ssub.s32 %s16, %s42
    %s104 = ssub.s32 %s17, %s38
    %s105 = sor.u32 %s103, %s104
    %s106 = ssub.s32 %s19, %s30
    %s107 = sor.u32 %s105, %s106
    %p108 = scmp.eq.s32.totalorder %s107, 0
    %s110 = sadd.s32 %s109, 1
    %s111 = scalar_select %p108, %s109, %s110
    %p114 = pneg %p108
    %p115 = scmp.eq.s32.totalorder %s9, 7
    %p116 = por %p114, %p115
    %p117 = scmp.ne.s32.totalorder %s109, %s112
    %p118 = scmp.eq.s32.totalorder %s9, 0
    %p119 = por %p117, %p118
    %p120 = scmp.ne.s32.totalorder %s109, %s112
    %p121 = scmp.eq.s32.totalorder %s14, 7
    %p122 = por %p120, %p121
    %p123 = scmp.ne.s32.totalorder %s112, %s113
    %p124 = scmp.eq.s32.totalorder %s14, 0
    %p125 = por %p123, %p124
    %p126 = scmp.ne.s32.totalorder %s112, %s113
    %p127 = scmp.eq.s32.totalorder %s15, 7
    %p128 = por %p126, %p127
    %p130 = scmp.ne.s32.totalorder %s113, %s129
    %p131 = scmp.eq.s32.totalorder %s15, 0
    %p132 = por %p130, %p131
    %s133 = ssub.s32 %s16, %s42
    %s134 = ssub.s32 %s17, %s38
    %s135 = sor.u32 %s133, %s134
    %s136 = ssub.s32 %s18, %s34
    %s137 = sor.u32 %s135, %s136
    %p138 = scmp.eq.s32.totalorder %s137, 0
    %s140 = sadd.s32 %s139, 1
    %s141 = scalar_select %p138, %s139, %s140
    %p144 = pneg %p138
    %p145 = scmp.eq.s32.totalorder %s9, 7
    %p146 = por %p144, %p145
    %p147 = scmp.ne.s32.totalorder %s139, %s142
    %p148 = scmp.eq.s32.totalorder %s9, 0
    %p149 = por %p147, %p148
    %p150 = scmp.ne.s32.totalorder %s139, %s142
    %p151 = scmp.eq.s32.totalorder %s14, 7
    %p152 = por %p150, %p151
    %p153 = scmp.ne.s32.totalorder %s142, %s143
    %p154 = scmp.eq.s32.totalorder %s14, 0
    %p155 = por %p153, %p154
    %p156 = scmp.ne.s32.totalorder %s142, %s143
    %p157 = scmp.eq.s32.totalorder %s15, 7
    %p158 = por %p156, %p157
    %p160 = scmp.ne.s32.totalorder %s143, %s159
    %p161 = scmp.eq.s32.totalorder %s15, 0
    %p162 = por %p160, %p161
    %p163 = scmp.le.s32.totalorder 1, %s9
    %p164 = scmp.lt.s32.totalorder %s9, 9
    %p165 = pnand %p163, %p164
    %p166 = pneg %p165
    // Predicated region
    $region9: #{_lambda_.28} parent=5 // pred_check
      _
    $region10: #{_lambda_.28} parent=5 // pred_check_branch
      %168 = sbr.rel (%p165) target = $region12
    $region11: #{_lambda_.28} parent=5 // pred_region
      %s169 = ssub.s32 %s9, 1
    $region12: #{_lambda_.28} parent=5 // pred_fallthru
      _
    %p170 = scmp.lt.s32.totalorder %s9, 8
    // Predicated region
    $region13: #{_lambda_.28} parent=5 // pred_check
      %p171 = pneg %p170
    $region14: #{_lambda_.28} parent=5 // pred_check_branch
      %173 = sbr.rel (%p171) target = $region16
    $region15: #{_lambda_.28} parent=5 // pred_region
      // Predicated region
      $region17: #{_lambda_.28} parent=15 // pred_check
        %p174 = pneg %p59
      $region18: #{_lambda_.28} parent=15 // pred_check_branch
        %176 = sbr.rel (%p174) target = $region20
      $region19: #{_lambda_.28} parent=15 // pred_region
        %s177 = smul.u32 8, %s18
        %p178 = scmp.lt.s32.totalorder %s16, 1
        %s179 = scalar_select %p178, %s16, 1
        %p180 = scmp.lt.s32.totalorder %s17, 3
        %s181 = scalar_select %p180, %s17, 3
        %p182 = scmp.lt.s32.totalorder %s177, 7
        %s183 = scalar_select %p182, %s177, 7
        %s184 = smul.addr %s181, 8
        %s185 = sadd.s32 %s183, %s184
        %s186 = smul.addr %s179, 32
        %s187 = sadd.s32 %s185, %s186
        %s188 = smul.addr %s187, 4
        %s189 = scalar_lea.vmem %s0, %s188
        %s190 = smul.u32 8, %s18
      $region20: #{_lambda_.28} parent=15 // pred_fallthru
        _
      // Predicated region
      $region21: #{_lambda_.28} parent=15 // pred_check
        %p191 = pneg %p89
      $region22: #{_lambda_.28} parent=15 // pred_check_branch
        %193 = sbr.rel (%p191) target = $region24
      $region23: #{_lambda_.28} parent=15 // pred_region
        %s194 = smul.u32 8, %s19
        %p195 = scmp.lt.s32.totalorder %s16, 1
        %s196 = scalar_select %p195, %s16, 1
        %p197 = scmp.lt.s32.totalorder %s17, 3
        %s198 = scalar_select %p197, %s17, 3
        %p199 = scmp.lt.s32.totalorder %s194, 7
        %s200 = scalar_select %p199, %s194, 7
        %s201 = smul.addr %s198, 8
        %s202 = sadd.s32 %s200, %s201
        %s203 = smul.addr %s196, 32
        %s204 = sadd.s32 %s202, %s203
        %s205 = smul.addr %s204, 4
        %s206 = scalar_lea.vmem %s1, %s205
        %s207 = smul.u32 8, %s19
      $region24: #{_lambda_.28} parent=15 // pred_fallthru
        _
      // Predicated region
      $region25: #{_lambda_.28} parent=15 // pred_check
        %p208 = pneg %p119
      $region26: #{_lambda_.28} parent=15 // pred_check_branch
        %210 = sbr.rel (%p208) target = $region28
      $region27: #{_lambda_.28} parent=15 // pred_region
        %s211 = smul.u32 8, %s19
        %p212 = scmp.lt.s32.totalorder %s16, 1
        %s213 = scalar_select %p212, %s16, 1
        %p214 = scmp.lt.s32.totalorder %s17, 3
        %s215 = scalar_select %p214, %s17, 3
        %p216 = scmp.lt.s32.totalorder %s211, 7
        %s217 = scalar_select %p216, %s211, 7
        %s218 = smul.addr %s215, 8
        %s219 = sadd.s32 %s217, %s218
        %s220 = smul.addr %s213, 32
        %s221 = sadd.s32 %s219, %s220
        %s222 = smul.addr %s221, 4
        %s223 = scalar_lea.vmem %s2, %s222
        %s224 = smul.u32 8, %s19
      $region28: #{_lambda_.28} parent=15 // pred_fallthru
        _
    $region16: #{_lambda_.28} parent=5 // pred_fallthru
      _
    %p225 = scmp.le.s32.totalorder 1, %s9
    %p226 = scmp.lt.s32.totalorder %s9, 9
    %p227 = pnand %p225, %p226
    %p228 = pneg %p227
    // Predicated region
    $region29: #{_lambda_.28} parent=5 // pred_check
      _
    $region30: #{_lambda_.28} parent=5 // pred_check_branch
      %230 = sbr.rel (%p227) target = $region32
    $region31: #{_lambda_.28} parent=5 // pred_region
      %s231 = ssub.s32 %s9, 1
      %s232 = smul.u32 8, %s22
      %p233 = scmp.lt.s32.totalorder %s20, 1
      %s234 = scalar_select %p233, %s20, 1
      %p235 = scmp.lt.s32.totalorder %s21, 3
      %s236 = scalar_select %p235, %s21, 3
      %p237 = scmp.lt.s32.totalorder %s232, 7
      %s238 = scalar_select %p237, %s232, 7
      %s239 = smul.addr %s236, 8
      %s240 = sadd.s32 %s238, %s239
      %s241 = smul.addr %s234, 32
      %s242 = sadd.s32 %s240, %s241
      %s243 = smul.addr %s242, 4
      %s244 = scalar_lea.vmem %s0, %s243
      %p245 = pneg %p65
      %p246 = pneg %p62
      %s247 = smul.u32 8, %s23
      %p248 = scmp.lt.s32.totalorder %s20, 1
      %s249 = scalar_select %p248, %s20, 1
      %p250 = scmp.lt.s32.totalorder %s21, 3
      %s251 = scalar_select %p250, %s21, 3
      %p252 = scmp.lt.s32.totalorder %s247, 7
      %s253 = scalar_select %p252, %s247, 7
      %s254 = smul.addr %s251, 8
      %s255 = sadd.s32 %s253, %s254
      %s256 = smul.addr %s249, 32
      %s257 = sadd.s32 %s255, %s256
      %s258 = smul.addr %s257, 4
      %s259 = scalar_lea.vmem %s1, %s258
      %p260 = pneg %p95
      %p261 = pneg %p92
      %s262 = smul.u32 8, %s23
      %p263 = scmp.lt.s32.totalorder %s20, 1
      %s264 = scalar_select %p263, %s20, 1
      %p265 = scmp.lt.s32.totalorder %s21, 3
      %s266 = scalar_select %p265, %s21, 3
      %p267 = scmp.lt.s32.totalorder %s262, 7
      %s268 = scalar_select %p267, %s262, 7
      %s269 = smul.addr %s266, 8
      %s270 = sadd.s32 %s268, %s269
      %s271 = smul.addr %s264, 32
      %s272 = sadd.s32 %s270, %s271
      %s273 = smul.addr %s272, 4
      %s274 = scalar_lea.vmem %s2, %s273
      %p275 = pneg %p125
      %p276 = pneg %p122
      %p277 = pneg %p155
      %p278 = pneg %p152
      %s279 = smul.u32 8, %s22
      %p280 = scmp.lt.s32.totalorder %s20, 1
      %s281 = scalar_select %p280, %s20, 1
      %p282 = scmp.lt.s32.totalorder %s21, 3
      %s283 = scalar_select %p282, %s21, 3
      %p284 = scmp.lt.s32.totalorder %s279, 7
      %s285 = scalar_select %p284, %s279, 7
      %s286 = smul.addr %s283, 8
      %s287 = sadd.s32 %s285, %s286
      %s288 = smul.addr %s281, 32
      %s289 = sadd.s32 %s287, %s288
      %s290 = smul.addr %s289, 4
      %s291 = scalar_lea.vmem %s3, %s290
      %s292 = smul.u32 8, %s22
      %p293 = scmp.lt.s32.totalorder %s20, 1
      %s294 = scalar_select %p293, %s20, 1
      %p295 = scmp.lt.s32.totalorder %s21, 3
      %s296 = scalar_select %p295, %s21, 3
      %p297 = scmp.lt.s32.totalorder %s292, 7
      %s298 = scalar_select %p297, %s292, 7
      %s299 = smul.addr %s296, 8
      %s300 = sadd.s32 %s298, %s299
      %s301 = smul.addr %s294, 32
      %s302 = sadd.s32 %s300, %s301
      %s303 = smul.addr %s302, 4
      %s304 = scalar_lea.vmem %s0, %s303
      %s305 = smul.u32 8, %s22
      %s306 = smul.u32 8, %s23
      %p307 = scmp.lt.s32.totalorder %s20, 1
      %s308 = scalar_select %p307, %s20, 1
      %p309 = scmp.lt.s32.totalorder %s21, 3
      %s310 = scalar_select %p309, %s21, 3
      %p311 = scmp.lt.s32.totalorder %s306, 7
      %s312 = scalar_select %p311, %s306, 7
      %s313 = smul.addr %s310, 8
      %s314 = sadd.s32 %s312, %s313
      %s315 = smul.addr %s308, 32
      %s316 = sadd.s32 %s314, %s315
      %s317 = smul.addr %s316, 4
      %s318 = scalar_lea.vmem %s1, %s317
      %s319 = smul.u32 8, %s23
      %s320 = smul.u32 8, %s23
      %p321 = scmp.lt.s32.totalorder %s20, 1
      %s322 = scalar_select %p321, %s20, 1
      %p323 = scmp.lt.s32.totalorder %s21, 3
      %s324 = scalar_select %p323, %s21, 3
      %p325 = scmp.lt.s32.totalorder %s320, 7
      %s326 = scalar_select %p325, %s320, 7
      %s327 = smul.addr %s324, 8
      %s328 = sadd.s32 %s326, %s327
      %s329 = smul.addr %s322, 32
      %s330 = sadd.s32 %s328, %s329
      %s331 = smul.addr %s330, 4
      %s332 = scalar_lea.vmem %s2, %s331
      %s333 = smul.u32 8, %s23
      %s334 = smul.u32 8, %s22
      %p335 = scmp.lt.s32.totalorder %s20, 1
      %s336 = scalar_select %p335, %s20, 1
      %p337 = scmp.lt.s32.totalorder %s21, 3
      %s338 = scalar_select %p337, %s21, 3
      %p339 = scmp.lt.s32.totalorder %s334, 7
      %s340 = scalar_select %p339, %s334, 7
      %s341 = smul.addr %s338, 8
      %s342 = sadd.s32 %s340, %s341
      %s343 = smul.addr %s336, 32
      %s344 = sadd.s32 %s342, %s343
      %s345 = smul.addr %s344, 4
      %s346 = scalar_lea.vmem %s3, %s345
      %s347 = smul.u32 8, %s22
      %p349 = scmp.eq.s32.totalorder %s23, 0
      // Predicated region
      $region33: #{_lambda_.28} parent=31 // pred_check
        %p350 = pneg %p349
      $region34: #{_lambda_.28} parent=31 // pred_check_branch
        %352 = sbr.rel (%p350) target = $region36
      $region35: #{_lambda_.28} parent=31 // pred_region
        %vm353 = vcmask 7168
        %354 = vst.msk [vmem:[#allocation2] sm:$0xff] %vm353, -inf
        %355 = vst.msk [vmem:[#allocation2 + $0x8] sm:$0xff] %vm353, -inf
        %356 = vst.msk [vmem:[#allocation2 + $0x10] sm:$0xff] %vm353, -inf
        %357 = vst.msk [vmem:[#allocation2 + $0x18] sm:$0xff] %vm353, -inf
        %358 = vst.msk [vmem:[#allocation2 + $0x20] sm:$0xff] %vm353, -inf
        %359 = vst.msk [vmem:[#allocation2 + $0x28] sm:$0xff] %vm353, -inf
        %360 = vst.msk [vmem:[#allocation2 + $0x30] sm:$0xff] %vm353, -inf
        %361 = vst.msk [vmem:[#allocation2 + $0x38] sm:$0xff] %vm353, -inf
        %362 = vst.msk [vmem:[#allocation3] sm:$0xff] %vm353, 0.0
        %363 = vst.msk [vmem:[#allocation3 + $0x8] sm:$0xff] %vm353, 0.0
        %364 = vst.msk [vmem:[#allocation3 + $0x10] sm:$0xff] %vm353, 0.0
        %365 = vst.msk [vmem:[#allocation3 + $0x18] sm:$0xff] %vm353, 0.0
        %366 = vst.msk [vmem:[#allocation3 + $0x20] sm:$0xff] %vm353, 0.0
        %367 = vst.msk [vmem:[#allocation3 + $0x28] sm:$0xff] %vm353, 0.0
        %368 = vst.msk [vmem:[#allocation3 + $0x30] sm:$0xff] %vm353, 0.0
        %369 = vst.msk [vmem:[#allocation3 + $0x38] sm:$0xff] %vm353, 0.0
        %vm370 = vcmask 130048
        %371 = vst.msk [vmem:[#allocation4] sm:$0xff] %vm370, 0.0
        %372 = vst.msk [vmem:[#allocation4 + $0x8] sm:$0xff] %vm370, 0.0
        %373 = vst.msk [vmem:[#allocation4 + $0x10] sm:$0xff] %vm370, 0.0
        %374 = vst.msk [vmem:[#allocation4 + $0x18] sm:$0xff] %vm370, 0.0
        %375 = vst.msk [vmem:[#allocation4 + $0x20] sm:$0xff] %vm370, 0.0
        %376 = vst.msk [vmem:[#allocation4 + $0x28] sm:$0xff] %vm370, 0.0
        %377 = vst.msk [vmem:[#allocation4 + $0x30] sm:$0xff] %vm370, 0.0
        %378 = vst.msk [vmem:[#allocation4 + $0x38] sm:$0xff] %vm370, 0.0
      $region36: #{_lambda_.28} parent=31 // pred_fallthru
        _
      %v379 = vld [vmem:[%s304] sm:$0xf]
      %v380 = vld [vmem:[%s304 + $0x4] sm:$0xf]
      %v381 = vld [vmem:[%s304 + $0x8] sm:$0xf]
      %v382 = vld [vmem:[%s304 + $0xc] sm:$0xf]
      %v383 = vld [vmem:[%s304 + $0x10] sm:$0xf]
      %v384 = vld [vmem:[%s304 + $0x14] sm:$0xf]
      %v385 = vld [vmem:[%s304 + $0x18] sm:$0xf]
      %v386 = vld [vmem:[%s304 + $0x1c] sm:$0xf]
      %v387 = vld [vmem:[%s318] sm:$0xf]
      %v388 = vld [vmem:[%s318 + $0x4] sm:$0xf]
      %v389 = vld [vmem:[%s318 + $0x8] sm:$0xf]
      %v390 = vld [vmem:[%s318 + $0xc] sm:$0xf]
      %v391 = vld [vmem:[%s318 + $0x10] sm:$0xf]
      %v392 = vld [vmem:[%s318 + $0x14] sm:$0xf]
      %v393 = vld [vmem:[%s318 + $0x18] sm:$0xf]
      %v394 = vld [vmem:[%s318 + $0x1c] sm:$0xf]
      %v395 = vld [vmem:[%s332] sm:$0xf]
      %v396 = vld [vmem:[%s332 + $0x4] sm:$0xf]
      %v397 = vld [vmem:[%s332 + $0x8] sm:$0xf]
      %v398 = vld [vmem:[%s332 + $0xc] sm:$0xf]
      %v399 = vld [vmem:[%s332 + $0x10] sm:$0xf]
      %v400 = vld [vmem:[%s332 + $0x14] sm:$0xf]
      %v401 = vld [vmem:[%s332 + $0x18] sm:$0xf]
      %v402 = vld [vmem:[%s332 + $0x1c] sm:$0xf]
      %v411 = vunpack.c.l.b16 %v379
      %v412 = vunpack.c.l.b16 %v380
      %v413 = vunpack.c.l.b16 %v381
      %v414 = vunpack.c.l.b16 %v382
      %v415 = vunpack.c.l.b16 %v383
      %v416 = vunpack.c.l.b16 %v384
      %v417 = vunpack.c.l.b16 %v385
      %v418 = vunpack.c.l.b16 %v386
      %v419 = vpack.c.b16 %v412, %v411
      %v420 = vpack.c.b16 %v414, %v413
      %v421 = vpack.c.b16 %v416, %v415
      %v422 = vpack.c.b16 %v418, %v417
      %v431 = vunpack.c.l.b16 %v387
      %v432 = vunpack.c.l.b16 %v388
      %v433 = vunpack.c.l.b16 %v389
      %v434 = vunpack.c.l.b16 %v390
      %v435 = vunpack.c.l.b16 %v391
      %v436 = vunpack.c.l.b16 %v392
      %v437 = vunpack.c.l.b16 %v393
      %v438 = vunpack.c.l.b16 %v394
      %v439 = vpack.c.b16 %v432, %v431
      %v440 = vpack.c.b16 %v434, %v433
      %v441 = vpack.c.b16 %v436, %v435
      %v442 = vpack.c.b16 %v438, %v437
      %vm443 = vcmask 130048
      %v445 = vsel %vm443, %v419, 0
      %v448 = vsel %vm443, %v420, 0
      %v451 = vsel %vm443, %v421, 0
      %v454 = vsel %vm443, %v422, 0
      %v457 = vsel %vm443, %v439, 0
      %v460 = vsel %vm443, %v440, 0
      %v463 = vsel %vm443, %v441, 0
      %v466 = vsel %vm443, %v442, 0
      %468 = vmatprep.subr.bf16.mxu0 0
      %469 = vmatpush1.bf16.xpose.msra.mxu0 %v457
      %470 = vmatprep.subr.bf16.mxu0 0
      %471 = vmatpush1.bf16.xpose.msra.mxu0 %v460
      %472 = vmatprep.subr.bf16.mxu0 0
      %473 = vmatpush1.bf16.xpose.msra.mxu0 %v463
      %474 = vmatprep.subr.bf16.mxu0 0
      %475 = vmatpush1.bf16.xpose.msra.mxu0 %v466
      %476 = vmatprep.subr.bf16.mxu0 0
      %477 = vmatpush1.bf16.xpose.msra.mxu0 0
      %478 = vmatprep.subr.bf16.mxu0 0
      %479 = vmatpush1.bf16.xpose.msra.mxu0 0
      %480 = vmatprep.subr.bf16.mxu0 0
      %481 = vmatpush1.bf16.xpose.msra.mxu0 0
      %482 = vmatprep.subr.bf16.mxu0 0
      %483 = vmatpush1.bf16.xpose.msra.mxu0 0
      %484 = vmatprep.subr.bf16.mxu0 0
      %485 = vmatpush1.bf16.xpose.msra.mxu0 0
      %486 = vmatprep.subr.bf16.mxu0 0
      %487 = vmatpush1.bf16.xpose.msra.mxu0 0
      %488 = vmatprep.subr.bf16.mxu0 0
      %489 = vmatpush1.bf16.xpose.msra.mxu0 0
      %490 = vmatprep.subr.bf16.mxu0 0
      %491 = vmatpush1.bf16.xpose.msra.mxu0 0
      %492 = vmatprep.subr.bf16.mxu0 0
      %493 = vmatpush1.bf16.xpose.msra.mxu0 0
      %494 = vmatprep.subr.bf16.mxu0 0
      %495 = vmatpush1.bf16.xpose.msra.mxu0 0
      %496 = vmatprep.subr.bf16.mxu0 0
      %497 = vmatpush1.bf16.xpose.msra.mxu0 0
      %498 = vmatprep.subr.bf16.mxu0 0
      %499 = vmatpush1.bf16.xpose.msra.mxu0 0
      %500 = vmatprep.mubr.bf16.mxu0 0
      %501 = vmatmul.mubr.bf16.gmra.mrb[0].mxu0 %v445
      %v502 = vpop.f32.mrb[0].mxu0
      %v503 = vadd.f32 0.0, %v502
      %v504 = vpop.f32.mrb[0].mxu0
      %v505 = vpop.f32.mrb[0].mxu0
      %v506 = vadd.f32 0.0, %v505
      %v507 = vpop.f32.mrb[0].mxu0
      %508 = vmatprep.mubr.bf16.mxu0 0
      %509 = vmatmul.mubr.bf16.gmra.mrb[0].mxu0 %v448
      %v510 = vpop.f32.mrb[0].mxu0
      %v511 = vadd.f32 0.0, %v510
      %v512 = vpop.f32.mrb[0].mxu0
      %v513 = vpop.f32.mrb[0].mxu0
      %v514 = vadd.f32 0.0, %v513
      %v515 = vpop.f32.mrb[0].mxu0
      %516 = vmatprep.mubr.bf16.mxu0 0
      %517 = vmatmul.mubr.bf16.gmra.mrb[0].mxu0 %v451
      %v518 = vpop.f32.mrb[0].mxu0
      %v519 = vadd.f32 0.0, %v518
      %v520 = vpop.f32.mrb[0].mxu0
      %v521 = vpop.f32.mrb[0].mxu0
      %v522 = vadd.f32 0.0, %v521
      %v523 = vpop.f32.mrb[0].mxu0
      %524 = vmatprep.mubr.bf16.mxu0 0
      %525 = vmatmul.mubr.bf16.gmra.mrb[0].mxu0 %v454
      %v526 = vpop.f32.mrb[0].mxu0
      %v527 = vadd.f32 0.0, %v526
      %v528 = vpop.f32.mrb[0].mxu0
      %v529 = vpop.f32.mrb[0].mxu0
      %v530 = vadd.f32 0.0, %v529
      %v531 = vpop.f32.mrb[0].mxu0
      %532 = vdwg.mxu0
      %v533 = vmul.f32 %v503, 0.25
      %v534 = vmul.f32 %v506, 0.25
      %v535 = vmul.f32 %v511, 0.25
      %v536 = vmul.f32 %v514, 0.25
      %v537 = vmul.f32 %v519, 0.25
      %v538 = vmul.f32 %v522, 0.25
      %v539 = vmul.f32 %v527, 0.25
      %v540 = vmul.f32 %v530, 0.25
      %v541 = vld [vmem:[#allocation2] sm:$0xff]
      %v542 = vld [vmem:[#allocation2 + $0x8] sm:$0xff]
      %v543 = vld [vmem:[#allocation2 + $0x10] sm:$0xff]
      %v544 = vld [vmem:[#allocation2 + $0x18] sm:$0xff]
      %v545 = vld [vmem:[#allocation2 + $0x20] sm:$0xff]
      %v546 = vld [vmem:[#allocation2 + $0x28] sm:$0xff]
      %v547 = vld [vmem:[#allocation2 + $0x30] sm:$0xff]
      %v548 = vld [vmem:[#allocation2 + $0x38] sm:$0xff]
      %vm549 = vcmask 523264
      %v550 = vsel %vm549, %v533, -inf
      %551 = vmax.xlane.f32.xlu0 %v550
      %v552 = vpop.xlane.xlu0 %551
      %v553 = vsel %vm549, %v534, -inf
      %554 = vmax.xlane.f32.xlu0 %v553
      %v555 = vpop.xlane.xlu0 %554
      %v556 = vsel %vm549, %v535, -inf
      %557 = vmax.xlane.f32.xlu0 %v556
      %v558 = vpop.xlane.xlu0 %557
      %v559 = vsel %vm549, %v536, -inf
      %560 = vmax.xlane.f32.xlu0 %v559
      %v561 = vpop.xlane.xlu0 %560
      %v562 = vsel %vm549, %v537, -inf
      %563 = vmax.xlane.f32.xlu0 %v562
      %v564 = vpop.xlane.xlu0 %563
      %v565 = vsel %vm549, %v538, -inf
      %566 = vmax.xlane.f32.xlu0 %v565
      %v567 = vpop.xlane.xlu0 %566
      %v568 = vsel %vm549, %v539, -inf
      %569 = vmax.xlane.f32.xlu0 %v568
      %v570 = vpop.xlane.xlu0 %569
      %v571 = vsel %vm549, %v540, -inf
      %572 = vmax.xlane.f32.xlu0 %v571
      %v573 = vpop.xlane.xlu0 %572
      %v574 = vmax.f32 %v541, %v552
      %v575 = vmax.f32 %v542, %v555
      %v576 = vmax.f32 %v543, %v558
      %v577 = vmax.f32 %v544, %v561
      %v578 = vmax.f32 %v545, %v564
      %v579 = vmax.f32 %v546, %v567
      %v580 = vmax.f32 %v547, %v570
      %v581 = vmax.f32 %v548, %v573
      %v582 = vsub.f32 %v541, %v574
      %v583 = vsub.f32 %v542, %v575
      %v584 = vsub.f32 %v543, %v576
      %v585 = vsub.f32 %v544, %v577
      %v586 = vsub.f32 %v545, %v578
      %v587 = vsub.f32 %v546, %v579
      %v588 = vsub.f32 %v547, %v580
      %v589 = vsub.f32 %v548, %v581
      %v590 = vmul.f32 %v582, 1.442695
      %v591 = vpow.pop %v590
      %v592 = vmul.f32 %v583, 1.442695
      %v593 = vpow.pop %v592
      %v594 = vmul.f32 %v584, 1.442695
      %v595 = vpow.pop %v594
      %v596 = vmul.f32 %v585, 1.442695
      %v597 = vpow.pop %v596
      %v598 = vmul.f32 %v586, 1.442695
      %v599 = vpow.pop %v598
      %v600 = vmul.f32 %v587, 1.442695
      %v601 = vpow.pop %v600
      %v602 = vmul.f32 %v588, 1.442695
      %v603 = vpow.pop %v602
      %v604 = vmul.f32 %v589, 1.442695
      %v605 = vpow.pop %v604
      %607 = vset.pattern.permute.xlu0 0
      %608 = vperm.xlu0 %607, %v574
      %v609 = vpop.permute.xlu0 %608
      %612 = vset.pattern.permute.xlu0 0
      %613 = vperm.xlu0 %612, %v575
      %v614 = vpop.permute.xlu0 %613
      %617 = vset.pattern.permute.xlu0 0
      %618 = vperm.xlu0 %617, %v576
      %v619 = vpop.permute.xlu0 %618
      %622 = vset.pattern.permute.xlu0 0
      %623 = vperm.xlu0 %622, %v577
      %v624 = vpop.permute.xlu0 %623
      %627 = vset.pattern.permute.xlu0 0
      %628 = vperm.xlu0 %627, %v578
      %v629 = vpop.permute.xlu0 %628
      %632 = vset.pattern.permute.xlu0 0
      %633 = vperm.xlu0 %632, %v579
      %v634 = vpop.permute.xlu0 %633
      %637 = vset.pattern.permute.xlu0 0
      %638 = vperm.xlu0 %637, %v580
      %v639 = vpop.permute.xlu0 %638
      %642 = vset.pattern.permute.xlu0 0
      %643 = vperm.xlu0 %642, %v581
      %v644 = vpop.permute.xlu0 %643
      %v646 = vsub.f32 %v533, %v609
      %v647 = vsub.f32 %v534, %v614
      %v648 = vsub.f32 %v535, %v619
      %v649 = vsub.f32 %v536, %v624
      %v650 = vsub.f32 %v537, %v629
      %v651 = vsub.f32 %v538, %v634
      %v652 = vsub.f32 %v539, %v639
      %v653 = vsub.f32 %v540, %v644
      %v654 = vmul.f32 %v646, 1.442695
      %v655 = vpow.pop %v654
      %v656 = vmul.f32 %v647, 1.442695
      %v657 = vpow.pop %v656
      %v658 = vmul.f32 %v648, 1.442695
      %v659 = vpow.pop %v658
      %v660 = vmul.f32 %v649, 1.442695
      %v661 = vpow.pop %v660
      %v662 = vmul.f32 %v650, 1.442695
      %v663 = vpow.pop %v662
      %v664 = vmul.f32 %v651, 1.442695
      %v665 = vpow.pop %v664
      %v666 = vmul.f32 %v652, 1.442695
      %v667 = vpow.pop %v666
      %v668 = vmul.f32 %v653, 1.442695
      %v669 = vpow.pop %v668
      %v670 = vld [vmem:[#allocation3] sm:$0xff]
      %v671 = vld [vmem:[#allocation3 + $0x8] sm:$0xff]
      %v672 = vld [vmem:[#allocation3 + $0x10] sm:$0xff]
      %v673 = vld [vmem:[#allocation3 + $0x18] sm:$0xff]
      %v674 = vld [vmem:[#allocation3 + $0x20] sm:$0xff]
      %v675 = vld [vmem:[#allocation3 + $0x28] sm:$0xff]
      %v676 = vld [vmem:[#allocation3 + $0x30] sm:$0xff]
      %v677 = vld [vmem:[#allocation3 + $0x38] sm:$0xff]
      %v678 = vmul.f32 %v591, %v670
      %v679 = vmul.f32 %v593, %v671
      %v680 = vmul.f32 %v595, %v672
      %v681 = vmul.f32 %v597, %v673
      %v682 = vmul.f32 %v599, %v674
      %v683 = vmul.f32 %v601, %v675
      %v684 = vmul.f32 %v603, %v676
      %v685 = vmul.f32 %v605, %v677
      %v686 = vsel %vm549, %v655, 0.0
      %687 = vadd.xlane.f32.xlu0 %v686
      %v688 = vpop.xlane.xlu0 %687
      %v689 = vsel %vm549, %v657, 0.0
      %690 = vadd.xlane.f32.xlu0 %v689
      %v691 = vpop.xlane.xlu0 %690
      %v692 = vsel %vm549, %v659, 0.0
      %693 = vadd.xlane.f32.xlu0 %v692
      %v694 = vpop.xlane.xlu0 %693
      %v695 = vsel %vm549, %v661, 0.0
      %696 = vadd.xlane.f32.xlu0 %v695
      %v697 = vpop.xlane.xlu0 %696
      %v698 = vsel %vm549, %v663, 0.0
      %699 = vadd.xlane.f32.xlu0 %v698
      %v700 = vpop.xlane.xlu0 %699
      %v701 = vsel %vm549, %v665, 0.0
      %702 = vadd.xlane.f32.xlu0 %v701
      %v703 = vpop.xlane.xlu0 %702
      %v704 = vsel %vm549, %v667, 0.0
      %705 = vadd.xlane.f32.xlu0 %v704
      %v706 = vpop.xlane.xlu0 %705
      %v707 = vsel %vm549, %v669, 0.0
      %708 = vadd.xlane.f32.xlu0 %v707
      %v709 = vpop.xlane.xlu0 %708
      %v710 = vadd.f32 %v678, %v688
      %v711 = vadd.f32 %v679, %v691
      %v712 = vadd.f32 %v680, %v694
      %v713 = vadd.f32 %v681, %v697
      %v714 = vadd.f32 %v682, %v700
      %v715 = vadd.f32 %v683, %v703
      %v716 = vadd.f32 %v684, %v706
      %v717 = vadd.f32 %v685, %v709
      %vm718 = vcmask 7168
      %719 = vst.msk [vmem:[#allocation3] sm:$0xff] %vm718, %v710
      %720 = vst.msk [vmem:[#allocation3 + $0x8] sm:$0xff] %vm718, %v711
      %721 = vst.msk [vmem:[#allocation3 + $0x10] sm:$0xff] %vm718, %v712
      %722 = vst.msk [vmem:[#allocation3 + $0x18] sm:$0xff] %vm718, %v713
      %723 = vst.msk [vmem:[#allocation3 + $0x20] sm:$0xff] %vm718, %v714
      %724 = vst.msk [vmem:[#allocation3 + $0x28] sm:$0xff] %vm718, %v715
      %725 = vst.msk [vmem:[#allocation3 + $0x30] sm:$0xff] %vm718, %v716
      %726 = vst.msk [vmem:[#allocation3 + $0x38] sm:$0xff] %vm718, %v717
      %v727 = vld [vmem:[#allocation4] sm:$0xff]
      %v728 = vld [vmem:[#allocation4 + $0x8] sm:$0xff]
      %v729 = vld [vmem:[#allocation4 + $0x10] sm:$0xff]
      %v730 = vld [vmem:[#allocation4 + $0x18] sm:$0xff]
      %v731 = vld [vmem:[#allocation4 + $0x20] sm:$0xff]
      %v732 = vld [vmem:[#allocation4 + $0x28] sm:$0xff]
      %v733 = vld [vmem:[#allocation4 + $0x30] sm:$0xff]
      %v734 = vld [vmem:[#allocation4 + $0x38] sm:$0xff]
      %736 = vset.pattern.permute.xlu0 0
      %737 = vperm.xlu0 %736, %v591
      %v738 = vpop.permute.xlu0 %737
      %741 = vset.pattern.permute.xlu0 0
      %742 = vperm.xlu0 %741, %v593
      %v743 = vpop.permute.xlu0 %742
      %746 = vset.pattern.permute.xlu0 0
      %747 = vperm.xlu0 %746, %v595
      %v748 = vpop.permute.xlu0 %747
      %751 = vset.pattern.permute.xlu0 0
      %752 = vperm.xlu0 %751, %v597
      %v753 = vpop.permute.xlu0 %752
      %756 = vset.pattern.permute.xlu0 0
      %757 = vperm.xlu0 %756, %v599
      %v758 = vpop.permute.xlu0 %757
      %761 = vset.pattern.permute.xlu0 0
      %762 = vperm.xlu0 %761, %v601
      %v763 = vpop.permute.xlu0 %762
      %766 = vset.pattern.permute.xlu0 0
      %767 = vperm.xlu0 %766, %v603
      %v768 = vpop.permute.xlu0 %767
      %771 = vset.pattern.permute.xlu0 0
      %772 = vperm.xlu0 %771, %v605
      %v773 = vpop.permute.xlu0 %772
      %v775 = vmul.f32 %v738, %v727
      %v776 = vmul.f32 %v743, %v728
      %v777 = vmul.f32 %v748, %v729
      %v778 = vmul.f32 %v753, %v730
      %v779 = vmul.f32 %v758, %v731
      %v780 = vmul.f32 %v763, %v732
      %v781 = vmul.f32 %v768, %v733
      %v782 = vmul.f32 %v773, %v734
      %v783 = vpack.c.bf16 %v657, %v655
      %v784 = vpack.c.bf16 %v661, %v659
      %v785 = vpack.c.bf16 %v665, %v663
      %v786 = vpack.c.bf16 %v669, %v667
      %v795 = vunpack.c.l.b16 %v395
      %v796 = vunpack.c.l.b16 %v396
      %v797 = vunpack.c.l.b16 %v397
      %v798 = vunpack.c.l.b16 %v398
      %v799 = vunpack.c.l.b16 %v399
      %v800 = vunpack.c.l.b16 %v400
      %v801 = vunpack.c.l.b16 %v401
      %v802 = vunpack.c.l.b16 %v402
      %v803 = vpack.c.b16 %v796, %v795
      %v804 = vpack.c.b16 %v798, %v797
      %v805 = vpack.c.b16 %v800, %v799
      %v806 = vpack.c.b16 %v802, %v801
      %v812 = vsel %vm549, %v783, 0
      %v815 = vsel %vm549, %v784, 0
      %v818 = vsel %vm549, %v785, 0
      %v821 = vsel %vm549, %v786, 0
      %823 = vmatprep.subr.bf16.mxu0 0
      %824 = vmatpush1.bf16.msra.mxu0 %v803
      %825 = vmatprep.subr.bf16.mxu0 0
      %826 = vmatpush1.bf16.msra.mxu0 %v804
      %827 = vmatprep.subr.bf16.mxu0 0
      %828 = vmatpush1.bf16.msra.mxu0 %v805
      %829 = vmatprep.subr.bf16.mxu0 0
      %830 = vmatpush1.bf16.msra.mxu0 %v806
      %831 = vmatprep.subr.bf16.mxu0 0
      %832 = vmatpush1.bf16.msra.mxu0 0
      %833 = vmatprep.subr.bf16.mxu0 0
      %834 = vmatpush1.bf16.msra.mxu0 0
      %835 = vmatprep.subr.bf16.mxu0 0
      %836 = vmatpush1.bf16.msra.mxu0 0
      %837 = vmatprep.subr.bf16.mxu0 0
      %838 = vmatpush1.bf16.msra.mxu0 0
      %839 = vmatprep.subr.bf16.mxu0 0
      %840 = vmatpush1.bf16.msra.mxu0 0
      %841 = vmatprep.subr.bf16.mxu0 0
      %842 = vmatpush1.bf16.msra.mxu0 0
      %843 = vmatprep.subr.bf16.mxu0 0
      %844 = vmatpush1.bf16.msra.mxu0 0
      %845 = vmatprep.subr.bf16.mxu0 0
      %846 = vmatpush1.bf16.msra.mxu0 0
      %847 = vmatprep.subr.bf16.mxu0 0
      %848 = vmatpush1.bf16.msra.mxu0 0
      %849 = vmatprep.subr.bf16.mxu0 0
      %850 = vmatpush1.bf16.msra.mxu0 0
      %851 = vmatprep.subr.bf16.mxu0 0
      %852 = vmatpush1.bf16.msra.mxu0 0
      %853 = vmatprep.subr.bf16.mxu0 0
      %854 = vmatpush1.bf16.msra.mxu0 0
      %855 = vmatprep.mubr.bf16.mxu0 0
      %856 = vmatmul.mubr.bf16.gmra.mrb[0].mxu0 %v812
      %v857 = vpop.f32.mrb[0].mxu0
      %v858 = vadd.f32 0.0, %v857
      %v859 = vpop.f32.mrb[0].mxu0
      %v860 = vpop.f32.mrb[0].mxu0
      %v861 = vadd.f32 0.0, %v860
      %v862 = vpop.f32.mrb[0].mxu0
      %863 = vmatprep.mubr.bf16.mxu0 0
      %864 = vmatmul.mubr.bf16.gmra.mrb[0].mxu0 %v815
      %v865 = vpop.f32.mrb[0].mxu0
      %v866 = vadd.f32 0.0, %v865
      %v867 = vpop.f32.mrb[0].mxu0
      %v868 = vpop.f32.mrb[0].mxu0
      %v869 = vadd.f32 0.0, %v868
      %v870 = vpop.f32.mrb[0].mxu0
      %871 = vmatprep.mubr.bf16.mxu0 0
      %872 = vmatmul.mubr.bf16.gmra.mrb[0].mxu0 %v818
      %v873 = vpop.f32.mrb[0].mxu0
      %v874 = vadd.f32 0.0, %v873
      %v875 = vpop.f32.mrb[0].mxu0
      %v876 = vpop.f32.mrb[0].mxu0
      %v877 = vadd.f32 0.0, %v876
      %v878 = vpop.f32.mrb[0].mxu0
      %879 = vmatprep.mubr.bf16.mxu0 0
      %880 = vmatmul.mubr.bf16.gmra.mrb[0].mxu0 %v821
      %v881 = vpop.f32.mrb[0].mxu0
      %v882 = vadd.f32 0.0, %v881
      %v883 = vpop.f32.mrb[0].mxu0
      %v884 = vpop.f32.mrb[0].mxu0
      %v885 = vadd.f32 0.0, %v884
      %v886 = vpop.f32.mrb[0].mxu0
      %887 = vdwg.mxu0
      %v888 = vadd.f32 %v775, %v858
      %v889 = vadd.f32 %v776, %v861
      %v890 = vadd.f32 %v777, %v866
      %v891 = vadd.f32 %v778, %v869
      %v892 = vadd.f32 %v779, %v874
      %v893 = vadd.f32 %v780, %v877
      %v894 = vadd.f32 %v781, %v882
      %v895 = vadd.f32 %v782, %v885
      %896 = vst.msk [vmem:[#allocation4] sm:$0xff] %vm443, %v888
      %897 = vst.msk [vmem:[#allocation4 + $0x8] sm:$0xff] %vm443, %v889
      %898 = vst.msk [vmem:[#allocation4 + $0x10] sm:$0xff] %vm443, %v890
      %899 = vst.msk [vmem:[#allocation4 + $0x18] sm:$0xff] %vm443, %v891
      %900 = vst.msk [vmem:[#allocation4 + $0x20] sm:$0xff] %vm443, %v892
      %901 = vst.msk [vmem:[#allocation4 + $0x28] sm:$0xff] %vm443, %v893
      %902 = vst.msk [vmem:[#allocation4 + $0x30] sm:$0xff] %vm443, %v894
      %903 = vst.msk [vmem:[#allocation4 + $0x38] sm:$0xff] %vm443, %v895
      %904 = vst.msk [vmem:[#allocation2] sm:$0xff] %vm718, %v574
      %905 = vst.msk [vmem:[#allocation2 + $0x8] sm:$0xff] %vm718, %v575
      %906 = vst.msk [vmem:[#allocation2 + $0x10] sm:$0xff] %vm718, %v576
      %907 = vst.msk [vmem:[#allocation2 + $0x18] sm:$0xff] %vm718, %v577
      %908 = vst.msk [vmem:[#allocation2 + $0x20] sm:$0xff] %vm718, %v578
      %909 = vst.msk [vmem:[#allocation2 + $0x28] sm:$0xff] %vm718, %v579
      %910 = vst.msk [vmem:[#allocation2 + $0x30] sm:$0xff] %vm718, %v580
      %911 = vst.msk [vmem:[#allocation2 + $0x38] sm:$0xff] %vm718, %v581
      // Predicated region
      $region37: #{_lambda_.28} parent=31 // pred_check
        %p912 = pneg %p349
      $region38: #{_lambda_.28} parent=31 // pred_check_branch
        %914 = sbr.rel (%p912) target = $region40
      $region39: #{_lambda_.28} parent=31 // pred_region
        %v915 = vld [vmem:[#allocation4] sm:$0xff]
        %v916 = vld [vmem:[#allocation4 + $0x8] sm:$0xff]
        %v917 = vld [vmem:[#allocation4 + $0x10] sm:$0xff]
        %v918 = vld [vmem:[#allocation4 + $0x18] sm:$0xff]
        %v919 = vld [vmem:[#allocation4 + $0x20] sm:$0xff]
        %v920 = vld [vmem:[#allocation4 + $0x28] sm:$0xff]
        %v921 = vld [vmem:[#allocation4 + $0x30] sm:$0xff]
        %v922 = vld [vmem:[#allocation4 + $0x38] sm:$0xff]
        %v923 = vld [vmem:[#allocation3] sm:$0xff]
        %v924 = vld [vmem:[#allocation3 + $0x8] sm:$0xff]
        %v925 = vld [vmem:[#allocation3 + $0x10] sm:$0xff]
        %v926 = vld [vmem:[#allocation3 + $0x18] sm:$0xff]
        %v927 = vld [vmem:[#allocation3 + $0x20] sm:$0xff]
        %v928 = vld [vmem:[#allocation3 + $0x28] sm:$0xff]
        %v929 = vld [vmem:[#allocation3 + $0x30] sm:$0xff]
        %v930 = vld [vmem:[#allocation3 + $0x38] sm:$0xff]
        %v931 = vrcp.pop %v923
        %v932 = vrcp.pop %v924
        %v933 = vrcp.pop %v925
        %v934 = vrcp.pop %v926
        %v935 = vrcp.pop %v927
        %v936 = vrcp.pop %v928
        %v937 = vrcp.pop %v929
        %v938 = vrcp.pop %v930
        %940 = vset.pattern.permute.xlu0 0
        %941 = vperm.xlu0 %940, %v931
        %v942 = vpop.permute.xlu0 %941
        %945 = vset.pattern.permute.xlu0 0
        %946 = vperm.xlu0 %945, %v932
        %v947 = vpop.permute.xlu0 %946
        %950 = vset.pattern.permute.xlu0 0
        %951 = vperm.xlu0 %950, %v933
        %v952 = vpop.permute.xlu0 %951
        %955 = vset.pattern.permute.xlu0 0
        %956 = vperm.xlu0 %955, %v934
        %v957 = vpop.permute.xlu0 %956
        %960 = vset.pattern.permute.xlu0 0
        %961 = vperm.xlu0 %960, %v935
        %v962 = vpop.permute.xlu0 %961
        %965 = vset.pattern.permute.xlu0 0
        %966 = vperm.xlu0 %965, %v936
        %v967 = vpop.permute.xlu0 %966
        %970 = vset.pattern.permute.xlu0 0
        %971 = vperm.xlu0 %970, %v937
        %v972 = vpop.permute.xlu0 %971
        %975 = vset.pattern.permute.xlu0 0
        %976 = vperm.xlu0 %975, %v938
        %v977 = vpop.permute.xlu0 %976
        %v979 = vmul.f32 %v915, %v942
        %v980 = vmul.f32 %v916, %v947
        %v981 = vmul.f32 %v917, %v952
        %v982 = vmul.f32 %v918, %v957
        %v983 = vmul.f32 %v919, %v962
        %v984 = vmul.f32 %v920, %v967
        %v985 = vmul.f32 %v921, %v972
        %v986 = vmul.f32 %v922, %v977
        %v987 = vpack.c.bf16 %v980, %v979
        %v988 = vpack.c.bf16 %v982, %v981
        %v989 = vpack.c.bf16 %v984, %v983
        %v990 = vpack.c.bf16 %v986, %v985
        %v995 = vunpack.c.l.b16 %v987
        %v996 = vunpack.c.h.b16 %v987
        %v997 = vunpack.c.l.b16 %v988
        %v998 = vunpack.c.h.b16 %v988
        %v999 = vunpack.c.l.b16 %v989
        %v1000 = vunpack.c.h.b16 %v989
        %v1001 = vunpack.c.l.b16 %v990
        %v1002 = vunpack.c.h.b16 %v990
        %v1003 = vpack.c.b16 %v995, %v995
        %v1004 = vpack.c.b16 %v996, %v996
        %v1005 = vpack.c.b16 %v997, %v997
        %v1006 = vpack.c.b16 %v998, %v998
        %v1007 = vpack.c.b16 %v999, %v999
        %v1008 = vpack.c.b16 %v1000, %v1000
        %v1009 = vpack.c.b16 %v1001, %v1001
        %v1010 = vpack.c.b16 %v1002, %v1002
        %vm1019 = vcmask 125952
        %1020 = vst.msk [vmem:[%s346] sm:$0xf] %vm1019, %v1003
        %1021 = vst.msk [vmem:[%s346 + $0x4] sm:$0xf] %vm1019, %v1004
        %1022 = vst.msk [vmem:[%s346 + $0x8] sm:$0xf] %vm1019, %v1005
        %1023 = vst.msk [vmem:[%s346 + $0xc] sm:$0xf] %vm1019, %v1006
        %1024 = vst.msk [vmem:[%s346 + $0x10] sm:$0xf] %vm1019, %v1007
        %1025 = vst.msk [vmem:[%s346 + $0x14] sm:$0xf] %vm1019, %v1008
        %1026 = vst.msk [vmem:[%s346 + $0x18] sm:$0xf] %vm1019, %v1009
        %1027 = vst.msk [vmem:[%s346 + $0x1c] sm:$0xf] %vm1019, %v1010
      $region40: #{_lambda_.28} parent=31 // pred_fallthru
        _
      %s1028 = smul.u32 8, %s22
      %p1029 = scmp.lt.s32.totalorder %s20, 1
      %s1030 = scalar_select %p1029, %s20, 1
      %p1031 = scmp.lt.s32.totalorder %s21, 3
      %s1032 = scalar_select %p1031, %s21, 3
      %p1033 = scmp.lt.s32.totalorder %s1028, 7
      %s1034 = scalar_select %p1033, %s1028, 7
      %s1035 = smul.addr %s1032, 8
      %s1036 = sadd.s32 %s1034, %s1035
      %s1037 = smul.addr %s1030, 32
      %s1038 = sadd.s32 %s1036, %s1037
      %s1039 = smul.addr %s1038, 4
      %s1040 = scalar_lea.vmem %s3, %s1039
      // Predicated region
      $region41: #{_lambda_.28} parent=31 // pred_check
        %p1041 = pneg %p152
      $region42: #{_lambda_.28} parent=31 // pred_check_branch
        %1043 = sbr.rel (%p1041) target = $region44
      $region43: #{_lambda_.28} parent=31 // pred_region
        %s1044 = smul.u32 8, %s22
      $region44: #{_lambda_.28} parent=31 // pred_fallthru
        _
    $region32: #{_lambda_.28} parent=5 // pred_fallthru
      _
    %p1045 = scmp.le.s32.totalorder 2, %s9
    // Predicated region
    $region45: #{_lambda_.28} parent=5 // pred_check
      %p1046 = pneg %p1045
    $region46: #{_lambda_.28} parent=5 // pred_check_branch
      %1048 = sbr.rel (%p1046) target = $region48
    $region47: #{_lambda_.28} parent=5 // pred_region
      %s1049 = ssub.s32 %s9, 2
      // Predicated region
      $region49: #{_lambda_.28} parent=47 // pred_check
        %p1050 = pneg %p158
      $region50: #{_lambda_.28} parent=47 // pred_check_branch
        %1052 = sbr.rel (%p1050) target = $region52
      $region51: #{_lambda_.28} parent=47 // pred_region
        %s1053 = smul.u32 8, %s26
        %p1054 = scmp.lt.s32.totalorder %s24, 1
        %s1055 = scalar_select %p1054, %s24, 1
        %p1056 = scmp.lt.s32.totalorder %s25, 3
        %s1057 = scalar_select %p1056, %s25, 3
        %p1058 = scmp.lt.s32.totalorder %s1053, 7
        %s1059 = scalar_select %p1058, %s1053, 7
        %s1060 = smul.addr %s1057, 8
        %s1061 = sadd.s32 %s1059, %s1060
        %s1062 = smul.addr %s1055, 32
        %s1063 = sadd.s32 %s1061, %s1062
        %s1064 = smul.addr %s1063, 4
        %s1065 = scalar_lea.vmem %s3, %s1064
      $region52: #{_lambda_.28} parent=47 // pred_fallthru
        _
    $region48: #{_lambda_.28} parent=5 // pred_fallthru
      _
  $region6: #{_lambda_.28} parent=0 // loop_footer
    %s13 = sadd.s32 1, %s9
  $region7: #{_lambda_.28} parent=0 // loop_footer_branch
    %8 = sbr.rel target = $region3
  $region8: #{_lambda_.28} parent=0 // loop_exit
    _

// kernel: _lambda_.30
$region0: #{_lambda_.30}
  #allocation0 [shape = 'u32[]', space=smem, size = 0x4, offset = 0x4, fixed_abs, tag = 'smem constant byte address 0x4 - core index']
  #allocation1 [shape = 'u32[144,128]{1,0:T(1,128)}', space=vmem, size = 0x12000, scoped, tag = 'internal scratch']
  %s0 = inlined_call_operand.vmem [shape: f32[2,64,64], index: 0, kind: input, shape index: {}]
  %s1 = inlined_call_operand.vmem [shape: f32[2,1,64], index: 1, kind: input, shape index: {}]
  %s2 = inlined_call_operand.vmem [shape: f32[2,1,64], index: 2, kind: input, shape index: {}]
  %s3 = inlined_call_operand.vmem [shape: bf16[64,64], index: 3, kind: input, shape index: {}]
  %s4 = inlined_call_operand.vmem [shape: f32[1,64], index: 4, kind: input, shape index: {}]
  %s5 = inlined_call_operand.vmem [shape: bf16[2,64,64], index: 5, kind: output, shape index: {}]
  %s6 = sld [smem:[#allocation0]]
  $region53: #{_lambda_.30} parent=0
    _
  %s8 = ssub.s32 1, %s6
  %s9 = scalar_select 0, %s8, %s6
  loop: start=0, step=1, limit=4
  $region2: #{_lambda_.30} parent=0 // loop_pre_header
    _
  $region3: #{_lambda_.30} parent=0 // loop_header
    %s11 = sphi 0, %s15
    %p12 = scmp.ge.s32.totalorder %s11, 4
    %s18 = sphi 0, %s37
    %s19 = sphi 0, %s33
    %s20 = sphi 0, %s29
    %s21 = sphi 0, %s18
    %s22 = sphi 0, %s19
    %s23 = sphi 0, %s20
    %s24 = sphi 0, %s21
    %s25 = sphi 0, %s22
    %s26 = sphi 0, %s23
    %s42 = sphi 0, %s44
    %s45 = sphi 0, %s42
    %s46 = sphi 0, %s45
    %s62 = sphi 0, %s46
    %s68 = sphi 0, %s70
    %s71 = sphi 0, %s68
    %s72 = sphi 0, %s71
    %s88 = sphi 0, %s72
    %s94 = sphi 0, %s96
    %s97 = sphi 0, %s94
    %s98 = sphi 0, %s97
    %s114 = sphi 0, %s98
    %s120 = sphi 0, %s122
    %s123 = sphi 0, %s120
    %s124 = sphi 0, %s123
    %s140 = sphi 0, %s124
    %s146 = sphi 0, %s148
    %s149 = sphi 0, %s146
    %s150 = sphi 0, %s149
    %s166 = sphi 0, %s150
    %s176 = sphi 0, %s178
    %s179 = sphi 0, %s176
    %s180 = sphi 0, %s179
    %s196 = sphi 0, %s180
  $region4: #{_lambda_.30} parent=0 // loop_header_branch
    %14 = sbr.rel (%p12) target = $region8
  $region5: #{_lambda_.30} parent=0 // loop_body
    %s16 = ssub.s32 %s11, 1
    %s17 = ssub.s32 %s11, 2
    %s27 = sadd.s32 1, %s20
    %p28 = scmp.ge.s32.totalorder %s27, 1
    %s29 = scalar_select %p28, 0, %s27
    %s30 = sadd.s32 1, %s19
    %s31 = scalar_select %p28, %s30, %s19
    %p32 = scmp.ge.s32.totalorder %s31, 1
    %s33 = scalar_select %p32, 0, %s31
    %s34 = sadd.s32 1, %s18
    %s35 = scalar_select %p32, %s34, %s18
    %p36 = scmp.ge.s32.totalorder %s35, 2
    %s37 = scalar_select %p36, 0, %s35
    %s38 = ssub.s32 %s18, %s37
    %s39 = ssub.s32 %s20, %s29
    %s40 = sor.u32 %s38, %s39
    %p41 = scmp.eq.s32.totalorder %s40, 0
    %s43 = sadd.s32 %s42, 1
    %s44 = scalar_select %p41, %s42, %s43
    %p47 = pneg %p41
    %p48 = scmp.eq.s32.totalorder %s11, 1
    %p49 = por %p47, %p48
    %p50 = scmp.ne.s32.totalorder %s42, %s45
    %p51 = scmp.eq.s32.totalorder %s11, 0
    %p52 = por %p50, %p51
    %p53 = scmp.ne.s32.totalorder %s42, %s45
    %p54 = scmp.eq.s32.totalorder %s16, 1
    %p55 = por %p53, %p54
    %p56 = scmp.ne.s32.totalorder %s45, %s46
    %p57 = scmp.eq.s32.totalorder %s16, 0
    %p58 = por %p56, %p57
    %p59 = scmp.ne.s32.totalorder %s45, %s46
    %p60 = scmp.eq.s32.totalorder %s17, 1
    %p61 = por %p59, %p60
    %p63 = scmp.ne.s32.totalorder %s46, %s62
    %p64 = scmp.eq.s32.totalorder %s17, 0
    %p65 = por %p63, %p64
    %s66 = ssub.s32 %s18, %s37
    %p67 = scmp.eq.s32.totalorder %s66, 0
    %s69 = sadd.s32 %s68, 1
    %s70 = scalar_select %p67, %s68, %s69
    %p73 = pneg %p67
    %p74 = scmp.eq.s32.totalorder %s11, 1
    %p75 = por %p73, %p74
    %p76 = scmp.ne.s32.totalorder %s68, %s71
    %p77 = scmp.eq.s32.totalorder %s11, 0
    %p78 = por %p76, %p77
    %p79 = scmp.ne.s32.totalorder %s68, %s71
    %p80 = scmp.eq.s32.totalorder %s16, 1
    %p81 = por %p79, %p80
    %p82 = scmp.ne.s32.totalorder %s71, %s72
    %p83 = scmp.eq.s32.totalorder %s16, 0
    %p84 = por %p82, %p83
    %p85 = scmp.ne.s32.totalorder %s71, %s72
    %p86 = scmp.eq.s32.totalorder %s17, 1
    %p87 = por %p85, %p86
    %p89 = scmp.ne.s32.totalorder %s72, %s88
    %p90 = scmp.eq.s32.totalorder %s17, 0
    %p91 = por %p89, %p90
    %s92 = ssub.s32 %s18, %s37
    %p93 = scmp.eq.s32.totalorder %s92, 0
    %s95 = sadd.s32 %s94, 1
    %s96 = scalar_select %p93, %s94, %s95
    %p99 = pneg %p93
    %p100 = scmp.eq.s32.totalorder %s11, 1
    %p101 = por %p99, %p100
    %p102 = scmp.ne.s32.totalorder %s94, %s97
    %p103 = scmp.eq.s32.totalorder %s11, 0
    %p104 = por %p102, %p103
    %p105 = scmp.ne.s32.totalorder %s94, %s97
    %p106 = scmp.eq.s32.totalorder %s16, 1
    %p107 = por %p105, %p106
    %p108 = scmp.ne.s32.totalorder %s97, %s98
    %p109 = scmp.eq.s32.totalorder %s16, 0
    %p110 = por %p108, %p109
    %p111 = scmp.ne.s32.totalorder %s97, %s98
    %p112 = scmp.eq.s32.totalorder %s17, 1
    %p113 = por %p111, %p112
    %p115 = scmp.ne.s32.totalorder %s98, %s114
    %p116 = scmp.eq.s32.totalorder %s17, 0
    %p117 = por %p115, %p116
    %s118 = ssub.s32 %s19, %s33
    %p119 = scmp.eq.s32.totalorder %s118, 0
    %s121 = sadd.s32 %s120, 1
    %s122 = scalar_select %p119, %s120, %s121
    %p125 = pneg %p119
    %p126 = scmp.eq.s32.totalorder %s11, 1
    %p127 = por %p125, %p126
    %p128 = scmp.ne.s32.totalorder %s120, %s123
    %p129 = scmp.eq.s32.totalorder %s11, 0
    %p130 = por %p128, %p129
    %p131 = scmp.ne.s32.totalorder %s120, %s123
    %p132 = scmp.eq.s32.totalorder %s16, 1
    %p133 = por %p131, %p132
    %p134 = scmp.ne.s32.totalorder %s123, %s124
    %p135 = scmp.eq.s32.totalorder %s16, 0
    %p136 = por %p134, %p135
    %p137 = scmp.ne.s32.totalorder %s123, %s124
    %p138 = scmp.eq.s32.totalorder %s17, 1
    %p139 = por %p137, %p138
    %p141 = scmp.ne.s32.totalorder %s124, %s140
    %p142 = scmp.eq.s32.totalorder %s17, 0
    %p143 = por %p141, %p142
    %s144 = ssub.s32 %s19, %s33
    %p145 = scmp.eq.s32.totalorder %s144, 0
    %s147 = sadd.s32 %s146, 1
    %s148 = scalar_select %p145, %s146, %s147
    %p151 = pneg %p145
    %p152 = scmp.eq.s32.totalorder %s11, 1
    %p153 = por %p151, %p152
    %p154 = scmp.ne.s32.totalorder %s146, %s149
    %p155 = scmp.eq.s32.totalorder %s11, 0
    %p156 = por %p154, %p155
    %p157 = scmp.ne.s32.totalorder %s146, %s149
    %p158 = scmp.eq.s32.totalorder %s16, 1
    %p159 = por %p157, %p158
    %p160 = scmp.ne.s32.totalorder %s149, %s150
    %p161 = scmp.eq.s32.totalorder %s16, 0
    %p162 = por %p160, %p161
    %p163 = scmp.ne.s32.totalorder %s149, %s150
    %p164 = scmp.eq.s32.totalorder %s17, 1
    %p165 = por %p163, %p164
    %p167 = scmp.ne.s32.totalorder %s150, %s166
    %p168 = scmp.eq.s32.totalorder %s17, 0
    %p169 = por %p167, %p168
    %s170 = ssub.s32 %s18, %s37
    %s171 = ssub.s32 %s20, %s29
    %s172 = sor.u32 %s170, %s171
    %s173 = ssub.s32 %s19, %s33
    %s174 = sor.u32 %s172, %s173
    %p175 = scmp.eq.s32.totalorder %s174, 0
    %s177 = sadd.s32 %s176, 1
    %s178 = scalar_select %p175, %s176, %s177
    %p181 = pneg %p175
    %p182 = scmp.eq.s32.totalorder %s11, 1
    %p183 = por %p181, %p182
    %p184 = scmp.ne.s32.totalorder %s176, %s179
    %p185 = scmp.eq.s32.totalorder %s11, 0
    %p186 = por %p184, %p185
    %p187 = scmp.ne.s32.totalorder %s176, %s179
    %p188 = scmp.eq.s32.totalorder %s16, 1
    %p189 = por %p187, %p188
    %p190 = scmp.ne.s32.totalorder %s179, %s180
    %p191 = scmp.eq.s32.totalorder %s16, 0
    %p192 = por %p190, %p191
    %p193 = scmp.ne.s32.totalorder %s179, %s180
    %p194 = scmp.eq.s32.totalorder %s17, 1
    %p195 = por %p193, %p194
    %p197 = scmp.ne.s32.totalorder %s180, %s196
    %p198 = scmp.eq.s32.totalorder %s17, 0
    %p199 = por %p197, %p198
    %p200 = scmp.le.s32.totalorder 1, %s11
    %p201 = scmp.lt.s32.totalorder %s11, 3
    %p202 = pnand %p200, %p201
    %p203 = pneg %p202
    // Predicated region
    $region9: #{_lambda_.30} parent=5 // pred_check
      _
    $region10: #{_lambda_.30} parent=5 // pred_check_branch
      %205 = sbr.rel (%p202) target = $region12
    $region11: #{_lambda_.30} parent=5 // pred_region
      %s206 = ssub.s32 %s11, 1
      // Predicated region
      $region13: #{_lambda_.30} parent=11 // pred_check
        %p207 = pneg %p136
      $region14: #{_lambda_.30} parent=11 // pred_check_branch
        %209 = sbr.rel (%p207) target = $region16
      $region15: #{_lambda_.30} parent=11 // pred_region
        %p210 = scmp.lt.s32.totalorder %s22, 0
        %s211 = scalar_select %p210, %s22, 0
        %s212 = smul.addr %s211, 4
        %s213 = scalar_lea.vmem %s3, %s212
      $region16: #{_lambda_.30} parent=11 // pred_fallthru
        _
      // Predicated region
      $region17: #{_lambda_.30} parent=11 // pred_check
        %p214 = pneg %p162
      $region18: #{_lambda_.30} parent=11 // pred_check_branch
        %216 = sbr.rel (%p214) target = $region20
      $region19: #{_lambda_.30} parent=11 // pred_region
        %p217 = scmp.lt.s32.totalorder %s22, 0
        %s218 = scalar_select %p217, %s22, 0
        %s219 = scalar_lea.vmem %s4, %s218
      $region20: #{_lambda_.30} parent=11 // pred_fallthru
        _
    $region12: #{_lambda_.30} parent=5 // pred_fallthru
      _
    %p220 = scmp.lt.s32.totalorder %s11, 2
    // Predicated region
    $region21: #{_lambda_.30} parent=5 // pred_check
      %p221 = pneg %p220
    $region22: #{_lambda_.30} parent=5 // pred_check_branch
      %223 = sbr.rel (%p221) target = $region24
    $region23: #{_lambda_.30} parent=5 // pred_region
      // Predicated region
      $region25: #{_lambda_.30} parent=23 // pred_check
        %p224 = pneg %p52
      $region26: #{_lambda_.30} parent=23 // pred_check_branch
        %226 = sbr.rel (%p224) target = $region28
      $region27: #{_lambda_.30} parent=23 // pred_region
        %s227 = smul.u32 8, %s20
        %p228 = scmp.lt.s32.totalorder %s18, 1
        %s229 = scalar_select %p228, %s18, 1
        %p230 = scmp.lt.s32.totalorder %s227, 7
        %s231 = scalar_select %p230, %s227, 7
        %s232 = smul.addr %s229, 8
        %s233 = sadd.s32 %s231, %s232
        %s234 = smul.addr %s233, 8
        %s235 = scalar_lea.vmem %s0, %s234
        %s236 = smul.u32 8, %s20
      $region28: #{_lambda_.30} parent=23 // pred_fallthru
        _
      // Predicated region
      $region29: #{_lambda_.30} parent=23 // pred_check
        %p237 = pneg %p78
      $region30: #{_lambda_.30} parent=23 // pred_check_branch
        %239 = sbr.rel (%p237) target = $region32
      $region31: #{_lambda_.30} parent=23 // pred_region
        %p240 = scmp.lt.s32.totalorder %s18, 1
        %s241 = scalar_select %p240, %s18, 1
        %s242 = scalar_lea.vmem %s1, %s241
      $region32: #{_lambda_.30} parent=23 // pred_fallthru
        _
      // Predicated region
      $region33: #{_lambda_.30} parent=23 // pred_check
        %p243 = pneg %p104
      $region34: #{_lambda_.30} parent=23 // pred_check_branch
        %245 = sbr.rel (%p243) target = $region36
      $region35: #{_lambda_.30} parent=23 // pred_region
        %p246 = scmp.lt.s32.totalorder %s18, 1
        %s247 = scalar_select %p246, %s18, 1
        %s248 = scalar_lea.vmem %s2, %s247
      $region36: #{_lambda_.30} parent=23 // pred_fallthru
        _
    $region24: #{_lambda_.30} parent=5 // pred_fallthru
      _
    %p249 = scmp.le.s32.totalorder 1, %s11
    %p250 = scmp.lt.s32.totalorder %s11, 3
    %p251 = pnand %p249, %p250
    %p252 = pneg %p251
    // Predicated region
    $region37: #{_lambda_.30} parent=5 // pred_check
      _
    $region38: #{_lambda_.30} parent=5 // pred_check_branch
      %254 = sbr.rel (%p251) target = $region40
    $region39: #{_lambda_.30} parent=5 // pred_region
      %s255 = ssub.s32 %s11, 1
      %s256 = smul.u32 8, %s23
      %p257 = scmp.lt.s32.totalorder %s21, 1
      %s258 = scalar_select %p257, %s21, 1
      %p259 = scmp.lt.s32.totalorder %s256, 7
      %s260 = scalar_select %p259, %s256, 7
      %s261 = smul.addr %s258, 8
      %s262 = sadd.s32 %s260, %s261
      %s263 = smul.addr %s262, 8
      %s264 = scalar_lea.vmem %s0, %s263
      %p265 = pneg %p58
      %p266 = pneg %p55
      %p267 = scmp.lt.s32.totalorder %s21, 1
      %s268 = scalar_select %p267, %s21, 1
      %s269 = scalar_lea.vmem %s1, %s268
      %p270 = pneg %p84
      %p271 = pneg %p81
      %p272 = scmp.lt.s32.totalorder %s21, 1
      %s273 = scalar_select %p272, %s21, 1
      %s274 = scalar_lea.vmem %s2, %s273
      %p275 = pneg %p110
      %p276 = pneg %p107
      %p277 = scmp.lt.s32.totalorder %s22, 0
      %s278 = scalar_select %p277, %s22, 0
      %s279 = smul.addr %s278, 4
      %s280 = scalar_lea.vmem %s3, %s279
      %p281 = pneg %p136
      %p282 = pneg %p133
      %p283 = scmp.lt.s32.totalorder %s22, 0
      %s284 = scalar_select %p283, %s22, 0
      %s285 = scalar_lea.vmem %s4, %s284
      %p286 = pneg %p162
      %p287 = pneg %p159
      %p288 = pneg %p192
      %p289 = pneg %p189
      %s290 = smul.u32 8, %s23
      %p291 = scmp.lt.s32.totalorder %s21, 1
      %s292 = scalar_select %p291, %s21, 1
      %p293 = scmp.lt.s32.totalorder %s290, 7
      %s294 = scalar_select %p293, %s290, 7
      %p295 = scmp.lt.s32.totalorder %s22, 0
      %s296 = scalar_select %p295, %s22, 0
      %s297 = sadd.s32 %s296, %s294
      %s298 = smul.addr %s292, 8
      %s299 = sadd.s32 %s297, %s298
      %s300 = smul.addr %s299, 4
      %s301 = scalar_lea.vmem %s5, %s300
      %s302 = smul.u32 8, %s23
      %p303 = scmp.lt.s32.totalorder %s21, 1
      %s304 = scalar_select %p303, %s21, 1
      %p305 = scmp.lt.s32.totalorder %s302, 7
      %s306 = scalar_select %p305, %s302, 7
      %s307 = smul.addr %s304, 8
      %s308 = sadd.s32 %s306, %s307
      %s309 = smul.addr %s308, 8
      %s310 = scalar_lea.vmem %s0, %s309
      %s311 = smul.u32 8, %s23
      %p312 = scmp.lt.s32.totalorder %s21, 1
      %s313 = scalar_select %p312, %s21, 1
      %s314 = scalar_lea.vmem %s1, %s313
      %p315 = scmp.lt.s32.totalorder %s21, 1
      %s316 = scalar_select %p315, %s21, 1
      %s317 = scalar_lea.vmem %s2, %s316
      %p318 = scmp.lt.s32.totalorder %s22, 0
      %s319 = scalar_select %p318, %s22, 0
      %s320 = smul.addr %s319, 4
      %s321 = scalar_lea.vmem %s3, %s320
      %p322 = scmp.lt.s32.totalorder %s22, 0
      %s323 = scalar_select %p322, %s22, 0
      %s324 = scalar_lea.vmem %s4, %s323
      %s325 = smul.u32 8, %s23
      %p326 = scmp.lt.s32.totalorder %s21, 1
      %s327 = scalar_select %p326, %s21, 1
      %p328 = scmp.lt.s32.totalorder %s325, 7
      %s329 = scalar_select %p328, %s325, 7
      %p330 = scmp.lt.s32.totalorder %s22, 0
      %s331 = scalar_select %p330, %s22, 0
      %s332 = sadd.s32 %s331, %s329
      %s333 = smul.addr %s327, 8
      %s334 = sadd.s32 %s332, %s333
      %s335 = smul.addr %s334, 4
      %s336 = scalar_lea.vmem %s5, %s335
      %s337 = smul.u32 8, %s23
      %v339 = vld [vmem:[%s310] sm:$0xff]
      %v340 = vld [vmem:[%s310 + $0x8] sm:$0xff]
      %v341 = vld [vmem:[%s310 + $0x10] sm:$0xff]
      %v342 = vld [vmem:[%s310 + $0x18] sm:$0xff]
      %v343 = vld [vmem:[%s310 + $0x20] sm:$0xff]
      %v344 = vld [vmem:[%s310 + $0x28] sm:$0xff]
      %v345 = vld [vmem:[%s310 + $0x30] sm:$0xff]
      %v346 = vld [vmem:[%s310 + $0x38] sm:$0xff]
      %vm347 = vcmask 523264
      %v348 = vsel %vm347, %v339, 0.0
      %349 = vadd.xlane.f32.xlu0 %v348
      %v350 = vpop.xlane.xlu0 %349
      %v351 = vsel %vm347, %v340, 0.0
      %352 = vadd.xlane.f32.xlu0 %v351
      %v353 = vpop.xlane.xlu0 %352
      %v354 = vsel %vm347, %v341, 0.0
      %355 = vadd.xlane.f32.xlu0 %v354
      %v356 = vpop.xlane.xlu0 %355
      %v357 = vsel %vm347, %v342, 0.0
      %358 = vadd.xlane.f32.xlu0 %v357
      %v359 = vpop.xlane.xlu0 %358
      %v360 = vsel %vm347, %v343, 0.0
      %361 = vadd.xlane.f32.xlu0 %v360
      %v362 = vpop.xlane.xlu0 %361
      %v363 = vsel %vm347, %v344, 0.0
      %364 = vadd.xlane.f32.xlu0 %v363
      %v365 = vpop.xlane.xlu0 %364
      %v366 = vsel %vm347, %v345, 0.0
      %367 = vadd.xlane.f32.xlu0 %v366
      %v368 = vpop.xlane.xlu0 %367
      %v369 = vsel %vm347, %v346, 0.0
      %370 = vadd.xlane.f32.xlu0 %v369
      %v371 = vpop.xlane.xlu0 %370
      %v372 = vrcp.pop 64.0
      %v373 = vmul.f32 %v350, %v372
      %v374 = vmul.f32 %v353, %v372
      %v375 = vmul.f32 %v356, %v372
      %v376 = vmul.f32 %v359, %v372
      %v377 = vmul.f32 %v362, %v372
      %v378 = vmul.f32 %v365, %v372
      %v379 = vmul.f32 %v368, %v372
      %v380 = vmul.f32 %v371, %v372
      %v381 = vsub.f32 %v339, %v373
      %v382 = vsub.f32 %v340, %v374
      %v383 = vsub.f32 %v341, %v375
      %v384 = vsub.f32 %v342, %v376
      %v385 = vsub.f32 %v343, %v377
      %v386 = vsub.f32 %v344, %v378
      %v387 = vsub.f32 %v345, %v379
      %v388 = vsub.f32 %v346, %v380
      %v389 = vmul.f32 %v381, %v381
      %v390 = vmul.f32 %v382, %v382
      %v391 = vmul.f32 %v383, %v383
      %v392 = vmul.f32 %v384, %v384
      %v393 = vmul.f32 %v385, %v385
      %v394 = vmul.f32 %v386, %v386
      %v395 = vmul.f32 %v387, %v387
      %v396 = vmul.f32 %v388, %v388
      %v397 = vsel %vm347, %v389, 0.0
      %398 = vadd.xlane.f32.xlu0 %v397
      %v399 = vpop.xlane.xlu0 %398
      %v400 = vsel %vm347, %v390, 0.0
      %401 = vadd.xlane.f32.xlu0 %v400
      %v402 = vpop.xlane.xlu0 %401
      %v403 = vsel %vm347, %v391, 0.0
      %404 = vadd.xlane.f32.xlu0 %v403
      %v405 = vpop.xlane.xlu0 %404
      %v406 = vsel %vm347, %v392, 0.0
      %407 = vadd.xlane.f32.xlu0 %v406
      %v408 = vpop.xlane.xlu0 %407
      %v409 = vsel %vm347, %v393, 0.0
      %410 = vadd.xlane.f32.xlu0 %v409
      %v411 = vpop.xlane.xlu0 %410
      %v412 = vsel %vm347, %v394, 0.0
      %413 = vadd.xlane.f32.xlu0 %v412
      %v414 = vpop.xlane.xlu0 %413
      %v415 = vsel %vm347, %v395, 0.0
      %416 = vadd.xlane.f32.xlu0 %v415
      %v417 = vpop.xlane.xlu0 %416
      %v418 = vsel %vm347, %v396, 0.0
      %419 = vadd.xlane.f32.xlu0 %v418
      %v420 = vpop.xlane.xlu0 %419
      %v421 = vmul.f32 %v399, %v372
      %v422 = vmul.f32 %v402, %v372
      %v423 = vmul.f32 %v405, %v372
      %v424 = vmul.f32 %v408, %v372
      %v425 = vmul.f32 %v411, %v372
      %v426 = vmul.f32 %v414, %v372
      %v427 = vmul.f32 %v417, %v372
      %v428 = vmul.f32 %v420, %v372
      %v429 = vadd.f32 %v421, 1e-06
      %v430 = vadd.f32 %v422, 1e-06
      %v431 = vadd.f32 %v423, 1e-06
      %v432 = vadd.f32 %v424, 1e-06
      %v433 = vadd.f32 %v425, 1e-06
      %v434 = vadd.f32 %v426, 1e-06
      %v435 = vadd.f32 %v427, 1e-06
      %v436 = vadd.f32 %v428, 1e-06
      %v437 = vrsqrt.pop %v429
      %v438 = vrsqrt.pop %v430
      %v439 = vrsqrt.pop %v431
      %v440 = vrsqrt.pop %v432
      %v441 = vrsqrt.pop %v433
      %v442 = vrsqrt.pop %v434
      %v443 = vrsqrt.pop %v435
      %v444 = vrsqrt.pop %v436
      %v445 = vmul.f32 %v381, %v437
      %v446 = vmul.f32 %v382, %v438
      %v447 = vmul.f32 %v383, %v439
      %v448 = vmul.f32 %v384, %v440
      %v449 = vmul.f32 %v385, %v441
      %v450 = vmul.f32 %v386, %v442
      %v451 = vmul.f32 %v387, %v443
      %v452 = vmul.f32 %v388, %v444
      %v453 = vld [vmem:[%s314] sm:$0x1]
      %v455 = vlaneseq
      %v456 = vshrl.u32 %v455, 7
      %v457 = vsub.s32 0, %v456
      %v458 = vrot.slane %v453, %v457
      %v460 = vmul.f32 %v445, %v458
      %v461 = vmul.f32 %v446, %v458
      %v462 = vmul.f32 %v447, %v458
      %v463 = vmul.f32 %v448, %v458
      %v464 = vmul.f32 %v449, %v458
      %v465 = vmul.f32 %v450, %v458
      %v466 = vmul.f32 %v451, %v458
      %v467 = vmul.f32 %v452, %v458
      %v468 = vld [vmem:[%s317] sm:$0x1]
      %v470 = vlaneseq
      %v471 = vshrl.u32 %v470, 7
      %v472 = vsub.s32 0, %v471
      %v473 = vrot.slane %v468, %v472
      %v475 = vadd.f32 %v460, %v473
      %v476 = vadd.f32 %v461, %v473
      %v477 = vadd.f32 %v462, %v473
      %v478 = vadd.f32 %v463, %v473
      %v479 = vadd.f32 %v464, %v473
      %v480 = vadd.f32 %v465, %v473
      %v481 = vadd.f32 %v466, %v473
      %v482 = vadd.f32 %v467, %v473
      %v483 = vpack.c.bf16 %v476, %v475
      %v484 = vpack.c.bf16 %v478, %v477
      %v485 = vpack.c.bf16 %v480, %v479
      %v486 = vpack.c.bf16 %v482, %v481
      %v487 = vld [vmem:[%s321] sm:$0xf]
      %v488 = vld [vmem:[%s321 + $0x4] sm:$0xf]
      %v489 = vld [vmem:[%s321 + $0x8] sm:$0xf]
      %v490 = vld [vmem:[%s321 + $0xc] sm:$0xf]
      %v491 = vld [vmem:[%s321 + $0x10] sm:$0xf]
      %v492 = vld [vmem:[%s321 + $0x14] sm:$0xf]
      %v493 = vld [vmem:[%s321 + $0x18] sm:$0xf]
      %v494 = vld [vmem:[%s321 + $0x1c] sm:$0xf]
      %v495 = vld [vmem:[%s324] sm:$0x1]
      %v497 = vlaneseq
      %v498 = vshrl.u32 %v497, 7
      %v499 = vsub.s32 0, %v498
      %v500 = vrot.slane %v495, %v499
      %v510 = vunpack.c.l.b16 %v487
      %v511 = vunpack.c.l.b16 %v488
      %v512 = vunpack.c.l.b16 %v489
      %v513 = vunpack.c.l.b16 %v490
      %v514 = vunpack.c.l.b16 %v491
      %v515 = vunpack.c.l.b16 %v492
      %v516 = vunpack.c.l.b16 %v493
      %v517 = vunpack.c.l.b16 %v494
      %v518 = vpack.c.b16 %v511, %v510
      %v519 = vpack.c.b16 %v513, %v512
      %v520 = vpack.c.b16 %v515, %v514
      %v521 = vpack.c.b16 %v517, %v516
      %v527 = vsel %vm347, %v483, 0
      %v530 = vsel %vm347, %v484, 0
      %v533 = vsel %vm347, %v485, 0
      %v536 = vsel %vm347, %v486, 0
      %538 = vmatprep.subr.bf16.mxu0 0
      %539 = vmatpush1.bf16.msra.mxu0 %v518
      %540 = vmatprep.subr.bf16.mxu0 0
      %541 = vmatpush1.bf16.msra.mxu0 %v519
      %542 = vmatprep.subr.bf16.mxu0 0
      %543 = vmatpush1.bf16.msra.mxu0 %v520
      %544 = vmatprep.subr.bf16.mxu0 0
      %545 = vmatpush1.bf16.msra.mxu0 %v521
      %546 = vmatprep.subr.bf16.mxu0 0
      %547 = vmatpush1.bf16.msra.mxu0 0
      %548 = vmatprep.subr.bf16.mxu0 0
      %549 = vmatpush1.bf16.msra.mxu0 0
      %550 = vmatprep.subr.bf16.mxu0 0
      %551 = vmatpush1.bf16.msra.mxu0 0
      %552 = vmatprep.subr.bf16.mxu0 0
      %553 = vmatpush1.bf16.msra.mxu0 0
      %554 = vmatprep.subr.bf16.mxu0 0
      %555 = vmatpush1.bf16.msra.mxu0 0
      %556 = vmatprep.subr.bf16.mxu0 0
      %557 = vmatpush1.bf16.msra.mxu0 0
      %558 = vmatprep.subr.bf16.mxu0 0
      %559 = vmatpush1.bf16.msra.mxu0 0
      %560 = vmatprep.subr.bf16.mxu0 0
      %561 = vmatpush1.bf16.msra.mxu0 0
      %562 = vmatprep.subr.bf16.mxu0 0
      %563 = vmatpush1.bf16.msra.mxu0 0
      %564 = vmatprep.subr.bf16.mxu0 0
      %565 = vmatpush1.bf16.msra.mxu0 0
      %566 = vmatprep.subr.bf16.mxu0 0
      %567 = vmatpush1.bf16.msra.mxu0 0
      %568 = vmatprep.subr.bf16.mxu0 0
      %569 = vmatpush1.bf16.msra.mxu0 0
      %570 = vmatprep.mubr.bf16.mxu0 0
      %571 = vmatmul.mubr.bf16.gmra.mrb[0].mxu0 %v527
      %v572 = vpop.f32.mrb[0].mxu0
      %v573 = vadd.f32 %v500, %v572
      %v574 = vpop.f32.mrb[0].mxu0
      %v575 = vpop.f32.mrb[0].mxu0
      %v576 = vadd.f32 %v500, %v575
      %v577 = vpop.f32.mrb[0].mxu0
      %578 = vmatprep.mubr.bf16.mxu0 0
      %579 = vmatmul.mubr.bf16.gmra.mrb[0].mxu0 %v530
      %v580 = vpop.f32.mrb[0].mxu0
      %v581 = vadd.f32 %v500, %v580
      %v582 = vpop.f32.mrb[0].mxu0
      %v583 = vpop.f32.mrb[0].mxu0
      %v584 = vadd.f32 %v500, %v583
      %v585 = vpop.f32.mrb[0].mxu0
      %586 = vmatprep.mubr.bf16.mxu0 0
      %587 = vmatmul.mubr.bf16.gmra.mrb[0].mxu0 %v533
      %v588 = vpop.f32.mrb[0].mxu0
      %v589 = vadd.f32 %v500, %v588
      %v590 = vpop.f32.mrb[0].mxu0
      %v591 = vpop.f32.mrb[0].mxu0
      %v592 = vadd.f32 %v500, %v591
      %v593 = vpop.f32.mrb[0].mxu0
      %594 = vmatprep.mubr.bf16.mxu0 0
      %595 = vmatmul.mubr.bf16.gmra.mrb[0].mxu0 %v536
      %v596 = vpop.f32.mrb[0].mxu0
      %v597 = vadd.f32 %v500, %v596
      %v598 = vpop.f32.mrb[0].mxu0
      %v599 = vpop.f32.mrb[0].mxu0
      %v600 = vadd.f32 %v500, %v599
      %v601 = vpop.f32.mrb[0].mxu0
      %602 = vdwg.mxu0
      %v603 = vpack.c.bf16 %v576, %v573
      %v604 = vpack.c.bf16 %v584, %v581
      %v605 = vpack.c.bf16 %v592, %v589
      %v606 = vpack.c.bf16 %v600, %v597
      %v611 = vunpack.c.l.b16 %v603
      %v612 = vunpack.c.h.b16 %v603
      %v613 = vunpack.c.l.b16 %v604
      %v614 = vunpack.c.h.b16 %v604
      %v615 = vunpack.c.l.b16 %v605
      %v616 = vunpack.c.h.b16 %v605
      %v617 = vunpack.c.l.b16 %v606
      %v618 = vunpack.c.h.b16 %v606
      %v619 = vpack.c.b16 %v611, %v611
      %v620 = vpack.c.b16 %v612, %v612
      %v621 = vpack.c.b16 %v613, %v613
      %v622 = vpack.c.b16 %v614, %v614
      %v623 = vpack.c.b16 %v615, %v615
      %v624 = vpack.c.b16 %v616, %v616
      %v625 = vpack.c.b16 %v617, %v617
      %v626 = vpack.c.b16 %v618, %v618
      %vm635 = vcmask 519168
      %636 = vst.msk [vmem:[%s336] sm:$0xf] %vm635, %v619
      %637 = vst.msk [vmem:[%s336 + $0x4] sm:$0xf] %vm635, %v620
      %638 = vst.msk [vmem:[%s336 + $0x8] sm:$0xf] %vm635, %v621
      %639 = vst.msk [vmem:[%s336 + $0xc] sm:$0xf] %vm635, %v622
      %640 = vst.msk [vmem:[%s336 + $0x10] sm:$0xf] %vm635, %v623
      %641 = vst.msk [vmem:[%s336 + $0x14] sm:$0xf] %vm635, %v624
      %642 = vst.msk [vmem:[%s336 + $0x18] sm:$0xf] %vm635, %v625
      %643 = vst.msk [vmem:[%s336 + $0x1c] sm:$0xf] %vm635, %v626
      %s644 = smul.u32 8, %s23
      %p645 = scmp.lt.s32.totalorder %s21, 1
      %s646 = scalar_select %p645, %s21, 1
      %p647 = scmp.lt.s32.totalorder %s644, 7
      %s648 = scalar_select %p647, %s644, 7
      %p649 = scmp.lt.s32.totalorder %s22, 0
      %s650 = scalar_select %p649, %s22, 0
      %s651 = sadd.s32 %s650, %s648
      %s652 = smul.addr %s646, 8
      %s653 = sadd.s32 %s651, %s652
      %s654 = smul.addr %s653, 4
      %s655 = scalar_lea.vmem %s5, %s654
      // Predicated region
      $region41: #{_lambda_.30} parent=39 // pred_check
        %p656 = pneg %p189
      $region42: #{_lambda_.30} parent=39 // pred_check_branch
        %658 = sbr.rel (%p656) target = $region44
      $region43: #{_lambda_.30} parent=39 // pred_region
        %s659 = smul.u32 8, %s23
      $region44: #{_lambda_.30} parent=39 // pred_fallthru
        _
    $region40: #{_lambda_.30} parent=5 // pred_fallthru
      _
    %p660 = scmp.le.s32.totalorder 2, %s11
    // Predicated region
    $region45: #{_lambda_.30} parent=5 // pred_check
      %p661 = pneg %p660
    $region46: #{_lambda_.30} parent=5 // pred_check_branch
      %663 = sbr.rel (%p661) target = $region48
    $region47: #{_lambda_.30} parent=5 // pred_region
      %s664 = ssub.s32 %s11, 2
      // Predicated region
      $region49: #{_lambda_.30} parent=47 // pred_check
        %p665 = pneg %p195
      $region50: #{_lambda_.30} parent=47 // pred_check_branch
        %667 = sbr.rel (%p665) target = $region52
      $region51: #{_lambda_.30} parent=47 // pred_region
        %s668 = smul.u32 8, %s26
        %p669 = scmp.lt.s32.totalorder %s24, 1
        %s670 = scalar_select %p669, %s24, 1
        %p671 = scmp.lt.s32.totalorder %s668, 7
        %s672 = scalar_select %p671, %s668, 7
        %p673 = scmp.lt.s32.totalorder %s25, 0
        %s674 = scalar_select %p673, %s25, 0
        %s675 = sadd.s32 %s674, %s672
        %s676 = smul.addr %s670, 8
        %s677 = sadd.s32 %s675, %s676
        %s678 = smul.addr %s677, 4
        %s679 = scalar_lea.vmem %s5, %s678
      $region52: #{_lambda_.30} parent=47 // pred_fallthru
        _
    $region48: #{_lambda_.30} parent=5 // pred_fallthru
      _
  $region6: #{_lambda_.30} parent=0 // loop_footer
    %s15 = sadd.s32 1, %s11
  $region7: #{_lambda_.30} parent=0 // loop_footer_branch
    %10 = sbr.rel target = $region3
  $region8: #{_lambda_.30} parent=0 // loop_exit
    _

// kernel: _lambda_.29
$region0: #{_lambda_.29}
  #allocation0 [shape = 'u32[]', space=smem, size = 0x4, offset = 0x4, fixed_abs, tag = 'smem constant byte address 0x4 - core index']
  #allocation1 [shape = 'u32[144,128]{1,0:T(1,128)}', space=vmem, size = 0x12000, scoped, tag = 'internal scratch']
  %s0 = inlined_call_operand.vmem [shape: bf16[2,64,64], index: 0, kind: input, shape index: {}]
  %s1 = inlined_call_operand.vmem [shape: bf16[64,64], index: 1, kind: input, shape index: {}]
  %s2 = inlined_call_operand.vmem [shape: f32[1,64], index: 2, kind: input, shape index: {}]
  %s3 = inlined_call_operand.vmem [shape: f32[2,1,64], index: 3, kind: input, shape index: {}]
  %s4 = inlined_call_operand.vmem [shape: f32[2,64,64], index: 4, kind: input, shape index: {}]
  %s5 = inlined_call_operand.vmem [shape: f32[2,64,64], index: 5, kind: output, shape index: {}]
  %s6 = sld [smem:[#allocation0]]
  $region53: #{_lambda_.29} parent=0
    _
  %s8 = ssub.s32 1, %s6
  %s9 = scalar_select 0, %s8, %s6
  loop: start=0, step=1, limit=4
  $region2: #{_lambda_.29} parent=0 // loop_pre_header
    _
  $region3: #{_lambda_.29} parent=0 // loop_header
    %s11 = sphi 0, %s15
    %p12 = scmp.ge.s32.totalorder %s11, 4
    %s18 = sphi 0, %s37
    %s19 = sphi 0, %s33
    %s20 = sphi 0, %s29
    %s21 = sphi 0, %s18
    %s22 = sphi 0, %s19
    %s23 = sphi 0, %s20
    %s24 = sphi 0, %s21
    %s25 = sphi 0, %s22
    %s26 = sphi 0, %s23
    %s42 = sphi 0, %s44
    %s45 = sphi 0, %s42
    %s46 = sphi 0, %s45
    %s62 = sphi 0, %s46
    %s68 = sphi 0, %s70
    %s71 = sphi 0, %s68
    %s72 = sphi 0, %s71
    %s88 = sphi 0, %s72
    %s94 = sphi 0, %s96
    %s97 = sphi 0, %s94
    %s98 = sphi 0, %s97
    %s114 = sphi 0, %s98
    %s122 = sphi 0, %s124
    %s125 = sphi 0, %s122
    %s126 = sphi 0, %s125
    %s142 = sphi 0, %s126
    %s152 = sphi 0, %s154
    %s155 = sphi 0, %s152
    %s156 = sphi 0, %s155
    %s172 = sphi 0, %s156
    %s182 = sphi 0, %s184
    %s185 = sphi 0, %s182
    %s186 = sphi 0, %s185
    %s202 = sphi 0, %s186
  $region4: #{_lambda_.29} parent=0 // loop_header_branch
    %14 = sbr.rel (%p12) target = $region8
  $region5: #{_lambda_.29} parent=0 // loop_body
    %s16 = ssub.s32 %s11, 1
    %s17 = ssub.s32 %s11, 2
    %s27 = sadd.s32 1, %s20
    %p28 = scmp.ge.s32.totalorder %s27, 1
    %s29 = scalar_select %p28, 0, %s27
    %s30 = sadd.s32 1, %s19
    %s31 = scalar_select %p28, %s30, %s19
    %p32 = scmp.ge.s32.totalorder %s31, 1
    %s33 = scalar_select %p32, 0, %s31
    %s34 = sadd.s32 1, %s18
    %s35 = scalar_select %p32, %s34, %s18
    %p36 = scmp.ge.s32.totalorder %s35, 2
    %s37 = scalar_select %p36, 0, %s35
    %s38 = ssub.s32 %s18, %s37
    %s39 = ssub.s32 %s20, %s29
    %s40 = sor.u32 %s38, %s39
    %p41 = scmp.eq.s32.totalorder %s40, 0
    %s43 = sadd.s32 %s42, 1
    %s44 = scalar_select %p41, %s42, %s43
    %p47 = pneg %p41
    %p48 = scmp.eq.s32.totalorder %s11, 1
    %p49 = por %p47, %p48
    %p50 = scmp.ne.s32.totalorder %s42, %s45
    %p51 = scmp.eq.s32.totalorder %s11, 0
    %p52 = por %p50, %p51
    %p53 = scmp.ne.s32.totalorder %s42, %s45
    %p54 = scmp.eq.s32.totalorder %s16, 1
    %p55 = por %p53, %p54
    %p56 = scmp.ne.s32.totalorder %s45, %s46
    %p57 = scmp.eq.s32.totalorder %s16, 0
    %p58 = por %p56, %p57
    %p59 = scmp.ne.s32.totalorder %s45, %s46
    %p60 = scmp.eq.s32.totalorder %s17, 1
    %p61 = por %p59, %p60
    %p63 = scmp.ne.s32.totalorder %s46, %s62
    %p64 = scmp.eq.s32.totalorder %s17, 0
    %p65 = por %p63, %p64
    %s66 = ssub.s32 %s19, %s33
    %p67 = scmp.eq.s32.totalorder %s66, 0
    %s69 = sadd.s32 %s68, 1
    %s70 = scalar_select %p67, %s68, %s69
    %p73 = pneg %p67
    %p74 = scmp.eq.s32.totalorder %s11, 1
    %p75 = por %p73, %p74
    %p76 = scmp.ne.s32.totalorder %s68, %s71
    %p77 = scmp.eq.s32.totalorder %s11, 0
    %p78 = por %p76, %p77
    %p79 = scmp.ne.s32.totalorder %s68, %s71
    %p80 = scmp.eq.s32.totalorder %s16, 1
    %p81 = por %p79, %p80
    %p82 = scmp.ne.s32.totalorder %s71, %s72
    %p83 = scmp.eq.s32.totalorder %s16, 0
    %p84 = por %p82, %p83
    %p85 = scmp.ne.s32.totalorder %s71, %s72
    %p86 = scmp.eq.s32.totalorder %s17, 1
    %p87 = por %p85, %p86
    %p89 = scmp.ne.s32.totalorder %s72, %s88
    %p90 = scmp.eq.s32.totalorder %s17, 0
    %p91 = por %p89, %p90
    %s92 = ssub.s32 %s19, %s33
    %p93 = scmp.eq.s32.totalorder %s92, 0
    %s95 = sadd.s32 %s94, 1
    %s96 = scalar_select %p93, %s94, %s95
    %p99 = pneg %p93
    %p100 = scmp.eq.s32.totalorder %s11, 1
    %p101 = por %p99, %p100
    %p102 = scmp.ne.s32.totalorder %s94, %s97
    %p103 = scmp.eq.s32.totalorder %s11, 0
    %p104 = por %p102, %p103
    %p105 = scmp.ne.s32.totalorder %s94, %s97
    %p106 = scmp.eq.s32.totalorder %s16, 1
    %p107 = por %p105, %p106
    %p108 = scmp.ne.s32.totalorder %s97, %s98
    %p109 = scmp.eq.s32.totalorder %s16, 0
    %p110 = por %p108, %p109
    %p111 = scmp.ne.s32.totalorder %s97, %s98
    %p112 = scmp.eq.s32.totalorder %s17, 1
    %p113 = por %p111, %p112
    %p115 = scmp.ne.s32.totalorder %s98, %s114
    %p116 = scmp.eq.s32.totalorder %s17, 0
    %p117 = por %p115, %p116
    %s118 = ssub.s32 %s18, %s37
    %s119 = ssub.s32 %s19, %s33
    %s120 = sor.u32 %s118, %s119
    %p121 = scmp.eq.s32.totalorder %s120, 0
    %s123 = sadd.s32 %s122, 1
    %s124 = scalar_select %p121, %s122, %s123
    %p127 = pneg %p121
    %p128 = scmp.eq.s32.totalorder %s11, 1
    %p129 = por %p127, %p128
    %p130 = scmp.ne.s32.totalorder %s122, %s125
    %p131 = scmp.eq.s32.totalorder %s11, 0
    %p132 = por %p130, %p131
    %p133 = scmp.ne.s32.totalorder %s122, %s125
    %p134 = scmp.eq.s32.totalorder %s16, 1
    %p135 = por %p133, %p134
    %p136 = scmp.ne.s32.totalorder %s125, %s126
    %p137 = scmp.eq.s32.totalorder %s16, 0
    %p138 = por %p136, %p137
    %p139 = scmp.ne.s32.totalorder %s125, %s126
    %p140 = scmp.eq.s32.totalorder %s17, 1
    %p141 = por %p139, %p140
    %p143 = scmp.ne.s32.totalorder %s126, %s142
    %p144 = scmp.eq.s32.totalorder %s17, 0
    %p145 = por %p143, %p144
    %s146 = ssub.s32 %s18, %s37
    %s147 = ssub.s32 %s20, %s29
    %s148 = sor.u32 %s146, %s147
    %s149 = ssub.s32 %s19, %s33
    %s150 = sor.u32 %s148, %s149
    %p151 = scmp.eq.s32.totalorder %s150, 0
    %s153 = sadd.s32 %s152, 1
    %s154 = scalar_select %p151, %s152, %s153
    %p157 = pneg %p151
    %p158 = scmp.eq.s32.totalorder %s11, 1
    %p159 = por %p157, %p158
    %p160 = scmp.ne.s32.totalorder %s152, %s155
    %p161 = scmp.eq.s32.totalorder %s11, 0
    %p162 = por %p160, %p161
    %p163 = scmp.ne.s32.totalorder %s152, %s155
    %p164 = scmp.eq.s32.totalorder %s16, 1
    %p165 = por %p163, %p164
    %p166 = scmp.ne.s32.totalorder %s155, %s156
    %p167 = scmp.eq.s32.totalorder %s16, 0
    %p168 = por %p166, %p167
    %p169 = scmp.ne.s32.totalorder %s155, %s156
    %p170 = scmp.eq.s32.totalorder %s17, 1
    %p171 = por %p169, %p170
    %p173 = scmp.ne.s32.totalorder %s156, %s172
    %p174 = scmp.eq.s32.totalorder %s17, 0
    %p175 = por %p173, %p174
    %s176 = ssub.s32 %s18, %s37
    %s177 = ssub.s32 %s20, %s29
    %s178 = sor.u32 %s176, %s177
    %s179 = ssub.s32 %s19, %s33
    %s180 = sor.u32 %s178, %s179
    %p181 = scmp.eq.s32.totalorder %s180, 0
    %s183 = sadd.s32 %s182, 1
    %s184 = scalar_select %p181, %s182, %s183
    %p187 = pneg %p181
    %p188 = scmp.eq.s32.totalorder %s11, 1
    %p189 = por %p187, %p188
    %p190 = scmp.ne.s32.totalorder %s182, %s185
    %p191 = scmp.eq.s32.totalorder %s11, 0
    %p192 = por %p190, %p191
    %p193 = scmp.ne.s32.totalorder %s182, %s185
    %p194 = scmp.eq.s32.totalorder %s16, 1
    %p195 = por %p193, %p194
    %p196 = scmp.ne.s32.totalorder %s185, %s186
    %p197 = scmp.eq.s32.totalorder %s16, 0
    %p198 = por %p196, %p197
    %p199 = scmp.ne.s32.totalorder %s185, %s186
    %p200 = scmp.eq.s32.totalorder %s17, 1
    %p201 = por %p199, %p200
    %p203 = scmp.ne.s32.totalorder %s186, %s202
    %p204 = scmp.eq.s32.totalorder %s17, 0
    %p205 = por %p203, %p204
    %p206 = scmp.le.s32.totalorder 1, %s11
    %p207 = scmp.lt.s32.totalorder %s11, 3
    %p208 = pnand %p206, %p207
    %p209 = pneg %p208
    // Predicated region
    $region9: #{_lambda_.29} parent=5 // pred_check
      _
    $region10: #{_lambda_.29} parent=5 // pred_check_branch
      %211 = sbr.rel (%p208) target = $region12
    $region11: #{_lambda_.29} parent=5 // pred_region
      %s212 = ssub.s32 %s11, 1
      // Predicated region
      $region13: #{_lambda_.29} parent=11 // pred_check
        %p213 = pneg %p84
      $region14: #{_lambda_.29} parent=11 // pred_check_branch
        %215 = sbr.rel (%p213) target = $region16
      $region15: #{_lambda_.29} parent=11 // pred_region
        %p216 = scmp.lt.s32.totalorder %s22, 0
        %s217 = scalar_select %p216, %s22, 0
        %s218 = smul.addr %s217, 4
        %s219 = scalar_lea.vmem %s1, %s218
      $region16: #{_lambda_.29} parent=11 // pred_fallthru
        _
      // Predicated region
      $region17: #{_lambda_.29} parent=11 // pred_check
        %p220 = pneg %p110
      $region18: #{_lambda_.29} parent=11 // pred_check_branch
        %222 = sbr.rel (%p220) target = $region20
      $region19: #{_lambda_.29} parent=11 // pred_region
        %p223 = scmp.lt.s32.totalorder %s22, 0
        %s224 = scalar_select %p223, %s22, 0
        %s225 = scalar_lea.vmem %s2, %s224
      $region20: #{_lambda_.29} parent=11 // pred_fallthru
        _
    $region12: #{_lambda_.29} parent=5 // pred_fallthru
      _
    %p226 = scmp.lt.s32.totalorder %s11, 2
    // Predicated region
    $region21: #{_lambda_.29} parent=5 // pred_check
      %p227 = pneg %p226
    $region22: #{_lambda_.29} parent=5 // pred_check_branch
      %229 = sbr.rel (%p227) target = $region24
    $region23: #{_lambda_.29} parent=5 // pred_region
      // Predicated region
      $region25: #{_lambda_.29} parent=23 // pred_check
        %p230 = pneg %p52
      $region26: #{_lambda_.29} parent=23 // pred_check_branch
        %232 = sbr.rel (%p230) target = $region28
      $region27: #{_lambda_.29} parent=23 // pred_region
        %s233 = smul.u32 8, %s20
        %p234 = scmp.lt.s32.totalorder %s18, 1
        %s235 = scalar_select %p234, %s18, 1
        %p236 = scmp.lt.s32.totalorder %s233, 7
        %s237 = scalar_select %p236, %s233, 7
        %s238 = smul.addr %s235, 8
        %s239 = sadd.s32 %s237, %s238
        %s240 = smul.addr %s239, 4
        %s241 = scalar_lea.vmem %s0, %s240
        %s242 = smul.u32 8, %s20
      $region28: #{_lambda_.29} parent=23 // pred_fallthru
        _
      // Predicated region
      $region29: #{_lambda_.29} parent=23 // pred_check
        %p243 = pneg %p132
      $region30: #{_lambda_.29} parent=23 // pred_check_branch
        %245 = sbr.rel (%p243) target = $region32
      $region31: #{_lambda_.29} parent=23 // pred_region
        %p246 = scmp.lt.s32.totalorder %s18, 1
        %s247 = scalar_select %p246, %s18, 1
        %p248 = scmp.lt.s32.totalorder %s19, 0
        %s249 = scalar_select %p248, %s19, 0
        %s250 = sadd.s32 %s249, %s247
        %s251 = scalar_lea.vmem %s3, %s250
      $region32: #{_lambda_.29} parent=23 // pred_fallthru
        _
      // Predicated region
      $region33: #{_lambda_.29} parent=23 // pred_check
        %p252 = pneg %p162
      $region34: #{_lambda_.29} parent=23 // pred_check_branch
        %254 = sbr.rel (%p252) target = $region36
      $region35: #{_lambda_.29} parent=23 // pred_region
        %s255 = smul.u32 8, %s20
        %p256 = scmp.lt.s32.totalorder %s18, 1
        %s257 = scalar_select %p256, %s18, 1
        %p258 = scmp.lt.s32.totalorder %s255, 7
        %s259 = scalar_select %p258, %s255, 7
        %p260 = scmp.lt.s32.totalorder %s19, 0
        %s261 = scalar_select %p260, %s19, 0
        %s262 = sadd.s32 %s261, %s259
        %s263 = smul.addr %s257, 8
        %s264 = sadd.s32 %s262, %s263
        %s265 = smul.addr %s264, 8
        %s266 = scalar_lea.vmem %s4, %s265
        %s267 = smul.u32 8, %s20
      $region36: #{_lambda_.29} parent=23 // pred_fallthru
        _
    $region24: #{_lambda_.29} parent=5 // pred_fallthru
      _
    %p268 = scmp.le.s32.totalorder 1, %s11
    %p269 = scmp.lt.s32.totalorder %s11, 3
    %p270 = pnand %p268, %p269
    %p271 = pneg %p270
    // Predicated region
    $region37: #{_lambda_.29} parent=5 // pred_check
      _
    $region38: #{_lambda_.29} parent=5 // pred_check_branch
      %273 = sbr.rel (%p270) target = $region40
    $region39: #{_lambda_.29} parent=5 // pred_region
      %s274 = ssub.s32 %s11, 1
      %s275 = smul.u32 8, %s23
      %p276 = scmp.lt.s32.totalorder %s21, 1
      %s277 = scalar_select %p276, %s21, 1
      %p278 = scmp.lt.s32.totalorder %s275, 7
      %s279 = scalar_select %p278, %s275, 7
      %s280 = smul.addr %s277, 8
      %s281 = sadd.s32 %s279, %s280
      %s282 = smul.addr %s281, 4
      %s283 = scalar_lea.vmem %s0, %s282
      %p284 = pneg %p58
      %p285 = pneg %p55
      %p286 = scmp.lt.s32.totalorder %s22, 0
      %s287 = scalar_select %p286, %s22, 0
      %s288 = smul.addr %s287, 4
      %s289 = scalar_lea.vmem %s1, %s288
      %p290 = pneg %p84
      %p291 = pneg %p81
      %p292 = scmp.lt.s32.totalorder %s22, 0
      %s293 = scalar_select %p292, %s22, 0
      %s294 = scalar_lea.vmem %s2, %s293
      %p295 = pneg %p110
      %p296 = pneg %p107
      %p297 = scmp.lt.s32.totalorder %s21, 1
      %s298 = scalar_select %p297, %s21, 1
      %p299 = scmp.lt.s32.totalorder %s22, 0
      %s300 = scalar_select %p299, %s22, 0
      %s301 = sadd.s32 %s300, %s298
      %s302 = scalar_lea.vmem %s3, %s301
      %p303 = pneg %p138
      %p304 = pneg %p135
      %s305 = smul.u32 8, %s23
      %p306 = scmp.lt.s32.totalorder %s21, 1
      %s307 = scalar_select %p306, %s21, 1
      %p308 = scmp.lt.s32.totalorder %s305, 7
      %s309 = scalar_select %p308, %s305, 7
      %p310 = scmp.lt.s32.totalorder %s22, 0
      %s311 = scalar_select %p310, %s22, 0
      %s312 = sadd.s32 %s311, %s309
      %s313 = smul.addr %s307, 8
      %s314 = sadd.s32 %s312, %s313
      %s315 = smul.addr %s314, 8
      %s316 = scalar_lea.vmem %s4, %s315
      %p317 = pneg %p168
      %p318 = pneg %p165
      %p319 = pneg %p198
      %p320 = pneg %p195
      %s321 = smul.u32 8, %s23
      %p322 = scmp.lt.s32.totalorder %s21, 1
      %s323 = scalar_select %p322, %s21, 1
      %p324 = scmp.lt.s32.totalorder %s321, 7
      %s325 = scalar_select %p324, %s321, 7
      %p326 = scmp.lt.s32.totalorder %s22, 0
      %s327 = scalar_select %p326, %s22, 0
      %s328 = sadd.s32 %s327, %s325
      %s329 = smul.addr %s323, 8
      %s330 = sadd.s32 %s328, %s329
      %s331 = smul.addr %s330, 8
      %s332 = scalar_lea.vmem %s5, %s331
      %s333 = smul.u32 8, %s23
      %p334 = scmp.lt.s32.totalorder %s21, 1
      %s335 = scalar_select %p334, %s21, 1
      %p336 = scmp.lt.s32.totalorder %s333, 7
      %s337 = scalar_select %p336, %s333, 7
      %s338 = smul.addr %s335, 8
      %s339 = sadd.s32 %s337, %s338
      %s340 = smul.addr %s339, 4
      %s341 = scalar_lea.vmem %s0, %s340
      %s342 = smul.u32 8, %s23
      %p343 = scmp.lt.s32.totalorder %s22, 0
      %s344 = scalar_select %p343, %s22, 0
      %s345 = smul.addr %s344, 4
      %s346 = scalar_lea.vmem %s1, %s345
      %p347 = scmp.lt.s32.totalorder %s22, 0
      %s348 = scalar_select %p347, %s22, 0
      %s349 = scalar_lea.vmem %s2, %s348
      %p350 = scmp.lt.s32.totalorder %s21, 1
      %s351 = scalar_select %p350, %s21, 1
      %p352 = scmp.lt.s32.totalorder %s22, 0
      %s353 = scalar_select %p352, %s22, 0
      %s354 = sadd.s32 %s353, %s351
      %s355 = scalar_lea.vmem %s3, %s354
      %s356 = smul.u32 8, %s23
      %p357 = scmp.lt.s32.totalorder %s21, 1
      %s358 = scalar_select %p357, %s21, 1
      %p359 = scmp.lt.s32.totalorder %s356, 7
      %s360 = scalar_select %p359, %s356, 7
      %p361 = scmp.lt.s32.totalorder %s22, 0
      %s362 = scalar_select %p361, %s22, 0
      %s363 = sadd.s32 %s362, %s360
      %s364 = smul.addr %s358, 8
      %s365 = sadd.s32 %s363, %s364
      %s366 = smul.addr %s365, 8
      %s367 = scalar_lea.vmem %s4, %s366
      %s368 = smul.u32 8, %s23
      %s369 = smul.u32 8, %s23
      %p370 = scmp.lt.s32.totalorder %s21, 1
      %s371 = scalar_select %p370, %s21, 1
      %p372 = scmp.lt.s32.totalorder %s369, 7
      %s373 = scalar_select %p372, %s369, 7
      %p374 = scmp.lt.s32.totalorder %s22, 0
      %s375 = scalar_select %p374, %s22, 0
      %s376 = sadd.s32 %s375, %s373
      %s377 = smul.addr %s371, 8
      %s378 = sadd.s32 %s376, %s377
      %s379 = smul.addr %s378, 8
      %s380 = scalar_lea.vmem %s5, %s379
      %s381 = smul.u32 8, %s23
      %v383 = vld [vmem:[%s341] sm:$0xf]
      %v384 = vld [vmem:[%s341 + $0x4] sm:$0xf]
      %v385 = vld [vmem:[%s341 + $0x8] sm:$0xf]
      %v386 = vld [vmem:[%s341 + $0xc] sm:$0xf]
      %v387 = vld [vmem:[%s341 + $0x10] sm:$0xf]
      %v388 = vld [vmem:[%s341 + $0x14] sm:$0xf]
      %v389 = vld [vmem:[%s341 + $0x18] sm:$0xf]
      %v390 = vld [vmem:[%s341 + $0x1c] sm:$0xf]
      %v391 = vld [vmem:[%s346] sm:$0xf]
      %v392 = vld [vmem:[%s346 + $0x4] sm:$0xf]
      %v393 = vld [vmem:[%s346 + $0x8] sm:$0xf]
      %v394 = vld [vmem:[%s346 + $0xc] sm:$0xf]
      %v395 = vld [vmem:[%s346 + $0x10] sm:$0xf]
      %v396 = vld [vmem:[%s346 + $0x14] sm:$0xf]
      %v397 = vld [vmem:[%s346 + $0x18] sm:$0xf]
      %v398 = vld [vmem:[%s346 + $0x1c] sm:$0xf]
      %v399 = vld [vmem:[%s349] sm:$0x1]
      %v401 = vlaneseq
      %v402 = vshrl.u32 %v401, 7
      %v403 = vsub.s32 0, %v402
      %v404 = vrot.slane %v399, %v403
      %v414 = vunpack.c.l.b16 %v383
      %v415 = vunpack.c.l.b16 %v384
      %v416 = vunpack.c.l.b16 %v385
      %v417 = vunpack.c.l.b16 %v386
      %v418 = vunpack.c.l.b16 %v387
      %v419 = vunpack.c.l.b16 %v388
      %v420 = vunpack.c.l.b16 %v389
      %v421 = vunpack.c.l.b16 %v390
      %v422 = vpack.c.b16 %v415, %v414
      %v423 = vpack.c.b16 %v417, %v416
      %v424 = vpack.c.b16 %v419, %v418
      %v425 = vpack.c.b16 %v421, %v420
      %v434 = vunpack.c.l.b16 %v391
      %v435 = vunpack.c.l.b16 %v392
      %v436 = vunpack.c.l.b16 %v393
      %v437 = vunpack.c.l.b16 %v394
      %v438 = vunpack.c.l.b16 %v395
      %v439 = vunpack.c.l.b16 %v396
      %v440 = vunpack.c.l.b16 %v397
      %v441 = vunpack.c.l.b16 %v398
      %v442 = vpack.c.b16 %v435, %v434
      %v443 = vpack.c.b16 %v437, %v436
      %v444 = vpack.c.b16 %v439, %v438
      %v445 = vpack.c.b16 %v441, %v440
      %vm450 = vcmask 523264
      %v452 = vsel %vm450, %v422, 0
      %v455 = vsel %vm450, %v423, 0
      %v458 = vsel %vm450, %v424, 0
      %v461 = vsel %vm450, %v425, 0
      %463 = vmatprep.subr.bf16.mxu0 0
      %464 = vmatpush1.bf16.msra.mxu0 %v442
      %465 = vmatprep.subr.bf16.mxu0 0
      %466 = vmatpush1.bf16.msra.mxu0 %v443
      %467 = vmatprep.subr.bf16.mxu0 0
      %468 = vmatpush1.bf16.msra.mxu0 %v444
      %469 = vmatprep.subr.bf16.mxu0 0
      %470 = vmatpush1.bf16.msra.mxu0 %v445
      %471 = vmatprep.subr.bf16.mxu0 0
      %472 = vmatpush1.bf16.msra.mxu0 0
      %473 = vmatprep.subr.bf16.mxu0 0
      %474 = vmatpush1.bf16.msra.mxu0 0
      %475 = vmatprep.subr.bf16.mxu0 0
      %476 = vmatpush1.bf16.msra.mxu0 0
      %477 = vmatprep.subr.bf16.mxu0 0
      %478 = vmatpush1.bf16.msra.mxu0 0
      %479 = vmatprep.subr.bf16.mxu0 0
      %480 = vmatpush1.bf16.msra.mxu0 0
      %481 = vmatprep.subr.bf16.mxu0 0
      %482 = vmatpush1.bf16.msra.mxu0 0
      %483 = vmatprep.subr.bf16.mxu0 0
      %484 = vmatpush1.bf16.msra.mxu0 0
      %485 = vmatprep.subr.bf16.mxu0 0
      %486 = vmatpush1.bf16.msra.mxu0 0
      %487 = vmatprep.subr.bf16.mxu0 0
      %488 = vmatpush1.bf16.msra.mxu0 0
      %489 = vmatprep.subr.bf16.mxu0 0
      %490 = vmatpush1.bf16.msra.mxu0 0
      %491 = vmatprep.subr.bf16.mxu0 0
      %492 = vmatpush1.bf16.msra.mxu0 0
      %493 = vmatprep.subr.bf16.mxu0 0
      %494 = vmatpush1.bf16.msra.mxu0 0
      %495 = vmatprep.mubr.bf16.mxu0 0
      %496 = vmatmul.mubr.bf16.gmra.mrb[0].mxu0 %v452
      %v497 = vpop.f32.mrb[0].mxu0
      %v498 = vadd.f32 %v404, %v497
      %v499 = vpop.f32.mrb[0].mxu0
      %v500 = vpop.f32.mrb[0].mxu0
      %v501 = vadd.f32 %v404, %v500
      %v502 = vpop.f32.mrb[0].mxu0
      %503 = vmatprep.mubr.bf16.mxu0 0
      %504 = vmatmul.mubr.bf16.gmra.mrb[0].mxu0 %v455
      %v505 = vpop.f32.mrb[0].mxu0
      %v506 = vadd.f32 %v404, %v505
      %v507 = vpop.f32.mrb[0].mxu0
      %v508 = vpop.f32.mrb[0].mxu0
      %v509 = vadd.f32 %v404, %v508
      %v510 = vpop.f32.mrb[0].mxu0
      %511 = vmatprep.mubr.bf16.mxu0 0
      %512 = vmatmul.mubr.bf16.gmra.mrb[0].mxu0 %v458
      %v513 = vpop.f32.mrb[0].mxu0
      %v514 = vadd.f32 %v404, %v513
      %v515 = vpop.f32.mrb[0].mxu0
      %v516 = vpop.f32.mrb[0].mxu0
      %v517 = vadd.f32 %v404, %v516
      %v518 = vpop.f32.mrb[0].mxu0
      %519 = vmatprep.mubr.bf16.mxu0 0
      %520 = vmatmul.mubr.bf16.gmra.mrb[0].mxu0 %v461
      %v521 = vpop.f32.mrb[0].mxu0
      %v522 = vadd.f32 %v404, %v521
      %v523 = vpop.f32.mrb[0].mxu0
      %v524 = vpop.f32.mrb[0].mxu0
      %v525 = vadd.f32 %v404, %v524
      %v526 = vpop.f32.mrb[0].mxu0
      %527 = vdwg.mxu0
      %v528 = vld [vmem:[%s355] sm:$0x1]
      %v530 = vlaneseq
      %v531 = vshrl.u32 %v530, 7
      %v532 = vsub.s32 0, %v531
      %v533 = vrot.slane %v528, %v532
      %v535 = vmul.f32 %v498, %v533
      %v536 = vmul.f32 %v501, %v533
      %v537 = vmul.f32 %v506, %v533
      %v538 = vmul.f32 %v509, %v533
      %v539 = vmul.f32 %v514, %v533
      %v540 = vmul.f32 %v517, %v533
      %v541 = vmul.f32 %v522, %v533
      %v542 = vmul.f32 %v525, %v533
      %v543 = vld [vmem:[%s367] sm:$0xff]
      %v544 = vld [vmem:[%s367 + $0x8] sm:$0xff]
      %v545 = vld [vmem:[%s367 + $0x10] sm:$0xff]
      %v546 = vld [vmem:[%s367 + $0x18] sm:$0xff]
      %v547 = vld [vmem:[%s367 + $0x20] sm:$0xff]
      %v548 = vld [vmem:[%s367 + $0x28] sm:$0xff]
      %v549 = vld [vmem:[%s367 + $0x30] sm:$0xff]
      %v550 = vld [vmem:[%s367 + $0x38] sm:$0xff]
      %v551 = vadd.f32 %v535, %v543
      %v552 = vadd.f32 %v536, %v544
      %v553 = vadd.f32 %v537, %v545
      %v554 = vadd.f32 %v538, %v546
      %v555 = vadd.f32 %v539, %v547
      %v556 = vadd.f32 %v540, %v548
      %v557 = vadd.f32 %v541, %v549
      %v558 = vadd.f32 %v542, %v550
      %559 = vst.msk [vmem:[%s380] sm:$0xff] %vm450, %v551
      %560 = vst.msk [vmem:[%s380 + $0x8] sm:$0xff] %vm450, %v552
      %561 = vst.msk [vmem:[%s380 + $0x10] sm:$0xff] %vm450, %v553
      %562 = vst.msk [vmem:[%s380 + $0x18] sm:$0xff] %vm450, %v554
      %563 = vst.msk [vmem:[%s380 + $0x20] sm:$0xff] %vm450, %v555
      %564 = vst.msk [vmem:[%s380 + $0x28] sm:$0xff] %vm450, %v556
      %565 = vst.msk [vmem:[%s380 + $0x30] sm:$0xff] %vm450, %v557
      %566 = vst.msk [vmem:[%s380 + $0x38] sm:$0xff] %vm450, %v558
      %s567 = smul.u32 8, %s23
      %p568 = scmp.lt.s32.totalorder %s21, 1
      %s569 = scalar_select %p568, %s21, 1
      %p570 = scmp.lt.s32.totalorder %s567, 7
      %s571 = scalar_select %p570, %s567, 7
      %p572 = scmp.lt.s32.totalorder %s22, 0
      %s573 = scalar_select %p572, %s22, 0
      %s574 = sadd.s32 %s573, %s571
      %s575 = smul.addr %s569, 8
      %s576 = sadd.s32 %s574, %s575
      %s577 = smul.addr %s576, 8
      %s578 = scalar_lea.vmem %s5, %s577
      // Predicated region
      $region41: #{_lambda_.29} parent=39 // pred_check
        %p579 = pneg %p195
      $region42: #{_lambda_.29} parent=39 // pred_check_branch
        %581 = sbr.rel (%p579) target = $region44
      $region43: #{_lambda_.29} parent=39 // pred_region
        %s582 = smul.u32 8, %s23
      $region44: #{_lambda_.29} parent=39 // pred_fallthru
        _
    $region40: #{_lambda_.29} parent=5 // pred_fallthru
      _
    %p583 = scmp.le.s32.totalorder 2, %s11
    // Predicated region
    $region45: #{_lambda_.29} parent=5 // pred_check
      %p584 = pneg %p583
    $region46: #{_lambda_.29} parent=5 // pred_check_branch
      %586 = sbr.rel (%p584) target = $region48
    $region47: #{_lambda_.29} parent=5 // pred_region
      %s587 = ssub.s32 %s11, 2
      // Predicated region
      $region49: #{_lambda_.29} parent=47 // pred_check
        %p588 = pneg %p201
      $region50: #{_lambda_.29} parent=47 // pred_check_branch
        %590 = sbr.rel (%p588) target = $region52
      $region51: #{_lambda_.29} parent=47 // pred_region
        %s591 = smul.u32 8, %s26
        %p592 = scmp.lt.s32.totalorder %s24, 1
        %s593 = scalar_select %p592, %s24, 1
        %p594 = scmp.lt.s32.totalorder %s591, 7
        %s595 = scalar_select %p594, %s591, 7
        %p596 = scmp.lt.s32.totalorder %s25, 0
        %s597 = scalar_select %p596, %s25, 0
        %s598 = sadd.s32 %s597, %s595
        %s599 = smul.addr %s593, 8
        %s600 = sadd.s32 %s598, %s599
        %s601 = smul.addr %s600, 8
        %s602 = scalar_lea.vmem %s5, %s601
      $region52: #{_lambda_.29} parent=47 // pred_fallthru
        _
    $region48: #{_lambda_.29} parent=5 // pred_fallthru
      _
  $region6: #{_lambda_.29} parent=0 // loop_footer
    %s15 = sadd.s32 1, %s11
  $region7: #{_lambda_.29} parent=0 // loop_footer_branch
    %10 = sbr.rel target = $region3
  $region8: #{_lambda_.29} parent=0 // loop_exit
    _

// kernel: _lambda_.31
$region0: #{_lambda_.31}
  #allocation0 [shape = 'u32[]', space=smem, size = 0x4, offset = 0x4, fixed_abs, tag = 'smem constant byte address 0x4 - core index']
  #allocation1 [shape = 'u32[144,128]{1,0:T(1,128)}', space=vmem, size = 0x12000, scoped, tag = 'internal scratch']
  %s0 = inlined_call_operand.vmem [shape: f32[2,8,48], index: 0, kind: input, shape index: {}]
  %s1 = inlined_call_operand.vmem [shape: bf16[48,128], index: 1, kind: input, shape index: {}]
  %s2 = inlined_call_operand.vmem [shape: f32[1,128], index: 2, kind: input, shape index: {}]
  %s3 = inlined_call_operand.vmem [shape: bf16[2,8,128], index: 3, kind: output, shape index: {}]
  %s4 = sld [smem:[#allocation0]]
  $region45: #{_lambda_.31} parent=0
    _
  %s6 = ssub.s32 1, %s4
  %s7 = scalar_select 0, %s6, %s4
  loop: start=0, step=1, limit=4
  $region2: #{_lambda_.31} parent=0 // loop_pre_header
    _
  $region3: #{_lambda_.31} parent=0 // loop_header
    %s9 = sphi 0, %s13
    %p10 = scmp.ge.s32.totalorder %s9, 4
    %s16 = sphi 0, %s35
    %s17 = sphi 0, %s31
    %s18 = sphi 0, %s27
    %s19 = sphi 0, %s16
    %s20 = sphi 0, %s17
    %s21 = sphi 0, %s18
    %s22 = sphi 0, %s19
    %s23 = sphi 0, %s20
    %s24 = sphi 0, %s21
    %s40 = sphi 0, %s42
    %s43 = sphi 0, %s40
    %s44 = sphi 0, %s43
    %s60 = sphi 0, %s44
    %s66 = sphi 0, %s68
    %s69 = sphi 0, %s66
    %s70 = sphi 0, %s69
    %s86 = sphi 0, %s70
    %s92 = sphi 0, %s94
    %s95 = sphi 0, %s92
    %s96 = sphi 0, %s95
    %s112 = sphi 0, %s96
    %s122 = sphi 0, %s124
    %s125 = sphi 0, %s122
    %s126 = sphi 0, %s125
    %s142 = sphi 0, %s126
  $region4: #{_lambda_.31} parent=0 // loop_header_branch
    %12 = sbr.rel (%p10) target = $region8
  $region5: #{_lambda_.31} parent=0 // loop_body
    %s14 = ssub.s32 %s9, 1
    %s15 = ssub.s32 %s9, 2
    %s25 = sadd.s32 1, %s18
    %p26 = scmp.ge.s32.totalorder %s25, 1
    %s27 = scalar_select %p26, 0, %s25
    %s28 = sadd.s32 1, %s17
    %s29 = scalar_select %p26, %s28, %s17
    %p30 = scmp.ge.s32.totalorder %s29, 1
    %s31 = scalar_select %p30, 0, %s29
    %s32 = sadd.s32 1, %s16
    %s33 = scalar_select %p30, %s32, %s16
    %p34 = scmp.ge.s32.totalorder %s33, 2
    %s35 = scalar_select %p34, 0, %s33
    %s36 = ssub.s32 %s16, %s35
    %s37 = ssub.s32 %s18, %s27
    %s38 = sor.u32 %s36, %s37
    %p39 = scmp.eq.s32.totalorder %s38, 0
    %s41 = sadd.s32 %s40, 1
    %s42 = scalar_select %p39, %s40, %s41
    %p45 = pneg %p39
    %p46 = scmp.eq.s32.totalorder %s9, 1
    %p47 = por %p45, %p46
    %p48 = scmp.ne.s32.totalorder %s40, %s43
    %p49 = scmp.eq.s32.totalorder %s9, 0
    %p50 = por %p48, %p49
    %p51 = scmp.ne.s32.totalorder %s40, %s43
    %p52 = scmp.eq.s32.totalorder %s14, 1
    %p53 = por %p51, %p52
    %p54 = scmp.ne.s32.totalorder %s43, %s44
    %p55 = scmp.eq.s32.totalorder %s14, 0
    %p56 = por %p54, %p55
    %p57 = scmp.ne.s32.totalorder %s43, %s44
    %p58 = scmp.eq.s32.totalorder %s15, 1
    %p59 = por %p57, %p58
    %p61 = scmp.ne.s32.totalorder %s44, %s60
    %p62 = scmp.eq.s32.totalorder %s15, 0
    %p63 = por %p61, %p62
    %s64 = ssub.s32 %s17, %s31
    %p65 = scmp.eq.s32.totalorder %s64, 0
    %s67 = sadd.s32 %s66, 1
    %s68 = scalar_select %p65, %s66, %s67
    %p71 = pneg %p65
    %p72 = scmp.eq.s32.totalorder %s9, 1
    %p73 = por %p71, %p72
    %p74 = scmp.ne.s32.totalorder %s66, %s69
    %p75 = scmp.eq.s32.totalorder %s9, 0
    %p76 = por %p74, %p75
    %p77 = scmp.ne.s32.totalorder %s66, %s69
    %p78 = scmp.eq.s32.totalorder %s14, 1
    %p79 = por %p77, %p78
    %p80 = scmp.ne.s32.totalorder %s69, %s70
    %p81 = scmp.eq.s32.totalorder %s14, 0
    %p82 = por %p80, %p81
    %p83 = scmp.ne.s32.totalorder %s69, %s70
    %p84 = scmp.eq.s32.totalorder %s15, 1
    %p85 = por %p83, %p84
    %p87 = scmp.ne.s32.totalorder %s70, %s86
    %p88 = scmp.eq.s32.totalorder %s15, 0
    %p89 = por %p87, %p88
    %s90 = ssub.s32 %s17, %s31
    %p91 = scmp.eq.s32.totalorder %s90, 0
    %s93 = sadd.s32 %s92, 1
    %s94 = scalar_select %p91, %s92, %s93
    %p97 = pneg %p91
    %p98 = scmp.eq.s32.totalorder %s9, 1
    %p99 = por %p97, %p98
    %p100 = scmp.ne.s32.totalorder %s92, %s95
    %p101 = scmp.eq.s32.totalorder %s9, 0
    %p102 = por %p100, %p101
    %p103 = scmp.ne.s32.totalorder %s92, %s95
    %p104 = scmp.eq.s32.totalorder %s14, 1
    %p105 = por %p103, %p104
    %p106 = scmp.ne.s32.totalorder %s95, %s96
    %p107 = scmp.eq.s32.totalorder %s14, 0
    %p108 = por %p106, %p107
    %p109 = scmp.ne.s32.totalorder %s95, %s96
    %p110 = scmp.eq.s32.totalorder %s15, 1
    %p111 = por %p109, %p110
    %p113 = scmp.ne.s32.totalorder %s96, %s112
    %p114 = scmp.eq.s32.totalorder %s15, 0
    %p115 = por %p113, %p114
    %s116 = ssub.s32 %s16, %s35
    %s117 = ssub.s32 %s18, %s27
    %s118 = sor.u32 %s116, %s117
    %s119 = ssub.s32 %s17, %s31
    %s120 = sor.u32 %s118, %s119
    %p121 = scmp.eq.s32.totalorder %s120, 0
    %s123 = sadd.s32 %s122, 1
    %s124 = scalar_select %p121, %s122, %s123
    %p127 = pneg %p121
    %p128 = scmp.eq.s32.totalorder %s9, 1
    %p129 = por %p127, %p128
    %p130 = scmp.ne.s32.totalorder %s122, %s125
    %p131 = scmp.eq.s32.totalorder %s9, 0
    %p132 = por %p130, %p131
    %p133 = scmp.ne.s32.totalorder %s122, %s125
    %p134 = scmp.eq.s32.totalorder %s14, 1
    %p135 = por %p133, %p134
    %p136 = scmp.ne.s32.totalorder %s125, %s126
    %p137 = scmp.eq.s32.totalorder %s14, 0
    %p138 = por %p136, %p137
    %p139 = scmp.ne.s32.totalorder %s125, %s126
    %p140 = scmp.eq.s32.totalorder %s15, 1
    %p141 = por %p139, %p140
    %p143 = scmp.ne.s32.totalorder %s126, %s142
    %p144 = scmp.eq.s32.totalorder %s15, 0
    %p145 = por %p143, %p144
    %p146 = scmp.le.s32.totalorder 1, %s9
    %p147 = scmp.lt.s32.totalorder %s9, 3
    %p148 = pnand %p146, %p147
    %p149 = pneg %p148
    // Predicated region
    $region9: #{_lambda_.31} parent=5 // pred_check
      _
    $region10: #{_lambda_.31} parent=5 // pred_check_branch
      %151 = sbr.rel (%p148) target = $region12
    $region11: #{_lambda_.31} parent=5 // pred_region
      %s152 = ssub.s32 %s9, 1
      // Predicated region
      $region13: #{_lambda_.31} parent=11 // pred_check
        %p153 = pneg %p82
      $region14: #{_lambda_.31} parent=11 // pred_check_branch
        %155 = sbr.rel (%p153) target = $region16
      $region15: #{_lambda_.31} parent=11 // pred_region
        %p156 = scmp.lt.s32.totalorder %s20, 0
        %s157 = scalar_select %p156, %s20, 0
        %s158 = smul.addr %s157, 4
        %s159 = scalar_lea.vmem %s1, %s158
      $region16: #{_lambda_.31} parent=11 // pred_fallthru
        _
      // Predicated region
      $region17: #{_lambda_.31} parent=11 // pred_check
        %p160 = pneg %p108
      $region18: #{_lambda_.31} parent=11 // pred_check_branch
        %162 = sbr.rel (%p160) target = $region20
      $region19: #{_lambda_.31} parent=11 // pred_region
        %p163 = scmp.lt.s32.totalorder %s20, 0
        %s164 = scalar_select %p163, %s20, 0
        %s165 = scalar_lea.vmem %s2, %s164
      $region20: #{_lambda_.31} parent=11 // pred_fallthru
        _
    $region12: #{_lambda_.31} parent=5 // pred_fallthru
      _
    %p166 = scmp.lt.s32.totalorder %s9, 2
    // Predicated region
    $region21: #{_lambda_.31} parent=5 // pred_check
      %p167 = pneg %p166
    $region22: #{_lambda_.31} parent=5 // pred_check_branch
      %169 = sbr.rel (%p167) target = $region24
    $region23: #{_lambda_.31} parent=5 // pred_region
      // Predicated region
      $region25: #{_lambda_.31} parent=23 // pred_check
        %p170 = pneg %p50
      $region26: #{_lambda_.31} parent=23 // pred_check_branch
        %172 = sbr.rel (%p170) target = $region28
      $region27: #{_lambda_.31} parent=23 // pred_region
        %p173 = scmp.lt.s32.totalorder %s16, 1
        %s174 = scalar_select %p173, %s16, 1
        %p175 = scmp.lt.s32.totalorder %s18, 0
        %s176 = scalar_select %p175, %s18, 0
        %s177 = sadd.s32 %s176, %s174
        %s178 = smul.addr %s177, 8
        %s179 = scalar_lea.vmem %s0, %s178
      $region28: #{_lambda_.31} parent=23 // pred_fallthru
        _
    $region24: #{_lambda_.31} parent=5 // pred_fallthru
      _
    %p180 = scmp.le.s32.totalorder 1, %s9
    %p181 = scmp.lt.s32.totalorder %s9, 3
    %p182 = pnand %p180, %p181
    %p183 = pneg %p182
    // Predicated region
    $region29: #{_lambda_.31} parent=5 // pred_check
      _
    $region30: #{_lambda_.31} parent=5 // pred_check_branch
      %185 = sbr.rel (%p182) target = $region32
    $region31: #{_lambda_.31} parent=5 // pred_region
      %s186 = ssub.s32 %s9, 1
      %p187 = scmp.lt.s32.totalorder %s19, 1
      %s188 = scalar_select %p187, %s19, 1
      %p189 = scmp.lt.s32.totalorder %s21, 0
      %s190 = scalar_select %p189, %s21, 0
      %s191 = sadd.s32 %s190, %s188
      %s192 = smul.addr %s191, 8
      %s193 = scalar_lea.vmem %s0, %s192
      %p194 = pneg %p56
      %p195 = pneg %p53
      %p196 = scmp.lt.s32.totalorder %s20, 0
      %s197 = scalar_select %p196, %s20, 0
      %s198 = smul.addr %s197, 4
      %s199 = scalar_lea.vmem %s1, %s198
      %p200 = pneg %p82
      %p201 = pneg %p79
      %p202 = scmp.lt.s32.totalorder %s20, 0
      %s203 = scalar_select %p202, %s20, 0
      %s204 = scalar_lea.vmem %s2, %s203
      %p205 = pneg %p108
      %p206 = pneg %p105
      %p207 = pneg %p138
      %p208 = pneg %p135
      %p209 = scmp.lt.s32.totalorder %s19, 1
      %s210 = scalar_select %p209, %s19, 1
      %p211 = scmp.lt.s32.totalorder %s21, 0
      %s212 = scalar_select %p211, %s21, 0
      %p213 = scmp.lt.s32.totalorder %s20, 0
      %s214 = scalar_select %p213, %s20, 0
      %s215 = sadd.s32 %s214, %s212
      %s216 = sadd.s32 %s215, %s210
      %s217 = smul.addr %s216, 4
      %s218 = scalar_lea.vmem %s3, %s217
      %p219 = scmp.lt.s32.totalorder %s19, 1
      %s220 = scalar_select %p219, %s19, 1
      %p221 = scmp.lt.s32.totalorder %s21, 0
      %s222 = scalar_select %p221, %s21, 0
      %s223 = sadd.s32 %s222, %s220
      %s224 = smul.addr %s223, 8
      %s225 = scalar_lea.vmem %s0, %s224
      %p226 = scmp.lt.s32.totalorder %s20, 0
      %s227 = scalar_select %p226, %s20, 0
      %s228 = smul.addr %s227, 4
      %s229 = scalar_lea.vmem %s1, %s228
      %p230 = scmp.lt.s32.totalorder %s20, 0
      %s231 = scalar_select %p230, %s20, 0
      %s232 = scalar_lea.vmem %s2, %s231
      %p233 = scmp.lt.s32.totalorder %s19, 1
      %s234 = scalar_select %p233, %s19, 1
      %p235 = scmp.lt.s32.totalorder %s21, 0
      %s236 = scalar_select %p235, %s21, 0
      %p237 = scmp.lt.s32.totalorder %s20, 0
      %s238 = scalar_select %p237, %s20, 0
      %s239 = sadd.s32 %s238, %s236
      %s240 = sadd.s32 %s239, %s234
      %s241 = smul.addr %s240, 4
      %s242 = scalar_lea.vmem %s3, %s241
      %v244 = vld [vmem:[%s225] sm:$0xff]
      %v245 = vpack.c.bf16 %v244, %v244
      %v246 = vld [vmem:[%s229] sm:$0xf]
      %v247 = vld [vmem:[%s229 + $0x4] sm:$0xf]
      %v248 = vld [vmem:[%s229 + $0x8] sm:$0xf]
      %v249 = vld [vmem:[%s229 + $0xc] sm:$0xf]
      %v250 = vld [vmem:[%s229 + $0x10] sm:$0xf]
      %v251 = vld [vmem:[%s229 + $0x14] sm:$0xf]
      %v252 = vld [vmem:[%s232] sm:$0x1]
      %v254 = vlaneseq
      %v255 = vshrl.u32 %v254, 7
      %v256 = vsub.s32 0, %v255
      %v257 = vrot.slane %v252, %v256
      %v265 = vunpack.c.l.b16 %v246
      %v266 = vunpack.c.l.b16 %v247
      %v267 = vunpack.c.l.b16 %v248
      %v268 = vunpack.c.l.b16 %v249
      %v269 = vunpack.c.l.b16 %v250
      %v270 = vunpack.c.l.b16 %v251
      %v271 = vpack.c.b16 %v266, %v265
      %v272 = vpack.c.b16 %v268, %v267
      %v273 = vpack.c.b16 %v270, %v269
      %vm277 = vcmask 392192
      %v279 = vsel %vm277, %v245, 0
      %281 = vmatprep.subr.bf16.mxu0 0
      %282 = vmatpush1.bf16.msra.mxu0 %v271
      %283 = vmatprep.subr.bf16.mxu0 0
      %284 = vmatpush1.bf16.msra.mxu0 %v272
      %285 = vmatprep.subr.bf16.mxu0 0
      %286 = vmatpush1.bf16.msra.mxu0 %v273
      %287 = vmatprep.subr.bf16.mxu0 0
      %288 = vmatpush1.bf16.msra.mxu0 0
      %289 = vmatprep.subr.bf16.mxu0 0
      %290 = vmatpush1.bf16.msra.mxu0 0
      %291 = vmatprep.subr.bf16.mxu0 0
      %292 = vmatpush1.bf16.msra.mxu0 0
      %293 = vmatprep.subr.bf16.mxu0 0
      %294 = vmatpush1.bf16.msra.mxu0 0
      %295 = vmatprep.subr.bf16.mxu0 0
      %296 = vmatpush1.bf16.msra.mxu0 0
      %297 = vmatprep.subr.bf16.mxu0 0
      %298 = vmatpush1.bf16.msra.mxu0 0
      %299 = vmatprep.subr.bf16.mxu0 0
      %300 = vmatpush1.bf16.msra.mxu0 0
      %301 = vmatprep.subr.bf16.mxu0 0
      %302 = vmatpush1.bf16.msra.mxu0 0
      %303 = vmatprep.subr.bf16.mxu0 0
      %304 = vmatpush1.bf16.msra.mxu0 0
      %305 = vmatprep.subr.bf16.mxu0 0
      %306 = vmatpush1.bf16.msra.mxu0 0
      %307 = vmatprep.subr.bf16.mxu0 0
      %308 = vmatpush1.bf16.msra.mxu0 0
      %309 = vmatprep.subr.bf16.mxu0 0
      %310 = vmatpush1.bf16.msra.mxu0 0
      %311 = vmatprep.subr.bf16.mxu0 0
      %312 = vmatpush1.bf16.msra.mxu0 0
      %313 = vmatprep.mubr.bf16.mxu0 0
      %314 = vmatmul.mubr.bf16.gmra.mrb[0].mxu0 %v279
      %v315 = vpop.f32.mrb[0].mxu0
      %v316 = vadd.f32 %v257, %v315
      %v317 = vpop.f32.mrb[0].mxu0
      %v318 = vpop.f32.mrb[0].mxu0
      %v319 = vpop.f32.mrb[0].mxu0
      %320 = vdwg.mxu0
      %v321 = vpack.c.bf16 %v316, %v316
      %322 = vst [vmem:[%s242] sm:$0xf] %v321
      %p323 = scmp.lt.s32.totalorder %s19, 1
      %s324 = scalar_select %p323, %s19, 1
      %p325 = scmp.lt.s32.totalorder %s21, 0
      %s326 = scalar_select %p325, %s21, 0
      %p327 = scmp.lt.s32.totalorder %s20, 0
      %s328 = scalar_select %p327, %s20, 0
      %s329 = sadd.s32 %s328, %s326
      %s330 = sadd.s32 %s329, %s324
      %s331 = smul.addr %s330, 4
      %s332 = scalar_lea.vmem %s3, %s331
      // Predicated region
      $region33: #{_lambda_.31} parent=31 // pred_check
        %p333 = pneg %p135
      $region34: #{_lambda_.31} parent=31 // pred_check_branch
        %335 = sbr.rel (%p333) target = $region36
      $region35: #{_lambda_.31} parent=31 // pred_region
        _
      $region36: #{_lambda_.31} parent=31 // pred_fallthru
        _
    $region32: #{_lambda_.31} parent=5 // pred_fallthru
      _
    %p336 = scmp.le.s32.totalorder 2, %s9
    // Predicated region
    $region37: #{_lambda_.31} parent=5 // pred_check
      %p337 = pneg %p336
    $region38: #{_lambda_.31} parent=5 // pred_check_branch
      %339 = sbr.rel (%p337) target = $region40
    $region39: #{_lambda_.31} parent=5 // pred_region
      %s340 = ssub.s32 %s9, 2
      // Predicated region
      $region41: #{_lambda_.31} parent=39 // pred_check
        %p341 = pneg %p141
      $region42: #{_lambda_.31} parent=39 // pred_check_branch
        %343 = sbr.rel (%p341) target = $region44
      $region43: #{_lambda_.31} parent=39 // pred_region
        %p344 = scmp.lt.s32.totalorder %s22, 1
        %s345 = scalar_select %p344, %s22, 1
        %p346 = scmp.lt.s32.totalorder %s24, 0
        %s347 = scalar_select %p346, %s24, 0
        %p348 = scmp.lt.s32.totalorder %s23, 0
        %s349 = scalar_select %p348, %s23, 0
        %s350 = sadd.s32 %s349, %s347
        %s351 = sadd.s32 %s350, %s345
        %s352 = smul.addr %s351, 4
        %s353 = scalar_lea.vmem %s3, %s352
      $region44: #{_lambda_.31} parent=39 // pred_fallthru
        _
    $region40: #{_lambda_.31} parent=5 // pred_fallthru
      _
  $region6: #{_lambda_.31} parent=0 // loop_footer
    %s13 = sadd.s32 1, %s9
  $region7: #{_lambda_.31} parent=0 // loop_footer_branch
    %8 = sbr.rel target = $region3
  $region8: #{_lambda_.31} parent=0 // loop_exit
    _

// kernel: _lambda_.33
$region0: #{_lambda_.33}
  #allocation0 [shape = 'u32[]', space=smem, size = 0x4, offset = 0x4, fixed_abs, tag = 'smem constant byte address 0x4 - core index']
  #allocation1 [shape = 'u32[144,128]{1,0:T(1,128)}', space=vmem, size = 0x12000, scoped, tag = 'internal scratch']
  %s0 = inlined_call_operand.vmem [shape: bf16[2,64,64], index: 0, kind: input, shape index: {}]
  %s1 = inlined_call_operand.vmem [shape: bf16[64,64], index: 1, kind: input, shape index: {}]
  %s2 = inlined_call_operand.vmem [shape: f32[1,64], index: 2, kind: input, shape index: {}]
  %s3 = inlined_call_operand.vmem [shape: f32[2,64,64], index: 3, kind: input, shape index: {}]
  %s4 = inlined_call_operand.vmem [shape: f32[2,64,64], index: 4, kind: output, shape index: {}]
  %s5 = sld [smem:[#allocation0]]
  $region49: #{_lambda_.33} parent=0
    _
  %s7 = ssub.s32 1, %s5
  %s8 = scalar_select 0, %s7, %s5
  loop: start=0, step=1, limit=4
  $region2: #{_lambda_.33} parent=0 // loop_pre_header
    _
  $region3: #{_lambda_.33} parent=0 // loop_header
    %s10 = sphi 0, %s14
    %p11 = scmp.ge.s32.totalorder %s10, 4
    %s17 = sphi 0, %s36
    %s18 = sphi 0, %s32
    %s19 = sphi 0, %s28
    %s20 = sphi 0, %s17
    %s21 = sphi 0, %s18
    %s22 = sphi 0, %s19
    %s23 = sphi 0, %s20
    %s24 = sphi 0, %s21
    %s25 = sphi 0, %s22
    %s41 = sphi 0, %s43
    %s44 = sphi 0, %s41
    %s45 = sphi 0, %s44
    %s61 = sphi 0, %s45
    %s67 = sphi 0, %s69
    %s70 = sphi 0, %s67
    %s71 = sphi 0, %s70
    %s87 = sphi 0, %s71
    %s93 = sphi 0, %s95
    %s96 = sphi 0, %s93
    %s97 = sphi 0, %s96
    %s113 = sphi 0, %s97
    %s123 = sphi 0, %s125
    %s126 = sphi 0, %s123
    %s127 = sphi 0, %s126
    %s143 = sphi 0, %s127
    %s153 = sphi 0, %s155
    %s156 = sphi 0, %s153
    %s157 = sphi 0, %s156
    %s173 = sphi 0, %s157
  $region4: #{_lambda_.33} parent=0 // loop_header_branch
    %13 = sbr.rel (%p11) target = $region8
  $region5: #{_lambda_.33} parent=0 // loop_body
    %s15 = ssub.s32 %s10, 1
    %s16 = ssub.s32 %s10, 2
    %s26 = sadd.s32 1, %s19
    %p27 = scmp.ge.s32.totalorder %s26, 1
    %s28 = scalar_select %p27, 0, %s26
    %s29 = sadd.s32 1, %s18
    %s30 = scalar_select %p27, %s29, %s18
    %p31 = scmp.ge.s32.totalorder %s30, 1
    %s32 = scalar_select %p31, 0, %s30
    %s33 = sadd.s32 1, %s17
    %s34 = scalar_select %p31, %s33, %s17
    %p35 = scmp.ge.s32.totalorder %s34, 2
    %s36 = scalar_select %p35, 0, %s34
    %s37 = ssub.s32 %s17, %s36
    %s38 = ssub.s32 %s19, %s28
    %s39 = sor.u32 %s37, %s38
    %p40 = scmp.eq.s32.totalorder %s39, 0
    %s42 = sadd.s32 %s41, 1
    %s43 = scalar_select %p40, %s41, %s42
    %p46 = pneg %p40
    %p47 = scmp.eq.s32.totalorder %s10, 1
    %p48 = por %p46, %p47
    %p49 = scmp.ne.s32.totalorder %s41, %s44
    %p50 = scmp.eq.s32.totalorder %s10, 0
    %p51 = por %p49, %p50
    %p52 = scmp.ne.s32.totalorder %s41, %s44
    %p53 = scmp.eq.s32.totalorder %s15, 1
    %p54 = por %p52, %p53
    %p55 = scmp.ne.s32.totalorder %s44, %s45
    %p56 = scmp.eq.s32.totalorder %s15, 0
    %p57 = por %p55, %p56
    %p58 = scmp.ne.s32.totalorder %s44, %s45
    %p59 = scmp.eq.s32.totalorder %s16, 1
    %p60 = por %p58, %p59
    %p62 = scmp.ne.s32.totalorder %s45, %s61
    %p63 = scmp.eq.s32.totalorder %s16, 0
    %p64 = por %p62, %p63
    %s65 = ssub.s32 %s18, %s32
    %p66 = scmp.eq.s32.totalorder %s65, 0
    %s68 = sadd.s32 %s67, 1
    %s69 = scalar_select %p66, %s67, %s68
    %p72 = pneg %p66
    %p73 = scmp.eq.s32.totalorder %s10, 1
    %p74 = por %p72, %p73
    %p75 = scmp.ne.s32.totalorder %s67, %s70
    %p76 = scmp.eq.s32.totalorder %s10, 0
    %p77 = por %p75, %p76
    %p78 = scmp.ne.s32.totalorder %s67, %s70
    %p79 = scmp.eq.s32.totalorder %s15, 1
    %p80 = por %p78, %p79
    %p81 = scmp.ne.s32.totalorder %s70, %s71
    %p82 = scmp.eq.s32.totalorder %s15, 0
    %p83 = por %p81, %p82
    %p84 = scmp.ne.s32.totalorder %s70, %s71
    %p85 = scmp.eq.s32.totalorder %s16, 1
    %p86 = por %p84, %p85
    %p88 = scmp.ne.s32.totalorder %s71, %s87
    %p89 = scmp.eq.s32.totalorder %s16, 0
    %p90 = por %p88, %p89
    %s91 = ssub.s32 %s18, %s32
    %p92 = scmp.eq.s32.totalorder %s91, 0
    %s94 = sadd.s32 %s93, 1
    %s95 = scalar_select %p92, %s93, %s94
    %p98 = pneg %p92
    %p99 = scmp.eq.s32.totalorder %s10, 1
    %p100 = por %p98, %p99
    %p101 = scmp.ne.s32.totalorder %s93, %s96
    %p102 = scmp.eq.s32.totalorder %s10, 0
    %p103 = por %p101, %p102
    %p104 = scmp.ne.s32.totalorder %s93, %s96
    %p105 = scmp.eq.s32.totalorder %s15, 1
    %p106 = por %p104, %p105
    %p107 = scmp.ne.s32.totalorder %s96, %s97
    %p108 = scmp.eq.s32.totalorder %s15, 0
    %p109 = por %p107, %p108
    %p110 = scmp.ne.s32.totalorder %s96, %s97
    %p111 = scmp.eq.s32.totalorder %s16, 1
    %p112 = por %p110, %p111
    %p114 = scmp.ne.s32.totalorder %s97, %s113
    %p115 = scmp.eq.s32.totalorder %s16, 0
    %p116 = por %p114, %p115
    %s117 = ssub.s32 %s17, %s36
    %s118 = ssub.s32 %s19, %s28
    %s119 = sor.u32 %s117, %s118
    %s120 = ssub.s32 %s18, %s32
    %s121 = sor.u32 %s119, %s120
    %p122 = scmp.eq.s32.totalorder %s121, 0
    %s124 = sadd.s32 %s123, 1
    %s125 = scalar_select %p122, %s123, %s124
    %p128 = pneg %p122
    %p129 = scmp.eq.s32.totalorder %s10, 1
    %p130 = por %p128, %p129
    %p131 = scmp.ne.s32.totalorder %s123, %s126
    %p132 = scmp.eq.s32.totalorder %s10, 0
    %p133 = por %p131, %p132
    %p134 = scmp.ne.s32.totalorder %s123, %s126
    %p135 = scmp.eq.s32.totalorder %s15, 1
    %p136 = por %p134, %p135
    %p137 = scmp.ne.s32.totalorder %s126, %s127
    %p138 = scmp.eq.s32.totalorder %s15, 0
    %p139 = por %p137, %p138
    %p140 = scmp.ne.s32.totalorder %s126, %s127
    %p141 = scmp.eq.s32.totalorder %s16, 1
    %p142 = por %p140, %p141
    %p144 = scmp.ne.s32.totalorder %s127, %s143
    %p145 = scmp.eq.s32.totalorder %s16, 0
    %p146 = por %p144, %p145
    %s147 = ssub.s32 %s17, %s36
    %s148 = ssub.s32 %s19, %s28
    %s149 = sor.u32 %s147, %s148
    %s150 = ssub.s32 %s18, %s32
    %s151 = sor.u32 %s149, %s150
    %p152 = scmp.eq.s32.totalorder %s151, 0
    %s154 = sadd.s32 %s153, 1
    %s155 = scalar_select %p152, %s153, %s154
    %p158 = pneg %p152
    %p159 = scmp.eq.s32.totalorder %s10, 1
    %p160 = por %p158, %p159
    %p161 = scmp.ne.s32.totalorder %s153, %s156
    %p162 = scmp.eq.s32.totalorder %s10, 0
    %p163 = por %p161, %p162
    %p164 = scmp.ne.s32.totalorder %s153, %s156
    %p165 = scmp.eq.s32.totalorder %s15, 1
    %p166 = por %p164, %p165
    %p167 = scmp.ne.s32.totalorder %s156, %s157
    %p168 = scmp.eq.s32.totalorder %s15, 0
    %p169 = por %p167, %p168
    %p170 = scmp.ne.s32.totalorder %s156, %s157
    %p171 = scmp.eq.s32.totalorder %s16, 1
    %p172 = por %p170, %p171
    %p174 = scmp.ne.s32.totalorder %s157, %s173
    %p175 = scmp.eq.s32.totalorder %s16, 0
    %p176 = por %p174, %p175
    %p177 = scmp.le.s32.totalorder 1, %s10
    %p178 = scmp.lt.s32.totalorder %s10, 3
    %p179 = pnand %p177, %p178
    %p180 = pneg %p179
    // Predicated region
    $region9: #{_lambda_.33} parent=5 // pred_check
      _
    $region10: #{_lambda_.33} parent=5 // pred_check_branch
      %182 = sbr.rel (%p179) target = $region12
    $region11: #{_lambda_.33} parent=5 // pred_region
      %s183 = ssub.s32 %s10, 1
      // Predicated region
      $region13: #{_lambda_.33} parent=11 // pred_check
        %p184 = pneg %p83
      $region14: #{_lambda_.33} parent=11 // pred_check_branch
        %186 = sbr.rel (%p184) target = $region16
      $region15: #{_lambda_.33} parent=11 // pred_region
        %p187 = scmp.lt.s32.totalorder %s21, 0
        %s188 = scalar_select %p187, %s21, 0
        %s189 = smul.addr %s188, 4
        %s190 = scalar_lea.vmem %s1, %s189
      $region16: #{_lambda_.33} parent=11 // pred_fallthru
        _
      // Predicated region
      $region17: #{_lambda_.33} parent=11 // pred_check
        %p191 = pneg %p109
      $region18: #{_lambda_.33} parent=11 // pred_check_branch
        %193 = sbr.rel (%p191) target = $region20
      $region19: #{_lambda_.33} parent=11 // pred_region
        %p194 = scmp.lt.s32.totalorder %s21, 0
        %s195 = scalar_select %p194, %s21, 0
        %s196 = scalar_lea.vmem %s2, %s195
      $region20: #{_lambda_.33} parent=11 // pred_fallthru
        _
    $region12: #{_lambda_.33} parent=5 // pred_fallthru
      _
    %p197 = scmp.lt.s32.totalorder %s10, 2
    // Predicated region
    $region21: #{_lambda_.33} parent=5 // pred_check
      %p198 = pneg %p197
    $region22: #{_lambda_.33} parent=5 // pred_check_branch
      %200 = sbr.rel (%p198) target = $region24
    $region23: #{_lambda_.33} parent=5 // pred_region
      // Predicated region
      $region25: #{_lambda_.33} parent=23 // pred_check
        %p201 = pneg %p51
      $region26: #{_lambda_.33} parent=23 // pred_check_branch
        %203 = sbr.rel (%p201) target = $region28
      $region27: #{_lambda_.33} parent=23 // pred_region
        %s204 = smul.u32 8, %s19
        %p205 = scmp.lt.s32.totalorder %s17, 1
        %s206 = scalar_select %p205, %s17, 1
        %p207 = scmp.lt.s32.totalorder %s204, 7
        %s208 = scalar_select %p207, %s204, 7
        %s209 = smul.addr %s206, 8
        %s210 = sadd.s32 %s208, %s209
        %s211 = smul.addr %s210, 4
        %s212 = scalar_lea.vmem %s0, %s211
        %s213 = smul.u32 8, %s19
      $region28: #{_lambda_.33} parent=23 // pred_fallthru
        _
      // Predicated region
      $region29: #{_lambda_.33} parent=23 // pred_check
        %p214 = pneg %p133
      $region30: #{_lambda_.33} parent=23 // pred_check_branch
        %216 = sbr.rel (%p214) target = $region32
      $region31: #{_lambda_.33} parent=23 // pred_region
        %s217 = smul.u32 8, %s19
        %p218 = scmp.lt.s32.totalorder %s17, 1
        %s219 = scalar_select %p218, %s17, 1
        %p220 = scmp.lt.s32.totalorder %s217, 7
        %s221 = scalar_select %p220, %s217, 7
        %p222 = scmp.lt.s32.totalorder %s18, 0
        %s223 = scalar_select %p222, %s18, 0
        %s224 = sadd.s32 %s223, %s221
        %s225 = smul.addr %s219, 8
        %s226 = sadd.s32 %s224, %s225
        %s227 = smul.addr %s226, 8
        %s228 = scalar_lea.vmem %s3, %s227
        %s229 = smul.u32 8, %s19
      $region32: #{_lambda_.33} parent=23 // pred_fallthru
        _
    $region24: #{_lambda_.33} parent=5 // pred_fallthru
      _
    %p230 = scmp.le.s32.totalorder 1, %s10
    %p231 = scmp.lt.s32.totalorder %s10, 3
    %p232 = pnand %p230, %p231
    %p233 = pneg %p232
    // Predicated region
    $region33: #{_lambda_.33} parent=5 // pred_check
      _
    $region34: #{_lambda_.33} parent=5 // pred_check_branch
      %235 = sbr.rel (%p232) target = $region36
    $region35: #{_lambda_.33} parent=5 // pred_region
      %s236 = ssub.s32 %s10, 1
      %s237 = smul.u32 8, %s22
      %p238 = scmp.lt.s32.totalorder %s20, 1
      %s239 = scalar_select %p238, %s20, 1
      %p240 = scmp.lt.s32.totalorder %s237, 7
      %s241 = scalar_select %p240, %s237, 7
      %s242 = smul.addr %s239, 8
      %s243 = sadd.s32 %s241, %s242
      %s244 = smul.addr %s243, 4
      %s245 = scalar_lea.vmem %s0, %s244
      %p246 = pneg %p57
      %p247 = pneg %p54
      %p248 = scmp.lt.s32.totalorder %s21, 0
      %s249 = scalar_select %p248, %s21, 0
      %s250 = smul.addr %s249, 4
      %s251 = scalar_lea.vmem %s1, %s250
      %p252 = pneg %p83
      %p253 = pneg %p80
      %p254 = scmp.lt.s32.totalorder %s21, 0
      %s255 = scalar_select %p254, %s21, 0
      %s256 = scalar_lea.vmem %s2, %s255
      %p257 = pneg %p109
      %p258 = pneg %p106
      %s259 = smul.u32 8, %s22
      %p260 = scmp.lt.s32.totalorder %s20, 1
      %s261 = scalar_select %p260, %s20, 1
      %p262 = scmp.lt.s32.totalorder %s259, 7
      %s263 = scalar_select %p262, %s259, 7
      %p264 = scmp.lt.s32.totalorder %s21, 0
      %s265 = scalar_select %p264, %s21, 0
      %s266 = sadd.s32 %s265, %s263
      %s267 = smul.addr %s261, 8
      %s268 = sadd.s32 %s266, %s267
      %s269 = smul.addr %s268, 8
      %s270 = scalar_lea.vmem %s3, %s269
      %p271 = pneg %p139
      %p272 = pneg %p136
      %p273 = pneg %p169
      %p274 = pneg %p166
      %s275 = smul.u32 8, %s22
      %p276 = scmp.lt.s32.totalorder %s20, 1
      %s277 = scalar_select %p276, %s20, 1
      %p278 = scmp.lt.s32.totalorder %s275, 7
      %s279 = scalar_select %p278, %s275, 7
      %p280 = scmp.lt.s32.totalorder %s21, 0
      %s281 = scalar_select %p280, %s21, 0
      %s282 = sadd.s32 %s281, %s279
      %s283 = smul.addr %s277, 8
      %s284 = sadd.s32 %s282, %s283
      %s285 = smul.addr %s284, 8
      %s286 = scalar_lea.vmem %s4, %s285
      %s287 = smul.u32 8, %s22
      %p288 = scmp.lt.s32.totalorder %s20, 1
      %s289 = scalar_select %p288, %s20, 1
      %p290 = scmp.lt.s32.totalorder %s287, 7
      %s291 = scalar_select %p290, %s287, 7
      %s292 = smul.addr %s289, 8
      %s293 = sadd.s32 %s291, %s292
      %s294 = smul.addr %s293, 4
      %s295 = scalar_lea.vmem %s0, %s294
      %s296 = smul.u32 8, %s22
      %p297 = scmp.lt.s32.totalorder %s21, 0
      %s298 = scalar_select %p297, %s21, 0
      %s299 = smul.addr %s298, 4
      %s300 = scalar_lea.vmem %s1, %s299
      %p301 = scmp.lt.s32.totalorder %s21, 0
      %s302 = scalar_select %p301, %s21, 0
      %s303 = scalar_lea.vmem %s2, %s302
      %s304 = smul.u32 8, %s22
      %p305 = scmp.lt.s32.totalorder %s20, 1
      %s306 = scalar_select %p305, %s20, 1
      %p307 = scmp.lt.s32.totalorder %s304, 7
      %s308 = scalar_select %p307, %s304, 7
      %p309 = scmp.lt.s32.totalorder %s21, 0
      %s310 = scalar_select %p309, %s21, 0
      %s311 = sadd.s32 %s310, %s308
      %s312 = smul.addr %s306, 8
      %s313 = sadd.s32 %s311, %s312
      %s314 = smul.addr %s313, 8
      %s315 = scalar_lea.vmem %s3, %s314
      %s316 = smul.u32 8, %s22
      %s317 = smul.u32 8, %s22
      %p318 = scmp.lt.s32.totalorder %s20, 1
      %s319 = scalar_select %p318, %s20, 1
      %p320 = scmp.lt.s32.totalorder %s317, 7
      %s321 = scalar_select %p320, %s317, 7
      %p322 = scmp.lt.s32.totalorder %s21, 0
      %s323 = scalar_select %p322, %s21, 0
      %s324 = sadd.s32 %s323, %s321
      %s325 = smul.addr %s319, 8
      %s326 = sadd.s32 %s324, %s325
      %s327 = smul.addr %s326, 8
      %s328 = scalar_lea.vmem %s4, %s327
      %s329 = smul.u32 8, %s22
      %v331 = vld [vmem:[%s295] sm:$0xf]
      %v332 = vld [vmem:[%s295 + $0x4] sm:$0xf]
      %v333 = vld [vmem:[%s295 + $0x8] sm:$0xf]
      %v334 = vld [vmem:[%s295 + $0xc] sm:$0xf]
      %v335 = vld [vmem:[%s295 + $0x10] sm:$0xf]
      %v336 = vld [vmem:[%s295 + $0x14] sm:$0xf]
      %v337 = vld [vmem:[%s295 + $0x18] sm:$0xf]
      %v338 = vld [vmem:[%s295 + $0x1c] sm:$0xf]
      %v339 = vld [vmem:[%s300] sm:$0xf]
      %v340 = vld [vmem:[%s300 + $0x4] sm:$0xf]
      %v341 = vld [vmem:[%s300 + $0x8] sm:$0xf]
      %v342 = vld [vmem:[%s300 + $0xc] sm:$0xf]
      %v343 = vld [vmem:[%s300 + $0x10] sm:$0xf]
      %v344 = vld [vmem:[%s300 + $0x14] sm:$0xf]
      %v345 = vld [vmem:[%s300 + $0x18] sm:$0xf]
      %v346 = vld [vmem:[%s300 + $0x1c] sm:$0xf]
      %v347 = vld [vmem:[%s303] sm:$0x1]
      %v349 = vlaneseq
      %v350 = vshrl.u32 %v349, 7
      %v351 = vsub.s32 0, %v350
      %v352 = vrot.slane %v347, %v351
      %v362 = vunpack.c.l.b16 %v331
      %v363 = vunpack.c.l.b16 %v332
      %v364 = vunpack.c.l.b16 %v333
      %v365 = vunpack.c.l.b16 %v334
      %v366 = vunpack.c.l.b16 %v335
      %v367 = vunpack.c.l.b16 %v336
      %v368 = vunpack.c.l.b16 %v337
      %v369 = vunpack.c.l.b16 %v338
      %v370 = vpack.c.b16 %v363, %v362
      %v371 = vpack.c.b16 %v365, %v364
      %v372 = vpack.c.b16 %v367, %v366
      %v373 = vpack.c.b16 %v369, %v368
      %v382 = vunpack.c.l.b16 %v339
      %v383 = vunpack.c.l.b16 %v340
      %v384 = vunpack.c.l.b16 %v341
      %v385 = vunpack.c.l.b16 %v342
      %v386 = vunpack.c.l.b16 %v343
      %v387 = vunpack.c.l.b16 %v344
      %v388 = vunpack.c.l.b16 %v345
      %v389 = vunpack.c.l.b16 %v346
      %v390 = vpack.c.b16 %v383, %v382
      %v391 = vpack.c.b16 %v385, %v384
      %v392 = vpack.c.b16 %v387, %v386
      %v393 = vpack.c.b16 %v389, %v388
      %vm398 = vcmask 523264
      %v400 = vsel %vm398, %v370, 0
      %v403 = vsel %vm398, %v371, 0
      %v406 = vsel %vm398, %v372, 0
      %v409 = vsel %vm398, %v373, 0
      %411 = vmatprep.subr.bf16.mxu0 0
      %412 = vmatpush1.bf16.msra.mxu0 %v390
      %413 = vmatprep.subr.bf16.mxu0 0
      %414 = vmatpush1.bf16.msra.mxu0 %v391
      %415 = vmatprep.subr.bf16.mxu0 0
      %416 = vmatpush1.bf16.msra.mxu0 %v392
      %417 = vmatprep.subr.bf16.mxu0 0
      %418 = vmatpush1.bf16.msra.mxu0 %v393
      %419 = vmatprep.subr.bf16.mxu0 0
      %420 = vmatpush1.bf16.msra.mxu0 0
      %421 = vmatprep.subr.bf16.mxu0 0
      %422 = vmatpush1.bf16.msra.mxu0 0
      %423 = vmatprep.subr.bf16.mxu0 0
      %424 = vmatpush1.bf16.msra.mxu0 0
      %425 = vmatprep.subr.bf16.mxu0 0
      %426 = vmatpush1.bf16.msra.mxu0 0
      %427 = vmatprep.subr.bf16.mxu0 0
      %428 = vmatpush1.bf16.msra.mxu0 0
      %429 = vmatprep.subr.bf16.mxu0 0
      %430 = vmatpush1.bf16.msra.mxu0 0
      %431 = vmatprep.subr.bf16.mxu0 0
      %432 = vmatpush1.bf16.msra.mxu0 0
      %433 = vmatprep.subr.bf16.mxu0 0
      %434 = vmatpush1.bf16.msra.mxu0 0
      %435 = vmatprep.subr.bf16.mxu0 0
      %436 = vmatpush1.bf16.msra.mxu0 0
      %437 = vmatprep.subr.bf16.mxu0 0
      %438 = vmatpush1.bf16.msra.mxu0 0
      %439 = vmatprep.subr.bf16.mxu0 0
      %440 = vmatpush1.bf16.msra.mxu0 0
      %441 = vmatprep.subr.bf16.mxu0 0
      %442 = vmatpush1.bf16.msra.mxu0 0
      %443 = vmatprep.mubr.bf16.mxu0 0
      %444 = vmatmul.mubr.bf16.gmra.mrb[0].mxu0 %v400
      %v445 = vpop.f32.mrb[0].mxu0
      %v446 = vadd.f32 %v352, %v445
      %v447 = vpop.f32.mrb[0].mxu0
      %v448 = vpop.f32.mrb[0].mxu0
      %v449 = vadd.f32 %v352, %v448
      %v450 = vpop.f32.mrb[0].mxu0
      %451 = vmatprep.mubr.bf16.mxu0 0
      %452 = vmatmul.mubr.bf16.gmra.mrb[0].mxu0 %v403
      %v453 = vpop.f32.mrb[0].mxu0
      %v454 = vadd.f32 %v352, %v453
      %v455 = vpop.f32.mrb[0].mxu0
      %v456 = vpop.f32.mrb[0].mxu0
      %v457 = vadd.f32 %v352, %v456
      %v458 = vpop.f32.mrb[0].mxu0
      %459 = vmatprep.mubr.bf16.mxu0 0
      %460 = vmatmul.mubr.bf16.gmra.mrb[0].mxu0 %v406
      %v461 = vpop.f32.mrb[0].mxu0
      %v462 = vadd.f32 %v352, %v461
      %v463 = vpop.f32.mrb[0].mxu0
      %v464 = vpop.f32.mrb[0].mxu0
      %v465 = vadd.f32 %v352, %v464
      %v466 = vpop.f32.mrb[0].mxu0
      %467 = vmatprep.mubr.bf16.mxu0 0
      %468 = vmatmul.mubr.bf16.gmra.mrb[0].mxu0 %v409
      %v469 = vpop.f32.mrb[0].mxu0
      %v470 = vadd.f32 %v352, %v469
      %v471 = vpop.f32.mrb[0].mxu0
      %v472 = vpop.f32.mrb[0].mxu0
      %v473 = vadd.f32 %v352, %v472
      %v474 = vpop.f32.mrb[0].mxu0
      %475 = vdwg.mxu0
      %v476 = vld [vmem:[%s315] sm:$0xff]
      %v477 = vld [vmem:[%s315 + $0x8] sm:$0xff]
      %v478 = vld [vmem:[%s315 + $0x10] sm:$0xff]
      %v479 = vld [vmem:[%s315 + $0x18] sm:$0xff]
      %v480 = vld [vmem:[%s315 + $0x20] sm:$0xff]
      %v481 = vld [vmem:[%s315 + $0x28] sm:$0xff]
      %v482 = vld [vmem:[%s315 + $0x30] sm:$0xff]
      %v483 = vld [vmem:[%s315 + $0x38] sm:$0xff]
      %v484 = vadd.f32 %v446, %v476
      %v485 = vadd.f32 %v449, %v477
      %v486 = vadd.f32 %v454, %v478
      %v487 = vadd.f32 %v457, %v479
      %v488 = vadd.f32 %v462, %v480
      %v489 = vadd.f32 %v465, %v481
      %v490 = vadd.f32 %v470, %v482
      %v491 = vadd.f32 %v473, %v483
      %492 = vst.msk [vmem:[%s328] sm:$0xff] %vm398, %v484
      %493 = vst.msk [vmem:[%s328 + $0x8] sm:$0xff] %vm398, %v485
      %494 = vst.msk [vmem:[%s328 + $0x10] sm:$0xff] %vm398, %v486
      %495 = vst.msk [vmem:[%s328 + $0x18] sm:$0xff] %vm398, %v487
      %496 = vst.msk [vmem:[%s328 + $0x20] sm:$0xff] %vm398, %v488
      %497 = vst.msk [vmem:[%s328 + $0x28] sm:$0xff] %vm398, %v489
      %498 = vst.msk [vmem:[%s328 + $0x30] sm:$0xff] %vm398, %v490
      %499 = vst.msk [vmem:[%s328 + $0x38] sm:$0xff] %vm398, %v491
      %s500 = smul.u32 8, %s22
      %p501 = scmp.lt.s32.totalorder %s20, 1
      %s502 = scalar_select %p501, %s20, 1
      %p503 = scmp.lt.s32.totalorder %s500, 7
      %s504 = scalar_select %p503, %s500, 7
      %p505 = scmp.lt.s32.totalorder %s21, 0
      %s506 = scalar_select %p505, %s21, 0
      %s507 = sadd.s32 %s506, %s504
      %s508 = smul.addr %s502, 8
      %s509 = sadd.s32 %s507, %s508
      %s510 = smul.addr %s509, 8
      %s511 = scalar_lea.vmem %s4, %s510
      // Predicated region
      $region37: #{_lambda_.33} parent=35 // pred_check
        %p512 = pneg %p166
      $region38: #{_lambda_.33} parent=35 // pred_check_branch
        %514 = sbr.rel (%p512) target = $region40
      $region39: #{_lambda_.33} parent=35 // pred_region
        %s515 = smul.u32 8, %s22
      $region40: #{_lambda_.33} parent=35 // pred_fallthru
        _
    $region36: #{_lambda_.33} parent=5 // pred_fallthru
      _
    %p516 = scmp.le.s32.totalorder 2, %s10
    // Predicated region
    $region41: #{_lambda_.33} parent=5 // pred_check
      %p517 = pneg %p516
    $region42: #{_lambda_.33} parent=5 // pred_check_branch
      %519 = sbr.rel (%p517) target = $region44
    $region43: #{_lambda_.33} parent=5 // pred_region
      %s520 = ssub.s32 %s10, 2
      // Predicated region
      $region45: #{_lambda_.33} parent=43 // pred_check
        %p521 = pneg %p172
      $region46: #{_lambda_.33} parent=43 // pred_check_branch
        %523 = sbr.rel (%p521) target = $region48
      $region47: #{_lambda_.33} parent=43 // pred_region
        %s524 = smul.u32 8, %s25
        %p525 = scmp.lt.s32.totalorder %s23, 1
        %s526 = scalar_select %p525, %s23, 1
        %p527 = scmp.lt.s32.totalorder %s524, 7
        %s528 = scalar_select %p527, %s524, 7
        %p529 = scmp.lt.s32.totalorder %s24, 0
        %s530 = scalar_select %p529, %s24, 0
        %s531 = sadd.s32 %s530, %s528
        %s532 = smul.addr %s526, 8
        %s533 = sadd.s32 %s531, %s532
        %s534 = smul.addr %s533, 8
        %s535 = scalar_lea.vmem %s4, %s534
      $region48: #{_lambda_.33} parent=43 // pred_fallthru
        _
    $region44: #{_lambda_.33} parent=5 // pred_fallthru
      _
  $region6: #{_lambda_.33} parent=0 // loop_footer
    %s14 = sadd.s32 1, %s10
  $region7: #{_lambda_.33} parent=0 // loop_footer_branch
    %9 = sbr.rel target = $region3
  $region8: #{_lambda_.33} parent=0 // loop_exit
    _

// kernel: _lambda_.32
$region0: #{_lambda_.32}
  #allocation0 [shape = 'u32[]', space=smem, size = 0x4, offset = 0x4, fixed_abs, tag = 'smem constant byte address 0x4 - core index']
  #allocation1 [shape = 'u32[144,128]{1,0:T(1,128)}', space=vmem, size = 0x12000, scoped, tag = 'internal scratch']
  #allocation2 [shape = 'f32[64,1]{1,0:T(8,128)}', space=vmem, size = 0x8000, scoped, tag = 'scratch operand']
  #allocation3 [shape = 'f32[64,1]{1,0:T(8,128)}', space=vmem, size = 0x8000, scoped, tag = 'scratch operand']
  #allocation4 [shape = 'f32[64,16]{1,0:T(8,128)}', space=vmem, size = 0x8000, scoped, tag = 'scratch operand']
  %s0 = inlined_call_operand.vmem [shape: bf16[2,4,64,16], index: 0, kind: input, shape index: {}]
  %s1 = inlined_call_operand.vmem [shape: bf16[2,4,8,16], index: 1, kind: input, shape index: {}]
  %s2 = inlined_call_operand.vmem [shape: bf16[2,4,8,16], index: 2, kind: input, shape index: {}]
  %s3 = inlined_call_operand.vmem [shape: bf16[2,4,64,16], index: 3, kind: output, shape index: {}]
  %s4 = sld [smem:[#allocation0]]
  $region53: #{_lambda_.32} parent=0
    _
  %s6 = ssub.s32 1, %s4
  %s7 = scalar_select 0, %s6, %s4
  loop: start=0, step=1, limit=10
  $region2: #{_lambda_.32} parent=0 // loop_pre_header
    _
  $region3: #{_lambda_.32} parent=0 // loop_header
    %s9 = sphi 0, %s13
    %p10 = scmp.ge.s32.totalorder %s9, 10
    %s16 = sphi 0, %s42
    %s17 = sphi 0, %s38
    %s18 = sphi 0, %s34
    %s19 = sphi 0, %s30
    %s20 = sphi 0, %s16
    %s21 = sphi 0, %s17
    %s22 = sphi 0, %s18
    %s23 = sphi 0, %s19
    %s24 = sphi 0, %s20
    %s25 = sphi 0, %s21
    %s26 = sphi 0, %s22
    %s27 = sphi 0, %s23
    %s49 = sphi 0, %s51
    %s52 = sphi 0, %s49
    %s53 = sphi 0, %s52
    %s69 = sphi 0, %s53
    %s79 = sphi 0, %s81
    %s82 = sphi 0, %s79
    %s83 = sphi 0, %s82
    %s99 = sphi 0, %s83
    %s109 = sphi 0, %s111
    %s112 = sphi 0, %s109
    %s113 = sphi 0, %s112
    %s129 = sphi 0, %s113
    %s139 = sphi 0, %s141
    %s142 = sphi 0, %s139
    %s143 = sphi 0, %s142
    %s159 = sphi 0, %s143
  $region4: #{_lambda_.32} parent=0 // loop_header_branch
    %12 = sbr.rel (%p10) target = $region8
  $region5: #{_lambda_.32} parent=0 // loop_body
    %s14 = ssub.s32 %s9, 1
    %s15 = ssub.s32 %s9, 2
    %s28 = sadd.s32 1, %s19
    %p29 = scmp.ge.s32.totalorder %s28, 1
    %s30 = scalar_select %p29, 0, %s28
    %s31 = sadd.s32 1, %s18
    %s32 = scalar_select %p29, %s31, %s18
    %p33 = scmp.ge.s32.totalorder %s32, 1
    %s34 = scalar_select %p33, 0, %s32
    %s35 = sadd.s32 1, %s17
    %s36 = scalar_select %p33, %s35, %s17
    %p37 = scmp.ge.s32.totalorder %s36, 4
    %s38 = scalar_select %p37, 0, %s36
    %s39 = sadd.s32 1, %s16
    %s40 = scalar_select %p37, %s39, %s16
    %p41 = scmp.ge.s32.totalorder %s40, 2
    %s42 = scalar_select %p41, 0, %s40
    %s43 = ssub.s32 %s16, %s42
    %s44 = ssub.s32 %s17, %s38
    %s45 = sor.u32 %s43, %s44
    %s46 = ssub.s32 %s18, %s34
    %s47 = sor.u32 %s45, %s46
    %p48 = scmp.eq.s32.totalorder %s47, 0
    %s50 = sadd.s32 %s49, 1
    %s51 = scalar_select %p48, %s49, %s50
    %p54 = pneg %p48
    %p55 = scmp.eq.s32.totalorder %s9, 7
    %p56 = por %p54, %p55
    %p57 = scmp.ne.s32.totalorder %s49, %s52
    %p58 = scmp.eq.s32.totalorder %s9, 0
    %p59 = por %p57, %p58
    %p60 = scmp.ne.s32.totalorder %s49, %s52
    %p61 = scmp.eq.s32.totalorder %s14, 7
    %p62 = por %p60, %p61
    %p63 = scmp.ne.s32.totalorder %s52, %s53
    %p64 = scmp.eq.s32.totalorder %s14, 0
    %p65 = por %p63, %p64
    %p66 = scmp.ne.s32.totalorder %s52, %s53
    %p67 = scmp.eq.s32.totalorder %s15, 7
    %p68 = por %p66, %p67
    %p70 = scmp.ne.s32.totalorder %s53, %s69
    %p71 = scmp.eq.s32.totalorder %s15, 0
    %p72 = por %p70, %p71
    %s73 = ssub.s32 %s16, %s42
    %s74 = ssub.s32 %s17, %s38
    %s75 = sor.u32 %s73, %s74
    %s76 = ssub.s32 %s19, %s30
    %s77 = sor.u32 %s75, %s76
    %p78 = scmp.eq.s32.totalorder %s77, 0
    %s80 = sadd.s32 %s79, 1
    %s81 = scalar_select %p78, %s79, %s80
    %p84 = pneg %p78
    %p85 = scmp.eq.s32.totalorder %s9, 7
    %p86 = por %p84, %p85
    %p87 = scmp.ne.s32.totalorder %s79, %s82
    %p88 = scmp.eq.s32.totalorder %s9, 0
    %p89 = por %p87, %p88
    %p90 = scmp.ne.s32.totalorder %s79, %s82
    %p91 = scmp.eq.s32.totalorder %s14, 7
    %p92 = por %p90, %p91
    %p93 = scmp.ne.s32.totalorder %s82, %s83
    %p94 = scmp.eq.s32.totalorder %s14, 0
    %p95 = por %p93, %p94
    %p96 = scmp.ne.s32.totalorder %s82, %s83
    %p97 = scmp.eq.s32.totalorder %s15, 7
    %p98 = por %p96, %p97
    %p100 = scmp.ne.s32.totalorder %s83, %s99
    %p101 = scmp.eq.s32.totalorder %s15, 0
    %p102 = por %p100, %p101
    %s103 = ssub.s32 %s16, %s42
    %s104 = ssub.s32 %s17, %s38
    %s105 = sor.u32 %s103, %s104
    %s106 = ssub.s32 %s19, %s30
    %s107 = sor.u32 %s105, %s106
    %p108 = scmp.eq.s32.totalorder %s107, 0
    %s110 = sadd.s32 %s109, 1
    %s111 = scalar_select %p108, %s109, %s110
    %p114 = pneg %p108
    %p115 = scmp.eq.s32.totalorder %s9, 7
    %p116 = por %p114, %p115
    %p117 = scmp.ne.s32.totalorder %s109, %s112
    %p118 = scmp.eq.s32.totalorder %s9, 0
    %p119 = por %p117, %p118
    %p120 = scmp.ne.s32.totalorder %s109, %s112
    %p121 = scmp.eq.s32.totalorder %s14, 7
    %p122 = por %p120, %p121
    %p123 = scmp.ne.s32.totalorder %s112, %s113
    %p124 = scmp.eq.s32.totalorder %s14, 0
    %p125 = por %p123, %p124
    %p126 = scmp.ne.s32.totalorder %s112, %s113
    %p127 = scmp.eq.s32.totalorder %s15, 7
    %p128 = por %p126, %p127
    %p130 = scmp.ne.s32.totalorder %s113, %s129
    %p131 = scmp.eq.s32.totalorder %s15, 0
    %p132 = por %p130, %p131
    %s133 = ssub.s32 %s16, %s42
    %s134 = ssub.s32 %s17, %s38
    %s135 = sor.u32 %s133, %s134
    %s136 = ssub.s32 %s18, %s34
    %s137 = sor.u32 %s135, %s136
    %p138 = scmp.eq.s32.totalorder %s137, 0
    %s140 = sadd.s32 %s139, 1
    %s141 = scalar_select %p138, %s139, %s140
    %p144 = pneg %p138
    %p145 = scmp.eq.s32.totalorder %s9, 7
    %p146 = por %p144, %p145
    %p147 = scmp.ne.s32.totalorder %s139, %s142
    %p148 = scmp.eq.s32.totalorder %s9, 0
    %p149 = por %p147, %p148
    %p150 = scmp.ne.s32.totalorder %s139, %s142
    %p151 = scmp.eq.s32.totalorder %s14, 7
    %p152 = por %p150, %p151
    %p153 = scmp.ne.s32.totalorder %s142, %s143
    %p154 = scmp.eq.s32.totalorder %s14, 0
    %p155 = por %p153, %p154
    %p156 = scmp.ne.s32.totalorder %s142, %s143
    %p157 = scmp.eq.s32.totalorder %s15, 7
    %p158 = por %p156, %p157
    %p160 = scmp.ne.s32.totalorder %s143, %s159
    %p161 = scmp.eq.s32.totalorder %s15, 0
    %p162 = por %p160, %p161
    %p163 = scmp.le.s32.totalorder 1, %s9
    %p164 = scmp.lt.s32.totalorder %s9, 9
    %p165 = pnand %p163, %p164
    %p166 = pneg %p165
    // Predicated region
    $region9: #{_lambda_.32} parent=5 // pred_check
      _
    $region10: #{_lambda_.32} parent=5 // pred_check_branch
      %168 = sbr.rel (%p165) target = $region12
    $region11: #{_lambda_.32} parent=5 // pred_region
      %s169 = ssub.s32 %s9, 1
    $region12: #{_lambda_.32} parent=5 // pred_fallthru
      _
    %p170 = scmp.lt.s32.totalorder %s9, 8
    // Predicated region
    $region13: #{_lambda_.32} parent=5 // pred_check
      %p171 = pneg %p170
    $region14: #{_lambda_.32} parent=5 // pred_check_branch
      %173 = sbr.rel (%p171) target = $region16
    $region15: #{_lambda_.32} parent=5 // pred_region
      // Predicated region
      $region17: #{_lambda_.32} parent=15 // pred_check
        %p174 = pneg %p59
      $region18: #{_lambda_.32} parent=15 // pred_check_branch
        %176 = sbr.rel (%p174) target = $region20
      $region19: #{_lambda_.32} parent=15 // pred_region
        %s177 = smul.u32 8, %s18
        %p178 = scmp.lt.s32.totalorder %s16, 1
        %s179 = scalar_select %p178, %s16, 1
        %p180 = scmp.lt.s32.totalorder %s17, 3
        %s181 = scalar_select %p180, %s17, 3
        %p182 = scmp.lt.s32.totalorder %s177, 7
        %s183 = scalar_select %p182, %s177, 7
        %s184 = smul.addr %s181, 8
        %s185 = sadd.s32 %s183, %s184
        %s186 = smul.addr %s179, 32
        %s187 = sadd.s32 %s185, %s186
        %s188 = smul.addr %s187, 4
        %s189 = scalar_lea.vmem %s0, %s188
        %s190 = smul.u32 8, %s18
      $region20: #{_lambda_.32} parent=15 // pred_fallthru
        _
      // Predicated region
      $region21: #{_lambda_.32} parent=15 // pred_check
        %p191 = pneg %p89
      $region22: #{_lambda_.32} parent=15 // pred_check_branch
        %193 = sbr.rel (%p191) target = $region24
      $region23: #{_lambda_.32} parent=15 // pred_region
        %p194 = scmp.lt.s32.totalorder %s16, 1
        %s195 = scalar_select %p194, %s16, 1
        %p196 = scmp.lt.s32.totalorder %s17, 3
        %s197 = scalar_select %p196, %s17, 3
        %p198 = scmp.lt.s32.totalorder %s19, 0
        %s199 = scalar_select %p198, %s19, 0
        %s200 = sadd.s32 %s199, %s197
        %s201 = smul.addr %s195, 4
        %s202 = sadd.s32 %s200, %s201
        %s203 = smul.addr %s202, 4
        %s204 = scalar_lea.vmem %s1, %s203
      $region24: #{_lambda_.32} parent=15 // pred_fallthru
        _
      // Predicated region
      $region25: #{_lambda_.32} parent=15 // pred_check
        %p205 = pneg %p119
      $region26: #{_lambda_.32} parent=15 // pred_check_branch
        %207 = sbr.rel (%p205) target = $region28
      $region27: #{_lambda_.32} parent=15 // pred_region
        %p208 = scmp.lt.s32.totalorder %s16, 1
        %s209 = scalar_select %p208, %s16, 1
        %p210 = scmp.lt.s32.totalorder %s17, 3
        %s211 = scalar_select %p210, %s17, 3
        %p212 = scmp.lt.s32.totalorder %s19, 0
        %s213 = scalar_select %p212, %s19, 0
        %s214 = sadd.s32 %s213, %s211
        %s215 = smul.addr %s209, 4
        %s216 = sadd.s32 %s214, %s215
        %s217 = smul.addr %s216, 4
        %s218 = scalar_lea.vmem %s2, %s217
      $region28: #{_lambda_.32} parent=15 // pred_fallthru
        _
    $region16: #{_lambda_.32} parent=5 // pred_fallthru
      _
    %p219 = scmp.le.s32.totalorder 1, %s9
    %p220 = scmp.lt.s32.totalorder %s9, 9
    %p221 = pnand %p219, %p220
    %p222 = pneg %p221
    // Predicated region
    $region29: #{_lambda_.32} parent=5 // pred_check
      _
    $region30: #{_lambda_.32} parent=5 // pred_check_branch
      %224 = sbr.rel (%p221) target = $region32
    $region31: #{_lambda_.32} parent=5 // pred_region
      %s225 = ssub.s32 %s9, 1
      %s226 = smul.u32 8, %s22
      %p227 = scmp.lt.s32.totalorder %s20, 1
      %s228 = scalar_select %p227, %s20, 1
      %p229 = scmp.lt.s32.totalorder %s21, 3
      %s230 = scalar_select %p229, %s21, 3
      %p231 = scmp.lt.s32.totalorder %s226, 7
      %s232 = scalar_select %p231, %s226, 7
      %s233 = smul.addr %s230, 8
      %s234 = sadd.s32 %s232, %s233
      %s235 = smul.addr %s228, 32
      %s236 = sadd.s32 %s234, %s235
      %s237 = smul.addr %s236, 4
      %s238 = scalar_lea.vmem %s0, %s237
      %p239 = pneg %p65
      %p240 = pneg %p62
      %p241 = scmp.lt.s32.totalorder %s20, 1
      %s242 = scalar_select %p241, %s20, 1
      %p243 = scmp.lt.s32.totalorder %s21, 3
      %s244 = scalar_select %p243, %s21, 3
      %p245 = scmp.lt.s32.totalorder %s23, 0
      %s246 = scalar_select %p245, %s23, 0
      %s247 = sadd.s32 %s246, %s244
      %s248 = smul.addr %s242, 4
      %s249 = sadd.s32 %s247, %s248
      %s250 = smul.addr %s249, 4
      %s251 = scalar_lea.vmem %s1, %s250
      %p252 = pneg %p95
      %p253 = pneg %p92
      %p254 = scmp.lt.s32.totalorder %s20, 1
      %s255 = scalar_select %p254, %s20, 1
      %p256 = scmp.lt.s32.totalorder %s21, 3
      %s257 = scalar_select %p256, %s21, 3
      %p258 = scmp.lt.s32.totalorder %s23, 0
      %s259 = scalar_select %p258, %s23, 0
      %s260 = sadd.s32 %s259, %s257
      %s261 = smul.addr %s255, 4
      %s262 = sadd.s32 %s260, %s261
      %s263 = smul.addr %s262, 4
      %s264 = scalar_lea.vmem %s2, %s263
      %p265 = pneg %p125
      %p266 = pneg %p122
      %p267 = pneg %p155
      %p268 = pneg %p152
      %s269 = smul.u32 8, %s22
      %p270 = scmp.lt.s32.totalorder %s20, 1
      %s271 = scalar_select %p270, %s20, 1
      %p272 = scmp.lt.s32.totalorder %s21, 3
      %s273 = scalar_select %p272, %s21, 3
      %p274 = scmp.lt.s32.totalorder %s269, 7
      %s275 = scalar_select %p274, %s269, 7
      %s276 = smul.addr %s273, 8
      %s277 = sadd.s32 %s275, %s276
      %s278 = smul.addr %s271, 32
      %s279 = sadd.s32 %s277, %s278
      %s280 = smul.addr %s279, 4
      %s281 = scalar_lea.vmem %s3, %s280
      %s282 = smul.u32 8, %s22
      %p283 = scmp.lt.s32.totalorder %s20, 1
      %s284 = scalar_select %p283, %s20, 1
      %p285 = scmp.lt.s32.totalorder %s21, 3
      %s286 = scalar_select %p285, %s21, 3
      %p287 = scmp.lt.s32.totalorder %s282, 7
      %s288 = scalar_select %p287, %s282, 7
      %s289 = smul.addr %s286, 8
      %s290 = sadd.s32 %s288, %s289
      %s291 = smul.addr %s284, 32
      %s292 = sadd.s32 %s290, %s291
      %s293 = smul.addr %s292, 4
      %s294 = scalar_lea.vmem %s0, %s293
      %s295 = smul.u32 8, %s22
      %p296 = scmp.lt.s32.totalorder %s20, 1
      %s297 = scalar_select %p296, %s20, 1
      %p298 = scmp.lt.s32.totalorder %s21, 3
      %s299 = scalar_select %p298, %s21, 3
      %p300 = scmp.lt.s32.totalorder %s23, 0
      %s301 = scalar_select %p300, %s23, 0
      %s302 = sadd.s32 %s301, %s299
      %s303 = smul.addr %s297, 4
      %s304 = sadd.s32 %s302, %s303
      %s305 = smul.addr %s304, 4
      %s306 = scalar_lea.vmem %s1, %s305
      %p307 = scmp.lt.s32.totalorder %s20, 1
      %s308 = scalar_select %p307, %s20, 1
      %p309 = scmp.lt.s32.totalorder %s21, 3
      %s310 = scalar_select %p309, %s21, 3
      %p311 = scmp.lt.s32.totalorder %s23, 0
      %s312 = scalar_select %p311, %s23, 0
      %s313 = sadd.s32 %s312, %s310
      %s314 = smul.addr %s308, 4
      %s315 = sadd.s32 %s313, %s314
      %s316 = smul.addr %s315, 4
      %s317 = scalar_lea.vmem %s2, %s316
      %s318 = smul.u32 8, %s22
      %p319 = scmp.lt.s32.totalorder %s20, 1
      %s320 = scalar_select %p319, %s20, 1
      %p321 = scmp.lt.s32.totalorder %s21, 3
      %s322 = scalar_select %p321, %s21, 3
      %p323 = scmp.lt.s32.totalorder %s318, 7
      %s324 = scalar_select %p323, %s318, 7
      %s325 = smul.addr %s322, 8
      %s326 = sadd.s32 %s324, %s325
      %s327 = smul.addr %s320, 32
      %s328 = sadd.s32 %s326, %s327
      %s329 = smul.addr %s328, 4
      %s330 = scalar_lea.vmem %s3, %s329
      %s331 = smul.u32 8, %s22
      %p333 = scmp.eq.s32.totalorder %s23, 0
      // Predicated region
      $region33: #{_lambda_.32} parent=31 // pred_check
        %p334 = pneg %p333
      $region34: #{_lambda_.32} parent=31 // pred_check_branch
        %336 = sbr.rel (%p334) target = $region36
      $region35: #{_lambda_.32} parent=31 // pred_region
        %vm337 = vcmask 7168
        %338 = vst.msk [vmem:[#allocation2] sm:$0xff] %vm337, -inf
        %339 = vst.msk [vmem:[#allocation2 + $0x8] sm:$0xff] %vm337, -inf
        %340 = vst.msk [vmem:[#allocation2 + $0x10] sm:$0xff] %vm337, -inf
        %341 = vst.msk [vmem:[#allocation2 + $0x18] sm:$0xff] %vm337, -inf
        %342 = vst.msk [vmem:[#allocation2 + $0x20] sm:$0xff] %vm337, -inf
        %343 = vst.msk [vmem:[#allocation2 + $0x28] sm:$0xff] %vm337, -inf
        %344 = vst.msk [vmem:[#allocation2 + $0x30] sm:$0xff] %vm337, -inf
        %345 = vst.msk [vmem:[#allocation2 + $0x38] sm:$0xff] %vm337, -inf
        %346 = vst.msk [vmem:[#allocation3] sm:$0xff] %vm337, 0.0
        %347 = vst.msk [vmem:[#allocation3 + $0x8] sm:$0xff] %vm337, 0.0
        %348 = vst.msk [vmem:[#allocation3 + $0x10] sm:$0xff] %vm337, 0.0
        %349 = vst.msk [vmem:[#allocation3 + $0x18] sm:$0xff] %vm337, 0.0
        %350 = vst.msk [vmem:[#allocation3 + $0x20] sm:$0xff] %vm337, 0.0
        %351 = vst.msk [vmem:[#allocation3 + $0x28] sm:$0xff] %vm337, 0.0
        %352 = vst.msk [vmem:[#allocation3 + $0x30] sm:$0xff] %vm337, 0.0
        %353 = vst.msk [vmem:[#allocation3 + $0x38] sm:$0xff] %vm337, 0.0
        %vm354 = vcmask 130048
        %355 = vst.msk [vmem:[#allocation4] sm:$0xff] %vm354, 0.0
        %356 = vst.msk [vmem:[#allocation4 + $0x8] sm:$0xff] %vm354, 0.0
        %357 = vst.msk [vmem:[#allocation4 + $0x10] sm:$0xff] %vm354, 0.0
        %358 = vst.msk [vmem:[#allocation4 + $0x18] sm:$0xff] %vm354, 0.0
        %359 = vst.msk [vmem:[#allocation4 + $0x20] sm:$0xff] %vm354, 0.0
        %360 = vst.msk [vmem:[#allocation4 + $0x28] sm:$0xff] %vm354, 0.0
        %361 = vst.msk [vmem:[#allocation4 + $0x30] sm:$0xff] %vm354, 0.0
        %362 = vst.msk [vmem:[#allocation4 + $0x38] sm:$0xff] %vm354, 0.0
      $region36: #{_lambda_.32} parent=31 // pred_fallthru
        _
      %v363 = vld [vmem:[%s294] sm:$0xf]
      %v364 = vld [vmem:[%s294 + $0x4] sm:$0xf]
      %v365 = vld [vmem:[%s294 + $0x8] sm:$0xf]
      %v366 = vld [vmem:[%s294 + $0xc] sm:$0xf]
      %v367 = vld [vmem:[%s294 + $0x10] sm:$0xf]
      %v368 = vld [vmem:[%s294 + $0x14] sm:$0xf]
      %v369 = vld [vmem:[%s294 + $0x18] sm:$0xf]
      %v370 = vld [vmem:[%s294 + $0x1c] sm:$0xf]
      %v371 = vld [vmem:[%s306] sm:$0xf]
      %v372 = vld [vmem:[%s317] sm:$0xf]
      %v381 = vunpack.c.l.b16 %v363
      %v382 = vunpack.c.l.b16 %v364
      %v383 = vunpack.c.l.b16 %v365
      %v384 = vunpack.c.l.b16 %v366
      %v385 = vunpack.c.l.b16 %v367
      %v386 = vunpack.c.l.b16 %v368
      %v387 = vunpack.c.l.b16 %v369
      %v388 = vunpack.c.l.b16 %v370
      %v389 = vpack.c.b16 %v382, %v381
      %v390 = vpack.c.b16 %v384, %v383
      %v391 = vpack.c.b16 %v386, %v385
      %v392 = vpack.c.b16 %v388, %v387
      %vm393 = vcmask 130048
      %v395 = vsel %vm393, %v389, 0
      %v398 = vsel %vm393, %v390, 0
      %v401 = vsel %vm393, %v391, 0
      %v404 = vsel %vm393, %v392, 0
      %v407 = vsel %vm393, %v371, 0
      %409 = vmatprep.subr.bf16.mxu0 0
      %410 = vmatpush1.bf16.xpose.msra.mxu0 %v407
      %411 = vmatprep.subr.bf16.mxu0 0
      %412 = vmatpush1.bf16.xpose.msra.mxu0 0
      %413 = vmatprep.subr.bf16.mxu0 0
      %414 = vmatpush1.bf16.xpose.msra.mxu0 0
      %415 = vmatprep.subr.bf16.mxu0 0
      %416 = vmatpush1.bf16.xpose.msra.mxu0 0
      %417 = vmatprep.subr.bf16.mxu0 0
      %418 = vmatpush1.bf16.xpose.msra.mxu0 0
      %419 = vmatprep.subr.bf16.mxu0 0
      %420 = vmatpush1.bf16.xpose.msra.mxu0 0
      %421 = vmatprep.subr.bf16.mxu0 0
      %422 = vmatpush1.bf16.xpose.msra.mxu0 0
      %423 = vmatprep.subr.bf16.mxu0 0
      %424 = vmatpush1.bf16.xpose.msra.mxu0 0
      %425 = vmatprep.subr.bf16.mxu0 0
      %426 = vmatpush1.bf16.xpose.msra.mxu0 0
      %427 = vmatprep.subr.bf16.mxu0 0
      %428 = vmatpush1.bf16.xpose.msra.mxu0 0
      %429 = vmatprep.subr.bf16.mxu0 0
      %430 = vmatpush1.bf16.xpose.msra.mxu0 0
      %431 = vmatprep.subr.bf16.mxu0 0
      %432 = vmatpush1.bf16.xpose.msra.mxu0 0
      %433 = vmatprep.subr.bf16.mxu0 0
      %434 = vmatpush1.bf16.xpose.msra.mxu0 0
      %435 = vmatprep.subr.bf16.mxu0 0
      %436 = vmatpush1.bf16.xpose.msra.mxu0 0
      %437 = vmatprep.subr.bf16.mxu0 0
      %438 = vmatpush1.bf16.xpose.msra.mxu0 0
      %439 = vmatprep.subr.bf16.mxu0 0
      %440 = vmatpush1.bf16.xpose.msra.mxu0 0
      %441 = vmatprep.mubr.bf16.mxu0 0
      %442 = vmatmul.mubr.bf16.gmra.mrb[0].mxu0 %v395
      %v443 = vpop.f32.mrb[0].mxu0
      %v444 = vadd.f32 0.0, %v443
      %v445 = vpop.f32.mrb[0].mxu0
      %v446 = vpop.f32.mrb[0].mxu0
      %v447 = vadd.f32 0.0, %v446
      %v448 = vpop.f32.mrb[0].mxu0
      %449 = vmatprep.mubr.bf16.mxu0 0
      %450 = vmatmul.mubr.bf16.gmra.mrb[0].mxu0 %v398
      %v451 = vpop.f32.mrb[0].mxu0
      %v452 = vadd.f32 0.0, %v451
      %v453 = vpop.f32.mrb[0].mxu0
      %v454 = vpop.f32.mrb[0].mxu0
      %v455 = vadd.f32 0.0, %v454
      %v456 = vpop.f32.mrb[0].mxu0
      %457 = vmatprep.mubr.bf16.mxu0 0
      %458 = vmatmul.mubr.bf16.gmra.mrb[0].mxu0 %v401
      %v459 = vpop.f32.mrb[0].mxu0
      %v460 = vadd.f32 0.0, %v459
      %v461 = vpop.f32.mrb[0].mxu0
      %v462 = vpop.f32.mrb[0].mxu0
      %v463 = vadd.f32 0.0, %v462
      %v464 = vpop.f32.mrb[0].mxu0
      %465 = vmatprep.mubr.bf16.mxu0 0
      %466 = vmatmul.mubr.bf16.gmra.mrb[0].mxu0 %v404
      %v467 = vpop.f32.mrb[0].mxu0
      %v468 = vadd.f32 0.0, %v467
      %v469 = vpop.f32.mrb[0].mxu0
      %v470 = vpop.f32.mrb[0].mxu0
      %v471 = vadd.f32 0.0, %v470
      %v472 = vpop.f32.mrb[0].mxu0
      %473 = vdwg.mxu0
      %v474 = vmul.f32 %v444, 0.25
      %v475 = vmul.f32 %v447, 0.25
      %v476 = vmul.f32 %v452, 0.25
      %v477 = vmul.f32 %v455, 0.25
      %v478 = vmul.f32 %v460, 0.25
      %v479 = vmul.f32 %v463, 0.25
      %v480 = vmul.f32 %v468, 0.25
      %v481 = vmul.f32 %v471, 0.25
      %v482 = vld [vmem:[#allocation2] sm:$0xff]
      %v483 = vld [vmem:[#allocation2 + $0x8] sm:$0xff]
      %v484 = vld [vmem:[#allocation2 + $0x10] sm:$0xff]
      %v485 = vld [vmem:[#allocation2 + $0x18] sm:$0xff]
      %v486 = vld [vmem:[#allocation2 + $0x20] sm:$0xff]
      %v487 = vld [vmem:[#allocation2 + $0x28] sm:$0xff]
      %v488 = vld [vmem:[#allocation2 + $0x30] sm:$0xff]
      %v489 = vld [vmem:[#allocation2 + $0x38] sm:$0xff]
      %vm490 = vcmask 64512
      %v491 = vsel %vm490, %v474, -inf
      %492 = vmax.xlane.f32.xlu0 %v491
      %v493 = vpop.xlane.xlu0 %492
      %v494 = vsel %vm490, %v475, -inf
      %495 = vmax.xlane.f32.xlu0 %v494
      %v496 = vpop.xlane.xlu0 %495
      %v497 = vsel %vm490, %v476, -inf
      %498 = vmax.xlane.f32.xlu0 %v497
      %v499 = vpop.xlane.xlu0 %498
      %v500 = vsel %vm490, %v477, -inf
      %501 = vmax.xlane.f32.xlu0 %v500
      %v502 = vpop.xlane.xlu0 %501
      %v503 = vsel %vm490, %v478, -inf
      %504 = vmax.xlane.f32.xlu0 %v503
      %v505 = vpop.xlane.xlu0 %504
      %v506 = vsel %vm490, %v479, -inf
      %507 = vmax.xlane.f32.xlu0 %v506
      %v508 = vpop.xlane.xlu0 %507
      %v509 = vsel %vm490, %v480, -inf
      %510 = vmax.xlane.f32.xlu0 %v509
      %v511 = vpop.xlane.xlu0 %510
      %v512 = vsel %vm490, %v481, -inf
      %513 = vmax.xlane.f32.xlu0 %v512
      %v514 = vpop.xlane.xlu0 %513
      %v515 = vmax.f32 %v482, %v493
      %v516 = vmax.f32 %v483, %v496
      %v517 = vmax.f32 %v484, %v499
      %v518 = vmax.f32 %v485, %v502
      %v519 = vmax.f32 %v486, %v505
      %v520 = vmax.f32 %v487, %v508
      %v521 = vmax.f32 %v488, %v511
      %v522 = vmax.f32 %v489, %v514
      %v523 = vsub.f32 %v482, %v515
      %v524 = vsub.f32 %v483, %v516
      %v525 = vsub.f32 %v484, %v517
      %v526 = vsub.f32 %v485, %v518
      %v527 = vsub.f32 %v486, %v519
      %v528 = vsub.f32 %v487, %v520
      %v529 = vsub.f32 %v488, %v521
      %v530 = vsub.f32 %v489, %v522
      %v531 = vmul.f32 %v523, 1.442695
      %v532 = vpow.pop %v531
      %v533 = vmul.f32 %v524, 1.442695
      %v534 = vpow.pop %v533
      %v535 = vmul.f32 %v525, 1.442695
      %v536 = vpow.pop %v535
      %v537 = vmul.f32 %v526, 1.442695
      %v538 = vpow.pop %v537
      %v539 = vmul.f32 %v527, 1.442695
      %v540 = vpow.pop %v539
      %v541 = vmul.f32 %v528, 1.442695
      %v542 = vpow.pop %v541
      %v543 = vmul.f32 %v529, 1.442695
      %v544 = vpow.pop %v543
      %v545 = vmul.f32 %v530, 1.442695
      %v546 = vpow.pop %v545
      %548 = vset.pattern.permute.xlu0 0
      %549 = vperm.xlu0 %548, %v515
      %v550 = vpop.permute.xlu0 %549
      %553 = vset.pattern.permute.xlu0 0
      %554 = vperm.xlu0 %553, %v516
      %v555 = vpop.permute.xlu0 %554
      %558 = vset.pattern.permute.xlu0 0
      %559 = vperm.xlu0 %558, %v517
      %v560 = vpop.permute.xlu0 %559
      %563 = vset.pattern.permute.xlu0 0
      %564 = vperm.xlu0 %563, %v518
      %v565 = vpop.permute.xlu0 %564
      %568 = vset.pattern.permute.xlu0 0
      %569 = vperm.xlu0 %568, %v519
      %v570 = vpop.permute.xlu0 %569
      %573 = vset.pattern.permute.xlu0 0
      %574 = vperm.xlu0 %573, %v520
      %v575 = vpop.permute.xlu0 %574
      %578 = vset.pattern.permute.xlu0 0
      %579 = vperm.xlu0 %578, %v521
      %v580 = vpop.permute.xlu0 %579
      %583 = vset.pattern.permute.xlu0 0
      %584 = vperm.xlu0 %583, %v522
      %v585 = vpop.permute.xlu0 %584
      %v587 = vsub.f32 %v474, %v550
      %v588 = vsub.f32 %v475, %v555
      %v589 = vsub.f32 %v476, %v560
      %v590 = vsub.f32 %v477, %v565
      %v591 = vsub.f32 %v478, %v570
      %v592 = vsub.f32 %v479, %v575
      %v593 = vsub.f32 %v480, %v580
      %v594 = vsub.f32 %v481, %v585
      %v595 = vmul.f32 %v587, 1.442695
      %v596 = vpow.pop %v595
      %v597 = vmul.f32 %v588, 1.442695
      %v598 = vpow.pop %v597
      %v599 = vmul.f32 %v589, 1.442695
      %v600 = vpow.pop %v599
      %v601 = vmul.f32 %v590, 1.442695
      %v602 = vpow.pop %v601
      %v603 = vmul.f32 %v591, 1.442695
      %v604 = vpow.pop %v603
      %v605 = vmul.f32 %v592, 1.442695
      %v606 = vpow.pop %v605
      %v607 = vmul.f32 %v593, 1.442695
      %v608 = vpow.pop %v607
      %v609 = vmul.f32 %v594, 1.442695
      %v610 = vpow.pop %v609
      %v611 = vld [vmem:[#allocation3] sm:$0xff]
      %v612 = vld [vmem:[#allocation3 + $0x8] sm:$0xff]
      %v613 = vld [vmem:[#allocation3 + $0x10] sm:$0xff]
      %v614 = vld [vmem:[#allocation3 + $0x18] sm:$0xff]
      %v615 = vld [vmem:[#allocation3 + $0x20] sm:$0xff]
      %v616 = vld [vmem:[#allocation3 + $0x28] sm:$0xff]
      %v617 = vld [vmem:[#allocation3 + $0x30] sm:$0xff]
      %v618 = vld [vmem:[#allocation3 + $0x38] sm:$0xff]
      %v619 = vmul.f32 %v532, %v611
      %v620 = vmul.f32 %v534, %v612
      %v621 = vmul.f32 %v536, %v613
      %v622 = vmul.f32 %v538, %v614
      %v623 = vmul.f32 %v540, %v615
      %v624 = vmul.f32 %v542, %v616
      %v625 = vmul.f32 %v544, %v617
      %v626 = vmul.f32 %v546, %v618
      %v627 = vsel %vm490, %v596, 0.0
      %628 = vadd.xlane.f32.xlu0 %v627
      %v629 = vpop.xlane.xlu0 %628
      %v630 = vsel %vm490, %v598, 0.0
      %631 = vadd.xlane.f32.xlu0 %v630
      %v632 = vpop.xlane.xlu0 %631
      %v633 = vsel %vm490, %v600, 0.0
      %634 = vadd.xlane.f32.xlu0 %v633
      %v635 = vpop.xlane.xlu0 %634
      %v636 = vsel %vm490, %v602, 0.0
      %637 = vadd.xlane.f32.xlu0 %v636
      %v638 = vpop.xlane.xlu0 %637
      %v639 = vsel %vm490, %v604, 0.0
      %640 = vadd.xlane.f32.xlu0 %v639
      %v641 = vpop.xlane.xlu0 %640
      %v642 = vsel %vm490, %v606, 0.0
      %643 = vadd.xlane.f32.xlu0 %v642
      %v644 = vpop.xlane.xlu0 %643
      %v645 = vsel %vm490, %v608, 0.0
      %646 = vadd.xlane.f32.xlu0 %v645
      %v647 = vpop.xlane.xlu0 %646
      %v648 = vsel %vm490, %v610, 0.0
      %649 = vadd.xlane.f32.xlu0 %v648
      %v650 = vpop.xlane.xlu0 %649
      %v651 = vadd.f32 %v619, %v629
      %v652 = vadd.f32 %v620, %v632
      %v653 = vadd.f32 %v621, %v635
      %v654 = vadd.f32 %v622, %v638
      %v655 = vadd.f32 %v623, %v641
      %v656 = vadd.f32 %v624, %v644
      %v657 = vadd.f32 %v625, %v647
      %v658 = vadd.f32 %v626, %v650
      %vm659 = vcmask 7168
      %660 = vst.msk [vmem:[#allocation3] sm:$0xff] %vm659, %v651
      %661 = vst.msk [vmem:[#allocation3 + $0x8] sm:$0xff] %vm659, %v652
      %662 = vst.msk [vmem:[#allocation3 + $0x10] sm:$0xff] %vm659, %v653
      %663 = vst.msk [vmem:[#allocation3 + $0x18] sm:$0xff] %vm659, %v654
      %664 = vst.msk [vmem:[#allocation3 + $0x20] sm:$0xff] %vm659, %v655
      %665 = vst.msk [vmem:[#allocation3 + $0x28] sm:$0xff] %vm659, %v656
      %666 = vst.msk [vmem:[#allocation3 + $0x30] sm:$0xff] %vm659, %v657
      %667 = vst.msk [vmem:[#allocation3 + $0x38] sm:$0xff] %vm659, %v658
      %v668 = vld [vmem:[#allocation4] sm:$0xff]
      %v669 = vld [vmem:[#allocation4 + $0x8] sm:$0xff]
      %v670 = vld [vmem:[#allocation4 + $0x10] sm:$0xff]
      %v671 = vld [vmem:[#allocation4 + $0x18] sm:$0xff]
      %v672 = vld [vmem:[#allocation4 + $0x20] sm:$0xff]
      %v673 = vld [vmem:[#allocation4 + $0x28] sm:$0xff]
      %v674 = vld [vmem:[#allocation4 + $0x30] sm:$0xff]
      %v675 = vld [vmem:[#allocation4 + $0x38] sm:$0xff]
      %677 = vset.pattern.permute.xlu0 0
      %678 = vperm.xlu0 %677, %v532
      %v679 = vpop.permute.xlu0 %678
      %682 = vset.pattern.permute.xlu0 0
      %683 = vperm.xlu0 %682, %v534
      %v684 = vpop.permute.xlu0 %683
      %687 = vset.pattern.permute.xlu0 0
      %688 = vperm.xlu0 %687, %v536
      %v689 = vpop.permute.xlu0 %688
      %692 = vset.pattern.permute.xlu0 0
      %693 = vperm.xlu0 %692, %v538
      %v694 = vpop.permute.xlu0 %693
      %697 = vset.pattern.permute.xlu0 0
      %698 = vperm.xlu0 %697, %v540
      %v699 = vpop.permute.xlu0 %698
      %702 = vset.pattern.permute.xlu0 0
      %703 = vperm.xlu0 %702, %v542
      %v704 = vpop.permute.xlu0 %703
      %707 = vset.pattern.permute.xlu0 0
      %708 = vperm.xlu0 %707, %v544
      %v709 = vpop.permute.xlu0 %708
      %712 = vset.pattern.permute.xlu0 0
      %713 = vperm.xlu0 %712, %v546
      %v714 = vpop.permute.xlu0 %713
      %v716 = vmul.f32 %v679, %v668
      %v717 = vmul.f32 %v684, %v669
      %v718 = vmul.f32 %v689, %v670
      %v719 = vmul.f32 %v694, %v671
      %v720 = vmul.f32 %v699, %v672
      %v721 = vmul.f32 %v704, %v673
      %v722 = vmul.f32 %v709, %v674
      %v723 = vmul.f32 %v714, %v675
      %v724 = vpack.c.bf16 %v598, %v596
      %v725 = vpack.c.bf16 %v602, %v600
      %v726 = vpack.c.bf16 %v606, %v604
      %v727 = vpack.c.bf16 %v610, %v608
      %v729 = vsel %vm490, %v724, 0
      %v732 = vsel %vm490, %v725, 0
      %v735 = vsel %vm490, %v726, 0
      %v738 = vsel %vm490, %v727, 0
      %vm740 = vcmask 1043456
      %v742 = vsel %vm740, %v372, 0
      %744 = vmatprep.subr.bf16.mxu0 0
      %745 = vmatpush1.bf16.msra.mxu0 %v742
      %746 = vmatprep.subr.bf16.mxu0 0
      %747 = vmatpush1.bf16.msra.mxu0 0
      %748 = vmatprep.subr.bf16.mxu0 0
      %749 = vmatpush1.bf16.msra.mxu0 0
      %750 = vmatprep.subr.bf16.mxu0 0
      %751 = vmatpush1.bf16.msra.mxu0 0
      %752 = vmatprep.subr.bf16.mxu0 0
      %753 = vmatpush1.bf16.msra.mxu0 0
      %754 = vmatprep.subr.bf16.mxu0 0
      %755 = vmatpush1.bf16.msra.mxu0 0
      %756 = vmatprep.subr.bf16.mxu0 0
      %757 = vmatpush1.bf16.msra.mxu0 0
      %758 = vmatprep.subr.bf16.mxu0 0
      %759 = vmatpush1.bf16.msra.mxu0 0
      %760 = vmatprep.subr.bf16.mxu0 0
      %761 = vmatpush1.bf16.msra.mxu0 0
      %762 = vmatprep.subr.bf16.mxu0 0
      %763 = vmatpush1.bf16.msra.mxu0 0
      %764 = vmatprep.subr.bf16.mxu0 0
      %765 = vmatpush1.bf16.msra.mxu0 0
      %766 = vmatprep.subr.bf16.mxu0 0
      %767 = vmatpush1.bf16.msra.mxu0 0
      %768 = vmatprep.subr.bf16.mxu0 0
      %769 = vmatpush1.bf16.msra.mxu0 0
      %770 = vmatprep.subr.bf16.mxu0 0
      %771 = vmatpush1.bf16.msra.mxu0 0
      %772 = vmatprep.subr.bf16.mxu0 0
      %773 = vmatpush1.bf16.msra.mxu0 0
      %774 = vmatprep.subr.bf16.mxu0 0
      %775 = vmatpush1.bf16.msra.mxu0 0
      %776 = vmatprep.mubr.bf16.mxu0 0
      %777 = vmatmul.mubr.bf16.gmra.mrb[0].mxu0 %v729
      %v778 = vpop.f32.mrb[0].mxu0
      %v779 = vadd.f32 0.0, %v778
      %v780 = vpop.f32.mrb[0].mxu0
      %v781 = vpop.f32.mrb[0].mxu0
      %v782 = vadd.f32 0.0, %v781
      %v783 = vpop.f32.mrb[0].mxu0
      %784 = vmatprep.mubr.bf16.mxu0 0
      %785 = vmatmul.mubr.bf16.gmra.mrb[0].mxu0 %v732
      %v786 = vpop.f32.mrb[0].mxu0
      %v787 = vadd.f32 0.0, %v786
      %v788 = vpop.f32.mrb[0].mxu0
      %v789 = vpop.f32.mrb[0].mxu0
      %v790 = vadd.f32 0.0, %v789
      %v791 = vpop.f32.mrb[0].mxu0
      %792 = vmatprep.mubr.bf16.mxu0 0
      %793 = vmatmul.mubr.bf16.gmra.mrb[0].mxu0 %v735
      %v794 = vpop.f32.mrb[0].mxu0
      %v795 = vadd.f32 0.0, %v794
      %v796 = vpop.f32.mrb[0].mxu0
      %v797 = vpop.f32.mrb[0].mxu0
      %v798 = vadd.f32 0.0, %v797
      %v799 = vpop.f32.mrb[0].mxu0
      %800 = vmatprep.mubr.bf16.mxu0 0
      %801 = vmatmul.mubr.bf16.gmra.mrb[0].mxu0 %v738
      %v802 = vpop.f32.mrb[0].mxu0
      %v803 = vadd.f32 0.0, %v802
      %v804 = vpop.f32.mrb[0].mxu0
      %v805 = vpop.f32.mrb[0].mxu0
      %v806 = vadd.f32 0.0, %v805
      %v807 = vpop.f32.mrb[0].mxu0
      %808 = vdwg.mxu0
      %v809 = vadd.f32 %v716, %v779
      %v810 = vadd.f32 %v717, %v782
      %v811 = vadd.f32 %v718, %v787
      %v812 = vadd.f32 %v719, %v790
      %v813 = vadd.f32 %v720, %v795
      %v814 = vadd.f32 %v721, %v798
      %v815 = vadd.f32 %v722, %v803
      %v816 = vadd.f32 %v723, %v806
      %817 = vst.msk [vmem:[#allocation4] sm:$0xff] %vm393, %v809
      %818 = vst.msk [vmem:[#allocation4 + $0x8] sm:$0xff] %vm393, %v810
      %819 = vst.msk [vmem:[#allocation4 + $0x10] sm:$0xff] %vm393, %v811
      %820 = vst.msk [vmem:[#allocation4 + $0x18] sm:$0xff] %vm393, %v812
      %821 = vst.msk [vmem:[#allocation4 + $0x20] sm:$0xff] %vm393, %v813
      %822 = vst.msk [vmem:[#allocation4 + $0x28] sm:$0xff] %vm393, %v814
      %823 = vst.msk [vmem:[#allocation4 + $0x30] sm:$0xff] %vm393, %v815
      %824 = vst.msk [vmem:[#allocation4 + $0x38] sm:$0xff] %vm393, %v816
      %825 = vst.msk [vmem:[#allocation2] sm:$0xff] %vm659, %v515
      %826 = vst.msk [vmem:[#allocation2 + $0x8] sm:$0xff] %vm659, %v516
      %827 = vst.msk [vmem:[#allocation2 + $0x10] sm:$0xff] %vm659, %v517
      %828 = vst.msk [vmem:[#allocation2 + $0x18] sm:$0xff] %vm659, %v518
      %829 = vst.msk [vmem:[#allocation2 + $0x20] sm:$0xff] %vm659, %v519
      %830 = vst.msk [vmem:[#allocation2 + $0x28] sm:$0xff] %vm659, %v520
      %831 = vst.msk [vmem:[#allocation2 + $0x30] sm:$0xff] %vm659, %v521
      %832 = vst.msk [vmem:[#allocation2 + $0x38] sm:$0xff] %vm659, %v522
      // Predicated region
      $region37: #{_lambda_.32} parent=31 // pred_check
        %p833 = pneg %p333
      $region38: #{_lambda_.32} parent=31 // pred_check_branch
        %835 = sbr.rel (%p833) target = $region40
      $region39: #{_lambda_.32} parent=31 // pred_region
        %v836 = vld [vmem:[#allocation4] sm:$0xff]
        %v837 = vld [vmem:[#allocation4 + $0x8] sm:$0xff]
        %v838 = vld [vmem:[#allocation4 + $0x10] sm:$0xff]
        %v839 = vld [vmem:[#allocation4 + $0x18] sm:$0xff]
        %v840 = vld [vmem:[#allocation4 + $0x20] sm:$0xff]
        %v841 = vld [vmem:[#allocation4 + $0x28] sm:$0xff]
        %v842 = vld [vmem:[#allocation4 + $0x30] sm:$0xff]
        %v843 = vld [vmem:[#allocation4 + $0x38] sm:$0xff]
        %v844 = vld [vmem:[#allocation3] sm:$0xff]
        %v845 = vld [vmem:[#allocation3 + $0x8] sm:$0xff]
        %v846 = vld [vmem:[#allocation3 + $0x10] sm:$0xff]
        %v847 = vld [vmem:[#allocation3 + $0x18] sm:$0xff]
        %v848 = vld [vmem:[#allocation3 + $0x20] sm:$0xff]
        %v849 = vld [vmem:[#allocation3 + $0x28] sm:$0xff]
        %v850 = vld [vmem:[#allocation3 + $0x30] sm:$0xff]
        %v851 = vld [vmem:[#allocation3 + $0x38] sm:$0xff]
        %v852 = vrcp.pop %v844
        %v853 = vrcp.pop %v845
        %v854 = vrcp.pop %v846
        %v855 = vrcp.pop %v847
        %v856 = vrcp.pop %v848
        %v857 = vrcp.pop %v849
        %v858 = vrcp.pop %v850
        %v859 = vrcp.pop %v851
        %861 = vset.pattern.permute.xlu0 0
        %862 = vperm.xlu0 %861, %v852
        %v863 = vpop.permute.xlu0 %862
        %866 = vset.pattern.permute.xlu0 0
        %867 = vperm.xlu0 %866, %v853
        %v868 = vpop.permute.xlu0 %867
        %871 = vset.pattern.permute.xlu0 0
        %872 = vperm.xlu0 %871, %v854
        %v873 = vpop.permute.xlu0 %872
        %876 = vset.pattern.permute.xlu0 0
        %877 = vperm.xlu0 %876, %v855
        %v878 = vpop.permute.xlu0 %877
        %881 = vset.pattern.permute.xlu0 0
        %882 = vperm.xlu0 %881, %v856
        %v883 = vpop.permute.xlu0 %882
        %886 = vset.pattern.permute.xlu0 0
        %887 = vperm.xlu0 %886, %v857
        %v888 = vpop.permute.xlu0 %887
        %891 = vset.pattern.permute.xlu0 0
        %892 = vperm.xlu0 %891, %v858
        %v893 = vpop.permute.xlu0 %892
        %896 = vset.pattern.permute.xlu0 0
        %897 = vperm.xlu0 %896, %v859
        %v898 = vpop.permute.xlu0 %897
        %v900 = vmul.f32 %v836, %v863
        %v901 = vmul.f32 %v837, %v868
        %v902 = vmul.f32 %v838, %v873
        %v903 = vmul.f32 %v839, %v878
        %v904 = vmul.f32 %v840, %v883
        %v905 = vmul.f32 %v841, %v888
        %v906 = vmul.f32 %v842, %v893
        %v907 = vmul.f32 %v843, %v898
        %v908 = vpack.c.bf16 %v901, %v900
        %v909 = vpack.c.bf16 %v903, %v902
        %v910 = vpack.c.bf16 %v905, %v904
        %v911 = vpack.c.bf16 %v907, %v906
        %v916 = vunpack.c.l.b16 %v908
        %v917 = vunpack.c.h.b16 %v908
        %v918 = vunpack.c.l.b16 %v909
        %v919 = vunpack.c.h.b16 %v909
        %v920 = vunpack.c.l.b16 %v910
        %v921 = vunpack.c.h.b16 %v910
        %v922 = vunpack.c.l.b16 %v911
        %v923 = vunpack.c.h.b16 %v911
        %v924 = vpack.c.b16 %v916, %v916
        %v925 = vpack.c.b16 %v917, %v917
        %v926 = vpack.c.b16 %v918, %v918
        %v927 = vpack.c.b16 %v919, %v919
        %v928 = vpack.c.b16 %v920, %v920
        %v929 = vpack.c.b16 %v921, %v921
        %v930 = vpack.c.b16 %v922, %v922
        %v931 = vpack.c.b16 %v923, %v923
        %vm940 = vcmask 125952
        %941 = vst.msk [vmem:[%s330] sm:$0xf] %vm940, %v924
        %942 = vst.msk [vmem:[%s330 + $0x4] sm:$0xf] %vm940, %v925
        %943 = vst.msk [vmem:[%s330 + $0x8] sm:$0xf] %vm940, %v926
        %944 = vst.msk [vmem:[%s330 + $0xc] sm:$0xf] %vm940, %v927
        %945 = vst.msk [vmem:[%s330 + $0x10] sm:$0xf] %vm940, %v928
        %946 = vst.msk [vmem:[%s330 + $0x14] sm:$0xf] %vm940, %v929
        %947 = vst.msk [vmem:[%s330 + $0x18] sm:$0xf] %vm940, %v930
        %948 = vst.msk [vmem:[%s330 + $0x1c] sm:$0xf] %vm940, %v931
      $region40: #{_lambda_.32} parent=31 // pred_fallthru
        _
      %s949 = smul.u32 8, %s22
      %p950 = scmp.lt.s32.totalorder %s20, 1
      %s951 = scalar_select %p950, %s20, 1
      %p952 = scmp.lt.s32.totalorder %s21, 3
      %s953 = scalar_select %p952, %s21, 3
      %p954 = scmp.lt.s32.totalorder %s949, 7
      %s955 = scalar_select %p954, %s949, 7
      %s956 = smul.addr %s953, 8
      %s957 = sadd.s32 %s955, %s956
      %s958 = smul.addr %s951, 32
      %s959 = sadd.s32 %s957, %s958
      %s960 = smul.addr %s959, 4
      %s961 = scalar_lea.vmem %s3, %s960
      // Predicated region
      $region41: #{_lambda_.32} parent=31 // pred_check
        %p962 = pneg %p152
      $region42: #{_lambda_.32} parent=31 // pred_check_branch
        %964 = sbr.rel (%p962) target = $region44
      $region43: #{_lambda_.32} parent=31 // pred_region
        %s965 = smul.u32 8, %s22
      $region44: #{_lambda_.32} parent=31 // pred_fallthru
        _
    $region32: #{_lambda_.32} parent=5 // pred_fallthru
      _
    %p966 = scmp.le.s32.totalorder 2, %s9
    // Predicated region
    $region45: #{_lambda_.32} parent=5 // pred_check
      %p967 = pneg %p966
    $region46: #{_lambda_.32} parent=5 // pred_check_branch
      %969 = sbr.rel (%p967) target = $region48
    $region47: #{_lambda_.32} parent=5 // pred_region
      %s970 = ssub.s32 %s9, 2
      // Predicated region
      $region49: #{_lambda_.32} parent=47 // pred_check
        %p971 = pneg %p158
      $region50: #{_lambda_.32} parent=47 // pred_check_branch
        %973 = sbr.rel (%p971) target = $region52
      $region51: #{_lambda_.32} parent=47 // pred_region
        %s974 = smul.u32 8, %s26
        %p975 = scmp.lt.s32.totalorder %s24, 1
        %s976 = scalar_select %p975, %s24, 1
        %p977 = scmp.lt.s32.totalorder %s25, 3
        %s978 = scalar_select %p977, %s25, 3
        %p979 = scmp.lt.s32.totalorder %s974, 7
        %s980 = scalar_select %p979, %s974, 7
        %s981 = smul.addr %s978, 8
        %s982 = sadd.s32 %s980, %s981
        %s983 = smul.addr %s976, 32
        %s984 = sadd.s32 %s982, %s983
        %s985 = smul.addr %s984, 4
        %s986 = scalar_lea.vmem %s3, %s985
      $region52: #{_lambda_.32} parent=47 // pred_fallthru
        _
    $region48: #{_lambda_.32} parent=5 // pred_fallthru
      _
  $region6: #{_lambda_.32} parent=0 // loop_footer
    %s13 = sadd.s32 1, %s9
  $region7: #{_lambda_.32} parent=0 // loop_footer_branch
    %8 = sbr.rel target = $region3
  $region8: #{_lambda_.32} parent=0 // loop_exit
    _

// kernel: _lambda_.34
$region0: #{_lambda_.34}
  #allocation0 [shape = 'u32[]', space=smem, size = 0x4, offset = 0x4, fixed_abs, tag = 'smem constant byte address 0x4 - core index']
  #allocation1 [shape = 'u32[144,128]{1,0:T(1,128)}', space=vmem, size = 0x12000, scoped, tag = 'internal scratch']
  %s0 = inlined_call_operand.vmem [shape: f32[2,64,64], index: 0, kind: input, shape index: {}]
  %s1 = inlined_call_operand.vmem [shape: f32[2,1,64], index: 1, kind: input, shape index: {}]
  %s2 = inlined_call_operand.vmem [shape: f32[2,1,64], index: 2, kind: input, shape index: {}]
  %s3 = inlined_call_operand.vmem [shape: bf16[64,256], index: 3, kind: input, shape index: {}]
  %s4 = inlined_call_operand.vmem [shape: f32[1,256], index: 4, kind: input, shape index: {}]
  %s5 = inlined_call_operand.vmem [shape: bf16[2,64,256], index: 5, kind: output, shape index: {}]
  %s6 = sld [smem:[#allocation0]]
  $region53: #{_lambda_.34} parent=0
    _
  %s8 = ssub.s32 1, %s6
  %s9 = scalar_select 0, %s8, %s6
  loop: start=0, step=1, limit=4
  $region2: #{_lambda_.34} parent=0 // loop_pre_header
    _
  $region3: #{_lambda_.34} parent=0 // loop_header
    %s11 = sphi 0, %s15
    %p12 = scmp.ge.s32.totalorder %s11, 4
    %s18 = sphi 0, %s37
    %s19 = sphi 0, %s33
    %s20 = sphi 0, %s29
    %s21 = sphi 0, %s18
    %s22 = sphi 0, %s19
    %s23 = sphi 0, %s20
    %s24 = sphi 0, %s21
    %s25 = sphi 0, %s22
    %s26 = sphi 0, %s23
    %s42 = sphi 0, %s44
    %s45 = sphi 0, %s42
    %s46 = sphi 0, %s45
    %s62 = sphi 0, %s46
    %s68 = sphi 0, %s70
    %s71 = sphi 0, %s68
    %s72 = sphi 0, %s71
    %s88 = sphi 0, %s72
    %s94 = sphi 0, %s96
    %s97 = sphi 0, %s94
    %s98 = sphi 0, %s97
    %s114 = sphi 0, %s98
    %s120 = sphi 0, %s122
    %s123 = sphi 0, %s120
    %s124 = sphi 0, %s123
    %s140 = sphi 0, %s124
    %s146 = sphi 0, %s148
    %s149 = sphi 0, %s146
    %s150 = sphi 0, %s149
    %s166 = sphi 0, %s150
    %s176 = sphi 0, %s178
    %s179 = sphi 0, %s176
    %s180 = sphi 0, %s179
    %s196 = sphi 0, %s180
  $region4: #{_lambda_.34} parent=0 // loop_header_branch
    %14 = sbr.rel (%p12) target = $region8
  $region5: #{_lambda_.34} parent=0 // loop_body
    %s16 = ssub.s32 %s11, 1
    %s17 = ssub.s32 %s11, 2
    %s27 = sadd.s32 1, %s20
    %p28 = scmp.ge.s32.totalorder %s27, 1
    %s29 = scalar_select %p28, 0, %s27
    %s30 = sadd.s32 1, %s19
    %s31 = scalar_select %p28, %s30, %s19
    %p32 = scmp.ge.s32.totalorder %s31, 1
    %s33 = scalar_select %p32, 0, %s31
    %s34 = sadd.s32 1, %s18
    %s35 = scalar_select %p32, %s34, %s18
    %p36 = scmp.ge.s32.totalorder %s35, 2
    %s37 = scalar_select %p36, 0, %s35
    %s38 = ssub.s32 %s18, %s37
    %s39 = ssub.s32 %s20, %s29
    %s40 = sor.u32 %s38, %s39
    %p41 = scmp.eq.s32.totalorder %s40, 0
    %s43 = sadd.s32 %s42, 1
    %s44 = scalar_select %p41, %s42, %s43
    %p47 = pneg %p41
    %p48 = scmp.eq.s32.totalorder %s11, 1
    %p49 = por %p47, %p48
    %p50 = scmp.ne.s32.totalorder %s42, %s45
    %p51 = scmp.eq.s32.totalorder %s11, 0
    %p52 = por %p50, %p51
    %p53 = scmp.ne.s32.totalorder %s42, %s45
    %p54 = scmp.eq.s32.totalorder %s16, 1
    %p55 = por %p53, %p54
    %p56 = scmp.ne.s32.totalorder %s45, %s46
    %p57 = scmp.eq.s32.totalorder %s16, 0
    %p58 = por %p56, %p57
    %p59 = scmp.ne.s32.totalorder %s45, %s46
    %p60 = scmp.eq.s32.totalorder %s17, 1
    %p61 = por %p59, %p60
    %p63 = scmp.ne.s32.totalorder %s46, %s62
    %p64 = scmp.eq.s32.totalorder %s17, 0
    %p65 = por %p63, %p64
    %s66 = ssub.s32 %s18, %s37
    %p67 = scmp.eq.s32.totalorder %s66, 0
    %s69 = sadd.s32 %s68, 1
    %s70 = scalar_select %p67, %s68, %s69
    %p73 = pneg %p67
    %p74 = scmp.eq.s32.totalorder %s11, 1
    %p75 = por %p73, %p74
    %p76 = scmp.ne.s32.totalorder %s68, %s71
    %p77 = scmp.eq.s32.totalorder %s11, 0
    %p78 = por %p76, %p77
    %p79 = scmp.ne.s32.totalorder %s68, %s71
    %p80 = scmp.eq.s32.totalorder %s16, 1
    %p81 = por %p79, %p80
    %p82 = scmp.ne.s32.totalorder %s71, %s72
    %p83 = scmp.eq.s32.totalorder %s16, 0
    %p84 = por %p82, %p83
    %p85 = scmp.ne.s32.totalorder %s71, %s72
    %p86 = scmp.eq.s32.totalorder %s17, 1
    %p87 = por %p85, %p86
    %p89 = scmp.ne.s32.totalorder %s72, %s88
    %p90 = scmp.eq.s32.totalorder %s17, 0
    %p91 = por %p89, %p90
    %s92 = ssub.s32 %s18, %s37
    %p93 = scmp.eq.s32.totalorder %s92, 0
    %s95 = sadd.s32 %s94, 1
    %s96 = scalar_select %p93, %s94, %s95
    %p99 = pneg %p93
    %p100 = scmp.eq.s32.totalorder %s11, 1
    %p101 = por %p99, %p100
    %p102 = scmp.ne.s32.totalorder %s94, %s97
    %p103 = scmp.eq.s32.totalorder %s11, 0
    %p104 = por %p102, %p103
    %p105 = scmp.ne.s32.totalorder %s94, %s97
    %p106 = scmp.eq.s32.totalorder %s16, 1
    %p107 = por %p105, %p106
    %p108 = scmp.ne.s32.totalorder %s97, %s98
    %p109 = scmp.eq.s32.totalorder %s16, 0
    %p110 = por %p108, %p109
    %p111 = scmp.ne.s32.totalorder %s97, %s98
    %p112 = scmp.eq.s32.totalorder %s17, 1
    %p113 = por %p111, %p112
    %p115 = scmp.ne.s32.totalorder %s98, %s114
    %p116 = scmp.eq.s32.totalorder %s17, 0
    %p117 = por %p115, %p116
    %s118 = ssub.s32 %s19, %s33
    %p119 = scmp.eq.s32.totalorder %s118, 0
    %s121 = sadd.s32 %s120, 1
    %s122 = scalar_select %p119, %s120, %s121
    %p125 = pneg %p119
    %p126 = scmp.eq.s32.totalorder %s11, 1
    %p127 = por %p125, %p126
    %p128 = scmp.ne.s32.totalorder %s120, %s123
    %p129 = scmp.eq.s32.totalorder %s11, 0
    %p130 = por %p128, %p129
    %p131 = scmp.ne.s32.totalorder %s120, %s123
    %p132 = scmp.eq.s32.totalorder %s16, 1
    %p133 = por %p131, %p132
    %p134 = scmp.ne.s32.totalorder %s123, %s124
    %p135 = scmp.eq.s32.totalorder %s16, 0
    %p136 = por %p134, %p135
    %p137 = scmp.ne.s32.totalorder %s123, %s124
    %p138 = scmp.eq.s32.totalorder %s17, 1
    %p139 = por %p137, %p138
    %p141 = scmp.ne.s32.totalorder %s124, %s140
    %p142 = scmp.eq.s32.totalorder %s17, 0
    %p143 = por %p141, %p142
    %s144 = ssub.s32 %s19, %s33
    %p145 = scmp.eq.s32.totalorder %s144, 0
    %s147 = sadd.s32 %s146, 1
    %s148 = scalar_select %p145, %s146, %s147
    %p151 = pneg %p145
    %p152 = scmp.eq.s32.totalorder %s11, 1
    %p153 = por %p151, %p152
    %p154 = scmp.ne.s32.totalorder %s146, %s149
    %p155 = scmp.eq.s32.totalorder %s11, 0
    %p156 = por %p154, %p155
    %p157 = scmp.ne.s32.totalorder %s146, %s149
    %p158 = scmp.eq.s32.totalorder %s16, 1
    %p159 = por %p157, %p158
    %p160 = scmp.ne.s32.totalorder %s149, %s150
    %p161 = scmp.eq.s32.totalorder %s16, 0
    %p162 = por %p160, %p161
    %p163 = scmp.ne.s32.totalorder %s149, %s150
    %p164 = scmp.eq.s32.totalorder %s17, 1
    %p165 = por %p163, %p164
    %p167 = scmp.ne.s32.totalorder %s150, %s166
    %p168 = scmp.eq.s32.totalorder %s17, 0
    %p169 = por %p167, %p168
    %s170 = ssub.s32 %s18, %s37
    %s171 = ssub.s32 %s20, %s29
    %s172 = sor.u32 %s170, %s171
    %s173 = ssub.s32 %s19, %s33
    %s174 = sor.u32 %s172, %s173
    %p175 = scmp.eq.s32.totalorder %s174, 0
    %s177 = sadd.s32 %s176, 1
    %s178 = scalar_select %p175, %s176, %s177
    %p181 = pneg %p175
    %p182 = scmp.eq.s32.totalorder %s11, 1
    %p183 = por %p181, %p182
    %p184 = scmp.ne.s32.totalorder %s176, %s179
    %p185 = scmp.eq.s32.totalorder %s11, 0
    %p186 = por %p184, %p185
    %p187 = scmp.ne.s32.totalorder %s176, %s179
    %p188 = scmp.eq.s32.totalorder %s16, 1
    %p189 = por %p187, %p188
    %p190 = scmp.ne.s32.totalorder %s179, %s180
    %p191 = scmp.eq.s32.totalorder %s16, 0
    %p192 = por %p190, %p191
    %p193 = scmp.ne.s32.totalorder %s179, %s180
    %p194 = scmp.eq.s32.totalorder %s17, 1
    %p195 = por %p193, %p194
    %p197 = scmp.ne.s32.totalorder %s180, %s196
    %p198 = scmp.eq.s32.totalorder %s17, 0
    %p199 = por %p197, %p198
    %p200 = scmp.le.s32.totalorder 1, %s11
    %p201 = scmp.lt.s32.totalorder %s11, 3
    %p202 = pnand %p200, %p201
    %p203 = pneg %p202
    // Predicated region
    $region9: #{_lambda_.34} parent=5 // pred_check
      _
    $region10: #{_lambda_.34} parent=5 // pred_check_branch
      %205 = sbr.rel (%p202) target = $region12
    $region11: #{_lambda_.34} parent=5 // pred_region
      %s206 = ssub.s32 %s11, 1
      // Predicated region
      $region13: #{_lambda_.34} parent=11 // pred_check
        %p207 = pneg %p136
      $region14: #{_lambda_.34} parent=11 // pred_check_branch
        %209 = sbr.rel (%p207) target = $region16
      $region15: #{_lambda_.34} parent=11 // pred_region
        %s210 = smul.u32 2, %s22
        %p211 = scmp.lt.s32.totalorder %s210, 1
        %s212 = scalar_select %p211, %s210, 1
        %s213 = smul.addr %s212, 4
        %s214 = scalar_lea.vmem %s3, %s213
        %s215 = smul.u32 2, %s22
      $region16: #{_lambda_.34} parent=11 // pred_fallthru
        _
      // Predicated region
      $region17: #{_lambda_.34} parent=11 // pred_check
        %p216 = pneg %p162
      $region18: #{_lambda_.34} parent=11 // pred_check_branch
        %218 = sbr.rel (%p216) target = $region20
      $region19: #{_lambda_.34} parent=11 // pred_region
        %s219 = smul.u32 2, %s22
        %p220 = scmp.lt.s32.totalorder %s219, 1
        %s221 = scalar_select %p220, %s219, 1
        %s222 = scalar_lea.vmem %s4, %s221
        %s223 = smul.u32 2, %s22
      $region20: #{_lambda_.34} parent=11 // pred_fallthru
        _
    $region12: #{_lambda_.34} parent=5 // pred_fallthru
      _
    %p224 = scmp.lt.s32.totalorder %s11, 2
    // Predicated region
    $region21: #{_lambda_.34} parent=5 // pred_check
      %p225 = pneg %p224
    $region22: #{_lambda_.34} parent=5 // pred_check_branch
      %227 = sbr.rel (%p225) target = $region24
    $region23: #{_lambda_.34} parent=5 // pred_region
      // Predicated region
      $region25: #{_lambda_.34} parent=23 // pred_check
        %p228 = pneg %p52
      $region26: #{_lambda_.34} parent=23 // pred_check_branch
        %230 = sbr.rel (%p228) target = $region28
      $region27: #{_lambda_.34} parent=23 // pred_region
        %s231 = smul.u32 8, %s20
        %p232 = scmp.lt.s32.totalorder %s18, 1
        %s233 = scalar_select %p232, %s18, 1
        %p234 = scmp.lt.s32.totalorder %s231, 7
        %s235 = scalar_select %p234, %s231, 7
        %s236 = smul.addr %s233, 8
        %s237 = sadd.s32 %s235, %s236
        %s238 = smul.addr %s237, 8
        %s239 = scalar_lea.vmem %s0, %s238
        %s240 = smul.u32 8, %s20
      $region28: #{_lambda_.34} parent=23 // pred_fallthru
        _
      // Predicated region
      $region29: #{_lambda_.34} parent=23 // pred_check
        %p241 = pneg %p78
      $region30: #{_lambda_.34} parent=23 // pred_check_branch
        %243 = sbr.rel (%p241) target = $region32
      $region31: #{_lambda_.34} parent=23 // pred_region
        %p244 = scmp.lt.s32.totalorder %s18, 1
        %s245 = scalar_select %p244, %s18, 1
        %s246 = scalar_lea.vmem %s1, %s245
      $region32: #{_lambda_.34} parent=23 // pred_fallthru
        _
      // Predicated region
      $region33: #{_lambda_.34} parent=23 // pred_check
        %p247 = pneg %p104
      $region34: #{_lambda_.34} parent=23 // pred_check_branch
        %249 = sbr.rel (%p247) target = $region36
      $region35: #{_lambda_.34} parent=23 // pred_region
        %p250 = scmp.lt.s32.totalorder %s18, 1
        %s251 = scalar_select %p250, %s18, 1
        %s252 = scalar_lea.vmem %s2, %s251
      $region36: #{_lambda_.34} parent=23 // pred_fallthru
        _
    $region24: #{_lambda_.34} parent=5 // pred_fallthru
      _
    %p253 = scmp.le.s32.totalorder 1, %s11
    %p254 = scmp.lt.s32.totalorder %s11, 3
    %p255 = pnand %p253, %p254
    %p256 = pneg %p255
    // Predicated region
    $region37: #{_lambda_.34} parent=5 // pred_check
      _
    $region38: #{_lambda_.34} parent=5 // pred_check_branch
      %258 = sbr.rel (%p255) target = $region40
    $region39: #{_lambda_.34} parent=5 // pred_region
      %s259 = ssub.s32 %s11, 1
      %s260 = smul.u32 8, %s23
      %p261 = scmp.lt.s32.totalorder %s21, 1
      %s262 = scalar_select %p261, %s21, 1
      %p263 = scmp.lt.s32.totalorder %s260, 7
      %s264 = scalar_select %p263, %s260, 7
      %s265 = smul.addr %s262, 8
      %s266 = sadd.s32 %s264, %s265
      %s267 = smul.addr %s266, 8
      %s268 = scalar_lea.vmem %s0, %s267
      %p269 = pneg %p58
      %p270 = pneg %p55
      %p271 = scmp.lt.s32.totalorder %s21, 1
      %s272 = scalar_select %p271, %s21, 1
      %s273 = scalar_lea.vmem %s1, %s272
      %p274 = pneg %p84
      %p275 = pneg %p81
      %p276 = scmp.lt.s32.totalorder %s21, 1
      %s277 = scalar_select %p276, %s21, 1
      %s278 = scalar_lea.vmem %s2, %s277
      %p279 = pneg %p110
      %p280 = pneg %p107
      %s281 = smul.u32 2, %s22
      %p282 = scmp.lt.s32.totalorder %s281, 1
      %s283 = scalar_select %p282, %s281, 1
      %s284 = smul.addr %s283, 4
      %s285 = scalar_lea.vmem %s3, %s284
      %p286 = pneg %p136
      %p287 = pneg %p133
      %s288 = smul.u32 2, %s22
      %p289 = scmp.lt.s32.totalorder %s288, 1
      %s290 = scalar_select %p289, %s288, 1
      %s291 = scalar_lea.vmem %s4, %s290
      %p292 = pneg %p162
      %p293 = pneg %p159
      %p294 = pneg %p192
      %p295 = pneg %p189
      %s296 = smul.u32 8, %s23
      %s297 = smul.u32 2, %s22
      %p298 = scmp.lt.s32.totalorder %s21, 1
      %s299 = scalar_select %p298, %s21, 1
      %p300 = scmp.lt.s32.totalorder %s296, 7
      %s301 = scalar_select %p300, %s296, 7
      %p302 = scmp.lt.s32.totalorder %s297, 1
      %s303 = scalar_select %p302, %s297, 1
      %s304 = smul.addr %s301, 2
      %s305 = sadd.s32 %s303, %s304
      %s306 = smul.addr %s299, 16
      %s307 = sadd.s32 %s305, %s306
      %s308 = smul.addr %s307, 4
      %s309 = scalar_lea.vmem %s5, %s308
      %s310 = smul.u32 8, %s23
      %p311 = scmp.lt.s32.totalorder %s21, 1
      %s312 = scalar_select %p311, %s21, 1
      %p313 = scmp.lt.s32.totalorder %s310, 7
      %s314 = scalar_select %p313, %s310, 7
      %s315 = smul.addr %s312, 8
      %s316 = sadd.s32 %s314, %s315
      %s317 = smul.addr %s316, 8
      %s318 = scalar_lea.vmem %s0, %s317
      %s319 = smul.u32 8, %s23
      %p320 = scmp.lt.s32.totalorder %s21, 1
      %s321 = scalar_select %p320, %s21, 1
      %s322 = scalar_lea.vmem %s1, %s321
      %p323 = scmp.lt.s32.totalorder %s21, 1
      %s324 = scalar_select %p323, %s21, 1
      %s325 = scalar_lea.vmem %s2, %s324
      %s326 = smul.u32 2, %s22
      %p327 = scmp.lt.s32.totalorder %s326, 1
      %s328 = scalar_select %p327, %s326, 1
      %s329 = smul.addr %s328, 4
      %s330 = scalar_lea.vmem %s3, %s329
      %s331 = smul.u32 2, %s22
      %s332 = smul.u32 2, %s22
      %p333 = scmp.lt.s32.totalorder %s332, 1
      %s334 = scalar_select %p333, %s332, 1
      %s335 = scalar_lea.vmem %s4, %s334
      %s336 = smul.u32 2, %s22
      %s337 = smul.u32 8, %s23
      %s338 = smul.u32 2, %s22
      %p339 = scmp.lt.s32.totalorder %s21, 1
      %s340 = scalar_select %p339, %s21, 1
      %p341 = scmp.lt.s32.totalorder %s337, 7
      %s342 = scalar_select %p341, %s337, 7
      %p343 = scmp.lt.s32.totalorder %s338, 1
      %s344 = scalar_select %p343, %s338, 1
      %s345 = smul.addr %s342, 2
      %s346 = sadd.s32 %s344, %s345
      %s347 = smul.addr %s340, 16
      %s348 = sadd.s32 %s346, %s347
      %s349 = smul.addr %s348, 4
      %s350 = scalar_lea.vmem %s5, %s349
      %s351 = smul.u32 8, %s23
      %s352 = smul.u32 2, %s22
      %v354 = vld [vmem:[%s318] sm:$0xff]
      %v355 = vld [vmem:[%s318 + $0x8] sm:$0xff]
      %v356 = vld [vmem:[%s318 + $0x10] sm:$0xff]
      %v357 = vld [vmem:[%s318 + $0x18] sm:$0xff]
      %v358 = vld [vmem:[%s318 + $0x20] sm:$0xff]
      %v359 = vld [vmem:[%s318 + $0x28] sm:$0xff]
      %v360 = vld [vmem:[%s318 + $0x30] sm:$0xff]
      %v361 = vld [vmem:[%s318 + $0x38] sm:$0xff]
      %vm362 = vcmask 523264
      %v363 = vsel %vm362, %v354, 0.0
      %364 = vadd.xlane.f32.xlu0 %v363
      %v365 = vpop.xlane.xlu0 %364
      %v366 = vsel %vm362, %v355, 0.0
      %367 = vadd.xlane.f32.xlu0 %v366
      %v368 = vpop.xlane.xlu0 %367
      %v369 = vsel %vm362, %v356, 0.0
      %370 = vadd.xlane.f32.xlu0 %v369
      %v371 = vpop.xlane.xlu0 %370
      %v372 = vsel %vm362, %v357, 0.0
      %373 = vadd.xlane.f32.xlu0 %v372
      %v374 = vpop.xlane.xlu0 %373
      %v375 = vsel %vm362, %v358, 0.0
      %376 = vadd.xlane.f32.xlu0 %v375
      %v377 = vpop.xlane.xlu0 %376
      %v378 = vsel %vm362, %v359, 0.0
      %379 = vadd.xlane.f32.xlu0 %v378
      %v380 = vpop.xlane.xlu0 %379
      %v381 = vsel %vm362, %v360, 0.0
      %382 = vadd.xlane.f32.xlu0 %v381
      %v383 = vpop.xlane.xlu0 %382
      %v384 = vsel %vm362, %v361, 0.0
      %385 = vadd.xlane.f32.xlu0 %v384
      %v386 = vpop.xlane.xlu0 %385
      %v387 = vrcp.pop 64.0
      %v388 = vmul.f32 %v365, %v387
      %v389 = vmul.f32 %v368, %v387
      %v390 = vmul.f32 %v371, %v387
      %v391 = vmul.f32 %v374, %v387
      %v392 = vmul.f32 %v377, %v387
      %v393 = vmul.f32 %v380, %v387
      %v394 = vmul.f32 %v383, %v387
      %v395 = vmul.f32 %v386, %v387
      %v396 = vsub.f32 %v354, %v388
      %v397 = vsub.f32 %v355, %v389
      %v398 = vsub.f32 %v356, %v390
      %v399 = vsub.f32 %v357, %v391
      %v400 = vsub.f32 %v358, %v392
      %v401 = vsub.f32 %v359, %v393
      %v402 = vsub.f32 %v360, %v394
      %v403 = vsub.f32 %v361, %v395
      %v404 = vmul.f32 %v396, %v396
      %v405 = vmul.f32 %v397, %v397
      %v406 = vmul.f32 %v398, %v398
      %v407 = vmul.f32 %v399, %v399
      %v408 = vmul.f32 %v400, %v400
      %v409 = vmul.f32 %v401, %v401
      %v410 = vmul.f32 %v402, %v402
      %v411 = vmul.f32 %v403, %v403
      %v412 = vsel %vm362, %v404, 0.0
      %413 = vadd.xlane.f32.xlu0 %v412
      %v414 = vpop.xlane.xlu0 %413
      %v415 = vsel %vm362, %v405, 0.0
      %416 = vadd.xlane.f32.xlu0 %v415
      %v417 = vpop.xlane.xlu0 %416
      %v418 = vsel %vm362, %v406, 0.0
      %419 = vadd.xlane.f32.xlu0 %v418
      %v420 = vpop.xlane.xlu0 %419
      %v421 = vsel %vm362, %v407, 0.0
      %422 = vadd.xlane.f32.xlu0 %v421
      %v423 = vpop.xlane.xlu0 %422
      %v424 = vsel %vm362, %v408, 0.0
      %425 = vadd.xlane.f32.xlu0 %v424
      %v426 = vpop.xlane.xlu0 %425
      %v427 = vsel %vm362, %v409, 0.0
      %428 = vadd.xlane.f32.xlu0 %v427
      %v429 = vpop.xlane.xlu0 %428
      %v430 = vsel %vm362, %v410, 0.0
      %431 = vadd.xlane.f32.xlu0 %v430
      %v432 = vpop.xlane.xlu0 %431
      %v433 = vsel %vm362, %v411, 0.0
      %434 = vadd.xlane.f32.xlu0 %v433
      %v435 = vpop.xlane.xlu0 %434
      %v436 = vmul.f32 %v414, %v387
      %v437 = vmul.f32 %v417, %v387
      %v438 = vmul.f32 %v420, %v387
      %v439 = vmul.f32 %v423, %v387
      %v440 = vmul.f32 %v426, %v387
      %v441 = vmul.f32 %v429, %v387
      %v442 = vmul.f32 %v432, %v387
      %v443 = vmul.f32 %v435, %v387
      %v444 = vadd.f32 %v436, 1e-06
      %v445 = vadd.f32 %v437, 1e-06
      %v446 = vadd.f32 %v438, 1e-06
      %v447 = vadd.f32 %v439, 1e-06
      %v448 = vadd.f32 %v440, 1e-06
      %v449 = vadd.f32 %v441, 1e-06
      %v450 = vadd.f32 %v442, 1e-06
      %v451 = vadd.f32 %v443, 1e-06
      %v452 = vrsqrt.pop %v444
      %v453 = vrsqrt.pop %v445
      %v454 = vrsqrt.pop %v446
      %v455 = vrsqrt.pop %v447
      %v456 = vrsqrt.pop %v448
      %v457 = vrsqrt.pop %v449
      %v458 = vrsqrt.pop %v450
      %v459 = vrsqrt.pop %v451
      %v460 = vmul.f32 %v396, %v452
      %v461 = vmul.f32 %v397, %v453
      %v462 = vmul.f32 %v398, %v454
      %v463 = vmul.f32 %v399, %v455
      %v464 = vmul.f32 %v400, %v456
      %v465 = vmul.f32 %v401, %v457
      %v466 = vmul.f32 %v402, %v458
      %v467 = vmul.f32 %v403, %v459
      %v468 = vld [vmem:[%s322] sm:$0x1]
      %v470 = vlaneseq
      %v471 = vshrl.u32 %v470, 7
      %v472 = vsub.s32 0, %v471
      %v473 = vrot.slane %v468, %v472
      %v475 = vmul.f32 %v460, %v473
      %v476 = vmul.f32 %v461, %v473
      %v477 = vmul.f32 %v462, %v473
      %v478 = vmul.f32 %v463, %v473
      %v479 = vmul.f32 %v464, %v473
      %v480 = vmul.f32 %v465, %v473
      %v481 = vmul.f32 %v466, %v473
      %v482 = vmul.f32 %v467, %v473
      %v483 = vld [vmem:[%s325] sm:$0x1]
      %v485 = vlaneseq
      %v486 = vshrl.u32 %v485, 7
      %v487 = vsub.s32 0, %v486
      %v488 = vrot.slane %v483, %v487
      %v490 = vadd.f32 %v475, %v488
      %v491 = vadd.f32 %v476, %v488
      %v492 = vadd.f32 %v477, %v488
      %v493 = vadd.f32 %v478, %v488
      %v494 = vadd.f32 %v479, %v488
      %v495 = vadd.f32 %v480, %v488
      %v496 = vadd.f32 %v481, %v488
      %v497 = vadd.f32 %v482, %v488
      %v498 = vpack.c.bf16 %v491, %v490
      %v499 = vpack.c.bf16 %v493, %v492
      %v500 = vpack.c.bf16 %v495, %v494
      %v501 = vpack.c.bf16 %v497, %v496
      %v502 = vld [vmem:[%s330] sm:$0xff]
      %v503 = vld [vmem:[%s330 + $0x8] sm:$0xff]
      %v504 = vld [vmem:[%s330 + $0x10] sm:$0xff]
      %v505 = vld [vmem:[%s330 + $0x18] sm:$0xff]
      %v506 = vld [vmem:[%s330 + $0x20] sm:$0xff]
      %v507 = vld [vmem:[%s330 + $0x28] sm:$0xff]
      %v508 = vld [vmem:[%s330 + $0x30] sm:$0xff]
      %v509 = vld [vmem:[%s330 + $0x38] sm:$0xff]
      %v510 = vld [vmem:[%s335] sm:$0x3]
      %v512 = vlaneseq
      %v513 = vshrl.u32 %v512, 7
      %v514 = vsub.s32 0, %v513
      %v515 = vrot.slane %v510, %v514
      %v516 = vlaneseq
      %v517 = vshrl.u32 %v516, 7
      %v518 = vsub.s32 1, %v517
      %v519 = vrot.slane %v510, %v518
      %v530 = vunpack.c.l.b16 %v502
      %v531 = vunpack.c.h.b16 %v502
      %v532 = vunpack.c.l.b16 %v503
      %v533 = vunpack.c.h.b16 %v503
      %v534 = vunpack.c.l.b16 %v504
      %v535 = vunpack.c.h.b16 %v504
      %v536 = vunpack.c.l.b16 %v505
      %v537 = vunpack.c.h.b16 %v505
      %v538 = vunpack.c.l.b16 %v506
      %v539 = vunpack.c.h.b16 %v506
      %v540 = vunpack.c.l.b16 %v507
      %v541 = vunpack.c.h.b16 %v507
      %v542 = vunpack.c.l.b16 %v508
      %v543 = vunpack.c.h.b16 %v508
      %v544 = vunpack.c.l.b16 %v509
      %v545 = vunpack.c.h.b16 %v509
      %v546 = vpack.c.b16 %v532, %v530
      %v547 = vpack.c.b16 %v533, %v531
      %v548 = vpack.c.b16 %v536, %v534
      %v549 = vpack.c.b16 %v537, %v535
      %v550 = vpack.c.b16 %v540, %v538
      %v551 = vpack.c.b16 %v541, %v539
      %v552 = vpack.c.b16 %v544, %v542
      %v553 = vpack.c.b16 %v545, %v543
      %v563 = vsel %vm362, %v498, 0
      %v566 = vsel %vm362, %v499, 0
      %v569 = vsel %vm362, %v500, 0
      %v572 = vsel %vm362, %v501, 0
      %574 = vmatprep.subr.bf16.mxu0 %v547
      %575 = vmatpush1.bf16.msra.mxu0 %v546
      %576 = vmatprep.subr.bf16.mxu0 %v549
      %577 = vmatpush1.bf16.msra.mxu0 %v548
      %578 = vmatprep.subr.bf16.mxu0 %v551
      %579 = vmatpush1.bf16.msra.mxu0 %v550
      %580 = vmatprep.subr.bf16.mxu0 %v553
      %581 = vmatpush1.bf16.msra.mxu0 %v552
      %582 = vmatprep.subr.bf16.mxu0 0
      %583 = vmatpush1.bf16.msra.mxu0 0
      %584 = vmatprep.subr.bf16.mxu0 0
      %585 = vmatpush1.bf16.msra.mxu0 0
      %586 = vmatprep.subr.bf16.mxu0 0
      %587 = vmatpush1.bf16.msra.mxu0 0
      %588 = vmatprep.subr.bf16.mxu0 0
      %589 = vmatpush1.bf16.msra.mxu0 0
      %590 = vmatprep.subr.bf16.mxu0 0
      %591 = vmatpush1.bf16.msra.mxu0 0
      %592 = vmatprep.subr.bf16.mxu0 0
      %593 = vmatpush1.bf16.msra.mxu0 0
      %594 = vmatprep.subr.bf16.mxu0 0
      %595 = vmatpush1.bf16.msra.mxu0 0
      %596 = vmatprep.subr.bf16.mxu0 0
      %597 = vmatpush1.bf16.msra.mxu0 0
      %598 = vmatprep.subr.bf16.mxu0 0
      %599 = vmatpush1.bf16.msra.mxu0 0
      %600 = vmatprep.subr.bf16.mxu0 0
      %601 = vmatpush1.bf16.msra.mxu0 0
      %602 = vmatprep.subr.bf16.mxu0 0
      %603 = vmatpush1.bf16.msra.mxu0 0
      %604 = vmatprep.subr.bf16.mxu0 0
      %605 = vmatpush1.bf16.msra.mxu0 0
      %606 = vmatprep.mubr.bf16.mxu0 0
      %607 = vmatmul.mubr.bf16.gmra.mrb[0].mxu0 %v563
      %v608 = vpop.f32.mrb[0].mxu0
      %v609 = vadd.f32 %v515, %v608
      %v610 = vpop.f32.mrb[0].mxu0
      %v611 = vadd.f32 %v519, %v610
      %v612 = vpop.f32.mrb[0].mxu0
      %v613 = vadd.f32 %v515, %v612
      %v614 = vpop.f32.mrb[0].mxu0
      %v615 = vadd.f32 %v519, %v614
      %616 = vmatprep.mubr.bf16.mxu0 0
      %617 = vmatmul.mubr.bf16.gmra.mrb[0].mxu0 %v566
      %v618 = vpop.f32.mrb[0].mxu0
      %v619 = vadd.f32 %v515, %v618
      %v620 = vpop.f32.mrb[0].mxu0
      %v621 = vadd.f32 %v519, %v620
      %v622 = vpop.f32.mrb[0].mxu0
      %v623 = vadd.f32 %v515, %v622
      %v624 = vpop.f32.mrb[0].mxu0
      %v625 = vadd.f32 %v519, %v624
      %626 = vmatprep.mubr.bf16.mxu0 0
      %627 = vmatmul.mubr.bf16.gmra.mrb[0].mxu0 %v569
      %v628 = vpop.f32.mrb[0].mxu0
      %v629 = vadd.f32 %v515, %v628
      %v630 = vpop.f32.mrb[0].mxu0
      %v631 = vadd.f32 %v519, %v630
      %v632 = vpop.f32.mrb[0].mxu0
      %v633 = vadd.f32 %v515, %v632
      %v634 = vpop.f32.mrb[0].mxu0
      %v635 = vadd.f32 %v519, %v634
      %636 = vmatprep.mubr.bf16.mxu0 0
      %637 = vmatmul.mubr.bf16.gmra.mrb[0].mxu0 %v572
      %v638 = vpop.f32.mrb[0].mxu0
      %v639 = vadd.f32 %v515, %v638
      %v640 = vpop.f32.mrb[0].mxu0
      %v641 = vadd.f32 %v519, %v640
      %v642 = vpop.f32.mrb[0].mxu0
      %v643 = vadd.f32 %v515, %v642
      %v644 = vpop.f32.mrb[0].mxu0
      %v645 = vadd.f32 %v519, %v644
      %646 = vdwg.mxu0
      %v647 = vmul.f32 %v609, 0.5
      %v648 = vmul.f32 %v611, 0.5
      %v649 = vmul.f32 %v613, 0.5
      %v650 = vmul.f32 %v615, 0.5
      %v651 = vmul.f32 %v619, 0.5
      %v652 = vmul.f32 %v621, 0.5
      %v653 = vmul.f32 %v623, 0.5
      %v654 = vmul.f32 %v625, 0.5
      %v655 = vmul.f32 %v629, 0.5
      %v656 = vmul.f32 %v631, 0.5
      %v657 = vmul.f32 %v633, 0.5
      %v658 = vmul.f32 %v635, 0.5
      %v659 = vmul.f32 %v639, 0.5
      %v660 = vmul.f32 %v641, 0.5
      %v661 = vmul.f32 %v643, 0.5
      %v662 = vmul.f32 %v645, 0.5
      %v663 = vmul.f32 %v609, 0.044715
      %v664 = vmul.f32 %v611, 0.044715
      %v665 = vmul.f32 %v613, 0.044715
      %v666 = vmul.f32 %v615, 0.044715
      %v667 = vmul.f32 %v619, 0.044715
      %v668 = vmul.f32 %v621, 0.044715
      %v669 = vmul.f32 %v623, 0.044715
      %v670 = vmul.f32 %v625, 0.044715
      %v671 = vmul.f32 %v629, 0.044715
      %v672 = vmul.f32 %v631, 0.044715
      %v673 = vmul.f32 %v633, 0.044715
      %v674 = vmul.f32 %v635, 0.044715
      %v675 = vmul.f32 %v639, 0.044715
      %v676 = vmul.f32 %v641, 0.044715
      %v677 = vmul.f32 %v643, 0.044715
      %v678 = vmul.f32 %v645, 0.044715
      %v679 = vmul.f32 %v663, %v609
      %v680 = vmul.f32 %v664, %v611
      %v681 = vmul.f32 %v665, %v613
      %v682 = vmul.f32 %v666, %v615
      %v683 = vmul.f32 %v667, %v619
      %v684 = vmul.f32 %v668, %v621
      %v685 = vmul.f32 %v669, %v623
      %v686 = vmul.f32 %v670, %v625
      %v687 = vmul.f32 %v671, %v629
      %v688 = vmul.f32 %v672, %v631
      %v689 = vmul.f32 %v673, %v633
      %v690 = vmul.f32 %v674, %v635
      %v691 = vmul.f32 %v675, %v639
      %v692 = vmul.f32 %v676, %v641
      %v693 = vmul.f32 %v677, %v643
      %v694 = vmul.f32 %v678, %v645
      %v695 = vmul.f32 %v679, %v609
      %v696 = vmul.f32 %v680, %v611
      %v697 = vmul.f32 %v681, %v613
      %v698 = vmul.f32 %v682, %v615
      %v699 = vmul.f32 %v683, %v619
      %v700 = vmul.f32 %v684, %v621
      %v701 = vmul.f32 %v685, %v623
      %v702 = vmul.f32 %v686, %v625
      %v703 = vmul.f32 %v687, %v629
      %v704 = vmul.f32 %v688, %v631
      %v705 = vmul.f32 %v689, %v633
      %v706 = vmul.f32 %v690, %v635
      %v707 = vmul.f32 %v691, %v639
      %v708 = vmul.f32 %v692, %v641
      %v709 = vmul.f32 %v693, %v643
      %v710 = vmul.f32 %v694, %v645
      %v711 = vadd.f32 %v609, %v695
      %v712 = vadd.f32 %v611, %v696
      %v713 = vadd.f32 %v613, %v697
      %v714 = vadd.f32 %v615, %v698
      %v715 = vadd.f32 %v619, %v699
      %v716 = vadd.f32 %v621, %v700
      %v717 = vadd.f32 %v623, %v701
      %v718 = vadd.f32 %v625, %v702
      %v719 = vadd.f32 %v629, %v703
      %v720 = vadd.f32 %v631, %v704
      %v721 = vadd.f32 %v633, %v705
      %v722 = vadd.f32 %v635, %v706
      %v723 = vadd.f32 %v639, %v707
      %v724 = vadd.f32 %v641, %v708
      %v725 = vadd.f32 %v643, %v709
      %v726 = vadd.f32 %v645, %v710
      %v727 = vmul.f32 %v711, 0.7978846
      %v728 = vmul.f32 %v712, 0.7978846
      %v729 = vmul.f32 %v713, 0.7978846
      %v730 = vmul.f32 %v714, 0.7978846
      %v731 = vmul.f32 %v715, 0.7978846
      %v732 = vmul.f32 %v716, 0.7978846
      %v733 = vmul.f32 %v717, 0.7978846
      %v734 = vmul.f32 %v718, 0.7978846
      %v735 = vmul.f32 %v719, 0.7978846
      %v736 = vmul.f32 %v720, 0.7978846
      %v737 = vmul.f32 %v721, 0.7978846
      %v738 = vmul.f32 %v722, 0.7978846
      %v739 = vmul.f32 %v723, 0.7978846
      %v740 = vmul.f32 %v724, 0.7978846
      %v741 = vmul.f32 %v725, 0.7978846
      %v742 = vmul.f32 %v726, 0.7978846
      %v743 = vtanh.pop %v727
      %v744 = vtanh.pop %v728
      %v745 = vtanh.pop %v729
      %v746 = vtanh.pop %v730
      %v747 = vtanh.pop %v731
      %v748 = vtanh.pop %v732
      %v749 = vtanh.pop %v733
      %v750 = vtanh.pop %v734
      %v751 = vtanh.pop %v735
      %v752 = vtanh.pop %v736
      %v753 = vtanh.pop %v737
      %v754 = vtanh.pop %v738
      %v755 = vtanh.pop %v739
      %v756 = vtanh.pop %v740
      %v757 = vtanh.pop %v741
      %v758 = vtanh.pop %v742
      %v759 = vadd.f32 %v743, 1.0
      %v760 = vadd.f32 %v744, 1.0
      %v761 = vadd.f32 %v745, 1.0
      %v762 = vadd.f32 %v746, 1.0
      %v763 = vadd.f32 %v747, 1.0
      %v764 = vadd.f32 %v748, 1.0
      %v765 = vadd.f32 %v749, 1.0
      %v766 = vadd.f32 %v750, 1.0
      %v767 = vadd.f32 %v751, 1.0
      %v768 = vadd.f32 %v752, 1.0
      %v769 = vadd.f32 %v753, 1.0
      %v770 = vadd.f32 %v754, 1.0
      %v771 = vadd.f32 %v755, 1.0
      %v772 = vadd.f32 %v756, 1.0
      %v773 = vadd.f32 %v757, 1.0
      %v774 = vadd.f32 %v758, 1.0
      %v775 = vmul.f32 %v647, %v759
      %v776 = vmul.f32 %v648, %v760
      %v777 = vmul.f32 %v649, %v761
      %v778 = vmul.f32 %v650, %v762
      %v779 = vmul.f32 %v651, %v763
      %v780 = vmul.f32 %v652, %v764
      %v781 = vmul.f32 %v653, %v765
      %v782 = vmul.f32 %v654, %v766
      %v783 = vmul.f32 %v655, %v767
      %v784 = vmul.f32 %v656, %v768
      %v785 = vmul.f32 %v657, %v769
      %v786 = vmul.f32 %v658, %v770
      %v787 = vmul.f32 %v659, %v771
      %v788 = vmul.f32 %v660, %v772
      %v789 = vmul.f32 %v661, %v773
      %v790 = vmul.f32 %v662, %v774
      %v791 = vpack.c.bf16 %v777, %v775
      %v792 = vpack.c.bf16 %v778, %v776
      %v793 = vpack.c.bf16 %v781, %v779
      %v794 = vpack.c.bf16 %v782, %v780
      %v795 = vpack.c.bf16 %v785, %v783
      %v796 = vpack.c.bf16 %v786, %v784
      %v797 = vpack.c.bf16 %v789, %v787
      %v798 = vpack.c.bf16 %v790, %v788
      %v807 = vunpack.c.l.b16 %v791
      %v808 = vunpack.c.l.b16 %v792
      %v809 = vunpack.c.h.b16 %v791
      %v810 = vunpack.c.h.b16 %v792
      %v811 = vunpack.c.l.b16 %v793
      %v812 = vunpack.c.l.b16 %v794
      %v813 = vunpack.c.h.b16 %v793
      %v814 = vunpack.c.h.b16 %v794
      %v815 = vunpack.c.l.b16 %v795
      %v816 = vunpack.c.l.b16 %v796
      %v817 = vunpack.c.h.b16 %v795
      %v818 = vunpack.c.h.b16 %v796
      %v819 = vunpack.c.l.b16 %v797
      %v820 = vunpack.c.l.b16 %v798
      %v821 = vunpack.c.h.b16 %v797
      %v822 = vunpack.c.h.b16 %v798
      %v823 = vpack.c.b16 %v808, %v807
      %v824 = vpack.c.b16 %v810, %v809
      %v825 = vpack.c.b16 %v812, %v811
      %v826 = vpack.c.b16 %v814, %v813
      %v827 = vpack.c.b16 %v816, %v815
      %v828 = vpack.c.b16 %v818, %v817
      %v829 = vpack.c.b16 %v820, %v819
      %v830 = vpack.c.b16 %v822, %v821
      %839 = vst [vmem:[%s350] sm:$0xff] %v823
      %840 = vst [vmem:[%s350 + $0x8] sm:$0xff] %v824
      %841 = vst [vmem:[%s350 + $0x10] sm:$0xff] %v825
      %842 = vst [vmem:[%s350 + $0x18] sm:$0xff] %v826
      %843 = vst [vmem:[%s350 + $0x20] sm:$0xff] %v827
      %844 = vst [vmem:[%s350 + $0x28] sm:$0xff] %v828
      %845 = vst [vmem:[%s350 + $0x30] sm:$0xff] %v829
      %846 = vst [vmem:[%s350 + $0x38] sm:$0xff] %v830
      %s847 = smul.u32 8, %s23
      %s848 = smul.u32 2, %s22
      %p849 = scmp.lt.s32.totalorder %s21, 1
      %s850 = scalar_select %p849, %s21, 1
      %p851 = scmp.lt.s32.totalorder %s847, 7
      %s852 = scalar_select %p851, %s847, 7
      %p853 = scmp.lt.s32.totalorder %s848, 1
      %s854 = scalar_select %p853, %s848, 1
      %s855 = smul.addr %s852, 2
      %s856 = sadd.s32 %s854, %s855
      %s857 = smul.addr %s850, 16
      %s858 = sadd.s32 %s856, %s857
      %s859 = smul.addr %s858, 4
      %s860 = scalar_lea.vmem %s5, %s859
      // Predicated region
      $region41: #{_lambda_.34} parent=39 // pred_check
        %p861 = pneg %p189
      $region42: #{_lambda_.34} parent=39 // pred_check_branch
        %863 = sbr.rel (%p861) target = $region44
      $region43: #{_lambda_.34} parent=39 // pred_region
        %s864 = smul.u32 8, %s23
        %s865 = smul.u32 2, %s22
      $region44: #{_lambda_.34} parent=39 // pred_fallthru
        _
    $region40: #{_lambda_.34} parent=5 // pred_fallthru
      _
    %p866 = scmp.le.s32.totalorder 2, %s11
    // Predicated region
    $region45: #{_lambda_.34} parent=5 // pred_check
      %p867 = pneg %p866
    $region46: #{_lambda_.34} parent=5 // pred_check_branch
      %869 = sbr.rel (%p867) target = $region48
    $region47: #{_lambda_.34} parent=5 // pred_region
      %s870 = ssub.s32 %s11, 2
      // Predicated region
      $region49: #{_lambda_.34} parent=47 // pred_check
        %p871 = pneg %p195
      $region50: #{_lambda_.34} parent=47 // pred_check_branch
        %873 = sbr.rel (%p871) target = $region52
      $region51: #{_lambda_.34} parent=47 // pred_region
        %s874 = smul.u32 8, %s26
        %s875 = smul.u32 2, %s25
        %p876 = scmp.lt.s32.totalorder %s24, 1
        %s877 = scalar_select %p876, %s24, 1
        %p878 = scmp.lt.s32.totalorder %s874, 7
        %s879 = scalar_select %p878, %s874, 7
        %p880 = scmp.lt.s32.totalorder %s875, 1
        %s881 = scalar_select %p880, %s875, 1
        %s882 = smul.addr %s879, 2
        %s883 = sadd.s32 %s881, %s882
        %s884 = smul.addr %s877, 16
        %s885 = sadd.s32 %s883, %s884
        %s886 = smul.addr %s885, 4
        %s887 = scalar_lea.vmem %s5, %s886
      $region52: #{_lambda_.34} parent=47 // pred_fallthru
        _
    $region48: #{_lambda_.34} parent=5 // pred_fallthru
      _
  $region6: #{_lambda_.34} parent=0 // loop_footer
    %s15 = sadd.s32 1, %s11
  $region7: #{_lambda_.34} parent=0 // loop_footer_branch
    %10 = sbr.rel target = $region3
  $region8: #{_lambda_.34} parent=0 // loop_exit
    _

// kernel: _lambda_.35
$region0: #{_lambda_.35}
  #allocation0 [shape = 'u32[]', space=smem, size = 0x4, offset = 0x4, fixed_abs, tag = 'smem constant byte address 0x4 - core index']
  #allocation1 [shape = 'u32[144,128]{1,0:T(1,128)}', space=vmem, size = 0x12000, scoped, tag = 'internal scratch']
  %s0 = inlined_call_operand.vmem [shape: bf16[2,64,256], index: 0, kind: input, shape index: {}]
  %s1 = inlined_call_operand.vmem [shape: bf16[256,64], index: 1, kind: input, shape index: {}]
  %s2 = inlined_call_operand.vmem [shape: f32[1,64], index: 2, kind: input, shape index: {}]
  %s3 = inlined_call_operand.vmem [shape: f32[2,1,64], index: 3, kind: input, shape index: {}]
  %s4 = inlined_call_operand.vmem [shape: f32[2,64,64], index: 4, kind: input, shape index: {}]
  %s5 = inlined_call_operand.vmem [shape: f32[2,64,64], index: 5, kind: output, shape index: {}]
  %s6 = sld [smem:[#allocation0]]
  $region53: #{_lambda_.35} parent=0
    _
  %s8 = ssub.s32 1, %s6
  %s9 = scalar_select 0, %s8, %s6
  loop: start=0, step=1, limit=4
  $region2: #{_lambda_.35} parent=0 // loop_pre_header
    _
  $region3: #{_lambda_.35} parent=0 // loop_header
    %s11 = sphi 0, %s15
    %p12 = scmp.ge.s32.totalorder %s11, 4
    %s18 = sphi 0, %s37
    %s19 = sphi 0, %s33
    %s20 = sphi 0, %s29
    %s21 = sphi 0, %s18
    %s22 = sphi 0, %s19
    %s23 = sphi 0, %s20
    %s24 = sphi 0, %s21
    %s25 = sphi 0, %s22
    %s26 = sphi 0, %s23
    %s42 = sphi 0, %s44
    %s45 = sphi 0, %s42
    %s46 = sphi 0, %s45
    %s62 = sphi 0, %s46
    %s68 = sphi 0, %s70
    %s71 = sphi 0, %s68
    %s72 = sphi 0, %s71
    %s88 = sphi 0, %s72
    %s94 = sphi 0, %s96
    %s97 = sphi 0, %s94
    %s98 = sphi 0, %s97
    %s114 = sphi 0, %s98
    %s122 = sphi 0, %s124
    %s125 = sphi 0, %s122
    %s126 = sphi 0, %s125
    %s142 = sphi 0, %s126
    %s152 = sphi 0, %s154
    %s155 = sphi 0, %s152
    %s156 = sphi 0, %s155
    %s172 = sphi 0, %s156
    %s182 = sphi 0, %s184
    %s185 = sphi 0, %s182
    %s186 = sphi 0, %s185
    %s202 = sphi 0, %s186
  $region4: #{_lambda_.35} parent=0 // loop_header_branch
    %14 = sbr.rel (%p12) target = $region8
  $region5: #{_lambda_.35} parent=0 // loop_body
    %s16 = ssub.s32 %s11, 1
    %s17 = ssub.s32 %s11, 2
    %s27 = sadd.s32 1, %s20
    %p28 = scmp.ge.s32.totalorder %s27, 1
    %s29 = scalar_select %p28, 0, %s27
    %s30 = sadd.s32 1, %s19
    %s31 = scalar_select %p28, %s30, %s19
    %p32 = scmp.ge.s32.totalorder %s31, 1
    %s33 = scalar_select %p32, 0, %s31
    %s34 = sadd.s32 1, %s18
    %s35 = scalar_select %p32, %s34, %s18
    %p36 = scmp.ge.s32.totalorder %s35, 2
    %s37 = scalar_select %p36, 0, %s35
    %s38 = ssub.s32 %s18, %s37
    %s39 = ssub.s32 %s20, %s29
    %s40 = sor.u32 %s38, %s39
    %p41 = scmp.eq.s32.totalorder %s40, 0
    %s43 = sadd.s32 %s42, 1
    %s44 = scalar_select %p41, %s42, %s43
    %p47 = pneg %p41
    %p48 = scmp.eq.s32.totalorder %s11, 1
    %p49 = por %p47, %p48
    %p50 = scmp.ne.s32.totalorder %s42, %s45
    %p51 = scmp.eq.s32.totalorder %s11, 0
    %p52 = por %p50, %p51
    %p53 = scmp.ne.s32.totalorder %s42, %s45
    %p54 = scmp.eq.s32.totalorder %s16, 1
    %p55 = por %p53, %p54
    %p56 = scmp.ne.s32.totalorder %s45, %s46
    %p57 = scmp.eq.s32.totalorder %s16, 0
    %p58 = por %p56, %p57
    %p59 = scmp.ne.s32.totalorder %s45, %s46
    %p60 = scmp.eq.s32.totalorder %s17, 1
    %p61 = por %p59, %p60
    %p63 = scmp.ne.s32.totalorder %s46, %s62
    %p64 = scmp.eq.s32.totalorder %s17, 0
    %p65 = por %p63, %p64
    %s66 = ssub.s32 %s19, %s33
    %p67 = scmp.eq.s32.totalorder %s66, 0
    %s69 = sadd.s32 %s68, 1
    %s70 = scalar_select %p67, %s68, %s69
    %p73 = pneg %p67
    %p74 = scmp.eq.s32.totalorder %s11, 1
    %p75 = por %p73, %p74
    %p76 = scmp.ne.s32.totalorder %s68, %s71
    %p77 = scmp.eq.s32.totalorder %s11, 0
    %p78 = por %p76, %p77
    %p79 = scmp.ne.s32.totalorder %s68, %s71
    %p80 = scmp.eq.s32.totalorder %s16, 1
    %p81 = por %p79, %p80
    %p82 = scmp.ne.s32.totalorder %s71, %s72
    %p83 = scmp.eq.s32.totalorder %s16, 0
    %p84 = por %p82, %p83
    %p85 = scmp.ne.s32.totalorder %s71, %s72
    %p86 = scmp.eq.s32.totalorder %s17, 1
    %p87 = por %p85, %p86
    %p89 = scmp.ne.s32.totalorder %s72, %s88
    %p90 = scmp.eq.s32.totalorder %s17, 0
    %p91 = por %p89, %p90
    %s92 = ssub.s32 %s19, %s33
    %p93 = scmp.eq.s32.totalorder %s92, 0
    %s95 = sadd.s32 %s94, 1
    %s96 = scalar_select %p93, %s94, %s95
    %p99 = pneg %p93
    %p100 = scmp.eq.s32.totalorder %s11, 1
    %p101 = por %p99, %p100
    %p102 = scmp.ne.s32.totalorder %s94, %s97
    %p103 = scmp.eq.s32.totalorder %s11, 0
    %p104 = por %p102, %p103
    %p105 = scmp.ne.s32.totalorder %s94, %s97
    %p106 = scmp.eq.s32.totalorder %s16, 1
    %p107 = por %p105, %p106
    %p108 = scmp.ne.s32.totalorder %s97, %s98
    %p109 = scmp.eq.s32.totalorder %s16, 0
    %p110 = por %p108, %p109
    %p111 = scmp.ne.s32.totalorder %s97, %s98
    %p112 = scmp.eq.s32.totalorder %s17, 1
    %p113 = por %p111, %p112
    %p115 = scmp.ne.s32.totalorder %s98, %s114
    %p116 = scmp.eq.s32.totalorder %s17, 0
    %p117 = por %p115, %p116
    %s118 = ssub.s32 %s18, %s37
    %s119 = ssub.s32 %s19, %s33
    %s120 = sor.u32 %s118, %s119
    %p121 = scmp.eq.s32.totalorder %s120, 0
    %s123 = sadd.s32 %s122, 1
    %s124 = scalar_select %p121, %s122, %s123
    %p127 = pneg %p121
    %p128 = scmp.eq.s32.totalorder %s11, 1
    %p129 = por %p127, %p128
    %p130 = scmp.ne.s32.totalorder %s122, %s125
    %p131 = scmp.eq.s32.totalorder %s11, 0
    %p132 = por %p130, %p131
    %p133 = scmp.ne.s32.totalorder %s122, %s125
    %p134 = scmp.eq.s32.totalorder %s16, 1
    %p135 = por %p133, %p134
    %p136 = scmp.ne.s32.totalorder %s125, %s126
    %p137 = scmp.eq.s32.totalorder %s16, 0
    %p138 = por %p136, %p137
    %p139 = scmp.ne.s32.totalorder %s125, %s126
    %p140 = scmp.eq.s32.totalorder %s17, 1
    %p141 = por %p139, %p140
    %p143 = scmp.ne.s32.totalorder %s126, %s142
    %p144 = scmp.eq.s32.totalorder %s17, 0
    %p145 = por %p143, %p144
    %s146 = ssub.s32 %s18, %s37
    %s147 = ssub.s32 %s20, %s29
    %s148 = sor.u32 %s146, %s147
    %s149 = ssub.s32 %s19, %s33
    %s150 = sor.u32 %s148, %s149
    %p151 = scmp.eq.s32.totalorder %s150, 0
    %s153 = sadd.s32 %s152, 1
    %s154 = scalar_select %p151, %s152, %s153
    %p157 = pneg %p151
    %p158 = scmp.eq.s32.totalorder %s11, 1
    %p159 = por %p157, %p158
    %p160 = scmp.ne.s32.totalorder %s152, %s155
    %p161 = scmp.eq.s32.totalorder %s11, 0
    %p162 = por %p160, %p161
    %p163 = scmp.ne.s32.totalorder %s152, %s155
    %p164 = scmp.eq.s32.totalorder %s16, 1
    %p165 = por %p163, %p164
    %p166 = scmp.ne.s32.totalorder %s155, %s156
    %p167 = scmp.eq.s32.totalorder %s16, 0
    %p168 = por %p166, %p167
    %p169 = scmp.ne.s32.totalorder %s155, %s156
    %p170 = scmp.eq.s32.totalorder %s17, 1
    %p171 = por %p169, %p170
    %p173 = scmp.ne.s32.totalorder %s156, %s172
    %p174 = scmp.eq.s32.totalorder %s17, 0
    %p175 = por %p173, %p174
    %s176 = ssub.s32 %s18, %s37
    %s177 = ssub.s32 %s20, %s29
    %s178 = sor.u32 %s176, %s177
    %s179 = ssub.s32 %s19, %s33
    %s180 = sor.u32 %s178, %s179
    %p181 = scmp.eq.s32.totalorder %s180, 0
    %s183 = sadd.s32 %s182, 1
    %s184 = scalar_select %p181, %s182, %s183
    %p187 = pneg %p181
    %p188 = scmp.eq.s32.totalorder %s11, 1
    %p189 = por %p187, %p188
    %p190 = scmp.ne.s32.totalorder %s182, %s185
    %p191 = scmp.eq.s32.totalorder %s11, 0
    %p192 = por %p190, %p191
    %p193 = scmp.ne.s32.totalorder %s182, %s185
    %p194 = scmp.eq.s32.totalorder %s16, 1
    %p195 = por %p193, %p194
    %p196 = scmp.ne.s32.totalorder %s185, %s186
    %p197 = scmp.eq.s32.totalorder %s16, 0
    %p198 = por %p196, %p197
    %p199 = scmp.ne.s32.totalorder %s185, %s186
    %p200 = scmp.eq.s32.totalorder %s17, 1
    %p201 = por %p199, %p200
    %p203 = scmp.ne.s32.totalorder %s186, %s202
    %p204 = scmp.eq.s32.totalorder %s17, 0
    %p205 = por %p203, %p204
    %p206 = scmp.le.s32.totalorder 1, %s11
    %p207 = scmp.lt.s32.totalorder %s11, 3
    %p208 = pnand %p206, %p207
    %p209 = pneg %p208
    // Predicated region
    $region9: #{_lambda_.35} parent=5 // pred_check
      _
    $region10: #{_lambda_.35} parent=5 // pred_check_branch
      %211 = sbr.rel (%p208) target = $region12
    $region11: #{_lambda_.35} parent=5 // pred_region
      %s212 = ssub.s32 %s11, 1
      // Predicated region
      $region13: #{_lambda_.35} parent=11 // pred_check
        %p213 = pneg %p84
      $region14: #{_lambda_.35} parent=11 // pred_check_branch
        %215 = sbr.rel (%p213) target = $region16
      $region15: #{_lambda_.35} parent=11 // pred_region
        %p216 = scmp.lt.s32.totalorder %s22, 0
        %s217 = scalar_select %p216, %s22, 0
        %s218 = smul.addr %s217, 4
        %s219 = scalar_lea.vmem %s1, %s218
      $region16: #{_lambda_.35} parent=11 // pred_fallthru
        _
      // Predicated region
      $region17: #{_lambda_.35} parent=11 // pred_check
        %p220 = pneg %p110
      $region18: #{_lambda_.35} parent=11 // pred_check_branch
        %222 = sbr.rel (%p220) target = $region20
      $region19: #{_lambda_.35} parent=11 // pred_region
        %p223 = scmp.lt.s32.totalorder %s22, 0
        %s224 = scalar_select %p223, %s22, 0
        %s225 = scalar_lea.vmem %s2, %s224
      $region20: #{_lambda_.35} parent=11 // pred_fallthru
        _
    $region12: #{_lambda_.35} parent=5 // pred_fallthru
      _
    %p226 = scmp.lt.s32.totalorder %s11, 2
    // Predicated region
    $region21: #{_lambda_.35} parent=5 // pred_check
      %p227 = pneg %p226
    $region22: #{_lambda_.35} parent=5 // pred_check_branch
      %229 = sbr.rel (%p227) target = $region24
    $region23: #{_lambda_.35} parent=5 // pred_region
      // Predicated region
      $region25: #{_lambda_.35} parent=23 // pred_check
        %p230 = pneg %p52
      $region26: #{_lambda_.35} parent=23 // pred_check_branch
        %232 = sbr.rel (%p230) target = $region28
      $region27: #{_lambda_.35} parent=23 // pred_region
        %s233 = smul.u32 8, %s20
        %p234 = scmp.lt.s32.totalorder %s18, 1
        %s235 = scalar_select %p234, %s18, 1
        %p236 = scmp.lt.s32.totalorder %s233, 7
        %s237 = scalar_select %p236, %s233, 7
        %s238 = smul.addr %s237, 2
        %s239 = smul.addr %s235, 16
        %s240 = sadd.s32 %s238, %s239
        %s241 = smul.addr %s240, 4
        %s242 = scalar_lea.vmem %s0, %s241
        %s243 = smul.u32 8, %s20
      $region28: #{_lambda_.35} parent=23 // pred_fallthru
        _
      // Predicated region
      $region29: #{_lambda_.35} parent=23 // pred_check
        %p244 = pneg %p132
      $region30: #{_lambda_.35} parent=23 // pred_check_branch
        %246 = sbr.rel (%p244) target = $region32
      $region31: #{_lambda_.35} parent=23 // pred_region
        %p247 = scmp.lt.s32.totalorder %s18, 1
        %s248 = scalar_select %p247, %s18, 1
        %p249 = scmp.lt.s32.totalorder %s19, 0
        %s250 = scalar_select %p249, %s19, 0
        %s251 = sadd.s32 %s250, %s248
        %s252 = scalar_lea.vmem %s3, %s251
      $region32: #{_lambda_.35} parent=23 // pred_fallthru
        _
      // Predicated region
      $region33: #{_lambda_.35} parent=23 // pred_check
        %p253 = pneg %p162
      $region34: #{_lambda_.35} parent=23 // pred_check_branch
        %255 = sbr.rel (%p253) target = $region36
      $region35: #{_lambda_.35} parent=23 // pred_region
        %s256 = smul.u32 8, %s20
        %p257 = scmp.lt.s32.totalorder %s18, 1
        %s258 = scalar_select %p257, %s18, 1
        %p259 = scmp.lt.s32.totalorder %s256, 7
        %s260 = scalar_select %p259, %s256, 7
        %p261 = scmp.lt.s32.totalorder %s19, 0
        %s262 = scalar_select %p261, %s19, 0
        %s263 = sadd.s32 %s262, %s260
        %s264 = smul.addr %s258, 8
        %s265 = sadd.s32 %s263, %s264
        %s266 = smul.addr %s265, 8
        %s267 = scalar_lea.vmem %s4, %s266
        %s268 = smul.u32 8, %s20
      $region36: #{_lambda_.35} parent=23 // pred_fallthru
        _
    $region24: #{_lambda_.35} parent=5 // pred_fallthru
      _
    %p269 = scmp.le.s32.totalorder 1, %s11
    %p270 = scmp.lt.s32.totalorder %s11, 3
    %p271 = pnand %p269, %p270
    %p272 = pneg %p271
    // Predicated region
    $region37: #{_lambda_.35} parent=5 // pred_check
      _
    $region38: #{_lambda_.35} parent=5 // pred_check_branch
      %274 = sbr.rel (%p271) target = $region40
    $region39: #{_lambda_.35} parent=5 // pred_region
      %s275 = ssub.s32 %s11, 1
      %s276 = smul.u32 8, %s23
      %p277 = scmp.lt.s32.totalorder %s21, 1
      %s278 = scalar_select %p277, %s21, 1
      %p279 = scmp.lt.s32.totalorder %s276, 7
      %s280 = scalar_select %p279, %s276, 7
      %s281 = smul.addr %s280, 2
      %s282 = smul.addr %s278, 16
      %s283 = sadd.s32 %s281, %s282
      %s284 = smul.addr %s283, 4
      %s285 = scalar_lea.vmem %s0, %s284
      %p286 = pneg %p58
      %p287 = pneg %p55
      %p288 = scmp.lt.s32.totalorder %s22, 0
      %s289 = scalar_select %p288, %s22, 0
      %s290 = smul.addr %s289, 4
      %s291 = scalar_lea.vmem %s1, %s290
      %p292 = pneg %p84
      %p293 = pneg %p81
      %p294 = scmp.lt.s32.totalorder %s22, 0
      %s295 = scalar_select %p294, %s22, 0
      %s296 = scalar_lea.vmem %s2, %s295
      %p297 = pneg %p110
      %p298 = pneg %p107
      %p299 = scmp.lt.s32.totalorder %s21, 1
      %s300 = scalar_select %p299, %s21, 1
      %p301 = scmp.lt.s32.totalorder %s22, 0
      %s302 = scalar_select %p301, %s22, 0
      %s303 = sadd.s32 %s302, %s300
      %s304 = scalar_lea.vmem %s3, %s303
      %p305 = pneg %p138
      %p306 = pneg %p135
      %s307 = smul.u32 8, %s23
      %p308 = scmp.lt.s32.totalorder %s21, 1
      %s309 = scalar_select %p308, %s21, 1
      %p310 = scmp.lt.s32.totalorder %s307, 7
      %s311 = scalar_select %p310, %s307, 7
      %p312 = scmp.lt.s32.totalorder %s22, 0
      %s313 = scalar_select %p312, %s22, 0
      %s314 = sadd.s32 %s313, %s311
      %s315 = smul.addr %s309, 8
      %s316 = sadd.s32 %s314, %s315
      %s317 = smul.addr %s316, 8
      %s318 = scalar_lea.vmem %s4, %s317
      %p319 = pneg %p168
      %p320 = pneg %p165
      %p321 = pneg %p198
      %p322 = pneg %p195
      %s323 = smul.u32 8, %s23
      %p324 = scmp.lt.s32.totalorder %s21, 1
      %s325 = scalar_select %p324, %s21, 1
      %p326 = scmp.lt.s32.totalorder %s323, 7
      %s327 = scalar_select %p326, %s323, 7
      %p328 = scmp.lt.s32.totalorder %s22, 0
      %s329 = scalar_select %p328, %s22, 0
      %s330 = sadd.s32 %s329, %s327
      %s331 = smul.addr %s325, 8
      %s332 = sadd.s32 %s330, %s331
      %s333 = smul.addr %s332, 8
      %s334 = scalar_lea.vmem %s5, %s333
      %s335 = smul.u32 8, %s23
      %p336 = scmp.lt.s32.totalorder %s21, 1
      %s337 = scalar_select %p336, %s21, 1
      %p338 = scmp.lt.s32.totalorder %s335, 7
      %s339 = scalar_select %p338, %s335, 7
      %s340 = smul.addr %s339, 2
      %s341 = smul.addr %s337, 16
      %s342 = sadd.s32 %s340, %s341
      %s343 = smul.addr %s342, 4
      %s344 = scalar_lea.vmem %s0, %s343
      %s345 = smul.u32 8, %s23
      %p346 = scmp.lt.s32.totalorder %s22, 0
      %s347 = scalar_select %p346, %s22, 0
      %s348 = smul.addr %s347, 4
      %s349 = scalar_lea.vmem %s1, %s348
      %p350 = scmp.lt.s32.totalorder %s22, 0
      %s351 = scalar_select %p350, %s22, 0
      %s352 = scalar_lea.vmem %s2, %s351
      %p353 = scmp.lt.s32.totalorder %s21, 1
      %s354 = scalar_select %p353, %s21, 1
      %p355 = scmp.lt.s32.totalorder %s22, 0
      %s356 = scalar_select %p355, %s22, 0
      %s357 = sadd.s32 %s356, %s354
      %s358 = scalar_lea.vmem %s3, %s357
      %s359 = smul.u32 8, %s23
      %p360 = scmp.lt.s32.totalorder %s21, 1
      %s361 = scalar_select %p360, %s21, 1
      %p362 = scmp.lt.s32.totalorder %s359, 7
      %s363 = scalar_select %p362, %s359, 7
      %p364 = scmp.lt.s32.totalorder %s22, 0
      %s365 = scalar_select %p364, %s22, 0
      %s366 = sadd.s32 %s365, %s363
      %s367 = smul.addr %s361, 8
      %s368 = sadd.s32 %s366, %s367
      %s369 = smul.addr %s368, 8
      %s370 = scalar_lea.vmem %s4, %s369
      %s371 = smul.u32 8, %s23
      %s372 = smul.u32 8, %s23
      %p373 = scmp.lt.s32.totalorder %s21, 1
      %s374 = scalar_select %p373, %s21, 1
      %p375 = scmp.lt.s32.totalorder %s372, 7
      %s376 = scalar_select %p375, %s372, 7
      %p377 = scmp.lt.s32.totalorder %s22, 0
      %s378 = scalar_select %p377, %s22, 0
      %s379 = sadd.s32 %s378, %s376
      %s380 = smul.addr %s374, 8
      %s381 = sadd.s32 %s379, %s380
      %s382 = smul.addr %s381, 8
      %s383 = scalar_lea.vmem %s5, %s382
      %s384 = smul.u32 8, %s23
      %v386 = vld [vmem:[%s344] sm:$0xff]
      %v387 = vld [vmem:[%s344 + $0x8] sm:$0xff]
      %v388 = vld [vmem:[%s344 + $0x10] sm:$0xff]
      %v389 = vld [vmem:[%s344 + $0x18] sm:$0xff]
      %v390 = vld [vmem:[%s344 + $0x20] sm:$0xff]
      %v391 = vld [vmem:[%s344 + $0x28] sm:$0xff]
      %v392 = vld [vmem:[%s344 + $0x30] sm:$0xff]
      %v393 = vld [vmem:[%s344 + $0x38] sm:$0xff]
      %v394 = vld [vmem:[%s349] sm:$0xf]
      %v395 = vld [vmem:[%s349 + $0x4] sm:$0xf]
      %v396 = vld [vmem:[%s349 + $0x8] sm:$0xf]
      %v397 = vld [vmem:[%s349 + $0xc] sm:$0xf]
      %v398 = vld [vmem:[%s349 + $0x10] sm:$0xf]
      %v399 = vld [vmem:[%s349 + $0x14] sm:$0xf]
      %v400 = vld [vmem:[%s349 + $0x18] sm:$0xf]
      %v401 = vld [vmem:[%s349 + $0x1c] sm:$0xf]
      %v402 = vld [vmem:[%s349 + $0x20] sm:$0xf]
      %v403 = vld [vmem:[%s349 + $0x24] sm:$0xf]
      %v404 = vld [vmem:[%s349 + $0x28] sm:$0xf]
      %v405 = vld [vmem:[%s349 + $0x2c] sm:$0xf]
      %v406 = vld [vmem:[%s349 + $0x30] sm:$0xf]
      %v407 = vld [vmem:[%s349 + $0x34] sm:$0xf]
      %v408 = vld [vmem:[%s349 + $0x38] sm:$0xf]
      %v409 = vld [vmem:[%s349 + $0x3c] sm:$0xf]
      %v410 = vld [vmem:[%s349 + $0x40] sm:$0xf]
      %v411 = vld [vmem:[%s349 + $0x44] sm:$0xf]
      %v412 = vld [vmem:[%s349 + $0x48] sm:$0xf]
      %v413 = vld [vmem:[%s349 + $0x4c] sm:$0xf]
      %v414 = vld [vmem:[%s349 + $0x50] sm:$0xf]
      %v415 = vld [vmem:[%s349 + $0x54] sm:$0xf]
      %v416 = vld [vmem:[%s349 + $0x58] sm:$0xf]
      %v417 = vld [vmem:[%s349 + $0x5c] sm:$0xf]
      %v418 = vld [vmem:[%s349 + $0x60] sm:$0xf]
      %v419 = vld [vmem:[%s349 + $0x64] sm:$0xf]
      %v420 = vld [vmem:[%s349 + $0x68] sm:$0xf]
      %v421 = vld [vmem:[%s349 + $0x6c] sm:$0xf]
      %v422 = vld [vmem:[%s349 + $0x70] sm:$0xf]
      %v423 = vld [vmem:[%s349 + $0x74] sm:$0xf]
      %v424 = vld [vmem:[%s349 + $0x78] sm:$0xf]
      %v425 = vld [vmem:[%s349 + $0x7c] sm:$0xf]
      %v426 = vld [vmem:[%s352] sm:$0x1]
      %v428 = vlaneseq
      %v429 = vshrl.u32 %v428, 7
      %v430 = vsub.s32 0, %v429
      %v431 = vrot.slane %v426, %v430
      %v441 = vunpack.c.l.b16 %v386
      %v442 = vunpack.c.h.b16 %v386
      %v443 = vunpack.c.l.b16 %v387
      %v444 = vunpack.c.h.b16 %v387
      %v445 = vunpack.c.l.b16 %v388
      %v446 = vunpack.c.h.b16 %v388
      %v447 = vunpack.c.l.b16 %v389
      %v448 = vunpack.c.h.b16 %v389
      %v449 = vunpack.c.l.b16 %v390
      %v450 = vunpack.c.h.b16 %v390
      %v451 = vunpack.c.l.b16 %v391
      %v452 = vunpack.c.h.b16 %v391
      %v453 = vunpack.c.l.b16 %v392
      %v454 = vunpack.c.h.b16 %v392
      %v455 = vunpack.c.l.b16 %v393
      %v456 = vunpack.c.h.b16 %v393
      %v457 = vpack.c.b16 %v443, %v441
      %v458 = vpack.c.b16 %v444, %v442
      %v459 = vpack.c.b16 %v447, %v445
      %v460 = vpack.c.b16 %v448, %v446
      %v461 = vpack.c.b16 %v451, %v449
      %v462 = vpack.c.b16 %v452, %v450
      %v463 = vpack.c.b16 %v455, %v453
      %v464 = vpack.c.b16 %v456, %v454
      %v505 = vunpack.c.l.b16 %v394
      %v506 = vunpack.c.l.b16 %v395
      %v507 = vunpack.c.l.b16 %v396
      %v508 = vunpack.c.l.b16 %v397
      %v509 = vunpack.c.l.b16 %v398
      %v510 = vunpack.c.l.b16 %v399
      %v511 = vunpack.c.l.b16 %v400
      %v512 = vunpack.c.l.b16 %v401
      %v513 = vunpack.c.l.b16 %v402
      %v514 = vunpack.c.l.b16 %v403
      %v515 = vunpack.c.l.b16 %v404
      %v516 = vunpack.c.l.b16 %v405
      %v517 = vunpack.c.l.b16 %v406
      %v518 = vunpack.c.l.b16 %v407
      %v519 = vunpack.c.l.b16 %v408
      %v520 = vunpack.c.l.b16 %v409
      %v521 = vunpack.c.l.b16 %v410
      %v522 = vunpack.c.l.b16 %v411
      %v523 = vunpack.c.l.b16 %v412
      %v524 = vunpack.c.l.b16 %v413
      %v525 = vunpack.c.l.b16 %v414
      %v526 = vunpack.c.l.b16 %v415
      %v527 = vunpack.c.l.b16 %v416
      %v528 = vunpack.c.l.b16 %v417
      %v529 = vunpack.c.l.b16 %v418
      %v530 = vunpack.c.l.b16 %v419
      %v531 = vunpack.c.l.b16 %v420
      %v532 = vunpack.c.l.b16 %v421
      %v533 = vunpack.c.l.b16 %v422
      %v534 = vunpack.c.l.b16 %v423
      %v535 = vunpack.c.l.b16 %v424
      %v536 = vunpack.c.l.b16 %v425
      %v537 = vpack.c.b16 %v506, %v505
      %v538 = vpack.c.b16 %v508, %v507
      %v539 = vpack.c.b16 %v510, %v509
      %v540 = vpack.c.b16 %v512, %v511
      %v541 = vpack.c.b16 %v514, %v513
      %v542 = vpack.c.b16 %v516, %v515
      %v543 = vpack.c.b16 %v518, %v517
      %v544 = vpack.c.b16 %v520, %v519
      %v545 = vpack.c.b16 %v522, %v521
      %v546 = vpack.c.b16 %v524, %v523
      %v547 = vpack.c.b16 %v526, %v525
      %v548 = vpack.c.b16 %v528, %v527
      %v549 = vpack.c.b16 %v530, %v529
      %v550 = vpack.c.b16 %v532, %v531
      %v551 = vpack.c.b16 %v534, %v533
      %v552 = vpack.c.b16 %v536, %v535
      %569 = vmatprep.subr.bf16.mxu0 0
      %570 = vmatpush1.bf16.msra.mxu0 %v537
      %571 = vmatprep.subr.bf16.mxu0 0
      %572 = vmatpush1.bf16.msra.mxu0 %v538
      %573 = vmatprep.subr.bf16.mxu0 0
      %574 = vmatpush1.bf16.msra.mxu0 %v539
      %575 = vmatprep.subr.bf16.mxu0 0
      %576 = vmatpush1.bf16.msra.mxu0 %v540
      %577 = vmatprep.subr.bf16.mxu0 0
      %578 = vmatpush1.bf16.msra.mxu0 %v541
      %579 = vmatprep.subr.bf16.mxu0 0
      %580 = vmatpush1.bf16.msra.mxu0 %v542
      %581 = vmatprep.subr.bf16.mxu0 0
      %582 = vmatpush1.bf16.msra.mxu0 %v543
      %583 = vmatprep.subr.bf16.mxu0 0
      %584 = vmatpush1.bf16.msra.mxu0 %v544
      %585 = vmatprep.subr.bf16.mxu0 0
      %586 = vmatpush1.bf16.msra.mxu0 %v545
      %587 = vmatprep.subr.bf16.mxu0 0
      %588 = vmatpush1.bf16.msra.mxu0 %v546
      %589 = vmatprep.subr.bf16.mxu0 0
      %590 = vmatpush1.bf16.msra.mxu0 %v547
      %591 = vmatprep.subr.bf16.mxu0 0
      %592 = vmatpush1.bf16.msra.mxu0 %v548
      %593 = vmatprep.subr.bf16.mxu0 0
      %594 = vmatpush1.bf16.msra.mxu0 %v549
      %595 = vmatprep.subr.bf16.mxu0 0
      %596 = vmatpush1.bf16.msra.mxu0 %v550
      %597 = vmatprep.subr.bf16.mxu0 0
      %598 = vmatpush1.bf16.msra.mxu0 %v551
      %599 = vmatprep.subr.bf16.mxu0 0
      %600 = vmatpush1.bf16.msra.mxu0 %v552
      %601 = vmatprep.mubr.bf16.mxu0 %v458
      %602 = vmatmul.mubr.bf16.gmra.mrb[0].mxu0 %v457
      %v603 = vpop.f32.mrb[0].mxu0
      %v604 = vadd.f32 %v431, %v603
      %v605 = vpop.f32.mrb[0].mxu0
      %v606 = vpop.f32.mrb[0].mxu0
      %v607 = vadd.f32 %v431, %v606
      %v608 = vpop.f32.mrb[0].mxu0
      %609 = vmatprep.mubr.bf16.mxu0 %v460
      %610 = vmatmul.mubr.bf16.gmra.mrb[0].mxu0 %v459
      %v611 = vpop.f32.mrb[0].mxu0
      %v612 = vadd.f32 %v431, %v611
      %v613 = vpop.f32.mrb[0].mxu0
      %v614 = vpop.f32.mrb[0].mxu0
      %v615 = vadd.f32 %v431, %v614
      %v616 = vpop.f32.mrb[0].mxu0
      %617 = vmatprep.mubr.bf16.mxu0 %v462
      %618 = vmatmul.mubr.bf16.gmra.mrb[0].mxu0 %v461
      %v619 = vpop.f32.mrb[0].mxu0
      %v620 = vadd.f32 %v431, %v619
      %v621 = vpop.f32.mrb[0].mxu0
      %v622 = vpop.f32.mrb[0].mxu0
      %v623 = vadd.f32 %v431, %v622
      %v624 = vpop.f32.mrb[0].mxu0
      %625 = vmatprep.mubr.bf16.mxu0 %v464
      %626 = vmatmul.mubr.bf16.gmra.mrb[0].mxu0 %v463
      %v627 = vpop.f32.mrb[0].mxu0
      %v628 = vadd.f32 %v431, %v627
      %v629 = vpop.f32.mrb[0].mxu0
      %v630 = vpop.f32.mrb[0].mxu0
      %v631 = vadd.f32 %v431, %v630
      %v632 = vpop.f32.mrb[0].mxu0
      %633 = vdwg.mxu0
      %v634 = vld [vmem:[%s358] sm:$0x1]
      %v636 = vlaneseq
      %v637 = vshrl.u32 %v636, 7
      %v638 = vsub.s32 0, %v637
      %v639 = vrot.slane %v634, %v638
      %v641 = vmul.f32 %v604, %v639
      %v642 = vmul.f32 %v607, %v639
      %v643 = vmul.f32 %v612, %v639
      %v644 = vmul.f32 %v615, %v639
      %v645 = vmul.f32 %v620, %v639
      %v646 = vmul.f32 %v623, %v639
      %v647 = vmul.f32 %v628, %v639
      %v648 = vmul.f32 %v631, %v639
      %v649 = vld [vmem:[%s370] sm:$0xff]
      %v650 = vld [vmem:[%s370 + $0x8] sm:$0xff]
      %v651 = vld [vmem:[%s370 + $0x10] sm:$0xff]
      %v652 = vld [vmem:[%s370 + $0x18] sm:$0xff]
      %v653 = vld [vmem:[%s370 + $0x20] sm:$0xff]
      %v654 = vld [vmem:[%s370 + $0x28] sm:$0xff]
      %v655 = vld [vmem:[%s370 + $0x30] sm:$0xff]
      %v656 = vld [vmem:[%s370 + $0x38] sm:$0xff]
      %v657 = vadd.f32 %v641, %v649
      %v658 = vadd.f32 %v642, %v650
      %v659 = vadd.f32 %v643, %v651
      %v660 = vadd.f32 %v644, %v652
      %v661 = vadd.f32 %v645, %v653
      %v662 = vadd.f32 %v646, %v654
      %v663 = vadd.f32 %v647, %v655
      %v664 = vadd.f32 %v648, %v656
      %vm665 = vcmask 523264
      %666 = vst.msk [vmem:[%s383] sm:$0xff] %vm665, %v657
      %667 = vst.msk [vmem:[%s383 + $0x8] sm:$0xff] %vm665, %v658
      %668 = vst.msk [vmem:[%s383 + $0x10] sm:$0xff] %vm665, %v659
      %669 = vst.msk [vmem:[%s383 + $0x18] sm:$0xff] %vm665, %v660
      %670 = vst.msk [vmem:[%s383 + $0x20] sm:$0xff] %vm665, %v661
      %671 = vst.msk [vmem:[%s383 + $0x28] sm:$0xff] %vm665, %v662
      %672 = vst.msk [vmem:[%s383 + $0x30] sm:$0xff] %vm665, %v663
      %673 = vst.msk [vmem:[%s383 + $0x38] sm:$0xff] %vm665, %v664
      %s674 = smul.u32 8, %s23
      %p675 = scmp.lt.s32.totalorder %s21, 1
      %s676 = scalar_select %p675, %s21, 1
      %p677 = scmp.lt.s32.totalorder %s674, 7
      %s678 = scalar_select %p677, %s674, 7
      %p679 = scmp.lt.s32.totalorder %s22, 0
      %s680 = scalar_select %p679, %s22, 0
      %s681 = sadd.s32 %s680, %s678
      %s682 = smul.addr %s676, 8
      %s683 = sadd.s32 %s681, %s682
      %s684 = smul.addr %s683, 8
      %s685 = scalar_lea.vmem %s5, %s684
      // Predicated region
      $region41: #{_lambda_.35} parent=39 // pred_check
        %p686 = pneg %p195
      $region42: #{_lambda_.35} parent=39 // pred_check_branch
        %688 = sbr.rel (%p686) target = $region44
      $region43: #{_lambda_.35} parent=39 // pred_region
        %s689 = smul.u32 8, %s23
      $region44: #{_lambda_.35} parent=39 // pred_fallthru
        _
    $region40: #{_lambda_.35} parent=5 // pred_fallthru
      _
    %p690 = scmp.le.s32.totalorder 2, %s11
    // Predicated region
    $region45: #{_lambda_.35} parent=5 // pred_check
      %p691 = pneg %p690
    $region46: #{_lambda_.35} parent=5 // pred_check_branch
      %693 = sbr.rel (%p691) target = $region48
    $region47: #{_lambda_.35} parent=5 // pred_region
      %s694 = ssub.s32 %s11, 2
      // Predicated region
      $region49: #{_lambda_.35} parent=47 // pred_check
        %p695 = pneg %p201
      $region50: #{_lambda_.35} parent=47 // pred_check_branch
        %697 = sbr.rel (%p695) target = $region52
      $region51: #{_lambda_.35} parent=47 // pred_region
        %s698 = smul.u32 8, %s26
        %p699 = scmp.lt.s32.totalorder %s24, 1
        %s700 = scalar_select %p699, %s24, 1
        %p701 = scmp.lt.s32.totalorder %s698, 7
        %s702 = scalar_select %p701, %s698, 7
        %p703 = scmp.lt.s32.totalorder %s25, 0
        %s704 = scalar_select %p703, %s25, 0
        %s705 = sadd.s32 %s704, %s702
        %s706 = smul.addr %s700, 8
        %s707 = sadd.s32 %s705, %s706
        %s708 = smul.addr %s707, 8
        %s709 = scalar_lea.vmem %s5, %s708
      $region52: #{_lambda_.35} parent=47 // pred_fallthru
        _
    $region48: #{_lambda_.35} parent=5 // pred_fallthru
      _
  $region6: #{_lambda_.35} parent=0 // loop_footer
    %s15 = sadd.s32 1, %s11
  $region7: #{_lambda_.35} parent=0 // loop_footer_branch
    %10 = sbr.rel target = $region3
  $region8: #{_lambda_.35} parent=0 // loop_exit
    _

// kernel: _lambda_.45
$region0: #{_lambda_.45}
  #allocation0 [shape = 'u32[]', space=smem, size = 0x4, offset = 0x4, fixed_abs, tag = 'smem constant byte address 0x4 - core index']
  #allocation1 [shape = 'u32[144,128]{1,0:T(1,128)}', space=vmem, size = 0x12000, scoped, tag = 'internal scratch']
  %s0 = inlined_call_operand.vmem [shape: f32[2,64,64], index: 0, kind: input, shape index: {}]
  %s1 = inlined_call_operand.vmem [shape: f32[2,1,64], index: 1, kind: input, shape index: {}]
  %s2 = inlined_call_operand.vmem [shape: f32[2,1,64], index: 2, kind: input, shape index: {}]
  %s3 = inlined_call_operand.vmem [shape: bf16[64,128], index: 3, kind: input, shape index: {}]
  %s4 = inlined_call_operand.vmem [shape: f32[1,128], index: 4, kind: input, shape index: {}]
  %s5 = inlined_call_operand.vmem [shape: f32[2,64,128], index: 5, kind: output, shape index: {}]
  %s6 = sld [smem:[#allocation0]]
  $region53: #{_lambda_.45} parent=0
    _
  %s8 = ssub.s32 1, %s6
  %s9 = scalar_select 0, %s8, %s6
  loop: start=0, step=1, limit=4
  $region2: #{_lambda_.45} parent=0 // loop_pre_header
    _
  $region3: #{_lambda_.45} parent=0 // loop_header
    %s11 = sphi 0, %s15
    %p12 = scmp.ge.s32.totalorder %s11, 4
    %s18 = sphi 0, %s37
    %s19 = sphi 0, %s33
    %s20 = sphi 0, %s29
    %s21 = sphi 0, %s18
    %s22 = sphi 0, %s19
    %s23 = sphi 0, %s20
    %s24 = sphi 0, %s21
    %s25 = sphi 0, %s22
    %s26 = sphi 0, %s23
    %s42 = sphi 0, %s44
    %s45 = sphi 0, %s42
    %s46 = sphi 0, %s45
    %s62 = sphi 0, %s46
    %s68 = sphi 0, %s70
    %s71 = sphi 0, %s68
    %s72 = sphi 0, %s71
    %s88 = sphi 0, %s72
    %s94 = sphi 0, %s96
    %s97 = sphi 0, %s94
    %s98 = sphi 0, %s97
    %s114 = sphi 0, %s98
    %s120 = sphi 0, %s122
    %s123 = sphi 0, %s120
    %s124 = sphi 0, %s123
    %s140 = sphi 0, %s124
    %s146 = sphi 0, %s148
    %s149 = sphi 0, %s146
    %s150 = sphi 0, %s149
    %s166 = sphi 0, %s150
    %s176 = sphi 0, %s178
    %s179 = sphi 0, %s176
    %s180 = sphi 0, %s179
    %s196 = sphi 0, %s180
  $region4: #{_lambda_.45} parent=0 // loop_header_branch
    %14 = sbr.rel (%p12) target = $region8
  $region5: #{_lambda_.45} parent=0 // loop_body
    %s16 = ssub.s32 %s11, 1
    %s17 = ssub.s32 %s11, 2
    %s27 = sadd.s32 1, %s20
    %p28 = scmp.ge.s32.totalorder %s27, 1
    %s29 = scalar_select %p28, 0, %s27
    %s30 = sadd.s32 1, %s19
    %s31 = scalar_select %p28, %s30, %s19
    %p32 = scmp.ge.s32.totalorder %s31, 1
    %s33 = scalar_select %p32, 0, %s31
    %s34 = sadd.s32 1, %s18
    %s35 = scalar_select %p32, %s34, %s18
    %p36 = scmp.ge.s32.totalorder %s35, 2
    %s37 = scalar_select %p36, 0, %s35
    %s38 = ssub.s32 %s18, %s37
    %s39 = ssub.s32 %s20, %s29
    %s40 = sor.u32 %s38, %s39
    %p41 = scmp.eq.s32.totalorder %s40, 0
    %s43 = sadd.s32 %s42, 1
    %s44 = scalar_select %p41, %s42, %s43
    %p47 = pneg %p41
    %p48 = scmp.eq.s32.totalorder %s11, 1
    %p49 = por %p47, %p48
    %p50 = scmp.ne.s32.totalorder %s42, %s45
    %p51 = scmp.eq.s32.totalorder %s11, 0
    %p52 = por %p50, %p51
    %p53 = scmp.ne.s32.totalorder %s42, %s45
    %p54 = scmp.eq.s32.totalorder %s16, 1
    %p55 = por %p53, %p54
    %p56 = scmp.ne.s32.totalorder %s45, %s46
    %p57 = scmp.eq.s32.totalorder %s16, 0
    %p58 = por %p56, %p57
    %p59 = scmp.ne.s32.totalorder %s45, %s46
    %p60 = scmp.eq.s32.totalorder %s17, 1
    %p61 = por %p59, %p60
    %p63 = scmp.ne.s32.totalorder %s46, %s62
    %p64 = scmp.eq.s32.totalorder %s17, 0
    %p65 = por %p63, %p64
    %s66 = ssub.s32 %s18, %s37
    %p67 = scmp.eq.s32.totalorder %s66, 0
    %s69 = sadd.s32 %s68, 1
    %s70 = scalar_select %p67, %s68, %s69
    %p73 = pneg %p67
    %p74 = scmp.eq.s32.totalorder %s11, 1
    %p75 = por %p73, %p74
    %p76 = scmp.ne.s32.totalorder %s68, %s71
    %p77 = scmp.eq.s32.totalorder %s11, 0
    %p78 = por %p76, %p77
    %p79 = scmp.ne.s32.totalorder %s68, %s71
    %p80 = scmp.eq.s32.totalorder %s16, 1
    %p81 = por %p79, %p80
    %p82 = scmp.ne.s32.totalorder %s71, %s72
    %p83 = scmp.eq.s32.totalorder %s16, 0
    %p84 = por %p82, %p83
    %p85 = scmp.ne.s32.totalorder %s71, %s72
    %p86 = scmp.eq.s32.totalorder %s17, 1
    %p87 = por %p85, %p86
    %p89 = scmp.ne.s32.totalorder %s72, %s88
    %p90 = scmp.eq.s32.totalorder %s17, 0
    %p91 = por %p89, %p90
    %s92 = ssub.s32 %s18, %s37
    %p93 = scmp.eq.s32.totalorder %s92, 0
    %s95 = sadd.s32 %s94, 1
    %s96 = scalar_select %p93, %s94, %s95
    %p99 = pneg %p93
    %p100 = scmp.eq.s32.totalorder %s11, 1
    %p101 = por %p99, %p100
    %p102 = scmp.ne.s32.totalorder %s94, %s97
    %p103 = scmp.eq.s32.totalorder %s11, 0
    %p104 = por %p102, %p103
    %p105 = scmp.ne.s32.totalorder %s94, %s97
    %p106 = scmp.eq.s32.totalorder %s16, 1
    %p107 = por %p105, %p106
    %p108 = scmp.ne.s32.totalorder %s97, %s98
    %p109 = scmp.eq.s32.totalorder %s16, 0
    %p110 = por %p108, %p109
    %p111 = scmp.ne.s32.totalorder %s97, %s98
    %p112 = scmp.eq.s32.totalorder %s17, 1
    %p113 = por %p111, %p112
    %p115 = scmp.ne.s32.totalorder %s98, %s114
    %p116 = scmp.eq.s32.totalorder %s17, 0
    %p117 = por %p115, %p116
    %s118 = ssub.s32 %s19, %s33
    %p119 = scmp.eq.s32.totalorder %s118, 0
    %s121 = sadd.s32 %s120, 1
    %s122 = scalar_select %p119, %s120, %s121
    %p125 = pneg %p119
    %p126 = scmp.eq.s32.totalorder %s11, 1
    %p127 = por %p125, %p126
    %p128 = scmp.ne.s32.totalorder %s120, %s123
    %p129 = scmp.eq.s32.totalorder %s11, 0
    %p130 = por %p128, %p129
    %p131 = scmp.ne.s32.totalorder %s120, %s123
    %p132 = scmp.eq.s32.totalorder %s16, 1
    %p133 = por %p131, %p132
    %p134 = scmp.ne.s32.totalorder %s123, %s124
    %p135 = scmp.eq.s32.totalorder %s16, 0
    %p136 = por %p134, %p135
    %p137 = scmp.ne.s32.totalorder %s123, %s124
    %p138 = scmp.eq.s32.totalorder %s17, 1
    %p139 = por %p137, %p138
    %p141 = scmp.ne.s32.totalorder %s124, %s140
    %p142 = scmp.eq.s32.totalorder %s17, 0
    %p143 = por %p141, %p142
    %s144 = ssub.s32 %s19, %s33
    %p145 = scmp.eq.s32.totalorder %s144, 0
    %s147 = sadd.s32 %s146, 1
    %s148 = scalar_select %p145, %s146, %s147
    %p151 = pneg %p145
    %p152 = scmp.eq.s32.totalorder %s11, 1
    %p153 = por %p151, %p152
    %p154 = scmp.ne.s32.totalorder %s146, %s149
    %p155 = scmp.eq.s32.totalorder %s11, 0
    %p156 = por %p154, %p155
    %p157 = scmp.ne.s32.totalorder %s146, %s149
    %p158 = scmp.eq.s32.totalorder %s16, 1
    %p159 = por %p157, %p158
    %p160 = scmp.ne.s32.totalorder %s149, %s150
    %p161 = scmp.eq.s32.totalorder %s16, 0
    %p162 = por %p160, %p161
    %p163 = scmp.ne.s32.totalorder %s149, %s150
    %p164 = scmp.eq.s32.totalorder %s17, 1
    %p165 = por %p163, %p164
    %p167 = scmp.ne.s32.totalorder %s150, %s166
    %p168 = scmp.eq.s32.totalorder %s17, 0
    %p169 = por %p167, %p168
    %s170 = ssub.s32 %s18, %s37
    %s171 = ssub.s32 %s20, %s29
    %s172 = sor.u32 %s170, %s171
    %s173 = ssub.s32 %s19, %s33
    %s174 = sor.u32 %s172, %s173
    %p175 = scmp.eq.s32.totalorder %s174, 0
    %s177 = sadd.s32 %s176, 1
    %s178 = scalar_select %p175, %s176, %s177
    %p181 = pneg %p175
    %p182 = scmp.eq.s32.totalorder %s11, 1
    %p183 = por %p181, %p182
    %p184 = scmp.ne.s32.totalorder %s176, %s179
    %p185 = scmp.eq.s32.totalorder %s11, 0
    %p186 = por %p184, %p185
    %p187 = scmp.ne.s32.totalorder %s176, %s179
    %p188 = scmp.eq.s32.totalorder %s16, 1
    %p189 = por %p187, %p188
    %p190 = scmp.ne.s32.totalorder %s179, %s180
    %p191 = scmp.eq.s32.totalorder %s16, 0
    %p192 = por %p190, %p191
    %p193 = scmp.ne.s32.totalorder %s179, %s180
    %p194 = scmp.eq.s32.totalorder %s17, 1
    %p195 = por %p193, %p194
    %p197 = scmp.ne.s32.totalorder %s180, %s196
    %p198 = scmp.eq.s32.totalorder %s17, 0
    %p199 = por %p197, %p198
    %p200 = scmp.le.s32.totalorder 1, %s11
    %p201 = scmp.lt.s32.totalorder %s11, 3
    %p202 = pnand %p200, %p201
    %p203 = pneg %p202
    // Predicated region
    $region9: #{_lambda_.45} parent=5 // pred_check
      _
    $region10: #{_lambda_.45} parent=5 // pred_check_branch
      %205 = sbr.rel (%p202) target = $region12
    $region11: #{_lambda_.45} parent=5 // pred_region
      %s206 = ssub.s32 %s11, 1
      // Predicated region
      $region13: #{_lambda_.45} parent=11 // pred_check
        %p207 = pneg %p136
      $region14: #{_lambda_.45} parent=11 // pred_check_branch
        %209 = sbr.rel (%p207) target = $region16
      $region15: #{_lambda_.45} parent=11 // pred_region
        %p210 = scmp.lt.s32.totalorder %s22, 0
        %s211 = scalar_select %p210, %s22, 0
        %s212 = smul.addr %s211, 4
        %s213 = scalar_lea.vmem %s3, %s212
      $region16: #{_lambda_.45} parent=11 // pred_fallthru
        _
      // Predicated region
      $region17: #{_lambda_.45} parent=11 // pred_check
        %p214 = pneg %p162
      $region18: #{_lambda_.45} parent=11 // pred_check_branch
        %216 = sbr.rel (%p214) target = $region20
      $region19: #{_lambda_.45} parent=11 // pred_region
        %p217 = scmp.lt.s32.totalorder %s22, 0
        %s218 = scalar_select %p217, %s22, 0
        %s219 = scalar_lea.vmem %s4, %s218
      $region20: #{_lambda_.45} parent=11 // pred_fallthru
        _
    $region12: #{_lambda_.45} parent=5 // pred_fallthru
      _
    %p220 = scmp.lt.s32.totalorder %s11, 2
    // Predicated region
    $region21: #{_lambda_.45} parent=5 // pred_check
      %p221 = pneg %p220
    $region22: #{_lambda_.45} parent=5 // pred_check_branch
      %223 = sbr.rel (%p221) target = $region24
    $region23: #{_lambda_.45} parent=5 // pred_region
      // Predicated region
      $region25: #{_lambda_.45} parent=23 // pred_check
        %p224 = pneg %p52
      $region26: #{_lambda_.45} parent=23 // pred_check_branch
        %226 = sbr.rel (%p224) target = $region28
      $region27: #{_lambda_.45} parent=23 // pred_region
        %s227 = smul.u32 8, %s20
        %p228 = scmp.lt.s32.totalorder %s18, 1
        %s229 = scalar_select %p228, %s18, 1
        %p230 = scmp.lt.s32.totalorder %s227, 7
        %s231 = scalar_select %p230, %s227, 7
        %s232 = smul.addr %s229, 8
        %s233 = sadd.s32 %s231, %s232
        %s234 = smul.addr %s233, 8
        %s235 = scalar_lea.vmem %s0, %s234
        %s236 = smul.u32 8, %s20
      $region28: #{_lambda_.45} parent=23 // pred_fallthru
        _
      // Predicated region
      $region29: #{_lambda_.45} parent=23 // pred_check
        %p237 = pneg %p78
      $region30: #{_lambda_.45} parent=23 // pred_check_branch
        %239 = sbr.rel (%p237) target = $region32
      $region31: #{_lambda_.45} parent=23 // pred_region
        %p240 = scmp.lt.s32.totalorder %s18, 1
        %s241 = scalar_select %p240, %s18, 1
        %s242 = scalar_lea.vmem %s1, %s241
      $region32: #{_lambda_.45} parent=23 // pred_fallthru
        _
      // Predicated region
      $region33: #{_lambda_.45} parent=23 // pred_check
        %p243 = pneg %p104
      $region34: #{_lambda_.45} parent=23 // pred_check_branch
        %245 = sbr.rel (%p243) target = $region36
      $region35: #{_lambda_.45} parent=23 // pred_region
        %p246 = scmp.lt.s32.totalorder %s18, 1
        %s247 = scalar_select %p246, %s18, 1
        %s248 = scalar_lea.vmem %s2, %s247
      $region36: #{_lambda_.45} parent=23 // pred_fallthru
        _
    $region24: #{_lambda_.45} parent=5 // pred_fallthru
      _
    %p249 = scmp.le.s32.totalorder 1, %s11
    %p250 = scmp.lt.s32.totalorder %s11, 3
    %p251 = pnand %p249, %p250
    %p252 = pneg %p251
    // Predicated region
    $region37: #{_lambda_.45} parent=5 // pred_check
      _
    $region38: #{_lambda_.45} parent=5 // pred_check_branch
      %254 = sbr.rel (%p251) target = $region40
    $region39: #{_lambda_.45} parent=5 // pred_region
      %s255 = ssub.s32 %s11, 1
      %s256 = smul.u32 8, %s23
      %p257 = scmp.lt.s32.totalorder %s21, 1
      %s258 = scalar_select %p257, %s21, 1
      %p259 = scmp.lt.s32.totalorder %s256, 7
      %s260 = scalar_select %p259, %s256, 7
      %s261 = smul.addr %s258, 8
      %s262 = sadd.s32 %s260, %s261
      %s263 = smul.addr %s262, 8
      %s264 = scalar_lea.vmem %s0, %s263
      %p265 = pneg %p58
      %p266 = pneg %p55
      %p267 = scmp.lt.s32.totalorder %s21, 1
      %s268 = scalar_select %p267, %s21, 1
      %s269 = scalar_lea.vmem %s1, %s268
      %p270 = pneg %p84
      %p271 = pneg %p81
      %p272 = scmp.lt.s32.totalorder %s21, 1
      %s273 = scalar_select %p272, %s21, 1
      %s274 = scalar_lea.vmem %s2, %s273
      %p275 = pneg %p110
      %p276 = pneg %p107
      %p277 = scmp.lt.s32.totalorder %s22, 0
      %s278 = scalar_select %p277, %s22, 0
      %s279 = smul.addr %s278, 4
      %s280 = scalar_lea.vmem %s3, %s279
      %p281 = pneg %p136
      %p282 = pneg %p133
      %p283 = scmp.lt.s32.totalorder %s22, 0
      %s284 = scalar_select %p283, %s22, 0
      %s285 = scalar_lea.vmem %s4, %s284
      %p286 = pneg %p162
      %p287 = pneg %p159
      %p288 = pneg %p192
      %p289 = pneg %p189
      %s290 = smul.u32 8, %s23
      %p291 = scmp.lt.s32.totalorder %s21, 1
      %s292 = scalar_select %p291, %s21, 1
      %p293 = scmp.lt.s32.totalorder %s290, 7
      %s294 = scalar_select %p293, %s290, 7
      %p295 = scmp.lt.s32.totalorder %s22, 0
      %s296 = scalar_select %p295, %s22, 0
      %s297 = sadd.s32 %s296, %s294
      %s298 = smul.addr %s292, 8
      %s299 = sadd.s32 %s297, %s298
      %s300 = smul.addr %s299, 8
      %s301 = scalar_lea.vmem %s5, %s300
      %s302 = smul.u32 8, %s23
      %p303 = scmp.lt.s32.totalorder %s21, 1
      %s304 = scalar_select %p303, %s21, 1
      %p305 = scmp.lt.s32.totalorder %s302, 7
      %s306 = scalar_select %p305, %s302, 7
      %s307 = smul.addr %s304, 8
      %s308 = sadd.s32 %s306, %s307
      %s309 = smul.addr %s308, 8
      %s310 = scalar_lea.vmem %s0, %s309
      %s311 = smul.u32 8, %s23
      %p312 = scmp.lt.s32.totalorder %s21, 1
      %s313 = scalar_select %p312, %s21, 1
      %s314 = scalar_lea.vmem %s1, %s313
      %p315 = scmp.lt.s32.totalorder %s21, 1
      %s316 = scalar_select %p315, %s21, 1
      %s317 = scalar_lea.vmem %s2, %s316
      %p318 = scmp.lt.s32.totalorder %s22, 0
      %s319 = scalar_select %p318, %s22, 0
      %s320 = smul.addr %s319, 4
      %s321 = scalar_lea.vmem %s3, %s320
      %p322 = scmp.lt.s32.totalorder %s22, 0
      %s323 = scalar_select %p322, %s22, 0
      %s324 = scalar_lea.vmem %s4, %s323
      %s325 = smul.u32 8, %s23
      %p326 = scmp.lt.s32.totalorder %s21, 1
      %s327 = scalar_select %p326, %s21, 1
      %p328 = scmp.lt.s32.totalorder %s325, 7
      %s329 = scalar_select %p328, %s325, 7
      %p330 = scmp.lt.s32.totalorder %s22, 0
      %s331 = scalar_select %p330, %s22, 0
      %s332 = sadd.s32 %s331, %s329
      %s333 = smul.addr %s327, 8
      %s334 = sadd.s32 %s332, %s333
      %s335 = smul.addr %s334, 8
      %s336 = scalar_lea.vmem %s5, %s335
      %s337 = smul.u32 8, %s23
      %v339 = vld [vmem:[%s310] sm:$0xff]
      %v340 = vld [vmem:[%s310 + $0x8] sm:$0xff]
      %v341 = vld [vmem:[%s310 + $0x10] sm:$0xff]
      %v342 = vld [vmem:[%s310 + $0x18] sm:$0xff]
      %v343 = vld [vmem:[%s310 + $0x20] sm:$0xff]
      %v344 = vld [vmem:[%s310 + $0x28] sm:$0xff]
      %v345 = vld [vmem:[%s310 + $0x30] sm:$0xff]
      %v346 = vld [vmem:[%s310 + $0x38] sm:$0xff]
      %vm347 = vcmask 523264
      %v348 = vsel %vm347, %v339, 0.0
      %349 = vadd.xlane.f32.xlu0 %v348
      %v350 = vpop.xlane.xlu0 %349
      %v351 = vsel %vm347, %v340, 0.0
      %352 = vadd.xlane.f32.xlu0 %v351
      %v353 = vpop.xlane.xlu0 %352
      %v354 = vsel %vm347, %v341, 0.0
      %355 = vadd.xlane.f32.xlu0 %v354
      %v356 = vpop.xlane.xlu0 %355
      %v357 = vsel %vm347, %v342, 0.0
      %358 = vadd.xlane.f32.xlu0 %v357
      %v359 = vpop.xlane.xlu0 %358
      %v360 = vsel %vm347, %v343, 0.0
      %361 = vadd.xlane.f32.xlu0 %v360
      %v362 = vpop.xlane.xlu0 %361
      %v363 = vsel %vm347, %v344, 0.0
      %364 = vadd.xlane.f32.xlu0 %v363
      %v365 = vpop.xlane.xlu0 %364
      %v366 = vsel %vm347, %v345, 0.0
      %367 = vadd.xlane.f32.xlu0 %v366
      %v368 = vpop.xlane.xlu0 %367
      %v369 = vsel %vm347, %v346, 0.0
      %370 = vadd.xlane.f32.xlu0 %v369
      %v371 = vpop.xlane.xlu0 %370
      %v372 = vrcp.pop 64.0
      %v373 = vmul.f32 %v350, %v372
      %v374 = vmul.f32 %v353, %v372
      %v375 = vmul.f32 %v356, %v372
      %v376 = vmul.f32 %v359, %v372
      %v377 = vmul.f32 %v362, %v372
      %v378 = vmul.f32 %v365, %v372
      %v379 = vmul.f32 %v368, %v372
      %v380 = vmul.f32 %v371, %v372
      %v381 = vsub.f32 %v339, %v373
      %v382 = vsub.f32 %v340, %v374
      %v383 = vsub.f32 %v341, %v375
      %v384 = vsub.f32 %v342, %v376
      %v385 = vsub.f32 %v343, %v377
      %v386 = vsub.f32 %v344, %v378
      %v387 = vsub.f32 %v345, %v379
      %v388 = vsub.f32 %v346, %v380
      %v389 = vmul.f32 %v381, %v381
      %v390 = vmul.f32 %v382, %v382
      %v391 = vmul.f32 %v383, %v383
      %v392 = vmul.f32 %v384, %v384
      %v393 = vmul.f32 %v385, %v385
      %v394 = vmul.f32 %v386, %v386
      %v395 = vmul.f32 %v387, %v387
      %v396 = vmul.f32 %v388, %v388
      %v397 = vsel %vm347, %v389, 0.0
      %398 = vadd.xlane.f32.xlu0 %v397
      %v399 = vpop.xlane.xlu0 %398
      %v400 = vsel %vm347, %v390, 0.0
      %401 = vadd.xlane.f32.xlu0 %v400
      %v402 = vpop.xlane.xlu0 %401
      %v403 = vsel %vm347, %v391, 0.0
      %404 = vadd.xlane.f32.xlu0 %v403
      %v405 = vpop.xlane.xlu0 %404
      %v406 = vsel %vm347, %v392, 0.0
      %407 = vadd.xlane.f32.xlu0 %v406
      %v408 = vpop.xlane.xlu0 %407
      %v409 = vsel %vm347, %v393, 0.0
      %410 = vadd.xlane.f32.xlu0 %v409
      %v411 = vpop.xlane.xlu0 %410
      %v412 = vsel %vm347, %v394, 0.0
      %413 = vadd.xlane.f32.xlu0 %v412
      %v414 = vpop.xlane.xlu0 %413
      %v415 = vsel %vm347, %v395, 0.0
      %416 = vadd.xlane.f32.xlu0 %v415
      %v417 = vpop.xlane.xlu0 %416
      %v418 = vsel %vm347, %v396, 0.0
      %419 = vadd.xlane.f32.xlu0 %v418
      %v420 = vpop.xlane.xlu0 %419
      %v421 = vmul.f32 %v399, %v372
      %v422 = vmul.f32 %v402, %v372
      %v423 = vmul.f32 %v405, %v372
      %v424 = vmul.f32 %v408, %v372
      %v425 = vmul.f32 %v411, %v372
      %v426 = vmul.f32 %v414, %v372
      %v427 = vmul.f32 %v417, %v372
      %v428 = vmul.f32 %v420, %v372
      %v429 = vadd.f32 %v421, 1e-05
      %v430 = vadd.f32 %v422, 1e-05
      %v431 = vadd.f32 %v423, 1e-05
      %v432 = vadd.f32 %v424, 1e-05
      %v433 = vadd.f32 %v425, 1e-05
      %v434 = vadd.f32 %v426, 1e-05
      %v435 = vadd.f32 %v427, 1e-05
      %v436 = vadd.f32 %v428, 1e-05
      %v437 = vrsqrt.pop %v429
      %v438 = vrsqrt.pop %v430
      %v439 = vrsqrt.pop %v431
      %v440 = vrsqrt.pop %v432
      %v441 = vrsqrt.pop %v433
      %v442 = vrsqrt.pop %v434
      %v443 = vrsqrt.pop %v435
      %v444 = vrsqrt.pop %v436
      %v445 = vmul.f32 %v381, %v437
      %v446 = vmul.f32 %v382, %v438
      %v447 = vmul.f32 %v383, %v439
      %v448 = vmul.f32 %v384, %v440
      %v449 = vmul.f32 %v385, %v441
      %v450 = vmul.f32 %v386, %v442
      %v451 = vmul.f32 %v387, %v443
      %v452 = vmul.f32 %v388, %v444
      %v453 = vld [vmem:[%s314] sm:$0x1]
      %v455 = vlaneseq
      %v456 = vshrl.u32 %v455, 7
      %v457 = vsub.s32 0, %v456
      %v458 = vrot.slane %v453, %v457
      %v460 = vmul.f32 %v445, %v458
      %v461 = vmul.f32 %v446, %v458
      %v462 = vmul.f32 %v447, %v458
      %v463 = vmul.f32 %v448, %v458
      %v464 = vmul.f32 %v449, %v458
      %v465 = vmul.f32 %v450, %v458
      %v466 = vmul.f32 %v451, %v458
      %v467 = vmul.f32 %v452, %v458
      %v468 = vld [vmem:[%s317] sm:$0x1]
      %v470 = vlaneseq
      %v471 = vshrl.u32 %v470, 7
      %v472 = vsub.s32 0, %v471
      %v473 = vrot.slane %v468, %v472
      %v475 = vadd.f32 %v460, %v473
      %v476 = vadd.f32 %v461, %v473
      %v477 = vadd.f32 %v462, %v473
      %v478 = vadd.f32 %v463, %v473
      %v479 = vadd.f32 %v464, %v473
      %v480 = vadd.f32 %v465, %v473
      %v481 = vadd.f32 %v466, %v473
      %v482 = vadd.f32 %v467, %v473
      %v483 = vpack.c.bf16 %v476, %v475
      %v484 = vpack.c.bf16 %v478, %v477
      %v485 = vpack.c.bf16 %v480, %v479
      %v486 = vpack.c.bf16 %v482, %v481
      %v487 = vld [vmem:[%s321] sm:$0xf]
      %v488 = vld [vmem:[%s321 + $0x4] sm:$0xf]
      %v489 = vld [vmem:[%s321 + $0x8] sm:$0xf]
      %v490 = vld [vmem:[%s321 + $0xc] sm:$0xf]
      %v491 = vld [vmem:[%s321 + $0x10] sm:$0xf]
      %v492 = vld [vmem:[%s321 + $0x14] sm:$0xf]
      %v493 = vld [vmem:[%s321 + $0x18] sm:$0xf]
      %v494 = vld [vmem:[%s321 + $0x1c] sm:$0xf]
      %v495 = vld [vmem:[%s324] sm:$0x1]
      %v497 = vlaneseq
      %v498 = vshrl.u32 %v497, 7
      %v499 = vsub.s32 0, %v498
      %v500 = vrot.slane %v495, %v499
      %v510 = vunpack.c.l.b16 %v487
      %v511 = vunpack.c.l.b16 %v488
      %v512 = vunpack.c.l.b16 %v489
      %v513 = vunpack.c.l.b16 %v490
      %v514 = vunpack.c.l.b16 %v491
      %v515 = vunpack.c.l.b16 %v492
      %v516 = vunpack.c.l.b16 %v493
      %v517 = vunpack.c.l.b16 %v494
      %v518 = vpack.c.b16 %v511, %v510
      %v519 = vpack.c.b16 %v513, %v512
      %v520 = vpack.c.b16 %v515, %v514
      %v521 = vpack.c.b16 %v517, %v516
      %v527 = vsel %vm347, %v483, 0
      %v530 = vsel %vm347, %v484, 0
      %v533 = vsel %vm347, %v485, 0
      %v536 = vsel %vm347, %v486, 0
      %538 = vmatprep.subr.bf16.mxu0 0
      %539 = vmatpush1.bf16.msra.mxu0 %v518
      %540 = vmatprep.subr.bf16.mxu0 0
      %541 = vmatpush1.bf16.msra.mxu0 %v519
      %542 = vmatprep.subr.bf16.mxu0 0
      %543 = vmatpush1.bf16.msra.mxu0 %v520
      %544 = vmatprep.subr.bf16.mxu0 0
      %545 = vmatpush1.bf16.msra.mxu0 %v521
      %546 = vmatprep.subr.bf16.mxu0 0
      %547 = vmatpush1.bf16.msra.mxu0 0
      %548 = vmatprep.subr.bf16.mxu0 0
      %549 = vmatpush1.bf16.msra.mxu0 0
      %550 = vmatprep.subr.bf16.mxu0 0
      %551 = vmatpush1.bf16.msra.mxu0 0
      %552 = vmatprep.subr.bf16.mxu0 0
      %553 = vmatpush1.bf16.msra.mxu0 0
      %554 = vmatprep.subr.bf16.mxu0 0
      %555 = vmatpush1.bf16.msra.mxu0 0
      %556 = vmatprep.subr.bf16.mxu0 0
      %557 = vmatpush1.bf16.msra.mxu0 0
      %558 = vmatprep.subr.bf16.mxu0 0
      %559 = vmatpush1.bf16.msra.mxu0 0
      %560 = vmatprep.subr.bf16.mxu0 0
      %561 = vmatpush1.bf16.msra.mxu0 0
      %562 = vmatprep.subr.bf16.mxu0 0
      %563 = vmatpush1.bf16.msra.mxu0 0
      %564 = vmatprep.subr.bf16.mxu0 0
      %565 = vmatpush1.bf16.msra.mxu0 0
      %566 = vmatprep.subr.bf16.mxu0 0
      %567 = vmatpush1.bf16.msra.mxu0 0
      %568 = vmatprep.subr.bf16.mxu0 0
      %569 = vmatpush1.bf16.msra.mxu0 0
      %570 = vmatprep.mubr.bf16.mxu0 0
      %571 = vmatmul.mubr.bf16.gmra.mrb[0].mxu0 %v527
      %v572 = vpop.f32.mrb[0].mxu0
      %v573 = vadd.f32 %v500, %v572
      %v574 = vpop.f32.mrb[0].mxu0
      %v575 = vpop.f32.mrb[0].mxu0
      %v576 = vadd.f32 %v500, %v575
      %v577 = vpop.f32.mrb[0].mxu0
      %578 = vmatprep.mubr.bf16.mxu0 0
      %579 = vmatmul.mubr.bf16.gmra.mrb[0].mxu0 %v530
      %v580 = vpop.f32.mrb[0].mxu0
      %v581 = vadd.f32 %v500, %v580
      %v582 = vpop.f32.mrb[0].mxu0
      %v583 = vpop.f32.mrb[0].mxu0
      %v584 = vadd.f32 %v500, %v583
      %v585 = vpop.f32.mrb[0].mxu0
      %586 = vmatprep.mubr.bf16.mxu0 0
      %587 = vmatmul.mubr.bf16.gmra.mrb[0].mxu0 %v533
      %v588 = vpop.f32.mrb[0].mxu0
      %v589 = vadd.f32 %v500, %v588
      %v590 = vpop.f32.mrb[0].mxu0
      %v591 = vpop.f32.mrb[0].mxu0
      %v592 = vadd.f32 %v500, %v591
      %v593 = vpop.f32.mrb[0].mxu0
      %594 = vmatprep.mubr.bf16.mxu0 0
      %595 = vmatmul.mubr.bf16.gmra.mrb[0].mxu0 %v536
      %v596 = vpop.f32.mrb[0].mxu0
      %v597 = vadd.f32 %v500, %v596
      %v598 = vpop.f32.mrb[0].mxu0
      %v599 = vpop.f32.mrb[0].mxu0
      %v600 = vadd.f32 %v500, %v599
      %v601 = vpop.f32.mrb[0].mxu0
      %602 = vdwg.mxu0
      %603 = vst [vmem:[%s336] sm:$0xff] %v573
      %604 = vst [vmem:[%s336 + $0x8] sm:$0xff] %v576
      %605 = vst [vmem:[%s336 + $0x10] sm:$0xff] %v581
      %606 = vst [vmem:[%s336 + $0x18] sm:$0xff] %v584
      %607 = vst [vmem:[%s336 + $0x20] sm:$0xff] %v589
      %608 = vst [vmem:[%s336 + $0x28] sm:$0xff] %v592
      %609 = vst [vmem:[%s336 + $0x30] sm:$0xff] %v597
      %610 = vst [vmem:[%s336 + $0x38] sm:$0xff] %v600
      %s611 = smul.u32 8, %s23
      %p612 = scmp.lt.s32.totalorder %s21, 1
      %s613 = scalar_select %p612, %s21, 1
      %p614 = scmp.lt.s32.totalorder %s611, 7
      %s615 = scalar_select %p614, %s611, 7
      %p616 = scmp.lt.s32.totalorder %s22, 0
      %s617 = scalar_select %p616, %s22, 0
      %s618 = sadd.s32 %s617, %s615
      %s619 = smul.addr %s613, 8
      %s620 = sadd.s32 %s618, %s619
      %s621 = smul.addr %s620, 8
      %s622 = scalar_lea.vmem %s5, %s621
      // Predicated region
      $region41: #{_lambda_.45} parent=39 // pred_check
        %p623 = pneg %p189
      $region42: #{_lambda_.45} parent=39 // pred_check_branch
        %625 = sbr.rel (%p623) target = $region44
      $region43: #{_lambda_.45} parent=39 // pred_region
        %s626 = smul.u32 8, %s23
      $region44: #{_lambda_.45} parent=39 // pred_fallthru
        _
    $region40: #{_lambda_.45} parent=5 // pred_fallthru
      _
    %p627 = scmp.le.s32.totalorder 2, %s11
    // Predicated region
    $region45: #{_lambda_.45} parent=5 // pred_check
      %p628 = pneg %p627
    $region46: #{_lambda_.45} parent=5 // pred_check_branch
      %630 = sbr.rel (%p628) target = $region48
    $region47: #{_lambda_.45} parent=5 // pred_region
      %s631 = ssub.s32 %s11, 2
      // Predicated region
      $region49: #{_lambda_.45} parent=47 // pred_check
        %p632 = pneg %p195
      $region50: #{_lambda_.45} parent=47 // pred_check_branch
        %634 = sbr.rel (%p632) target = $region52
      $region51: #{_lambda_.45} parent=47 // pred_region
        %s635 = smul.u32 8, %s26
        %p636 = scmp.lt.s32.totalorder %s24, 1
        %s637 = scalar_select %p636, %s24, 1
        %p638 = scmp.lt.s32.totalorder %s635, 7
        %s639 = scalar_select %p638, %s635, 7
        %p640 = scmp.lt.s32.totalorder %s25, 0
        %s641 = scalar_select %p640, %s25, 0
        %s642 = sadd.s32 %s641, %s639
        %s643 = smul.addr %s637, 8
        %s644 = sadd.s32 %s642, %s643
        %s645 = smul.addr %s644, 8
        %s646 = scalar_lea.vmem %s5, %s645
      $region52: #{_lambda_.45} parent=47 // pred_fallthru
        _
    $region48: #{_lambda_.45} parent=5 // pred_fallthru
      _
  $region6: #{_lambda_.45} parent=0 // loop_footer
    %s15 = sadd.s32 1, %s11
  $region7: #{_lambda_.45} parent=0 // loop_footer_branch
    %10 = sbr.rel target = $region3
  $region8: #{_lambda_.45} parent=0 // loop_exit
    _

</llo_original>
